<compile_context>
chip_gen: v5e
topology: v5e:2x2
jax: 0.10.0
libtpu: 0.0.40
codegen_flags: <defaults>
</compile_context>

<pallas_src>
import math
import numpy as np
import jax
import jax.numpy as jnp
from jax.experimental import pallas as pl
from jax.experimental.pallas import tpu as pltpu

LN_EPS = 1e-5


def _quick_gelu(x):
    return x * jax.nn.sigmoid(1.702 * x)


def _layernorm(x, g, b):
    mu = jnp.mean(x, axis=-1, keepdims=True)
    var = jnp.mean(jnp.square(x - mu), axis=-1, keepdims=True)
    return (x - mu) * jax.lax.rsqrt(var + LN_EPS) * g + b


def _f32(w):
    return w.astype(jnp.float32)


# ---------------------------------------------------------------------------
# Generation-aware configuration (VMEM limit + tile targets).
# ---------------------------------------------------------------------------
def _hw_config():
    mib = 1024 * 1024
    try:
        cap = pltpu.get_tpu_info().vmem_capacity_bytes
    except Exception:  # fall back to the most conservative chip (v7x: 64 MiB)
        cap = 64 * mib
    big = cap >= 100 * mib            # v5e / v6e: 128 MiB physical VMEM per core
    return dict(
        vmem_limit=int(min(max(cap - 16 * mib, 32 * mib), 112 * mib)),
        mlp_rows=512 if big else 256,     # rows per MLP matmul step
        lmhra_cols=64 if big else 32,     # spatial positions per LMHRA step
        attn_batch=16 if big else 8,      # batch rows per attention step
    )


def _sublane_tile(total, target, min_steps=1):
    """Tile for a dim sitting in the sublane slot of a block (multiple of 8 or full).

    Balanced (last ragged block not much smaller), with >= min_steps grid steps
    whenever the dimension allows it."""
    if total < 8:
        return total
    steps = max(min_steps, pl.cdiv(total, target))
    steps = max(1, min(steps, total // 8))
    tile = ((pl.cdiv(total, steps) + 7) // 8) * 8
    max_tile = total if total % 8 == 0 else (total // 8) * 8
    return max(8, min(tile, max_tile))


def _leading_tile(total, target, min_steps=2):
    """Tile for an unconstrained leading block dim, >= min_steps grid steps."""
    steps = max(min_steps, pl.cdiv(total, target))
    steps = min(steps, total)
    return pl.cdiv(total, steps)


# ---------------------------------------------------------------------------
# LocalTemporal (LMHRA): LN -> 1x1x1 down_proj -> depthwise (3,1,1) temporal conv
# -> QuickGELU -> 1x1x1 up_proj, residual fused.  Operates on the full batch-major
# activation (NT, S, C): each grid step covers one batch element's T time steps and
# a tile of spatial positions.  The CLS token (s == 0) is a masked pass-through, so
# no wrapper concat is needed.
# ---------------------------------------------------------------------------
def _lmhra_kernel(x_ref, g_ref, b_ref, wd_ref, bd_ref, wdw_ref, bdw_ref,
                  wu_ref, bu_ref, o_ref):
    x = x_ref[...]                                   # (T, bs, C) f32
    T, bs, C = x.shape
    Cb = wd_ref.shape[1]

    x2 = x.reshape(T * bs, C)                        # bs % 8 == 0 -> free reshape
    xn = _layernorm(x2, g_ref[...], b_ref[...])
    d = jnp.dot(xn.astype(jnp.bfloat16), wd_ref[...],
                preferred_element_type=jnp.float32) + bd_ref[...]        # (T*bs, Cb)
    d3 = d.reshape(T, bs, Cb)

    # depthwise temporal conv, kernel=3, zero padding=1 (time is the leading axis)
    z = jnp.zeros((1, bs, Cb), jnp.float32)
    d_prev = jnp.concatenate([z, d3[:-1]], axis=0)
    d_next = jnp.concatenate([d3[1:], z], axis=0)
    w = wdw_ref[...]                                 # (3, Cb) f32
    conv = (d_prev * w[0][None, None, :] + d3 * w[1][None, None, :]
            + d_next * w[2][None, None, :])

    h = conv.reshape(T * bs, Cb) + bdw_ref[...]
    h = _quick_gelu(h)
    up = jnp.dot(h.astype(jnp.bfloat16), wu_ref[...],
                 preferred_element_type=jnp.float32) + bu_ref[...]
    up3 = up.reshape(T, bs, C)

    # CLS token (global spatial index 0) passes through unchanged.
    s_idx = (pl.program_id(1) * bs
             + jax.lax.broadcasted_iota(jnp.int32, (T, bs, C), 1))
    up3 = jnp.where(s_idx == 0, 0.0, up3)

    o_ref[...] = x_ref[...] + up3                    # residual re-read from the ref


def lmhra_call(y, p, *, T, cfg):
    NT, S, C = y.shape
    N = NT // T
    Cb = p['wd'].shape[1]
    bs = _sublane_tile(S, cfg['lmhra_cols'], min_steps=1 if N >= 2 else 2)
    grid = (N, pl.cdiv(S, bs))
    wspec = lambda shape: pl.BlockSpec(shape, lambda n, i: (0, 0))
    return pl.pallas_call(
        _lmhra_kernel,
        out_shape=jax.ShapeDtypeStruct((NT, S, C), jnp.float32),
        grid=grid,
        in_specs=[
            pl.BlockSpec((T, bs, C), lambda n, i: (n, i, 0)),
            wspec((1, C)), wspec((1, C)),
            wspec((C, Cb)), wspec((1, Cb)),
            wspec((3, Cb)), wspec((1, Cb)),
            wspec((Cb, C)), wspec((1, C)),
        ],
        out_specs=pl.BlockSpec((T, bs, C), lambda n, i: (n, i, 0)),
        compiler_params=pltpu.CompilerParams(
            dimension_semantics=("parallel", "parallel"),
            vmem_limit_bytes=cfg['vmem_limit']),
    )(y, p['ln_g'], p['ln_b'], p['wd'], p['bd'], p['wdw'], p['bdw'],
      p['wu'], p['bu'])


# ---------------------------------------------------------------------------
# Attention: fused ln_1 + multi-head softmax attention + out_proj + residual.
# Blocks the batch-major activation (NT, S, C) directly; the sequence padding
# S -> Sp (multiple of 8), the padded-key mask and the S-slice of the result are
# all VMEM-local.  out_proj is accumulated per head from ref-sliced weight rows.
# ---------------------------------------------------------------------------
def _make_attn_kernel(n_head, s_valid, s_pad):
    def kern(x_ref, g_ref, b_ref, wqkv_ref, bqkv_ref, wo_ref, bo_ref, o_ref):
        Bb, S, C = x_ref.shape                        # S == s_valid
        Dh = C // n_head
        scale = 1.0 / math.sqrt(Dh)

        x = x_ref[...]                                # (Bb, S, C) f32
        if s_pad > S:
            x = jnp.concatenate(
                [x, jnp.zeros((Bb, s_pad - S, C), jnp.float32)], axis=1)
        x2 = x.reshape(Bb * s_pad, C)                 # s_pad % 8 == 0 -> free
        xn = _layernorm(x2, g_ref[...], b_ref[...])
        qkv = jnp.dot(xn.astype(jnp.bfloat16), wqkv_ref[...],
                      preferred_element_type=jnp.float32) + bqkv_ref[...]
        qkv3 = qkv.reshape(Bb, s_pad, 3 * C)

        # mask padded key positions (j >= s_valid)
        key_ok = jax.lax.broadcasted_iota(
            jnp.int32, (Bb, s_pad, s_pad), 2) < s_valid

        acc = jnp.zeros((Bb * s_pad, C), jnp.float32)
        for h in range(n_head):                       # static unroll over heads
            q = (qkv3[:, :, h * Dh:(h + 1) * Dh] * scale).astype(jnp.bfloat16)
            k = qkv3[:, :, C + h * Dh:C + (h + 1) * Dh].astype(jnp.bfloat16)
            v = qkv3[:, :, 2 * C + h * Dh:2 * C + (h + 1) * Dh].astype(jnp.bfloat16)
            s = jnp.einsum('bqd,bkd->bqk', q, k,
                           preferred_element_type=jnp.float32)           # (Bb,Sp,Sp)
            s = jnp.where(key_ok, s, -1e30)
            s = s - jnp.max(s, axis=-1, keepdims=True)
            p = jnp.exp(s)
            p = p * pl.reciprocal(jnp.sum(p, axis=-1, keepdims=True), approx=True)
            ctx = jnp.einsum('bqk,bkd->bqd', p.astype(jnp.bfloat16), v,
                             preferred_element_type=jnp.float32)         # (Bb,Sp,Dh)
            # out_proj accumulated per head; weight rows sliced from the ref.
            acc = acc + jnp.dot(ctx.reshape(Bb * s_pad, Dh).astype(jnp.bfloat16),
                                wo_ref[h * Dh:(h + 1) * Dh, :],
                                preferred_element_type=jnp.float32)

        y = (acc + bo_ref[...]).reshape(Bb, s_pad, C)
        o_ref[...] = x_ref[...] + y[:, :s_valid, :]   # residual re-read from the ref
    return kern


def attn_call(y, lnp, ap, n_head, *, cfg):
    NT, S, C = y.shape
    Sp = ((S + 7) // 8) * 8
    Bb = _leading_tile(NT, cfg['attn_batch'], min_steps=2)
    grid = (pl.cdiv(NT, Bb),)
    wspec = lambda shape: pl.BlockSpec(shape, lambda i: (0, 0))
    return pl.pallas_call(
        _make_attn_kernel(n_head, S, Sp),
        out_shape=jax.ShapeDtypeStruct((NT, S, C), jnp.float32),
        grid=grid,
        in_specs=[
            pl.BlockSpec((Bb, S, C), lambda i: (i, 0, 0)),
            wspec((1, C)), wspec((1, C)),
            wspec((C, 3 * C)), wspec((1, 3 * C)),
            wspec((C, C)), wspec((1, C)),
        ],
        out_specs=pl.BlockSpec((Bb, S, C), lambda i: (i, 0, 0)),
        compiler_params=pltpu.CompilerParams(
            dimension_semantics=("parallel",),
            vmem_limit_bytes=cfg['vmem_limit']),
    )(y, lnp['g'], lnp['b'], ap['wqkv'], ap['bqkv'], ap['wo'], ap['bo'])


# ---------------------------------------------------------------------------
# MLP: fused ln_2 + c_fc + QuickGELU + c_proj + residual (row-wise, 2D view).
# ---------------------------------------------------------------------------
def _mlp_kernel(x_ref, g_ref, b_ref, w1_ref, b1_ref, w2_ref, b2_ref, o_ref):
    xn = _layernorm(x_ref[...], g_ref[...], b_ref[...])
    h = jnp.dot(xn.astype(jnp.bfloat16), w1_ref[...],
                preferred_element_type=jnp.float32) + b1_ref[...]
    h = _quick_gelu(h)
    yv = jnp.dot(h.astype(jnp.bfloat16), w2_ref[...],
                 preferred_element_type=jnp.float32) + b2_ref[...]
    o_ref[...] = x_ref[...] + yv                      # residual re-read from the ref


def mlp_call(x2d, lnp, mp, *, cfg):
    R, C = x2d.shape
    Ch = mp['w1'].shape[1]
    br = _sublane_tile(R, cfg['mlp_rows'], min_steps=2)
    wspec = lambda shape: pl.BlockSpec(shape, lambda i: (0, 0))
    return pl.pallas_call(
        _mlp_kernel,
        out_shape=jax.ShapeDtypeStruct((R, C), jnp.float32),
        grid=(pl.cdiv(R, br),),
        in_specs=[
            pl.BlockSpec((br, C), lambda i: (i, 0)),
            wspec((1, C)), wspec((1, C)),
            wspec((C, Ch)), wspec((1, Ch)),
            wspec((Ch, C)), wspec((1, C)),
        ],
        out_specs=pl.BlockSpec((br, C), lambda i: (i, 0)),
        compiler_params=pltpu.CompilerParams(
            dimension_semantics=("parallel",),
            vmem_limit_bytes=cfg['vmem_limit']),
    )(x2d, lnp['g'], lnp['b'], mp['w1'], mp['b1'], mp['w2'], mp['b2'])


# ---------------------------------------------------------------------------
# Pure-JAX references (f32 math, same parameters), mirroring the torch forward.
# Each includes its residual, matching the fused kernels.
# ---------------------------------------------------------------------------
def ref_lmhra(x_lnc, p, T):
    L, NT, C = x_lnc.shape
    N = NT // T
    t = x_lnc.reshape(L, N, T, C)
    xn = _layernorm(t, p['ln_g'], p['ln_b'])
    d = xn @ _f32(p['wd']) + p['bd']
    z = jnp.zeros_like(d[:, :, :1])
    dp = jnp.concatenate([z, d[:, :, :-1]], axis=2)
    dn = jnp.concatenate([d[:, :, 1:], z], axis=2)
    w = p['wdw']
    conv = dp * w[0] + d * w[1] + dn * w[2] + p['bdw']
    conv = _quick_gelu(conv)
    out = conv @ _f32(p['wu']) + p['bu']
    return x_lnc + out.reshape(L, NT, C)


def ref_attn(x_snc, lnp, ap, n_head):
    S, B, C = x_snc.shape
    Dh = C // n_head
    xn = _layernorm(x_snc, lnp['g'], lnp['b'])
    qkv = xn @ _f32(ap['wqkv']) + ap['bqkv']
    q, k, v = jnp.split(qkv, 3, axis=-1)

    def heads(t):
        return t.reshape(S, B, n_head, Dh).transpose(1, 2, 0, 3)    # (B, H, S, Dh)

    q, k, v = heads(q), heads(k), heads(v)
    s = jnp.einsum('bhsd,bhtd->bhst', q, k) / math.sqrt(Dh)
    pr = jax.nn.softmax(s, axis=-1)
    o = jnp.einsum('bhst,bhtd->bhsd', pr, v)
    o = o.transpose(2, 0, 1, 3).reshape(S, B, C)
    return x_snc + (o @ _f32(ap['wo']) + ap['bo'])


def ref_mlp(x, lnp, mp):
    xn = _layernorm(x, lnp['g'], lnp['b'])
    h = _quick_gelu(xn @ _f32(mp['w1']) + mp['b1'])
    return x + (h @ _f32(mp['w2']) + mp['b2'])


# ---------------------------------------------------------------------------
# TemporalBlock.forward  (drop_path=0 / eval => DropPath is identity)
# ---------------------------------------------------------------------------
def temporal_block_forward(params, x, T=8, n_head=4, use_pallas=True):
    S, NT, C = x.shape
    L = S - 1
    H = W = int(round(math.sqrt(L)))
    assert H * W == L and NT % T == 0

    if use_pallas:
        cfg = _hw_config()
        # Single entry layout change to batch-major (NT, S, C); the whole interior
        # (2x LMHRA, attention, MLP) runs natively in this layout with fused
        # residuals and a masked CLS pass-through -- no concats / pads / slices
        # over HBM in between.
        y = jnp.transpose(x, (1, 0, 2))                                   # (NT, S, C)
        y = lmhra_call(y, params['lmhra1'], T=T, cfg=cfg)
        y = attn_call(y, params['ln_1'], params['attn'], n_head, cfg=cfg)
        y = lmhra_call(y, params['lmhra2'], T=T, cfg=cfg)
        y = mlp_call(y.reshape(NT * S, C), params['ln_2'], params['mlp'],
                     cfg=cfg).reshape(NT, S, C)
        return jnp.transpose(y, (1, 0, 2))                                # (S, NT, C)

    # reference path (mirrors the torch forward exactly)
    tmp = ref_lmhra(x[1:], params['lmhra1'], T)
    x = jnp.concatenate([x[:1], tmp], axis=0)
    x = ref_attn(x, params['ln_1'], params['attn'], n_head)
    tmp = ref_lmhra(x[1:], params['lmhra2'], T)
    x = jnp.concatenate([x[:1], tmp], axis=0)
    return ref_mlp(x.reshape(S * NT, C), params['ln_2'],
                   params['mlp']).reshape(S, NT, C)


# ---------------------------------------------------------------------------
# Deterministic parameter init (shapes follow the module __init__);
# matmul weights stored in bf16, biases / LN / depthwise conv in f32.
# ---------------------------------------------------------------------------
def init_params(key, C):
    Cb = C // 2
    keys = iter(jax.random.split(key, 32))
    bf16 = jnp.bfloat16

    def nrm(shape, scale=0.05, dtype=jnp.float32):
        return (scale * jax.random.normal(next(keys), shape)).astype(dtype)

    def lmhra_params():
        # NOTE: torch zero-inits up_proj (wu/bu); random values are used here so the
        # kernel path is actually exercised.
        return dict(
            ln_g=1.0 + nrm((1, C)), ln_b=nrm((1, C)),
            wd=nrm((C, Cb), dtype=bf16), bd=nrm((1, Cb)),     # Conv3d 1x1x1 down_proj (transposed)
            wdw=nrm((3, Cb)), bdw=nrm((1, Cb)),               # depthwise (3,1,1) conv
            wu=nrm((Cb, C), dtype=bf16), bu=nrm((1, C)),      # Conv3d 1x1x1 up_proj (transposed)
        )

    return dict(
        lmhra1=lmhra_params(),
        lmhra2=lmhra_params(),
        ln_1=dict(g=1.0 + nrm((1, C)), b=nrm((1, C))),
        ln_2=dict(g=1.0 + nrm((1, C)), b=nrm((1, C))),
        attn=dict(wqkv=nrm((C, 3 * C), dtype=bf16), bqkv=nrm((1, 3 * C)),   # in_proj_weight.T / bias
                  wo=nrm((C, C), dtype=bf16), bo=nrm((1, C))),              # out_proj.weight.T / bias
        mlp=dict(w1=nrm((C, 4 * C), dtype=bf16), b1=nrm((1, 4 * C)),        # c_fc.weight.T / bias
                 w2=nrm((4 * C, C), dtype=bf16), b2=nrm((1, C))),           # c_proj.weight.T / bias
    )


if __name__ == "__main__":
    C, n_head, T, N, H = 64, 4, 8, 2, 4
    L = H * H              # 16 spatial tokens
    NT = N * T             # 16
    S = L + 1              # 17 (CLS + spatial)

    key = jax.random.PRNGKey(0)
    kp, kx = jax.random.split(key)
    params = init_params(kp, C)
    x = jax.random.normal(kx, (S, NT, C), jnp.float32)

    fwd_pallas = jax.jit(lambda p, xx: temporal_block_forward(
        p, xx, T=T, n_head=n_head, use_pallas=True))
    fwd_ref = jax.jit(lambda p, xx: temporal_block_forward(
        p, xx, T=T, n_head=n_head, use_pallas=False))

    out = jax.block_until_ready(fwd_pallas(params, x))
    ref = jax.block_until_ready(fwd_ref(params, x))

    np.testing.assert_allclose(np.asarray(out), np.asarray(ref), rtol=2e-2, atol=2e-2)
    print("KERNEL_OK")
</pallas_src>

<mosaic_0001>
module attributes {stable_mosaic.version = 11 : i64} {
  func.func @_lmhra_kernel(%arg0: i32, %arg1: i32, %arg2: memref<8x16x64xf32, #tpu.memory_space<vmem>>, %arg3: memref<1x64xf32, #tpu.memory_space<vmem>>, %arg4: memref<1x64xf32, #tpu.memory_space<vmem>>, %arg5: memref<64x32xbf16, #tpu.memory_space<vmem>>, %arg6: memref<1x32xf32, #tpu.memory_space<vmem>>, %arg7: memref<3x32xf32, #tpu.memory_space<vmem>>, %arg8: memref<1x32xf32, #tpu.memory_space<vmem>>, %arg9: memref<32x64xbf16, #tpu.memory_space<vmem>>, %arg10: memref<1x64xf32, #tpu.memory_space<vmem>>, %arg11: memref<8x16x64xf32, #tpu.memory_space<vmem>>) attributes {dimension_semantics = [#tpu.dimension_semantics<parallel>, #tpu.dimension_semantics<parallel>], iteration_bounds = array<i64: 2, 2>, scalar_prefetch = 0 : i64, scratch_operands = 0 : i64, tpu.core_type = #tpu.core_type<tc>, window_params = [{transform_indices = @transform_0, window_bounds = array<i64: 8, 16, 64>}, {pipeline_mode = #tpu.pipeline_mode<synchronous>, transform_indices = @transform_1, window_bounds = array<i64: 1, 64>}, {pipeline_mode = #tpu.pipeline_mode<synchronous>, transform_indices = @transform_2, window_bounds = array<i64: 1, 64>}, {pipeline_mode = #tpu.pipeline_mode<synchronous>, transform_indices = @transform_3, window_bounds = array<i64: 64, 32>}, {pipeline_mode = #tpu.pipeline_mode<synchronous>, transform_indices = @transform_4, window_bounds = array<i64: 1, 32>}, {pipeline_mode = #tpu.pipeline_mode<synchronous>, transform_indices = @transform_5, window_bounds = array<i64: 3, 32>}, {pipeline_mode = #tpu.pipeline_mode<synchronous>, transform_indices = @transform_6, window_bounds = array<i64: 1, 32>}, {pipeline_mode = #tpu.pipeline_mode<synchronous>, transform_indices = @transform_7, window_bounds = array<i64: 32, 64>}, {pipeline_mode = #tpu.pipeline_mode<synchronous>, transform_indices = @transform_8, window_bounds = array<i64: 1, 64>}, {transform_indices = @transform_9, window_bounds = array<i64: 8, 16, 64>}]} {
    %c0 = arith.constant 0 : index
    %c0_0 = arith.constant 0 : index
    %c0_1 = arith.constant 0 : index
    %0 = vector.load %arg2[%c0, %c0_0, %c0_1] : memref<8x16x64xf32, #tpu.memory_space<vmem>>, vector<8x16x64xf32>
    %1 = vector.shape_cast %0 : vector<8x16x64xf32> to vector<128x64xf32>
    %c0_2 = arith.constant 0 : index
    %c0_3 = arith.constant 0 : index
    %2 = vector.load %arg3[%c0_2, %c0_3] : memref<1x64xf32, #tpu.memory_space<vmem>>, vector<1x64xf32>
    %c0_4 = arith.constant 0 : index
    %c0_5 = arith.constant 0 : index
    %3 = vector.load %arg4[%c0_4, %c0_5] : memref<1x64xf32, #tpu.memory_space<vmem>>, vector<1x64xf32>
    %cst = arith.constant dense<0.000000e+00> : vector<128xf32>
    %4 = vector.multi_reduction <add>, %1, %cst [1] : vector<128x64xf32> to vector<128xf32>
    %5 = vector.shape_cast %4 : vector<128xf32> to vector<128x1xf32>
    %cst_6 = arith.constant 6.400000e+01 : f32
    %6 = vector.broadcast %cst_6 : f32 to vector<128x1xf32>
    %7 = arith.divf %5, %6 : vector<128x1xf32>
    %8 = vector.broadcast %7 : vector<128x1xf32> to vector<128x64xf32>
    %9 = arith.subf %1, %8 : vector<128x64xf32>
    %10 = arith.mulf %9, %9 : vector<128x64xf32>
    %cst_7 = arith.constant dense<0.000000e+00> : vector<128xf32>
    %11 = vector.multi_reduction <add>, %10, %cst_7 [1] : vector<128x64xf32> to vector<128xf32>
    %12 = vector.shape_cast %11 : vector<128xf32> to vector<128x1xf32>
    %cst_8 = arith.constant 6.400000e+01 : f32
    %13 = vector.broadcast %cst_8 : f32 to vector<128x1xf32>
    %14 = arith.divf %12, %13 : vector<128x1xf32>
    %15 = vector.broadcast %7 : vector<128x1xf32> to vector<128x64xf32>
    %16 = arith.subf %1, %15 : vector<128x64xf32>
    %cst_9 = arith.constant 9.99999974E-6 : f32
    %17 = vector.broadcast %cst_9 : f32 to vector<128x1xf32>
    %18 = arith.addf %14, %17 : vector<128x1xf32>
    %19 = math.rsqrt %18 : vector<128x1xf32>
    %20 = vector.broadcast %19 : vector<128x1xf32> to vector<128x64xf32>
    %21 = arith.mulf %16, %20 : vector<128x64xf32>
    %22 = vector.broadcast %2 : vector<1x64xf32> to vector<128x64xf32>
    %23 = arith.mulf %21, %22 : vector<128x64xf32>
    %24 = vector.broadcast %3 : vector<1x64xf32> to vector<128x64xf32>
    %25 = arith.addf %23, %24 : vector<128x64xf32>
    %26 = arith.truncf %25 : vector<128x64xf32> to vector<128x64xbf16>
    %c0_10 = arith.constant 0 : index
    %c0_11 = arith.constant 0 : index
    %27 = vector.load %arg5[%c0_10, %c0_11] : memref<64x32xbf16, #tpu.memory_space<vmem>>, vector<64x32xbf16>
    %cst_12 = arith.constant dense<0.000000e+00> : vector<128x32xf32>
    %28 = tpu.matmul %26, %27, %cst_12 {dimension_numbers = #tpu.dot_dimension_numbers<[1], [0], [0], [1], [0, 0, 1, 1], [], []>} : vector<128x64xbf16>, vector<64x32xbf16>, vector<128x32xf32> -> vector<128x32xf32>
    %c0_13 = arith.constant 0 : index
    %c0_14 = arith.constant 0 : index
    %29 = vector.load %arg6[%c0_13, %c0_14] : memref<1x32xf32, #tpu.memory_space<vmem>>, vector<1x32xf32>
    %30 = vector.broadcast %29 : vector<1x32xf32> to vector<128x32xf32>
    %31 = arith.addf %28, %30 : vector<128x32xf32>
    %32 = vector.shape_cast %31 : vector<128x32xf32> to vector<8x16x32xf32>
    %cst_15 = arith.constant 0.000000e+00 : f32
    %33 = vector.broadcast %cst_15 : f32 to vector<1x16x32xf32>
    %34 = vector.extract_strided_slice %32 {offsets = [0, 0, 0], sizes = [7, 16, 32], strides = [1, 1, 1]} : vector<8x16x32xf32> to vector<7x16x32xf32>
    %35 = tpu.concatenate %33, %34 in 0 : vector<1x16x32xf32>, vector<7x16x32xf32> -> vector<8x16x32xf32>
    %36 = vector.extract_strided_slice %32 {offsets = [1, 0, 0], sizes = [7, 16, 32], strides = [1, 1, 1]} : vector<8x16x32xf32> to vector<7x16x32xf32>
    %37 = tpu.concatenate %36, %33 in 0 : vector<7x16x32xf32>, vector<1x16x32xf32> -> vector<8x16x32xf32>
    %c0_16 = arith.constant 0 : index
    %c0_17 = arith.constant 0 : index
    %38 = vector.load %arg7[%c0_16, %c0_17] : memref<3x32xf32, #tpu.memory_space<vmem>>, vector<3x32xf32>
    %39 = vector.extract_strided_slice %38 {offsets = [0, 0], sizes = [1, 32], strides = [1, 1]} : vector<3x32xf32> to vector<1x32xf32>
    %40 = vector.shape_cast %39 : vector<1x32xf32> to vector<32xf32>
    %41 = vector.shape_cast %40 : vector<32xf32> to vector<1x1x32xf32>
    %42 = vector.broadcast %41 : vector<1x1x32xf32> to vector<8x16x32xf32>
    %43 = arith.mulf %35, %42 : vector<8x16x32xf32>
    %44 = vector.extract_strided_slice %38 {offsets = [1, 0], sizes = [1, 32], strides = [1, 1]} : vector<3x32xf32> to vector<1x32xf32>
    %45 = vector.shape_cast %44 : vector<1x32xf32> to vector<32xf32>
    %46 = vector.shape_cast %45 : vector<32xf32> to vector<1x1x32xf32>
    %47 = vector.broadcast %46 : vector<1x1x32xf32> to vector<8x16x32xf32>
    %48 = arith.mulf %32, %47 : vector<8x16x32xf32>
    %49 = arith.addf %43, %48 : vector<8x16x32xf32>
    %50 = vector.extract_strided_slice %38 {offsets = [2, 0], sizes = [1, 32], strides = [1, 1]} : vector<3x32xf32> to vector<1x32xf32>
    %51 = vector.shape_cast %50 : vector<1x32xf32> to vector<32xf32>
    %52 = vector.shape_cast %51 : vector<32xf32> to vector<1x1x32xf32>
    %53 = vector.broadcast %52 : vector<1x1x32xf32> to vector<8x16x32xf32>
    %54 = arith.mulf %37, %53 : vector<8x16x32xf32>
    %55 = arith.addf %49, %54 : vector<8x16x32xf32>
    %56 = vector.shape_cast %55 : vector<8x16x32xf32> to vector<128x32xf32>
    %c0_18 = arith.constant 0 : index
    %c0_19 = arith.constant 0 : index
    %57 = vector.load %arg8[%c0_18, %c0_19] : memref<1x32xf32, #tpu.memory_space<vmem>>, vector<1x32xf32>
    %58 = vector.broadcast %57 : vector<1x32xf32> to vector<128x32xf32>
    %59 = arith.addf %56, %58 : vector<128x32xf32>
    %cst_20 = arith.constant 1.702000e+00 : f32
    %60 = vector.broadcast %cst_20 : f32 to vector<128x32xf32>
    %61 = arith.mulf %60, %59 : vector<128x32xf32>
    %62 = arith.negf %61 : vector<128x32xf32>
    %63 = math.exp %62 : vector<128x32xf32>
    %cst_21 = arith.constant 1.000000e+00 : f32
    %64 = vector.broadcast %cst_21 : f32 to vector<128x32xf32>
    %65 = arith.addf %64, %63 : vector<128x32xf32>
    %66 = arith.divf %64, %65 : vector<128x32xf32>
    %67 = arith.mulf %59, %66 : vector<128x32xf32>
    %68 = arith.truncf %67 : vector<128x32xf32> to vector<128x32xbf16>
    %c0_22 = arith.constant 0 : index
    %c0_23 = arith.constant 0 : index
    %69 = vector.load %arg9[%c0_22, %c0_23] : memref<32x64xbf16, #tpu.memory_space<vmem>>, vector<32x64xbf16>
    %cst_24 = arith.constant dense<0.000000e+00> : vector<128x64xf32>
    %70 = tpu.matmul %68, %69, %cst_24 {dimension_numbers = #tpu.dot_dimension_numbers<[1], [0], [0], [1], [0, 0, 1, 1], [], []>} : vector<128x32xbf16>, vector<32x64xbf16>, vector<128x64xf32> -> vector<128x64xf32>
    %c0_25 = arith.constant 0 : index
    %c0_26 = arith.constant 0 : index
    %71 = vector.load %arg10[%c0_25, %c0_26] : memref<1x64xf32, #tpu.memory_space<vmem>>, vector<1x64xf32>
    %72 = vector.broadcast %71 : vector<1x64xf32> to vector<128x64xf32>
    %73 = arith.addf %70, %72 : vector<128x64xf32>
    %74 = vector.shape_cast %73 : vector<128x64xf32> to vector<8x16x64xf32>
    %c16_i32 = arith.constant 16 : i32
    %75 = arith.muli %arg1, %c16_i32 : i32
    %76 = tpu.iota {dimensions = array<i32: 1>} : vector<8x16x64xi32>
    %77 = vector.broadcast %75 : i32 to vector<8x16x64xi32>
    %78 = arith.addi %77, %76 : vector<8x16x64xi32>
    %c0_i32 = arith.constant 0 : i32
    %79 = vector.broadcast %c0_i32 : i32 to vector<8x16x64xi32>
    %80 = arith.cmpi eq, %78, %79 : vector<8x16x64xi32>
    %cst_27 = arith.constant 0.000000e+00 : f32
    %81 = vector.broadcast %cst_27 : f32 to vector<8x16x64xf32>
    %82 = arith.select %80, %81, %74 : vector<8x16x64xi1>, vector<8x16x64xf32>
    %c0_28 = arith.constant 0 : index
    %c0_29 = arith.constant 0 : index
    %c0_30 = arith.constant 0 : index
    %83 = vector.load %arg2[%c0_28, %c0_29, %c0_30] : memref<8x16x64xf32, #tpu.memory_space<vmem>>, vector<8x16x64xf32>
    %84 = arith.addf %83, %82 : vector<8x16x64xf32>
    %c0_31 = arith.constant 0 : index
    %c0_32 = arith.constant 0 : index
    %c0_33 = arith.constant 0 : index
    %85 = vector.load %arg11[%c0_31, %c0_32, %c0_33] : memref<8x16x64xf32, #tpu.memory_space<vmem>>, vector<8x16x64xf32>
    tpu.vector_store %arg11[%c0_31, %c0_32, %c0_33], %84 {strides = array<i32>} : memref<8x16x64xf32, #tpu.memory_space<vmem>>, vector<8x16x64xf32>,
    return
  }
  func.func @transform_0(%arg0: i32, %arg1: i32) -> (i32, i32, i32) {
    %c0_i32 = arith.constant 0 : i32
    %c0_i32_0 = arith.constant 0 : i32
    return %arg0, %arg1, %c0_i32 : i32, i32, i32
  }
  func.func @transform_1(%arg0: i32, %arg1: i32) -> (i32, i32) {
    %c0_i32 = arith.constant 0 : i32
    %c0_i32_0 = arith.constant 0 : i32
    %c0_i32_1 = arith.constant 0 : i32
    return %c0_i32, %c0_i32_0 : i32, i32
  }
  func.func @transform_2(%arg0: i32, %arg1: i32) -> (i32, i32) {
    %c0_i32 = arith.constant 0 : i32
    %c0_i32_0 = arith.constant 0 : i32
    %c0_i32_1 = arith.constant 0 : i32
    return %c0_i32, %c0_i32_0 : i32, i32
  }
  func.func @transform_3(%arg0: i32, %arg1: i32) -> (i32, i32) {
    %c0_i32 = arith.constant 0 : i32
    %c0_i32_0 = arith.constant 0 : i32
    %c0_i32_1 = arith.constant 0 : i32
    return %c0_i32, %c0_i32_0 : i32, i32
  }
  func.func @transform_4(%arg0: i32, %arg1: i32) -> (i32, i32) {
    %c0_i32 = arith.constant 0 : i32
    %c0_i32_0 = arith.constant 0 : i32
    %c0_i32_1 = arith.constant 0 : i32
    return %c0_i32, %c0_i32_0 : i32, i32
  }
  func.func @transform_5(%arg0: i32, %arg1: i32) -> (i32, i32) {
    %c0_i32 = arith.constant 0 : i32
    %c0_i32_0 = arith.constant 0 : i32
    %c0_i32_1 = arith.constant 0 : i32
    return %c0_i32, %c0_i32_0 : i32, i32
  }
  func.func @transform_6(%arg0: i32, %arg1: i32) -> (i32, i32) {
    %c0_i32 = arith.constant 0 : i32
    %c0_i32_0 = arith.constant 0 : i32
    %c0_i32_1 = arith.constant 0 : i32
    return %c0_i32, %c0_i32_0 : i32, i32
  }
  func.func @transform_7(%arg0: i32, %arg1: i32) -> (i32, i32) {
    %c0_i32 = arith.constant 0 : i32
    %c0_i32_0 = arith.constant 0 : i32
    %c0_i32_1 = arith.constant 0 : i32
    return %c0_i32, %c0_i32_0 : i32, i32
  }
  func.func @transform_8(%arg0: i32, %arg1: i32) -> (i32, i32) {
    %c0_i32 = arith.constant 0 : i32
    %c0_i32_0 = arith.constant 0 : i32
    %c0_i32_1 = arith.constant 0 : i32
    return %c0_i32, %c0_i32_0 : i32, i32
  }
  func.func @transform_9(%arg0: i32, %arg1: i32) -> (i32, i32, i32) {
    %c0_i32 = arith.constant 0 : i32
    %c0_i32_0 = arith.constant 0 : i32
    return %arg0, %arg1, %c0_i32 : i32, i32, i32
  }
}

module attributes {stable_mosaic.version = 11 : i64} {
  func.func @kern(%arg0: i32, %arg1: memref<8x17x64xf32, #tpu.memory_space<vmem>>, %arg2: memref<1x64xf32, #tpu.memory_space<vmem>>, %arg3: memref<1x64xf32, #tpu.memory_space<vmem>>, %arg4: memref<64x192xbf16, #tpu.memory_space<vmem>>, %arg5: memref<1x192xf32, #tpu.memory_space<vmem>>, %arg6: memref<64x64xbf16, #tpu.memory_space<vmem>>, %arg7: memref<1x64xf32, #tpu.memory_space<vmem>>, %arg8: memref<8x17x64xf32, #tpu.memory_space<vmem>>) attributes {dimension_semantics = [#tpu.dimension_semantics<parallel>], iteration_bounds = array<i64: 2>, scalar_prefetch = 0 : i64, scratch_operands = 0 : i64, tpu.core_type = #tpu.core_type<tc>, window_params = [{transform_indices = @transform_0, window_bounds = array<i64: 8, 17, 64>}, {pipeline_mode = #tpu.pipeline_mode<synchronous>, transform_indices = @transform_1, window_bounds = array<i64: 1, 64>}, {pipeline_mode = #tpu.pipeline_mode<synchronous>, transform_indices = @transform_2, window_bounds = array<i64: 1, 64>}, {pipeline_mode = #tpu.pipeline_mode<synchronous>, transform_indices = @transform_3, window_bounds = array<i64: 64, 192>}, {pipeline_mode = #tpu.pipeline_mode<synchronous>, transform_indices = @transform_4, window_bounds = array<i64: 1, 192>}, {pipeline_mode = #tpu.pipeline_mode<synchronous>, transform_indices = @transform_5, window_bounds = array<i64: 64, 64>}, {pipeline_mode = #tpu.pipeline_mode<synchronous>, transform_indices = @transform_6, window_bounds = array<i64: 1, 64>}, {transform_indices = @transform_7, window_bounds = array<i64: 8, 17, 64>}]} {
    %c0 = arith.constant 0 : index
    %c0_0 = arith.constant 0 : index
    %c0_1 = arith.constant 0 : index
    %0 = vector.load %arg1[%c0, %c0_0, %c0_1] : memref<8x17x64xf32, #tpu.memory_space<vmem>>, vector<8x17x64xf32>
    %cst = arith.constant 0.000000e+00 : f32
    %1 = vector.broadcast %cst : f32 to vector<8x7x64xf32>
    %2 = tpu.concatenate %0, %1 in 1 : vector<8x17x64xf32>, vector<8x7x64xf32> -> vector<8x24x64xf32>
    %3 = vector.shape_cast %2 : vector<8x24x64xf32> to vector<192x64xf32>
    %c0_2 = arith.constant 0 : index
    %c0_3 = arith.constant 0 : index
    %4 = vector.load %arg2[%c0_2, %c0_3] : memref<1x64xf32, #tpu.memory_space<vmem>>, vector<1x64xf32>
    %c0_4 = arith.constant 0 : index
    %c0_5 = arith.constant 0 : index
    %5 = vector.load %arg3[%c0_4, %c0_5] : memref<1x64xf32, #tpu.memory_space<vmem>>, vector<1x64xf32>
    %cst_6 = arith.constant dense<0.000000e+00> : vector<192xf32>
    %6 = vector.multi_reduction <add>, %3, %cst_6 [1] : vector<192x64xf32> to vector<192xf32>
    %7 = vector.shape_cast %6 : vector<192xf32> to vector<192x1xf32>
    %cst_7 = arith.constant 6.400000e+01 : f32
    %8 = vector.broadcast %cst_7 : f32 to vector<192x1xf32>
    %9 = arith.divf %7, %8 : vector<192x1xf32>
    %10 = vector.broadcast %9 : vector<192x1xf32> to vector<192x64xf32>
    %11 = arith.subf %3, %10 : vector<192x64xf32>
    %12 = arith.mulf %11, %11 : vector<192x64xf32>
    %cst_8 = arith.constant dense<0.000000e+00> : vector<192xf32>
    %13 = vector.multi_reduction <add>, %12, %cst_8 [1] : vector<192x64xf32> to vector<192xf32>
    %14 = vector.shape_cast %13 : vector<192xf32> to vector<192x1xf32>
    %cst_9 = arith.constant 6.400000e+01 : f32
    %15 = vector.broadcast %cst_9 : f32 to vector<192x1xf32>
    %16 = arith.divf %14, %15 : vector<192x1xf32>
    %17 = vector.broadcast %9 : vector<192x1xf32> to vector<192x64xf32>
    %18 = arith.subf %3, %17 : vector<192x64xf32>
    %cst_10 = arith.constant 9.99999974E-6 : f32
    %19 = vector.broadcast %cst_10 : f32 to vector<192x1xf32>
    %20 = arith.addf %16, %19 : vector<192x1xf32>
    %21 = math.rsqrt %20 : vector<192x1xf32>
    %22 = vector.broadcast %21 : vector<192x1xf32> to vector<192x64xf32>
    %23 = arith.mulf %18, %22 : vector<192x64xf32>
    %24 = vector.broadcast %4 : vector<1x64xf32> to vector<192x64xf32>
    %25 = arith.mulf %23, %24 : vector<192x64xf32>
    %26 = vector.broadcast %5 : vector<1x64xf32> to vector<192x64xf32>
    %27 = arith.addf %25, %26 : vector<192x64xf32>
    %28 = arith.truncf %27 : vector<192x64xf32> to vector<192x64xbf16>
    %c0_11 = arith.constant 0 : index
    %c0_12 = arith.constant 0 : index
    %29 = vector.load %arg4[%c0_11, %c0_12] : memref<64x192xbf16, #tpu.memory_space<vmem>>, vector<64x192xbf16>
    %cst_13 = arith.constant dense<0.000000e+00> : vector<192x192xf32>
    %30 = tpu.matmul %28, %29, %cst_13 {dimension_numbers = #tpu.dot_dimension_numbers<[1], [0], [0], [1], [0, 0, 1, 1], [], []>} : vector<192x64xbf16>, vector<64x192xbf16>, vector<192x192xf32> -> vector<192x192xf32>
    %c0_14 = arith.constant 0 : index
    %c0_15 = arith.constant 0 : index
    %31 = vector.load %arg5[%c0_14, %c0_15] : memref<1x192xf32, #tpu.memory_space<vmem>>, vector<1x192xf32>
    %32 = vector.broadcast %31 : vector<1x192xf32> to vector<192x192xf32>
    %33 = arith.addf %30, %32 : vector<192x192xf32>
    %34 = vector.shape_cast %33 : vector<192x192xf32> to vector<8x24x192xf32>
    %35 = tpu.iota {dimensions = array<i32: 2>} : vector<8x24x24xi32>
    %c17_i32 = arith.constant 17 : i32
    %36 = vector.broadcast %c17_i32 : i32 to vector<8x24x24xi32>
    %37 = arith.cmpi slt, %35, %36 : vector<8x24x24xi32>
    %cst_16 = arith.constant 0.000000e+00 : f32
    %38 = vector.broadcast %cst_16 : f32 to vector<192x64xf32>
    %39 = vector.extract_strided_slice %34 {offsets = [0, 0, 0], sizes = [8, 24, 16], strides = [1, 1, 1]} : vector<8x24x192xf32> to vector<8x24x16xf32>
    %cst_17 = arith.constant 2.500000e-01 : f32
    %40 = vector.broadcast %cst_17 : f32 to vector<8x24x16xf32>
    %41 = arith.mulf %39, %40 : vector<8x24x16xf32>
    %42 = arith.truncf %41 : vector<8x24x16xf32> to vector<8x24x16xbf16>
    %43 = vector.extract_strided_slice %34 {offsets = [0, 0, 64], sizes = [8, 24, 16], strides = [1, 1, 1]} : vector<8x24x192xf32> to vector<8x24x16xf32>
    %44 = arith.truncf %43 : vector<8x24x16xf32> to vector<8x24x16xbf16>
    %45 = vector.extract_strided_slice %34 {offsets = [0, 0, 128], sizes = [8, 24, 16], strides = [1, 1, 1]} : vector<8x24x192xf32> to vector<8x24x16xf32>
    %46 = arith.truncf %45 : vector<8x24x16xf32> to vector<8x24x16xbf16>
    "tpu.trace_start"() <{level = 10 : i32, message = "bqd,bkd->bqk"}> : () -> ()
    %cst_18 = arith.constant dense<0.000000e+00> : vector<8x24x24xf32>
    %47 = tpu.matmul %42, %44, %cst_18 {dimension_numbers = #tpu.dot_dimension_numbers<[2], [2], [1], [1], [0, 0, 0, 1, 1, 1], [0], [0]>} : vector<8x24x16xbf16>, vector<8x24x16xbf16>, vector<8x24x24xf32> -> vector<8x24x24xf32>
    %cst_19 = arith.constant -1.000000e+30 : f32
    "tpu.trace_stop"() : () -> ()
    %48 = vector.broadcast %cst_19 : f32 to vector<8x24x24xf32>
    %49 = arith.select %37, %47, %48 : vector<8x24x24xi1>, vector<8x24x24xf32>
    %cst_20 = arith.constant dense<0xFF800000> : vector<8x24xf32>
    %50 = vector.multi_reduction <maximumf>, %49, %cst_20 [2] : vector<8x24x24xf32> to vector<8x24xf32>
    %51 = vector.shape_cast %50 : vector<8x24xf32> to vector<8x24x1xf32>
    %52 = vector.broadcast %51 : vector<8x24x1xf32> to vector<8x24x24xf32>
    %53 = arith.subf %49, %52 : vector<8x24x24xf32>
    %54 = math.exp %53 : vector<8x24x24xf32>
    %cst_21 = arith.constant dense<0.000000e+00> : vector<8x24xf32>
    %55 = vector.multi_reduction <add>, %54, %cst_21 [2] : vector<8x24x24xf32> to vector<8x24xf32>
    %56 = vector.shape_cast %55 : vector<8x24xf32> to vector<8x24x1xf32>
    %57 = tpu.reciprocal %56 {approx = true} : vector<8x24x1xf32> -> vector<8x24x1xf32>
    %58 = vector.broadcast %57 : vector<8x24x1xf32> to vector<8x24x24xf32>
    %59 = arith.mulf %54, %58 : vector<8x24x24xf32>
    %60 = arith.truncf %59 : vector<8x24x24xf32> to vector<8x24x24xbf16>
    "tpu.trace_start"() <{level = 10 : i32, message = "bqk,bkd->bqd"}> : () -> ()
    %cst_22 = arith.constant dense<0.000000e+00> : vector<8x24x16xf32>
    %61 = tpu.matmul %60, %46, %cst_22 {dimension_numbers = #tpu.dot_dimension_numbers<[2], [1], [1], [2], [0, 0, 0, 1, 1, 2], [0], [0]>} : vector<8x24x24xbf16>, vector<8x24x16xbf16>, vector<8x24x16xf32> -> vector<8x24x16xf32>
    "tpu.trace_stop"() : () -> ()
    %62 = vector.shape_cast %61 : vector<8x24x16xf32> to vector<192x16xf32>
    %63 = arith.truncf %62 : vector<192x16xf32> to vector<192x16xbf16>
    %c0_23 = arith.constant 0 : index
    %c0_24 = arith.constant 0 : index
    %64 = vector.load %arg6[%c0_23, %c0_24] : memref<64x64xbf16, #tpu.memory_space<vmem>>, vector<16x64xbf16>
    %cst_25 = arith.constant dense<0.000000e+00> : vector<192x64xf32>
    %65 = tpu.matmul %63, %64, %cst_25 {dimension_numbers = #tpu.dot_dimension_numbers<[1], [0], [0], [1], [0, 0, 1, 1], [], []>} : vector<192x16xbf16>, vector<16x64xbf16>, vector<192x64xf32> -> vector<192x64xf32>
    %66 = arith.addf %38, %65 : vector<192x64xf32>
    %67 = vector.extract_strided_slice %34 {offsets = [0, 0, 16], sizes = [8, 24, 16], strides = [1, 1, 1]} : vector<8x24x192xf32> to vector<8x24x16xf32>
    %cst_26 = arith.constant 2.500000e-01 : f32
    %68 = vector.broadcast %cst_26 : f32 to vector<8x24x16xf32>
    %69 = arith.mulf %67, %68 : vector<8x24x16xf32>
    %70 = arith.truncf %69 : vector<8x24x16xf32> to vector<8x24x16xbf16>
    %71 = vector.extract_strided_slice %34 {offsets = [0, 0, 80], sizes = [8, 24, 16], strides = [1, 1, 1]} : vector<8x24x192xf32> to vector<8x24x16xf32>
    %72 = arith.truncf %71 : vector<8x24x16xf32> to vector<8x24x16xbf16>
    %73 = vector.extract_strided_slice %34 {offsets = [0, 0, 144], sizes = [8, 24, 16], strides = [1, 1, 1]} : vector<8x24x192xf32> to vector<8x24x16xf32>
    %74 = arith.truncf %73 : vector<8x24x16xf32> to vector<8x24x16xbf16>
    "tpu.trace_start"() <{level = 10 : i32, message = "bqd,bkd->bqk"}> : () -> ()
    %cst_27 = arith.constant dense<0.000000e+00> : vector<8x24x24xf32>
    %75 = tpu.matmul %70, %72, %cst_27 {dimension_numbers = #tpu.dot_dimension_numbers<[2], [2], [1], [1], [0, 0, 0, 1, 1, 1], [0], [0]>} : vector<8x24x16xbf16>, vector<8x24x16xbf16>, vector<8x24x24xf32> -> vector<8x24x24xf32>
    %cst_28 = arith.constant -1.000000e+30 : f32
    "tpu.trace_stop"() : () -> ()
    %76 = vector.broadcast %cst_28 : f32 to vector<8x24x24xf32>
    %77 = arith.select %37, %75, %76 : vector<8x24x24xi1>, vector<8x24x24xf32>
    %cst_29 = arith.constant dense<0xFF800000> : vector<8x24xf32>
    %78 = vector.multi_reduction <maximumf>, %77, %cst_29 [2] : vector<8x24x24xf32> to vector<8x24xf32>
    %79 = vector.shape_cast %78 : vector<8x24xf32> to vector<8x24x1xf32>
    %80 = vector.broadcast %79 : vector<8x24x1xf32> to vector<8x24x24xf32>
    %81 = arith.subf %77, %80 : vector<8x24x24xf32>
    %82 = math.exp %81 : vector<8x24x24xf32>
    %cst_30 = arith.constant dense<0.000000e+00> : vector<8x24xf32>
    %83 = vector.multi_reduction <add>, %82, %cst_30 [2] : vector<8x24x24xf32> to vector<8x24xf32>
    %84 = vector.shape_cast %83 : vector<8x24xf32> to vector<8x24x1xf32>
    %85 = tpu.reciprocal %84 {approx = true} : vector<8x24x1xf32> -> vector<8x24x1xf32>
    %86 = vector.broadcast %85 : vector<8x24x1xf32> to vector<8x24x24xf32>
    %87 = arith.mulf %82, %86 : vector<8x24x24xf32>
    %88 = arith.truncf %87 : vector<8x24x24xf32> to vector<8x24x24xbf16>
    "tpu.trace_start"() <{level = 10 : i32, message = "bqk,bkd->bqd"}> : () -> ()
    %cst_31 = arith.constant dense<0.000000e+00> : vector<8x24x16xf32>
    %89 = tpu.matmul %88, %74, %cst_31 {dimension_numbers = #tpu.dot_dimension_numbers<[2], [1], [1], [2], [0, 0, 0, 1, 1, 2], [0], [0]>} : vector<8x24x24xbf16>, vector<8x24x16xbf16>, vector<8x24x16xf32> -> vector<8x24x16xf32>
    "tpu.trace_stop"() : () -> ()
    %90 = vector.shape_cast %89 : vector<8x24x16xf32> to vector<192x16xf32>
    %91 = arith.truncf %90 : vector<192x16xf32> to vector<192x16xbf16>
    %c16 = arith.constant 16 : index
    %c0_32 = arith.constant 0 : index
    %92 = vector.load %arg6[%c16, %c0_32] : memref<64x64xbf16, #tpu.memory_space<vmem>>, vector<16x64xbf16>
    %cst_33 = arith.constant dense<0.000000e+00> : vector<192x64xf32>
    %93 = tpu.matmul %91, %92, %cst_33 {dimension_numbers = #tpu.dot_dimension_numbers<[1], [0], [0], [1], [0, 0, 1, 1], [], []>} : vector<192x16xbf16>, vector<16x64xbf16>, vector<192x64xf32> -> vector<192x64xf32>
    %94 = arith.addf %66, %93 : vector<192x64xf32>
    %95 = vector.extract_strided_slice %34 {offsets = [0, 0, 32], sizes = [8, 24, 16], strides = [1, 1, 1]} : vector<8x24x192xf32> to vector<8x24x16xf32>
    %cst_34 = arith.constant 2.500000e-01 : f32
    %96 = vector.broadcast %cst_34 : f32 to vector<8x24x16xf32>
    %97 = arith.mulf %95, %96 : vector<8x24x16xf32>
    %98 = arith.truncf %97 : vector<8x24x16xf32> to vector<8x24x16xbf16>
    %99 = vector.extract_strided_slice %34 {offsets = [0, 0, 96], sizes = [8, 24, 16], strides = [1, 1, 1]} : vector<8x24x192xf32> to vector<8x24x16xf32>
    %100 = arith.truncf %99 : vector<8x24x16xf32> to vector<8x24x16xbf16>
    %101 = vector.extract_strided_slice %34 {offsets = [0, 0, 160], sizes = [8, 24, 16], strides = [1, 1, 1]} : vector<8x24x192xf32> to vector<8x24x16xf32>
    %102 = arith.truncf %101 : vector<8x24x16xf32> to vector<8x24x16xbf16>
    "tpu.trace_start"() <{level = 10 : i32, message = "bqd,bkd->bqk"}> : () -> ()
    %cst_35 = arith.constant dense<0.000000e+00> : vector<8x24x24xf32>
    %103 = tpu.matmul %98, %100, %cst_35 {dimension_numbers = #tpu.dot_dimension_numbers<[2], [2], [1], [1], [0, 0, 0, 1, 1, 1], [0], [0]>} : vector<8x24x16xbf16>, vector<8x24x16xbf16>, vector<8x24x24xf32> -> vector<8x24x24xf32>
    %cst_36 = arith.constant -1.000000e+30 : f32
    "tpu.trace_stop"() : () -> ()
    %104 = vector.broadcast %cst_36 : f32 to vector<8x24x24xf32>
    %105 = arith.select %37, %103, %104 : vector<8x24x24xi1>, vector<8x24x24xf32>
    %cst_37 = arith.constant dense<0xFF800000> : vector<8x24xf32>
    %106 = vector.multi_reduction <maximumf>, %105, %cst_37 [2] : vector<8x24x24xf32> to vector<8x24xf32>
    %107 = vector.shape_cast %106 : vector<8x24xf32> to vector<8x24x1xf32>
    %108 = vector.broadcast %107 : vector<8x24x1xf32> to vector<8x24x24xf32>
    %109 = arith.subf %105, %108 : vector<8x24x24xf32>
    %110 = math.exp %109 : vector<8x24x24xf32>
    %cst_38 = arith.constant dense<0.000000e+00> : vector<8x24xf32>
    %111 = vector.multi_reduction <add>, %110, %cst_38 [2] : vector<8x24x24xf32> to vector<8x24xf32>
    %112 = vector.shape_cast %111 : vector<8x24xf32> to vector<8x24x1xf32>
    %113 = tpu.reciprocal %112 {approx = true} : vector<8x24x1xf32> -> vector<8x24x1xf32>
    %114 = vector.broadcast %113 : vector<8x24x1xf32> to vector<8x24x24xf32>
    %115 = arith.mulf %110, %114 : vector<8x24x24xf32>
    %116 = arith.truncf %115 : vector<8x24x24xf32> to vector<8x24x24xbf16>
    "tpu.trace_start"() <{level = 10 : i32, message = "bqk,bkd->bqd"}> : () -> ()
    %cst_39 = arith.constant dense<0.000000e+00> : vector<8x24x16xf32>
    %117 = tpu.matmul %116, %102, %cst_39 {dimension_numbers = #tpu.dot_dimension_numbers<[2], [1], [1], [2], [0, 0, 0, 1, 1, 2], [0], [0]>} : vector<8x24x24xbf16>, vector<8x24x16xbf16>, vector<8x24x16xf32> -> vector<8x24x16xf32>
    "tpu.trace_stop"() : () -> ()
    %118 = vector.shape_cast %117 : vector<8x24x16xf32> to vector<192x16xf32>
    %119 = arith.truncf %118 : vector<192x16xf32> to vector<192x16xbf16>
    %c32 = arith.constant 32 : index
    %c0_40 = arith.constant 0 : index
    %120 = vector.load %arg6[%c32, %c0_40] : memref<64x64xbf16, #tpu.memory_space<vmem>>, vector<16x64xbf16>
    %cst_41 = arith.constant dense<0.000000e+00> : vector<192x64xf32>
    %121 = tpu.matmul %119, %120, %cst_41 {dimension_numbers = #tpu.dot_dimension_numbers<[1], [0], [0], [1], [0, 0, 1, 1], [], []>} : vector<192x16xbf16>, vector<16x64xbf16>, vector<192x64xf32> -> vector<192x64xf32>
    %122 = arith.addf %94, %121 : vector<192x64xf32>
    %123 = vector.extract_strided_slice %34 {offsets = [0, 0, 48], sizes = [8, 24, 16], strides = [1, 1, 1]} : vector<8x24x192xf32> to vector<8x24x16xf32>
    %cst_42 = arith.constant 2.500000e-01 : f32
    %124 = vector.broadcast %cst_42 : f32 to vector<8x24x16xf32>
    %125 = arith.mulf %123, %124 : vector<8x24x16xf32>
    %126 = arith.truncf %125 : vector<8x24x16xf32> to vector<8x24x16xbf16>
    %127 = vector.extract_strided_slice %34 {offsets = [0, 0, 112], sizes = [8, 24, 16], strides = [1, 1, 1]} : vector<8x24x192xf32> to vector<8x24x16xf32>
    %128 = arith.truncf %127 : vector<8x24x16xf32> to vector<8x24x16xbf16>
    %129 = vector.extract_strided_slice %34 {offsets = [0, 0, 176], sizes = [8, 24, 16], strides = [1, 1, 1]} : vector<8x24x192xf32> to vector<8x24x16xf32>
    %130 = arith.truncf %129 : vector<8x24x16xf32> to vector<8x24x16xbf16>
    "tpu.trace_start"() <{level = 10 : i32, message = "bqd,bkd->bqk"}> : () -> ()
    %cst_43 = arith.constant dense<0.000000e+00> : vector<8x24x24xf32>
    %131 = tpu.matmul %126, %128, %cst_43 {dimension_numbers = #tpu.dot_dimension_numbers<[2], [2], [1], [1], [0, 0, 0, 1, 1, 1], [0], [0]>} : vector<8x24x16xbf16>, vector<8x24x16xbf16>, vector<8x24x24xf32> -> vector<8x24x24xf32>
    %cst_44 = arith.constant -1.000000e+30 : f32
    "tpu.trace_stop"() : () -> ()
    %132 = vector.broadcast %cst_44 : f32 to vector<8x24x24xf32>
    %133 = arith.select %37, %131, %132 : vector<8x24x24xi1>, vector<8x24x24xf32>
    %cst_45 = arith.constant dense<0xFF800000> : vector<8x24xf32>
    %134 = vector.multi_reduction <maximumf>, %133, %cst_45 [2] : vector<8x24x24xf32> to vector<8x24xf32>
    %135 = vector.shape_cast %134 : vector<8x24xf32> to vector<8x24x1xf32>
    %136 = vector.broadcast %135 : vector<8x24x1xf32> to vector<8x24x24xf32>
    %137 = arith.subf %133, %136 : vector<8x24x24xf32>
    %138 = math.exp %137 : vector<8x24x24xf32>
    %cst_46 = arith.constant dense<0.000000e+00> : vector<8x24xf32>
    %139 = vector.multi_reduction <add>, %138, %cst_46 [2] : vector<8x24x24xf32> to vector<8x24xf32>
    %140 = vector.shape_cast %139 : vector<8x24xf32> to vector<8x24x1xf32>
    %141 = tpu.reciprocal %140 {approx = true} : vector<8x24x1xf32> -> vector<8x24x1xf32>
    %142 = vector.broadcast %141 : vector<8x24x1xf32> to vector<8x24x24xf32>
    %143 = arith.mulf %138, %142 : vector<8x24x24xf32>
    %144 = arith.truncf %143 : vector<8x24x24xf32> to vector<8x24x24xbf16>
    "tpu.trace_start"() <{level = 10 : i32, message = "bqk,bkd->bqd"}> : () -> ()
    %cst_47 = arith.constant dense<0.000000e+00> : vector<8x24x16xf32>
    %145 = tpu.matmul %144, %130, %cst_47 {dimension_numbers = #tpu.dot_dimension_numbers<[2], [1], [1], [2], [0, 0, 0, 1, 1, 2], [0], [0]>} : vector<8x24x24xbf16>, vector<8x24x16xbf16>, vector<8x24x16xf32> -> vector<8x24x16xf32>
    "tpu.trace_stop"() : () -> ()
    %146 = vector.shape_cast %145 : vector<8x24x16xf32> to vector<192x16xf32>
    %147 = arith.truncf %146 : vector<192x16xf32> to vector<192x16xbf16>
    %c48 = arith.constant 48 : index
    %c0_48 = arith.constant 0 : index
    %148 = vector.load %arg6[%c48, %c0_48] : memref<64x64xbf16, #tpu.memory_space<vmem>>, vector<16x64xbf16>
    %cst_49 = arith.constant dense<0.000000e+00> : vector<192x64xf32>
    %149 = tpu.matmul %147, %148, %cst_49 {dimension_numbers = #tpu.dot_dimension_numbers<[1], [0], [0], [1], [0, 0, 1, 1], [], []>} : vector<192x16xbf16>, vector<16x64xbf16>, vector<192x64xf32> -> vector<192x64xf32>
    %150 = arith.addf %122, %149 : vector<192x64xf32>
    %c0_50 = arith.constant 0 : index
    %c0_51 = arith.constant 0 : index
    %151 = vector.load %arg7[%c0_50, %c0_51] : memref<1x64xf32, #tpu.memory_space<vmem>>, vector<1x64xf32>
    %152 = vector.broadcast %151 : vector<1x64xf32> to vector<192x64xf32>
    %153 = arith.addf %150, %152 : vector<192x64xf32>
    %154 = vector.shape_cast %153 : vector<192x64xf32> to vector<8x24x64xf32>
    %c0_52 = arith.constant 0 : index
    %c0_53 = arith.constant 0 : index
    %c0_54 = arith.constant 0 : index
    %155 = vector.load %arg1[%c0_52, %c0_53, %c0_54] : memref<8x17x64xf32, #tpu.memory_space<vmem>>, vector<8x17x64xf32>
    %156 = vector.extract_strided_slice %154 {offsets = [0, 0, 0], sizes = [8, 17, 64], strides = [1, 1, 1]} : vector<8x24x64xf32> to vector<8x17x64xf32>
    %157 = arith.addf %155, %156 : vector<8x17x64xf32>
    %c0_55 = arith.constant 0 : index
    %c0_56 = arith.constant 0 : index
    %c0_57 = arith.constant 0 : index
    %158 = vector.load %arg8[%c0_55, %c0_56, %c0_57] : memref<8x17x64xf32, #tpu.memory_space<vmem>>, vector<8x17x64xf32>
    tpu.vector_store %arg8[%c0_55, %c0_56, %c0_57], %157 {strides = array<i32>} : memref<8x17x64xf32, #tpu.memory_space<vmem>>, vector<8x17x64xf32>,
    return
  }
  func.func @transform_0(%arg0: i32) -> (i32, i32, i32) {
    %c0_i32 = arith.constant 0 : i32
    %c0_i32_0 = arith.constant 0 : i32
    %c0_i32_1 = arith.constant 0 : i32
    return %arg0, %c0_i32, %c0_i32_0 : i32, i32, i32
  }
  func.func @transform_1(%arg0: i32) -> (i32, i32) {
    %c0_i32 = arith.constant 0 : i32
    %c0_i32_0 = arith.constant 0 : i32
    %c0_i32_1 = arith.constant 0 : i32
    return %c0_i32, %c0_i32_0 : i32, i32
  }
  func.func @transform_2(%arg0: i32) -> (i32, i32) {
    %c0_i32 = arith.constant 0 : i32
    %c0_i32_0 = arith.constant 0 : i32
    %c0_i32_1 = arith.constant 0 : i32
    return %c0_i32, %c0_i32_0 : i32, i32
  }
  func.func @transform_3(%arg0: i32) -> (i32, i32) {
    %c0_i32 = arith.constant 0 : i32
    %c0_i32_0 = arith.constant 0 : i32
    %c0_i32_1 = arith.constant 0 : i32
    return %c0_i32, %c0_i32_0 : i32, i32
  }
  func.func @transform_4(%arg0: i32) -> (i32, i32) {
    %c0_i32 = arith.constant 0 : i32
    %c0_i32_0 = arith.constant 0 : i32
    %c0_i32_1 = arith.constant 0 : i32
    return %c0_i32, %c0_i32_0 : i32, i32
  }
  func.func @transform_5(%arg0: i32) -> (i32, i32) {
    %c0_i32 = arith.constant 0 : i32
    %c0_i32_0 = arith.constant 0 : i32
    %c0_i32_1 = arith.constant 0 : i32
    return %c0_i32, %c0_i32_0 : i32, i32
  }
  func.func @transform_6(%arg0: i32) -> (i32, i32) {
    %c0_i32 = arith.constant 0 : i32
    %c0_i32_0 = arith.constant 0 : i32
    %c0_i32_1 = arith.constant 0 : i32
    return %c0_i32, %c0_i32_0 : i32, i32
  }
  func.func @transform_7(%arg0: i32) -> (i32, i32, i32) {
    %c0_i32 = arith.constant 0 : i32
    %c0_i32_0 = arith.constant 0 : i32
    %c0_i32_1 = arith.constant 0 : i32
    return %arg0, %c0_i32, %c0_i32_0 : i32, i32, i32
  }
}

module attributes {stable_mosaic.version = 11 : i64} {
  func.func @_mlp_kernel(%arg0: i32, %arg1: memref<136x64xf32, #tpu.memory_space<vmem>>, %arg2: memref<1x64xf32, #tpu.memory_space<vmem>>, %arg3: memref<1x64xf32, #tpu.memory_space<vmem>>, %arg4: memref<64x256xbf16, #tpu.memory_space<vmem>>, %arg5: memref<1x256xf32, #tpu.memory_space<vmem>>, %arg6: memref<256x64xbf16, #tpu.memory_space<vmem>>, %arg7: memref<1x64xf32, #tpu.memory_space<vmem>>, %arg8: memref<136x64xf32, #tpu.memory_space<vmem>>) attributes {dimension_semantics = [#tpu.dimension_semantics<parallel>], iteration_bounds = array<i64: 2>, scalar_prefetch = 0 : i64, scratch_operands = 0 : i64, tpu.core_type = #tpu.core_type<tc>, window_params = [{transform_indices = @transform_0, window_bounds = array<i64: 136, 64>}, {pipeline_mode = #tpu.pipeline_mode<synchronous>, transform_indices = @transform_1, window_bounds = array<i64: 1, 64>}, {pipeline_mode = #tpu.pipeline_mode<synchronous>, transform_indices = @transform_2, window_bounds = array<i64: 1, 64>}, {pipeline_mode = #tpu.pipeline_mode<synchronous>, transform_indices = @transform_3, window_bounds = array<i64: 64, 256>}, {pipeline_mode = #tpu.pipeline_mode<synchronous>, transform_indices = @transform_4, window_bounds = array<i64: 1, 256>}, {pipeline_mode = #tpu.pipeline_mode<synchronous>, transform_indices = @transform_5, window_bounds = array<i64: 256, 64>}, {pipeline_mode = #tpu.pipeline_mode<synchronous>, transform_indices = @transform_6, window_bounds = array<i64: 1, 64>}, {transform_indices = @transform_7, window_bounds = array<i64: 136, 64>}]} {
    %c0 = arith.constant 0 : index
    %c0_0 = arith.constant 0 : index
    %0 = vector.load %arg1[%c0, %c0_0] : memref<136x64xf32, #tpu.memory_space<vmem>>, vector<136x64xf32>
    %c0_1 = arith.constant 0 : index
    %c0_2 = arith.constant 0 : index
    %1 = vector.load %arg2[%c0_1, %c0_2] : memref<1x64xf32, #tpu.memory_space<vmem>>, vector<1x64xf32>
    %c0_3 = arith.constant 0 : index
    %c0_4 = arith.constant 0 : index
    %2 = vector.load %arg3[%c0_3, %c0_4] : memref<1x64xf32, #tpu.memory_space<vmem>>, vector<1x64xf32>
    %cst = arith.constant dense<0.000000e+00> : vector<136xf32>
    %3 = vector.multi_reduction <add>, %0, %cst [1] : vector<136x64xf32> to vector<136xf32>
    %4 = vector.shape_cast %3 : vector<136xf32> to vector<136x1xf32>
    %cst_5 = arith.constant 6.400000e+01 : f32
    %5 = vector.broadcast %cst_5 : f32 to vector<136x1xf32>
    %6 = arith.divf %4, %5 : vector<136x1xf32>
    %7 = vector.broadcast %6 : vector<136x1xf32> to vector<136x64xf32>
    %8 = arith.subf %0, %7 : vector<136x64xf32>
    %9 = arith.mulf %8, %8 : vector<136x64xf32>
    %cst_6 = arith.constant dense<0.000000e+00> : vector<136xf32>
    %10 = vector.multi_reduction <add>, %9, %cst_6 [1] : vector<136x64xf32> to vector<136xf32>
    %11 = vector.shape_cast %10 : vector<136xf32> to vector<136x1xf32>
    %cst_7 = arith.constant 6.400000e+01 : f32
    %12 = vector.broadcast %cst_7 : f32 to vector<136x1xf32>
    %13 = arith.divf %11, %12 : vector<136x1xf32>
    %14 = vector.broadcast %6 : vector<136x1xf32> to vector<136x64xf32>
    %15 = arith.subf %0, %14 : vector<136x64xf32>
    %cst_8 = arith.constant 9.99999974E-6 : f32
    %16 = vector.broadcast %cst_8 : f32 to vector<136x1xf32>
    %17 = arith.addf %13, %16 : vector<136x1xf32>
    %18 = math.rsqrt %17 : vector<136x1xf32>
    %19 = vector.broadcast %18 : vector<136x1xf32> to vector<136x64xf32>
    %20 = arith.mulf %15, %19 : vector<136x64xf32>
    %21 = vector.broadcast %1 : vector<1x64xf32> to vector<136x64xf32>
    %22 = arith.mulf %20, %21 : vector<136x64xf32>
    %23 = vector.broadcast %2 : vector<1x64xf32> to vector<136x64xf32>
    %24 = arith.addf %22, %23 : vector<136x64xf32>
    %25 = arith.truncf %24 : vector<136x64xf32> to vector<136x64xbf16>
    %c0_9 = arith.constant 0 : index
    %c0_10 = arith.constant 0 : index
    %26 = vector.load %arg4[%c0_9, %c0_10] : memref<64x256xbf16, #tpu.memory_space<vmem>>, vector<64x256xbf16>
    %cst_11 = arith.constant dense<0.000000e+00> : vector<136x256xf32>
    %27 = tpu.matmul %25, %26, %cst_11 {dimension_numbers = #tpu.dot_dimension_numbers<[1], [0], [0], [1], [0, 0, 1, 1], [], []>} : vector<136x64xbf16>, vector<64x256xbf16>, vector<136x256xf32> -> vector<136x256xf32>
    %c0_12 = arith.constant 0 : index
    %c0_13 = arith.constant 0 : index
    %28 = vector.load %arg5[%c0_12, %c0_13] : memref<1x256xf32, #tpu.memory_space<vmem>>, vector<1x256xf32>
    %29 = vector.broadcast %28 : vector<1x256xf32> to vector<136x256xf32>
    %30 = arith.addf %27, %29 : vector<136x256xf32>
    %cst_14 = arith.constant 1.702000e+00 : f32
    %31 = vector.broadcast %cst_14 : f32 to vector<136x256xf32>
    %32 = arith.mulf %31, %30 : vector<136x256xf32>
    %33 = arith.negf %32 : vector<136x256xf32>
    %34 = math.exp %33 : vector<136x256xf32>
    %cst_15 = arith.constant 1.000000e+00 : f32
    %35 = vector.broadcast %cst_15 : f32 to vector<136x256xf32>
    %36 = arith.addf %35, %34 : vector<136x256xf32>
    %37 = arith.divf %35, %36 : vector<136x256xf32>
    %38 = arith.mulf %30, %37 : vector<136x256xf32>
    %39 = arith.truncf %38 : vector<136x256xf32> to vector<136x256xbf16>
    %c0_16 = arith.constant 0 : index
    %c0_17 = arith.constant 0 : index
    %40 = vector.load %arg6[%c0_16, %c0_17] : memref<256x64xbf16, #tpu.memory_space<vmem>>, vector<256x64xbf16>
    %cst_18 = arith.constant dense<0.000000e+00> : vector<136x64xf32>
    %41 = tpu.matmul %39, %40, %cst_18 {dimension_numbers = #tpu.dot_dimension_numbers<[1], [0], [0], [1], [0, 0, 1, 1], [], []>} : vector<136x256xbf16>, vector<256x64xbf16>, vector<136x64xf32> -> vector<136x64xf32>
    %c0_19 = arith.constant 0 : index
    %c0_20 = arith.constant 0 : index
    %42 = vector.load %arg7[%c0_19, %c0_20] : memref<1x64xf32, #tpu.memory_space<vmem>>, vector<1x64xf32>
    %43 = vector.broadcast %42 : vector<1x64xf32> to vector<136x64xf32>
    %44 = arith.addf %41, %43 : vector<136x64xf32>
    %c0_21 = arith.constant 0 : index
    %c0_22 = arith.constant 0 : index
    %45 = vector.load %arg1[%c0_21, %c0_22] : memref<136x64xf32, #tpu.memory_space<vmem>>, vector<136x64xf32>
    %46 = arith.addf %45, %44 : vector<136x64xf32>
    %c0_23 = arith.constant 0 : index
    %c0_24 = arith.constant 0 : index
    %47 = vector.load %arg8[%c0_23, %c0_24] : memref<136x64xf32, #tpu.memory_space<vmem>>, vector<136x64xf32>
    tpu.vector_store %arg8[%c0_23, %c0_24], %46 {strides = array<i32>} : memref<136x64xf32, #tpu.memory_space<vmem>>, vector<136x64xf32>,
    return
  }
  func.func @transform_0(%arg0: i32) -> (i32, i32) {
    %c0_i32 = arith.constant 0 : i32
    %c0_i32_0 = arith.constant 0 : i32
    return %arg0, %c0_i32 : i32, i32
  }
  func.func @transform_1(%arg0: i32) -> (i32, i32) {
    %c0_i32 = arith.constant 0 : i32
    %c0_i32_0 = arith.constant 0 : i32
    %c0_i32_1 = arith.constant 0 : i32
    return %c0_i32, %c0_i32_0 : i32, i32
  }
  func.func @transform_2(%arg0: i32) -> (i32, i32) {
    %c0_i32 = arith.constant 0 : i32
    %c0_i32_0 = arith.constant 0 : i32
    %c0_i32_1 = arith.constant 0 : i32
    return %c0_i32, %c0_i32_0 : i32, i32
  }
  func.func @transform_3(%arg0: i32) -> (i32, i32) {
    %c0_i32 = arith.constant 0 : i32
    %c0_i32_0 = arith.constant 0 : i32
    %c0_i32_1 = arith.constant 0 : i32
    return %c0_i32, %c0_i32_0 : i32, i32
  }
  func.func @transform_4(%arg0: i32) -> (i32, i32) {
    %c0_i32 = arith.constant 0 : i32
    %c0_i32_0 = arith.constant 0 : i32
    %c0_i32_1 = arith.constant 0 : i32
    return %c0_i32, %c0_i32_0 : i32, i32
  }
  func.func @transform_5(%arg0: i32) -> (i32, i32) {
    %c0_i32 = arith.constant 0 : i32
    %c0_i32_0 = arith.constant 0 : i32
    %c0_i32_1 = arith.constant 0 : i32
    return %c0_i32, %c0_i32_0 : i32, i32
  }
  func.func @transform_6(%arg0: i32) -> (i32, i32) {
    %c0_i32 = arith.constant 0 : i32
    %c0_i32_0 = arith.constant 0 : i32
    %c0_i32_1 = arith.constant 0 : i32
    return %c0_i32, %c0_i32_0 : i32, i32
  }
  func.func @transform_7(%arg0: i32) -> (i32, i32) {
    %c0_i32 = arith.constant 0 : i32
    %c0_i32_0 = arith.constant 0 : i32
    return %arg0, %c0_i32 : i32, i32
  }
}

</mosaic_0001>

<llo_original>
// kernel: _lambda_.4
$region0: #{_lambda_.4}
  #allocation0 [shape = 'u32[]', space=smem, size = 0x4, offset = 0x4, fixed_abs, tag = 'smem constant byte address 0x4 - core index']
  #allocation1 [shape = 'u32[72,128]{1,0:T(1,128)}', space=vmem, size = 0x9000, scoped, tag = 'internal scratch']
  %s0 = inlined_call_operand.vmem [shape: f32[16,17,64], index: 0, kind: input, shape index: {}]
  %s1 = inlined_call_operand.vmem [shape: f32[1,64], index: 1, kind: input, shape index: {}]
  %s2 = inlined_call_operand.vmem [shape: f32[1,64], index: 2, kind: input, shape index: {}]
  %s3 = inlined_call_operand.vmem [shape: bf16[64,32], index: 3, kind: input, shape index: {}]
  %s4 = inlined_call_operand.vmem [shape: f32[1,32], index: 4, kind: input, shape index: {}]
  %s5 = inlined_call_operand.vmem [shape: f32[3,32], index: 5, kind: input, shape index: {}]
  %s6 = inlined_call_operand.vmem [shape: f32[1,32], index: 6, kind: input, shape index: {}]
  %s7 = inlined_call_operand.vmem [shape: bf16[32,64], index: 7, kind: input, shape index: {}]
  %s8 = inlined_call_operand.vmem [shape: f32[1,64], index: 8, kind: input, shape index: {}]
  %s9 = inlined_call_operand.vmem [shape: f32[16,17,64], index: 9, kind: output, shape index: {}]
  %s10 = sld [smem:[#allocation0]]
  $region169: #{_lambda_.4} parent=0
    _
  %s12 = ssub.s32 1, %s10
  %s13 = scalar_select 0, %s12, %s10
  $region1: #{_lambda_.4} parent=0
    #allocation2 [shape = 'u8[131072]{0}', space=vmem, size = 0x20000, scoped, tag = 'input window, operand 0']
    #allocation3 [shape = 'u8[131072]{0}', space=vmem, size = 0x20000, scoped, tag = 'output window, operand 0']
    loop: start=0, step=1, limit=6
    $region2: #{_lambda_.4} parent=1 // loop_pre_header
      _
    $region3: #{_lambda_.4} parent=1 // loop_header
      %s15 = sphi 0, %s19
      %p16 = scmp.ge.s32.totalorder %s15, 6
      %s22 = sphi 0, %s34
      %s23 = sphi 0, %s30
      %s24 = sphi 0, %s22
      %s25 = sphi 0, %s23
      %s26 = sphi 0, %s24
      %s27 = sphi 0, %s25
      %s39 = sphi 0, %s41
      %s42 = sphi 0, %s39
      %s43 = sphi 0, %s42
      %s59 = sphi 0, %s43
      %s63 = sphi 0, %s63
      %s65 = sphi 0, %s63
      %s66 = sphi 0, %s65
      %s80 = sphi 0, %s66
      %s84 = sphi 0, %s84
      %s86 = sphi 0, %s84
      %s87 = sphi 0, %s86
      %s101 = sphi 0, %s87
      %s105 = sphi 0, %s105
      %s107 = sphi 0, %s105
      %s108 = sphi 0, %s107
      %s122 = sphi 0, %s108
      %s126 = sphi 0, %s126
      %s128 = sphi 0, %s126
      %s129 = sphi 0, %s128
      %s143 = sphi 0, %s129
      %s147 = sphi 0, %s147
      %s149 = sphi 0, %s147
      %s150 = sphi 0, %s149
      %s164 = sphi 0, %s150
      %s168 = sphi 0, %s168
      %s170 = sphi 0, %s168
      %s171 = sphi 0, %s170
      %s185 = sphi 0, %s171
      %s189 = sphi 0, %s189
      %s191 = sphi 0, %s189
      %s192 = sphi 0, %s191
      %s206 = sphi 0, %s192
      %s210 = sphi 0, %s210
      %s212 = sphi 0, %s210
      %s213 = sphi 0, %s212
      %s227 = sphi 0, %s213
      %s235 = sphi 0, %s237
      %s238 = sphi 0, %s235
      %s239 = sphi 0, %s238
      %s255 = sphi 0, %s239
    $region4: #{_lambda_.4} parent=1 // loop_header_branch
      %18 = sbr.rel (%p16) target = $region8
    $region5: #{_lambda_.4} parent=1 // loop_body
      %s20 = ssub.s32 %s15, 1
      %s21 = ssub.s32 %s15, 2
      %s28 = sadd.s32 1, %s23
      %p29 = scmp.ge.s32.totalorder %s28, 2
      %s30 = scalar_select %p29, 0, %s28
      %s31 = sadd.s32 1, %s22
      %s32 = scalar_select %p29, %s31, %s22
      %p33 = scmp.ge.s32.totalorder %s32, 2
      %s34 = scalar_select %p33, 0, %s32
      %s35 = ssub.s32 %s22, %s34
      %s36 = ssub.s32 %s23, %s30
      %s37 = sor.u32 %s35, %s36
      %p38 = scmp.eq.s32.totalorder %s37, 0
      %s40 = sadd.s32 %s39, 1
      %s41 = scalar_select %p38, %s39, %s40
      %p44 = pneg %p38
      %p45 = scmp.eq.s32.totalorder %s15, 3
      %p46 = por %p44, %p45
      %p47 = scmp.ne.s32.totalorder %s39, %s42
      %p48 = scmp.eq.s32.totalorder %s15, 0
      %p49 = por %p47, %p48
      %p50 = scmp.ne.s32.totalorder %s39, %s42
      %p51 = scmp.eq.s32.totalorder %s20, 3
      %p52 = por %p50, %p51
      %p53 = scmp.ne.s32.totalorder %s42, %s43
      %p54 = scmp.eq.s32.totalorder %s20, 0
      %p55 = por %p53, %p54
      %p56 = scmp.ne.s32.totalorder %s42, %s43
      %p57 = scmp.eq.s32.totalorder %s21, 3
      %p58 = por %p56, %p57
      %p60 = scmp.ne.s32.totalorder %s43, %s59
      %p61 = scmp.eq.s32.totalorder %s21, 0
      %p62 = por %p60, %p61
      %s64 = sadd.s32 %s63, 1
      %p67 = scmp.eq.s32.totalorder %s15, 3
      %p68 = scmp.ne.s32.totalorder %s63, %s65
      %p69 = scmp.eq.s32.totalorder %s15, 0
      %p70 = por %p68, %p69
      %p71 = scmp.ne.s32.totalorder %s63, %s65
      %p72 = scmp.eq.s32.totalorder %s20, 3
      %p73 = por %p71, %p72
      %p74 = scmp.ne.s32.totalorder %s65, %s66
      %p75 = scmp.eq.s32.totalorder %s20, 0
      %p76 = por %p74, %p75
      %p77 = scmp.ne.s32.totalorder %s65, %s66
      %p78 = scmp.eq.s32.totalorder %s21, 3
      %p79 = por %p77, %p78
      %p81 = scmp.ne.s32.totalorder %s66, %s80
      %p82 = scmp.eq.s32.totalorder %s21, 0
      %p83 = por %p81, %p82
      %s85 = sadd.s32 %s84, 1
      %p88 = scmp.eq.s32.totalorder %s15, 3
      %p89 = scmp.ne.s32.totalorder %s84, %s86
      %p90 = scmp.eq.s32.totalorder %s15, 0
      %p91 = por %p89, %p90
      %p92 = scmp.ne.s32.totalorder %s84, %s86
      %p93 = scmp.eq.s32.totalorder %s20, 3
      %p94 = por %p92, %p93
      %p95 = scmp.ne.s32.totalorder %s86, %s87
      %p96 = scmp.eq.s32.totalorder %s20, 0
      %p97 = por %p95, %p96
      %p98 = scmp.ne.s32.totalorder %s86, %s87
      %p99 = scmp.eq.s32.totalorder %s21, 3
      %p100 = por %p98, %p99
      %p102 = scmp.ne.s32.totalorder %s87, %s101
      %p103 = scmp.eq.s32.totalorder %s21, 0
      %p104 = por %p102, %p103
      %s106 = sadd.s32 %s105, 1
      %p109 = scmp.eq.s32.totalorder %s15, 3
      %p110 = scmp.ne.s32.totalorder %s105, %s107
      %p111 = scmp.eq.s32.totalorder %s15, 0
      %p112 = por %p110, %p111
      %p113 = scmp.ne.s32.totalorder %s105, %s107
      %p114 = scmp.eq.s32.totalorder %s20, 3
      %p115 = por %p113, %p114
      %p116 = scmp.ne.s32.totalorder %s107, %s108
      %p117 = scmp.eq.s32.totalorder %s20, 0
      %p118 = por %p116, %p117
      %p119 = scmp.ne.s32.totalorder %s107, %s108
      %p120 = scmp.eq.s32.totalorder %s21, 3
      %p121 = por %p119, %p120
      %p123 = scmp.ne.s32.totalorder %s108, %s122
      %p124 = scmp.eq.s32.totalorder %s21, 0
      %p125 = por %p123, %p124
      %s127 = sadd.s32 %s126, 1
      %p130 = scmp.eq.s32.totalorder %s15, 3
      %p131 = scmp.ne.s32.totalorder %s126, %s128
      %p132 = scmp.eq.s32.totalorder %s15, 0
      %p133 = por %p131, %p132
      %p134 = scmp.ne.s32.totalorder %s126, %s128
      %p135 = scmp.eq.s32.totalorder %s20, 3
      %p136 = por %p134, %p135
      %p137 = scmp.ne.s32.totalorder %s128, %s129
      %p138 = scmp.eq.s32.totalorder %s20, 0
      %p139 = por %p137, %p138
      %p140 = scmp.ne.s32.totalorder %s128, %s129
      %p141 = scmp.eq.s32.totalorder %s21, 3
      %p142 = por %p140, %p141
      %p144 = scmp.ne.s32.totalorder %s129, %s143
      %p145 = scmp.eq.s32.totalorder %s21, 0
      %p146 = por %p144, %p145
      %s148 = sadd.s32 %s147, 1
      %p151 = scmp.eq.s32.totalorder %s15, 3
      %p152 = scmp.ne.s32.totalorder %s147, %s149
      %p153 = scmp.eq.s32.totalorder %s15, 0
      %p154 = por %p152, %p153
      %p155 = scmp.ne.s32.totalorder %s147, %s149
      %p156 = scmp.eq.s32.totalorder %s20, 3
      %p157 = por %p155, %p156
      %p158 = scmp.ne.s32.totalorder %s149, %s150
      %p159 = scmp.eq.s32.totalorder %s20, 0
      %p160 = por %p158, %p159
      %p161 = scmp.ne.s32.totalorder %s149, %s150
      %p162 = scmp.eq.s32.totalorder %s21, 3
      %p163 = por %p161, %p162
      %p165 = scmp.ne.s32.totalorder %s150, %s164
      %p166 = scmp.eq.s32.totalorder %s21, 0
      %p167 = por %p165, %p166
      %s169 = sadd.s32 %s168, 1
      %p172 = scmp.eq.s32.totalorder %s15, 3
      %p173 = scmp.ne.s32.totalorder %s168, %s170
      %p174 = scmp.eq.s32.totalorder %s15, 0
      %p175 = por %p173, %p174
      %p176 = scmp.ne.s32.totalorder %s168, %s170
      %p177 = scmp.eq.s32.totalorder %s20, 3
      %p178 = por %p176, %p177
      %p179 = scmp.ne.s32.totalorder %s170, %s171
      %p180 = scmp.eq.s32.totalorder %s20, 0
      %p181 = por %p179, %p180
      %p182 = scmp.ne.s32.totalorder %s170, %s171
      %p183 = scmp.eq.s32.totalorder %s21, 3
      %p184 = por %p182, %p183
      %p186 = scmp.ne.s32.totalorder %s171, %s185
      %p187 = scmp.eq.s32.totalorder %s21, 0
      %p188 = por %p186, %p187
      %s190 = sadd.s32 %s189, 1
      %p193 = scmp.eq.s32.totalorder %s15, 3
      %p194 = scmp.ne.s32.totalorder %s189, %s191
      %p195 = scmp.eq.s32.totalorder %s15, 0
      %p196 = por %p194, %p195
      %p197 = scmp.ne.s32.totalorder %s189, %s191
      %p198 = scmp.eq.s32.totalorder %s20, 3
      %p199 = por %p197, %p198
      %p200 = scmp.ne.s32.totalorder %s191, %s192
      %p201 = scmp.eq.s32.totalorder %s20, 0
      %p202 = por %p200, %p201
      %p203 = scmp.ne.s32.totalorder %s191, %s192
      %p204 = scmp.eq.s32.totalorder %s21, 3
      %p205 = por %p203, %p204
      %p207 = scmp.ne.s32.totalorder %s192, %s206
      %p208 = scmp.eq.s32.totalorder %s21, 0
      %p209 = por %p207, %p208
      %s211 = sadd.s32 %s210, 1
      %p214 = scmp.eq.s32.totalorder %s15, 3
      %p215 = scmp.ne.s32.totalorder %s210, %s212
      %p216 = scmp.eq.s32.totalorder %s15, 0
      %p217 = por %p215, %p216
      %p218 = scmp.ne.s32.totalorder %s210, %s212
      %p219 = scmp.eq.s32.totalorder %s20, 3
      %p220 = por %p218, %p219
      %p221 = scmp.ne.s32.totalorder %s212, %s213
      %p222 = scmp.eq.s32.totalorder %s20, 0
      %p223 = por %p221, %p222
      %p224 = scmp.ne.s32.totalorder %s212, %s213
      %p225 = scmp.eq.s32.totalorder %s21, 3
      %p226 = por %p224, %p225
      %p228 = scmp.ne.s32.totalorder %s213, %s227
      %p229 = scmp.eq.s32.totalorder %s21, 0
      %p230 = por %p228, %p229
      %s231 = ssub.s32 %s22, %s34
      %s232 = ssub.s32 %s23, %s30
      %s233 = sor.u32 %s231, %s232
      %p234 = scmp.eq.s32.totalorder %s233, 0
      %s236 = sadd.s32 %s235, 1
      %s237 = scalar_select %p234, %s235, %s236
      %p240 = pneg %p234
      %p241 = scmp.eq.s32.totalorder %s15, 3
      %p242 = por %p240, %p241
      %p243 = scmp.ne.s32.totalorder %s235, %s238
      %p244 = scmp.eq.s32.totalorder %s15, 0
      %p245 = por %p243, %p244
      %p246 = scmp.ne.s32.totalorder %s235, %s238
      %p247 = scmp.eq.s32.totalorder %s20, 3
      %p248 = por %p246, %p247
      %p249 = scmp.ne.s32.totalorder %s238, %s239
      %p250 = scmp.eq.s32.totalorder %s20, 0
      %p251 = por %p249, %p250
      %p252 = scmp.ne.s32.totalorder %s238, %s239
      %p253 = scmp.eq.s32.totalorder %s21, 3
      %p254 = por %p252, %p253
      %p256 = scmp.ne.s32.totalorder %s239, %s255
      %p257 = scmp.eq.s32.totalorder %s21, 0
      %p258 = por %p256, %p257
      %p259 = scmp.le.s32.totalorder 1, %s15
      %p260 = scmp.lt.s32.totalorder %s15, 5
      %p261 = pnand %p259, %p260
      %p262 = pneg %p261
      // Predicated region
      $region9: #{_lambda_.4} parent=5 // pred_check
        _
      $region10: #{_lambda_.4} parent=5 // pred_check_branch
        %264 = sbr.rel (%p261) target = $region12
      $region11: #{_lambda_.4} parent=5 // pred_region
        %s265 = ssub.s32 %s15, 1
        // Predicated region
        $region13: #{_lambda_.4} parent=11 // pred_check
          %p266 = pneg %p76
        $region14: #{_lambda_.4} parent=11 // pred_check_branch
          %268 = sbr.rel (%p266) target = $region16
        $region15: #{_lambda_.4} parent=11 // pred_region
          _
        $region16: #{_lambda_.4} parent=11 // pred_fallthru
          _
        // Predicated region
        $region17: #{_lambda_.4} parent=11 // pred_check
          %p269 = pneg %p97
        $region18: #{_lambda_.4} parent=11 // pred_check_branch
          %271 = sbr.rel (%p269) target = $region20
        $region19: #{_lambda_.4} parent=11 // pred_region
          _
        $region20: #{_lambda_.4} parent=11 // pred_fallthru
          _
        // Predicated region
        $region21: #{_lambda_.4} parent=11 // pred_check
          %p272 = pneg %p118
        $region22: #{_lambda_.4} parent=11 // pred_check_branch
          %274 = sbr.rel (%p272) target = $region24
        $region23: #{_lambda_.4} parent=11 // pred_region
          _
        $region24: #{_lambda_.4} parent=11 // pred_fallthru
          _
        // Predicated region
        $region25: #{_lambda_.4} parent=11 // pred_check
          %p275 = pneg %p139
        $region26: #{_lambda_.4} parent=11 // pred_check_branch
          %277 = sbr.rel (%p275) target = $region28
        $region27: #{_lambda_.4} parent=11 // pred_region
          _
        $region28: #{_lambda_.4} parent=11 // pred_fallthru
          _
        // Predicated region
        $region29: #{_lambda_.4} parent=11 // pred_check
          %p278 = pneg %p160
        $region30: #{_lambda_.4} parent=11 // pred_check_branch
          %280 = sbr.rel (%p278) target = $region32
        $region31: #{_lambda_.4} parent=11 // pred_region
          _
        $region32: #{_lambda_.4} parent=11 // pred_fallthru
          _
        // Predicated region
        $region33: #{_lambda_.4} parent=11 // pred_check
          %p281 = pneg %p181
        $region34: #{_lambda_.4} parent=11 // pred_check_branch
          %283 = sbr.rel (%p281) target = $region36
        $region35: #{_lambda_.4} parent=11 // pred_region
          _
        $region36: #{_lambda_.4} parent=11 // pred_fallthru
          _
        // Predicated region
        $region37: #{_lambda_.4} parent=11 // pred_check
          %p284 = pneg %p202
        $region38: #{_lambda_.4} parent=11 // pred_check_branch
          %286 = sbr.rel (%p284) target = $region40
        $region39: #{_lambda_.4} parent=11 // pred_region
          _
        $region40: #{_lambda_.4} parent=11 // pred_fallthru
          _
        // Predicated region
        $region41: #{_lambda_.4} parent=11 // pred_check
          %p287 = pneg %p223
        $region42: #{_lambda_.4} parent=11 // pred_check_branch
          %289 = sbr.rel (%p287) target = $region44
        $region43: #{_lambda_.4} parent=11 // pred_region
          _
        $region44: #{_lambda_.4} parent=11 // pred_fallthru
          _
      $region12: #{_lambda_.4} parent=5 // pred_fallthru
        _
      %p290 = scmp.lt.s32.totalorder %s15, 4
      // Predicated region
      $region45: #{_lambda_.4} parent=5 // pred_check
        %p291 = pneg %p290
      $region46: #{_lambda_.4} parent=5 // pred_check_branch
        %293 = sbr.rel (%p291) target = $region48
      $region47: #{_lambda_.4} parent=5 // pred_region
        // Predicated region
        $region49: #{_lambda_.4} parent=47 // pred_check
          %p294 = pneg %p49
        $region50: #{_lambda_.4} parent=47 // pred_check_branch
          %296 = sbr.rel (%p294) target = $region52
        $region51: #{_lambda_.4} parent=47 // pred_region
          %s297 = sand.u32 %s39, 1
          %s298 = sand.u32 %s39, 1
          %s299 = smul.addr %s298, 128
          %s300 = scalar_lea.vmem [#allocation2], %s299
          %s301 = smul.u32 8, %s22
          %s302 = smul.u32 2, %s23
          %s303 = ssub.s32 3, %s302
          %p304 = scmp.lt.s32.totalorder %s303, 2
          %s305 = scalar_select %p304, %s303, 2
          %s306 = smul.u32 64, %s305
          %p307 = scmp.ne.s32.totalorder 0, %s306
          %s308 = smul.addr %s301, 3
          %s309 = sadd.s32 %s302, %s308
          %s310 = smul.addr %s309, 8
          %s311 = scalar_lea.vmem %s0, %s310
          // Predicated region
          $region53: #{_lambda_.4} parent=51 // pred_check
            %p312 = pneg %p307
          $region54: #{_lambda_.4} parent=51 // pred_check_branch
            %314 = sbr.rel (%p312) target = $region56
          $region55: #{_lambda_.4} parent=51 // pred_region
            // Predicated region
            $region57: #{_lambda_.4} parent=55 // pred_check
              _
            $region58: #{_lambda_.4} parent=55 // pred_check_branch
              %316 = sbr.rel (0) target = $region60
            $region59: #{_lambda_.4} parent=55 // pred_region
              // Predicated region
              $region79: #{_lambda_.4} parent=59 // pred_check
                _
              $region80: #{_lambda_.4} parent=59 // pred_check_branch
                %410 = sbr.rel (0) target = $region82
              $region81: #{_lambda_.4} parent=59 // pred_region
                %s411 = sshrl.u32 %s305, 1
                // While loop
                $region83: #{_lambda_.4} parent=81 // loop_pre_header
                  _
                $region84: #{_lambda_.4} parent=81 // loop_header
                  %s413 = sphi 0, %s415
                  %p414 = scmp.ge.s32.totalorder %s413, %s411
                  %s418 = sphi 0, %s455
                  %s419 = sphi %s311, %s458
                  %s420 = sphi %s300, %s459
                $region85: #{_lambda_.4} parent=81 // loop_header_branch
                  %417 = sbr.rel (%p414) target = $region89
                $region86: #{_lambda_.4} parent=81 // loop_body
                  %v421 = vld [vmem:[%s419] sm:$0xff]
                  %422 = vst [vmem:[%s420] sm:$0xff] %v421
                  %v423 = vld [vmem:[%s419 + $0x8] sm:$0xff]
                  %424 = vst [vmem:[%s420 + $0x8] sm:$0xff] %v423
                  %v425 = vld [vmem:[%s419 + $0x18] sm:$0xff]
                  %426 = vst [vmem:[%s420 + $0x10] sm:$0xff] %v425
                  %v427 = vld [vmem:[%s419 + $0x20] sm:$0xff]
                  %428 = vst [vmem:[%s420 + $0x18] sm:$0xff] %v427
                  %v429 = vld [vmem:[%s419 + $0x30] sm:$0xff]
                  %430 = vst [vmem:[%s420 + $0x20] sm:$0xff] %v429
                  %v431 = vld [vmem:[%s419 + $0x38] sm:$0xff]
                  %432 = vst [vmem:[%s420 + $0x28] sm:$0xff] %v431
                  %v433 = vld [vmem:[%s419 + $0x48] sm:$0xff]
                  %434 = vst [vmem:[%s420 + $0x30] sm:$0xff] %v433
                  %v435 = vld [vmem:[%s419 + $0x50] sm:$0xff]
                  %436 = vst [vmem:[%s420 + $0x38] sm:$0xff] %v435
                  %v437 = vld [vmem:[%s419 + $0x60] sm:$0xff]
                  %438 = vst [vmem:[%s420 + $0x40] sm:$0xff] %v437
                  %v439 = vld [vmem:[%s419 + $0x68] sm:$0xff]
                  %440 = vst [vmem:[%s420 + $0x48] sm:$0xff] %v439
                  %v441 = vld [vmem:[%s419 + $0x78] sm:$0xff]
                  %442 = vst [vmem:[%s420 + $0x50] sm:$0xff] %v441
                  %v443 = vld [vmem:[%s419 + $0x80] sm:$0xff]
                  %444 = vst [vmem:[%s420 + $0x58] sm:$0xff] %v443
                  %v445 = vld [vmem:[%s419 + $0x90] sm:$0xff]
                  %446 = vst [vmem:[%s420 + $0x60] sm:$0xff] %v445
                  %v447 = vld [vmem:[%s419 + $0x98] sm:$0xff]
                  %448 = vst [vmem:[%s420 + $0x68] sm:$0xff] %v447
                  %v449 = vld [vmem:[%s419 + $0xa8] sm:$0xff]
                  %450 = vst [vmem:[%s420 + $0x70] sm:$0xff] %v449
                  %v451 = vld [vmem:[%s419 + $0xb0] sm:$0xff]
                  %452 = vst [vmem:[%s420 + $0x78] sm:$0xff] %v451
                  %s453 = sadd.s32 1, %s418
                  %p454 = scmp.ge.s32.totalorder %s453, %s411
                  %s455 = scalar_select %p454, 0, %s453
                  %s456 = smul.u32 %s455, 16
                  %s457 = smul.u32 %s455, 16
                  %s458 = scalar_lea.vmem %s311, %s456
                  %s459 = scalar_lea.vmem %s300, %s457 [#allocation2]
                $region87: #{_lambda_.4} parent=81 // loop_footer
                  %s415 = sadd.s32 %s413, 1
                $region88: #{_lambda_.4} parent=81 // loop_footer_branch
                  %412 = sbr.rel target = $region84
                $region89: #{_lambda_.4} parent=81 // loop_exit
                  _
                %s460 = sshrl.u32 %s305, 1
                %s461 = sand.u32 %s305, 1
                %s462 = smul.u32 %s460, 2
                %s463 = smul.u32 8, %s462
                %s464 = scalar_lea.vmem %s311, %s463
                %s465 = smul.u32 8, %s462
                %s466 = scalar_lea.vmem %s300, %s465 [#allocation2]
                // While loop
                $region90: #{_lambda_.4} parent=81 // loop_pre_header
                  _
                $region91: #{_lambda_.4} parent=81 // loop_header
                  %s468 = sphi 0, %s470
                  %p469 = scmp.ge.s32.totalorder %s468, %s461
                  %s473 = sphi 0, %s494
                  %s474 = sphi %s464, %s497
                  %s475 = sphi %s466, %s498
                $region92: #{_lambda_.4} parent=81 // loop_header_branch
                  %472 = sbr.rel (%p469) target = $region96
                $region93: #{_lambda_.4} parent=81 // loop_body
                  %v476 = vld [vmem:[%s474] sm:$0xff]
                  %477 = vst [vmem:[%s475] sm:$0xff] %v476
                  %v478 = vld [vmem:[%s474 + $0x18] sm:$0xff]
                  %479 = vst [vmem:[%s475 + $0x10] sm:$0xff] %v478
                  %v480 = vld [vmem:[%s474 + $0x30] sm:$0xff]
                  %481 = vst [vmem:[%s475 + $0x20] sm:$0xff] %v480
                  %v482 = vld [vmem:[%s474 + $0x48] sm:$0xff]
                  %483 = vst [vmem:[%s475 + $0x30] sm:$0xff] %v482
                  %v484 = vld [vmem:[%s474 + $0x60] sm:$0xff]
                  %485 = vst [vmem:[%s475 + $0x40] sm:$0xff] %v484
                  %v486 = vld [vmem:[%s474 + $0x78] sm:$0xff]
                  %487 = vst [vmem:[%s475 + $0x50] sm:$0xff] %v486
                  %v488 = vld [vmem:[%s474 + $0x90] sm:$0xff]
                  %489 = vst [vmem:[%s475 + $0x60] sm:$0xff] %v488
                  %v490 = vld [vmem:[%s474 + $0xa8] sm:$0xff]
                  %491 = vst [vmem:[%s475 + $0x70] sm:$0xff] %v490
                  %s492 = sadd.s32 1, %s473
                  %p493 = scmp.ge.s32.totalorder %s492, %s461
                  %s494 = scalar_select %p493, 0, %s492
                  %s495 = smul.u32 %s494, 8
                  %s496 = smul.u32 %s494, 8
                  %s497 = scalar_lea.vmem %s464, %s495
                  %s498 = scalar_lea.vmem %s466, %s496 [#allocation2]
                $region94: #{_lambda_.4} parent=81 // loop_footer
                  %s470 = sadd.s32 %s468, 1
                $region95: #{_lambda_.4} parent=81 // loop_footer_branch
                  %467 = sbr.rel target = $region91
                $region96: #{_lambda_.4} parent=81 // loop_exit
                  _
              $region82: #{_lambda_.4} parent=59 // pred_fallthru
                _
              // Predicated region
              $region97: #{_lambda_.4} parent=59 // pred_check
                _
              $region98: #{_lambda_.4} parent=59 // pred_check_branch
                %500 = sbr.rel target = $region100
              $region99: #{_lambda_.4} parent=59 // pred_region
                _
              $region100: #{_lambda_.4} parent=59 // pred_fallthru
                _
            $region60: #{_lambda_.4} parent=55 // pred_fallthru
              _
            // Predicated region
            $region61: #{_lambda_.4} parent=55 // pred_check
              _
            $region62: #{_lambda_.4} parent=55 // pred_check_branch
              %318 = sbr.rel target = $region64
            $region63: #{_lambda_.4} parent=55 // pred_region
              %s320 = ssub.s32 256, 1
              %s321 = sshrl.u32 %s305, 1
              // While loop
              $region65: #{_lambda_.4} parent=63 // loop_pre_header
                _
              $region66: #{_lambda_.4} parent=63 // loop_header
                %s323 = sphi 0, %s325
                %p324 = scmp.ge.s32.totalorder %s323, %s321
                %s328 = sphi 0, %s365
                %s329 = sphi %s311, %s368
                %s330 = sphi %s300, %s369
              $region67: #{_lambda_.4} parent=63 // loop_header_branch
                %327 = sbr.rel (%p324) target = $region71
              $region68: #{_lambda_.4} parent=63 // loop_body
                %v331 = vld [vmem:[%s329] sm:%s320]
                %332 = vst [vmem:[%s330] sm:%s320] %v331
                %v333 = vld [vmem:[%s329 + $0x8] sm:%s320]
                %334 = vst [vmem:[%s330 + $0x8] sm:%s320] %v333
                %v335 = vld [vmem:[%s329 + $0x18] sm:%s320]
                %336 = vst [vmem:[%s330 + $0x10] sm:%s320] %v335
                %v337 = vld [vmem:[%s329 + $0x20] sm:%s320]
                %338 = vst [vmem:[%s330 + $0x18] sm:%s320] %v337
                %v339 = vld [vmem:[%s329 + $0x30] sm:%s320]
                %340 = vst [vmem:[%s330 + $0x20] sm:%s320] %v339
                %v341 = vld [vmem:[%s329 + $0x38] sm:%s320]
                %342 = vst [vmem:[%s330 + $0x28] sm:%s320] %v341
                %v343 = vld [vmem:[%s329 + $0x48] sm:%s320]
                %344 = vst [vmem:[%s330 + $0x30] sm:%s320] %v343
                %v345 = vld [vmem:[%s329 + $0x50] sm:%s320]
                %346 = vst [vmem:[%s330 + $0x38] sm:%s320] %v345
                %v347 = vld [vmem:[%s329 + $0x60] sm:%s320]
                %348 = vst [vmem:[%s330 + $0x40] sm:%s320] %v347
                %v349 = vld [vmem:[%s329 + $0x68] sm:%s320]
                %350 = vst [vmem:[%s330 + $0x48] sm:%s320] %v349
                %v351 = vld [vmem:[%s329 + $0x78] sm:%s320]
                %352 = vst [vmem:[%s330 + $0x50] sm:%s320] %v351
                %v353 = vld [vmem:[%s329 + $0x80] sm:%s320]
                %354 = vst [vmem:[%s330 + $0x58] sm:%s320] %v353
                %v355 = vld [vmem:[%s329 + $0x90] sm:%s320]
                %356 = vst [vmem:[%s330 + $0x60] sm:%s320] %v355
                %v357 = vld [vmem:[%s329 + $0x98] sm:%s320]
                %358 = vst [vmem:[%s330 + $0x68] sm:%s320] %v357
                %v359 = vld [vmem:[%s329 + $0xa8] sm:%s320]
                %360 = vst [vmem:[%s330 + $0x70] sm:%s320] %v359
                %v361 = vld [vmem:[%s329 + $0xb0] sm:%s320]
                %362 = vst [vmem:[%s330 + $0x78] sm:%s320] %v361
                %s363 = sadd.s32 1, %s328
                %p364 = scmp.ge.s32.totalorder %s363, %s321
                %s365 = scalar_select %p364, 0, %s363
                %s366 = smul.u32 %s365, 16
                %s367 = smul.u32 %s365, 16
                %s368 = scalar_lea.vmem %s311, %s366
                %s369 = scalar_lea.vmem %s300, %s367 [#allocation2]
              $region69: #{_lambda_.4} parent=63 // loop_footer
                %s325 = sadd.s32 %s323, 1
              $region70: #{_lambda_.4} parent=63 // loop_footer_branch
                %322 = sbr.rel target = $region66
              $region71: #{_lambda_.4} parent=63 // loop_exit
                _
              %s370 = sshrl.u32 %s305, 1
              %s371 = sand.u32 %s305, 1
              %s372 = smul.u32 %s370, 2
              %s373 = smul.u32 8, %s372
              %s374 = scalar_lea.vmem %s311, %s373
              %s375 = smul.u32 8, %s372
              %s376 = scalar_lea.vmem %s300, %s375 [#allocation2]
              // While loop
              $region72: #{_lambda_.4} parent=63 // loop_pre_header
                _
              $region73: #{_lambda_.4} parent=63 // loop_header
                %s378 = sphi 0, %s380
                %p379 = scmp.ge.s32.totalorder %s378, %s371
                %s383 = sphi 0, %s404
                %s384 = sphi %s374, %s407
                %s385 = sphi %s376, %s408
              $region74: #{_lambda_.4} parent=63 // loop_header_branch
                %382 = sbr.rel (%p379) target = $region78
              $region75: #{_lambda_.4} parent=63 // loop_body
                %v386 = vld [vmem:[%s384] sm:%s320]
                %387 = vst [vmem:[%s385] sm:%s320] %v386
                %v388 = vld [vmem:[%s384 + $0x18] sm:%s320]
                %389 = vst [vmem:[%s385 + $0x10] sm:%s320] %v388
                %v390 = vld [vmem:[%s384 + $0x30] sm:%s320]
                %391 = vst [vmem:[%s385 + $0x20] sm:%s320] %v390
                %v392 = vld [vmem:[%s384 + $0x48] sm:%s320]
                %393 = vst [vmem:[%s385 + $0x30] sm:%s320] %v392
                %v394 = vld [vmem:[%s384 + $0x60] sm:%s320]
                %395 = vst [vmem:[%s385 + $0x40] sm:%s320] %v394
                %v396 = vld [vmem:[%s384 + $0x78] sm:%s320]
                %397 = vst [vmem:[%s385 + $0x50] sm:%s320] %v396
                %v398 = vld [vmem:[%s384 + $0x90] sm:%s320]
                %399 = vst [vmem:[%s385 + $0x60] sm:%s320] %v398
                %v400 = vld [vmem:[%s384 + $0xa8] sm:%s320]
                %401 = vst [vmem:[%s385 + $0x70] sm:%s320] %v400
                %s402 = sadd.s32 1, %s383
                %p403 = scmp.ge.s32.totalorder %s402, %s371
                %s404 = scalar_select %p403, 0, %s402
                %s405 = smul.u32 %s404, 8
                %s406 = smul.u32 %s404, 8
                %s407 = scalar_lea.vmem %s374, %s405
                %s408 = scalar_lea.vmem %s376, %s406 [#allocation2]
              $region76: #{_lambda_.4} parent=63 // loop_footer
                %s380 = sadd.s32 %s378, 1
              $region77: #{_lambda_.4} parent=63 // loop_footer_branch
                %377 = sbr.rel target = $region73
              $region78: #{_lambda_.4} parent=63 // loop_exit
                _
            $region64: #{_lambda_.4} parent=55 // pred_fallthru
              _
          $region56: #{_lambda_.4} parent=51 // pred_fallthru
            _
          %501 = vnop
        $region52: #{_lambda_.4} parent=47 // pred_fallthru
          _
      $region48: #{_lambda_.4} parent=5 // pred_fallthru
        _
      %p502 = scmp.le.s32.totalorder 1, %s15
      %p503 = scmp.lt.s32.totalorder %s15, 5
      %p504 = pnand %p502, %p503
      %p505 = pneg %p504
      // Predicated region
      $region101: #{_lambda_.4} parent=5 // pred_check
        _
      $region102: #{_lambda_.4} parent=5 // pred_check_branch
        %507 = sbr.rel (%p504) target = $region104
      $region103: #{_lambda_.4} parent=5 // pred_region
        %s508 = ssub.s32 %s15, 1
        %s509 = sand.u32 %s42, 1
        %s510 = sand.u32 %s42, 1
        %s511 = smul.addr %s510, 128
        %s512 = scalar_lea.vmem [#allocation2], %s511
        // Predicated region
        $region105: #{_lambda_.4} parent=103 // pred_check
          %p513 = pneg %p55
        $region106: #{_lambda_.4} parent=103 // pred_check_branch
          %515 = sbr.rel (%p513) target = $region108
        $region107: #{_lambda_.4} parent=103 // pred_region
          _
        $region108: #{_lambda_.4} parent=103 // pred_fallthru
          _
        %s516 = sand.u32 %s42, 1
        %s517 = sand.u32 %s42, 1
        %s518 = smul.addr %s517, 128
        %s519 = scalar_lea.vmem [#allocation2], %s518
        %p520 = pneg %p55
        %p521 = pneg %p52
        %p522 = pneg %p76
        %p523 = pneg %p73
        %p524 = pneg %p97
        %p525 = pneg %p94
        %p526 = pneg %p118
        %p527 = pneg %p115
        %p528 = pneg %p139
        %p529 = pneg %p136
        %p530 = pneg %p160
        %p531 = pneg %p157
        %p532 = pneg %p181
        %p533 = pneg %p178
        %p534 = pneg %p202
        %p535 = pneg %p199
        %p536 = pneg %p223
        %p537 = pneg %p220
        %p538 = pneg %p251
        %p539 = pneg %p248
        %s540 = sand.u32 %s238, 1
        %s541 = sand.u32 %s238, 1
        %s542 = smul.addr %s541, 128
        %s543 = scalar_lea.vmem [#allocation3], %s542
        %s544 = smul.u32 8, %s24
        %s545 = smul.u32 2, %s25
        %s546 = ssub.s32 3, %s545
        %p547 = scmp.lt.s32.totalorder %s546, 2
        %s548 = scalar_select %p547, %s546, 2
        %s549 = smul.u32 64, %s548
        %s550 = smul.u32 8, %s24
        %s551 = smul.u32 2, %s25
        %s552 = ssub.s32 3, %s551
        %p553 = scmp.lt.s32.totalorder %s552, 2
        %s554 = scalar_select %p553, %s552, 2
        %s555 = smul.u32 64, %s554
        %v557 = vld [vmem:[%s512] sm:$0xff]
        %v558 = vld [vmem:[%s512 + $0x8] sm:$0xff]
        %v559 = vld [vmem:[%s512 + $0x10] sm:$0xff]
        %v560 = vld [vmem:[%s512 + $0x18] sm:$0xff]
        %v561 = vld [vmem:[%s512 + $0x20] sm:$0xff]
        %v562 = vld [vmem:[%s512 + $0x28] sm:$0xff]
        %v563 = vld [vmem:[%s512 + $0x30] sm:$0xff]
        %v564 = vld [vmem:[%s512 + $0x38] sm:$0xff]
        %v565 = vld [vmem:[%s512 + $0x40] sm:$0xff]
        %v566 = vld [vmem:[%s512 + $0x48] sm:$0xff]
        %v567 = vld [vmem:[%s512 + $0x50] sm:$0xff]
        %v568 = vld [vmem:[%s512 + $0x58] sm:$0xff]
        %v569 = vld [vmem:[%s512 + $0x60] sm:$0xff]
        %v570 = vld [vmem:[%s512 + $0x68] sm:$0xff]
        %v571 = vld [vmem:[%s512 + $0x70] sm:$0xff]
        %v572 = vld [vmem:[%s512 + $0x78] sm:$0xff]
        %v573 = vld [vmem:[%s1] sm:$0x1]
        %v574 = vld [vmem:[%s2] sm:$0x1]
        %vm575 = vcmask 523264
        %v576 = vsel %vm575, %v557, 0.0
        %577 = vadd.xlane.f32.xlu0 %v576
        %v578 = vpop.xlane.xlu0 %577
        %v579 = vsel %vm575, %v558, 0.0
        %580 = vadd.xlane.f32.xlu0 %v579
        %v581 = vpop.xlane.xlu0 %580
        %v582 = vsel %vm575, %v559, 0.0
        %583 = vadd.xlane.f32.xlu0 %v582
        %v584 = vpop.xlane.xlu0 %583
        %v585 = vsel %vm575, %v560, 0.0
        %586 = vadd.xlane.f32.xlu0 %v585
        %v587 = vpop.xlane.xlu0 %586
        %v588 = vsel %vm575, %v561, 0.0
        %589 = vadd.xlane.f32.xlu0 %v588
        %v590 = vpop.xlane.xlu0 %589
        %v591 = vsel %vm575, %v562, 0.0
        %592 = vadd.xlane.f32.xlu0 %v591
        %v593 = vpop.xlane.xlu0 %592
        %v594 = vsel %vm575, %v563, 0.0
        %595 = vadd.xlane.f32.xlu0 %v594
        %v596 = vpop.xlane.xlu0 %595
        %v597 = vsel %vm575, %v564, 0.0
        %598 = vadd.xlane.f32.xlu0 %v597
        %v599 = vpop.xlane.xlu0 %598
        %v600 = vsel %vm575, %v565, 0.0
        %601 = vadd.xlane.f32.xlu0 %v600
        %v602 = vpop.xlane.xlu0 %601
        %v603 = vsel %vm575, %v566, 0.0
        %604 = vadd.xlane.f32.xlu0 %v603
        %v605 = vpop.xlane.xlu0 %604
        %v606 = vsel %vm575, %v567, 0.0
        %607 = vadd.xlane.f32.xlu0 %v606
        %v608 = vpop.xlane.xlu0 %607
        %v609 = vsel %vm575, %v568, 0.0
        %610 = vadd.xlane.f32.xlu0 %v609
        %v611 = vpop.xlane.xlu0 %610
        %v612 = vsel %vm575, %v569, 0.0
        %613 = vadd.xlane.f32.xlu0 %v612
        %v614 = vpop.xlane.xlu0 %613
        %v615 = vsel %vm575, %v570, 0.0
        %616 = vadd.xlane.f32.xlu0 %v615
        %v617 = vpop.xlane.xlu0 %616
        %v618 = vsel %vm575, %v571, 0.0
        %619 = vadd.xlane.f32.xlu0 %v618
        %v620 = vpop.xlane.xlu0 %619
        %v621 = vsel %vm575, %v572, 0.0
        %622 = vadd.xlane.f32.xlu0 %v621
        %v623 = vpop.xlane.xlu0 %622
        %v624 = vrcp.pop 64.0
        %v625 = vmul.f32 64.0, %v624
        %v626 = vsub.f32 1.0, %v625
        %v627 = vmul.f32 %v624, %v626
        %v628 = vadd.f32 %v624, %v627
        %vm629 = vweird.f32 %v624
        %v630 = vsel %vm629, %v624, %v628
        %v631 = vmul.f32 %v578, %v630
        %v632 = vmul.f32 %v581, %v630
        %v633 = vmul.f32 %v584, %v630
        %v634 = vmul.f32 %v587, %v630
        %v635 = vmul.f32 %v590, %v630
        %v636 = vmul.f32 %v593, %v630
        %v637 = vmul.f32 %v596, %v630
        %v638 = vmul.f32 %v599, %v630
        %v639 = vmul.f32 %v602, %v630
        %v640 = vmul.f32 %v605, %v630
        %v641 = vmul.f32 %v608, %v630
        %v642 = vmul.f32 %v611, %v630
        %v643 = vmul.f32 %v614, %v630
        %v644 = vmul.f32 %v617, %v630
        %v645 = vmul.f32 %v620, %v630
        %v646 = vmul.f32 %v623, %v630
        %v647 = vsub.f32 %v557, %v631
        %v648 = vsub.f32 %v558, %v632
        %v649 = vsub.f32 %v559, %v633
        %v650 = vsub.f32 %v560, %v634
        %v651 = vsub.f32 %v561, %v635
        %v652 = vsub.f32 %v562, %v636
        %v653 = vsub.f32 %v563, %v637
        %v654 = vsub.f32 %v564, %v638
        %v655 = vsub.f32 %v565, %v639
        %v656 = vsub.f32 %v566, %v640
        %v657 = vsub.f32 %v567, %v641
        %v658 = vsub.f32 %v568, %v642
        %v659 = vsub.f32 %v569, %v643
        %v660 = vsub.f32 %v570, %v644
        %v661 = vsub.f32 %v571, %v645
        %v662 = vsub.f32 %v572, %v646
        %v663 = vmul.f32 %v647, %v647
        %v664 = vmul.f32 %v648, %v648
        %v665 = vmul.f32 %v649, %v649
        %v666 = vmul.f32 %v650, %v650
        %v667 = vmul.f32 %v651, %v651
        %v668 = vmul.f32 %v652, %v652
        %v669 = vmul.f32 %v653, %v653
        %v670 = vmul.f32 %v654, %v654
        %v671 = vmul.f32 %v655, %v655
        %v672 = vmul.f32 %v656, %v656
        %v673 = vmul.f32 %v657, %v657
        %v674 = vmul.f32 %v658, %v658
        %v675 = vmul.f32 %v659, %v659
        %v676 = vmul.f32 %v660, %v660
        %v677 = vmul.f32 %v661, %v661
        %v678 = vmul.f32 %v662, %v662
        %v679 = vsel %vm575, %v663, 0.0
        %680 = vadd.xlane.f32.xlu0 %v679
        %v681 = vpop.xlane.xlu0 %680
        %v682 = vsel %vm575, %v664, 0.0
        %683 = vadd.xlane.f32.xlu0 %v682
        %v684 = vpop.xlane.xlu0 %683
        %v685 = vsel %vm575, %v665, 0.0
        %686 = vadd.xlane.f32.xlu0 %v685
        %v687 = vpop.xlane.xlu0 %686
        %v688 = vsel %vm575, %v666, 0.0
        %689 = vadd.xlane.f32.xlu0 %v688
        %v690 = vpop.xlane.xlu0 %689
        %v691 = vsel %vm575, %v667, 0.0
        %692 = vadd.xlane.f32.xlu0 %v691
        %v693 = vpop.xlane.xlu0 %692
        %v694 = vsel %vm575, %v668, 0.0
        %695 = vadd.xlane.f32.xlu0 %v694
        %v696 = vpop.xlane.xlu0 %695
        %v697 = vsel %vm575, %v669, 0.0
        %698 = vadd.xlane.f32.xlu0 %v697
        %v699 = vpop.xlane.xlu0 %698
        %v700 = vsel %vm575, %v670, 0.0
        %701 = vadd.xlane.f32.xlu0 %v700
        %v702 = vpop.xlane.xlu0 %701
        %v703 = vsel %vm575, %v671, 0.0
        %704 = vadd.xlane.f32.xlu0 %v703
        %v705 = vpop.xlane.xlu0 %704
        %v706 = vsel %vm575, %v672, 0.0
        %707 = vadd.xlane.f32.xlu0 %v706
        %v708 = vpop.xlane.xlu0 %707
        %v709 = vsel %vm575, %v673, 0.0
        %710 = vadd.xlane.f32.xlu0 %v709
        %v711 = vpop.xlane.xlu0 %710
        %v712 = vsel %vm575, %v674, 0.0
        %713 = vadd.xlane.f32.xlu0 %v712
        %v714 = vpop.xlane.xlu0 %713
        %v715 = vsel %vm575, %v675, 0.0
        %716 = vadd.xlane.f32.xlu0 %v715
        %v717 = vpop.xlane.xlu0 %716
        %v718 = vsel %vm575, %v676, 0.0
        %719 = vadd.xlane.f32.xlu0 %v718
        %v720 = vpop.xlane.xlu0 %719
        %v721 = vsel %vm575, %v677, 0.0
        %722 = vadd.xlane.f32.xlu0 %v721
        %v723 = vpop.xlane.xlu0 %722
        %v724 = vsel %vm575, %v678, 0.0
        %725 = vadd.xlane.f32.xlu0 %v724
        %v726 = vpop.xlane.xlu0 %725
        %v727 = vmul.f32 %v681, %v630
        %v728 = vmul.f32 %v684, %v630
        %v729 = vmul.f32 %v687, %v630
        %v730 = vmul.f32 %v690, %v630
        %v731 = vmul.f32 %v693, %v630
        %v732 = vmul.f32 %v696, %v630
        %v733 = vmul.f32 %v699, %v630
        %v734 = vmul.f32 %v702, %v630
        %v735 = vmul.f32 %v705, %v630
        %v736 = vmul.f32 %v708, %v630
        %v737 = vmul.f32 %v711, %v630
        %v738 = vmul.f32 %v714, %v630
        %v739 = vmul.f32 %v717, %v630
        %v740 = vmul.f32 %v720, %v630
        %v741 = vmul.f32 %v723, %v630
        %v742 = vmul.f32 %v726, %v630
        %v743 = vadd.f32 %v727, 1e-05
        %v744 = vadd.f32 %v728, 1e-05
        %v745 = vadd.f32 %v729, 1e-05
        %v746 = vadd.f32 %v730, 1e-05
        %v747 = vadd.f32 %v731, 1e-05
        %v748 = vadd.f32 %v732, 1e-05
        %v749 = vadd.f32 %v733, 1e-05
        %v750 = vadd.f32 %v734, 1e-05
        %v751 = vadd.f32 %v735, 1e-05
        %v752 = vadd.f32 %v736, 1e-05
        %v753 = vadd.f32 %v737, 1e-05
        %v754 = vadd.f32 %v738, 1e-05
        %v755 = vadd.f32 %v739, 1e-05
        %v756 = vadd.f32 %v740, 1e-05
        %v757 = vadd.f32 %v741, 1e-05
        %v758 = vadd.f32 %v742, 1e-05
        %v759 = vrsqrt.pop %v743
        %v760 = vmul.f32 %v759, %v743
        %v761 = vmul.f32 %v760, %v759
        %v762 = vmul.f32 0.5, %v761
        %v763 = vsub.f32 1.5, %v762
        %v764 = vmul.f32 %v759, %v763
        %vm765 = vweird.f32 %v743
        %vm766 = vweird.f32 %v759
        %vm767 = vmor %vm765, %vm766
        %v768 = vsel %vm767, %v759, %v764
        %v769 = vrsqrt.pop %v744
        %v770 = vmul.f32 %v769, %v744
        %v771 = vmul.f32 %v770, %v769
        %v772 = vmul.f32 0.5, %v771
        %v773 = vsub.f32 1.5, %v772
        %v774 = vmul.f32 %v769, %v773
        %vm775 = vweird.f32 %v744
        %vm776 = vweird.f32 %v769
        %vm777 = vmor %vm775, %vm776
        %v778 = vsel %vm777, %v769, %v774
        %v779 = vrsqrt.pop %v745
        %v780 = vmul.f32 %v779, %v745
        %v781 = vmul.f32 %v780, %v779
        %v782 = vmul.f32 0.5, %v781
        %v783 = vsub.f32 1.5, %v782
        %v784 = vmul.f32 %v779, %v783
        %vm785 = vweird.f32 %v745
        %vm786 = vweird.f32 %v779
        %vm787 = vmor %vm785, %vm786
        %v788 = vsel %vm787, %v779, %v784
        %v789 = vrsqrt.pop %v746
        %v790 = vmul.f32 %v789, %v746
        %v791 = vmul.f32 %v790, %v789
        %v792 = vmul.f32 0.5, %v791
        %v793 = vsub.f32 1.5, %v792
        %v794 = vmul.f32 %v789, %v793
        %vm795 = vweird.f32 %v746
        %vm796 = vweird.f32 %v789
        %vm797 = vmor %vm795, %vm796
        %v798 = vsel %vm797, %v789, %v794
        %v799 = vrsqrt.pop %v747
        %v800 = vmul.f32 %v799, %v747
        %v801 = vmul.f32 %v800, %v799
        %v802 = vmul.f32 0.5, %v801
        %v803 = vsub.f32 1.5, %v802
        %v804 = vmul.f32 %v799, %v803
        %vm805 = vweird.f32 %v747
        %vm806 = vweird.f32 %v799
        %vm807 = vmor %vm805, %vm806
        %v808 = vsel %vm807, %v799, %v804
        %v809 = vrsqrt.pop %v748
        %v810 = vmul.f32 %v809, %v748
        %v811 = vmul.f32 %v810, %v809
        %v812 = vmul.f32 0.5, %v811
        %v813 = vsub.f32 1.5, %v812
        %v814 = vmul.f32 %v809, %v813
        %vm815 = vweird.f32 %v748
        %vm816 = vweird.f32 %v809
        %vm817 = vmor %vm815, %vm816
        %v818 = vsel %vm817, %v809, %v814
        %v819 = vrsqrt.pop %v749
        %v820 = vmul.f32 %v819, %v749
        %v821 = vmul.f32 %v820, %v819
        %v822 = vmul.f32 0.5, %v821
        %v823 = vsub.f32 1.5, %v822
        %v824 = vmul.f32 %v819, %v823
        %vm825 = vweird.f32 %v749
        %vm826 = vweird.f32 %v819
        %vm827 = vmor %vm825, %vm826
        %v828 = vsel %vm827, %v819, %v824
        %v829 = vrsqrt.pop %v750
        %v830 = vmul.f32 %v829, %v750
        %v831 = vmul.f32 %v830, %v829
        %v832 = vmul.f32 0.5, %v831
        %v833 = vsub.f32 1.5, %v832
        %v834 = vmul.f32 %v829, %v833
        %vm835 = vweird.f32 %v750
        %vm836 = vweird.f32 %v829
        %vm837 = vmor %vm835, %vm836
        %v838 = vsel %vm837, %v829, %v834
        %v839 = vrsqrt.pop %v751
        %v840 = vmul.f32 %v839, %v751
        %v841 = vmul.f32 %v840, %v839
        %v842 = vmul.f32 0.5, %v841
        %v843 = vsub.f32 1.5, %v842
        %v844 = vmul.f32 %v839, %v843
        %vm845 = vweird.f32 %v751
        %vm846 = vweird.f32 %v839
        %vm847 = vmor %vm845, %vm846
        %v848 = vsel %vm847, %v839, %v844
        %v849 = vrsqrt.pop %v752
        %v850 = vmul.f32 %v849, %v752
        %v851 = vmul.f32 %v850, %v849
        %v852 = vmul.f32 0.5, %v851
        %v853 = vsub.f32 1.5, %v852
        %v854 = vmul.f32 %v849, %v853
        %vm855 = vweird.f32 %v752
        %vm856 = vweird.f32 %v849
        %vm857 = vmor %vm855, %vm856
        %v858 = vsel %vm857, %v849, %v854
        %v859 = vrsqrt.pop %v753
        %v860 = vmul.f32 %v859, %v753
        %v861 = vmul.f32 %v860, %v859
        %v862 = vmul.f32 0.5, %v861
        %v863 = vsub.f32 1.5, %v862
        %v864 = vmul.f32 %v859, %v863
        %vm865 = vweird.f32 %v753
        %vm866 = vweird.f32 %v859
        %vm867 = vmor %vm865, %vm866
        %v868 = vsel %vm867, %v859, %v864
        %v869 = vrsqrt.pop %v754
        %v870 = vmul.f32 %v869, %v754
        %v871 = vmul.f32 %v870, %v869
        %v872 = vmul.f32 0.5, %v871
        %v873 = vsub.f32 1.5, %v872
        %v874 = vmul.f32 %v869, %v873
        %vm875 = vweird.f32 %v754
        %vm876 = vweird.f32 %v869
        %vm877 = vmor %vm875, %vm876
        %v878 = vsel %vm877, %v869, %v874
        %v879 = vrsqrt.pop %v755
        %v880 = vmul.f32 %v879, %v755
        %v881 = vmul.f32 %v880, %v879
        %v882 = vmul.f32 0.5, %v881
        %v883 = vsub.f32 1.5, %v882
        %v884 = vmul.f32 %v879, %v883
        %vm885 = vweird.f32 %v755
        %vm886 = vweird.f32 %v879
        %vm887 = vmor %vm885, %vm886
        %v888 = vsel %vm887, %v879, %v884
        %v889 = vrsqrt.pop %v756
        %v890 = vmul.f32 %v889, %v756
        %v891 = vmul.f32 %v890, %v889
        %v892 = vmul.f32 0.5, %v891
        %v893 = vsub.f32 1.5, %v892
        %v894 = vmul.f32 %v889, %v893
        %vm895 = vweird.f32 %v756
        %vm896 = vweird.f32 %v889
        %vm897 = vmor %vm895, %vm896
        %v898 = vsel %vm897, %v889, %v894
        %v899 = vrsqrt.pop %v757
        %v900 = vmul.f32 %v899, %v757
        %v901 = vmul.f32 %v900, %v899
        %v902 = vmul.f32 0.5, %v901
        %v903 = vsub.f32 1.5, %v902
        %v904 = vmul.f32 %v899, %v903
        %vm905 = vweird.f32 %v757
        %vm906 = vweird.f32 %v899
        %vm907 = vmor %vm905, %vm906
        %v908 = vsel %vm907, %v899, %v904
        %v909 = vrsqrt.pop %v758
        %v910 = vmul.f32 %v909, %v758
        %v911 = vmul.f32 %v910, %v909
        %v912 = vmul.f32 0.5, %v911
        %v913 = vsub.f32 1.5, %v912
        %v914 = vmul.f32 %v909, %v913
        %vm915 = vweird.f32 %v758
        %vm916 = vweird.f32 %v909
        %vm917 = vmor %vm915, %vm916
        %v918 = vsel %vm917, %v909, %v914
        %v919 = vmul.f32 %v647, %v768
        %v920 = vmul.f32 %v648, %v778
        %v921 = vmul.f32 %v649, %v788
        %v922 = vmul.f32 %v650, %v798
        %v923 = vmul.f32 %v651, %v808
        %v924 = vmul.f32 %v652, %v818
        %v925 = vmul.f32 %v653, %v828
        %v926 = vmul.f32 %v654, %v838
        %v927 = vmul.f32 %v655, %v848
        %v928 = vmul.f32 %v656, %v858
        %v929 = vmul.f32 %v657, %v868
        %v930 = vmul.f32 %v658, %v878
        %v931 = vmul.f32 %v659, %v888
        %v932 = vmul.f32 %v660, %v898
        %v933 = vmul.f32 %v661, %v908
        %v934 = vmul.f32 %v662, %v918
        %v936 = vperm.slane %v573, 0
        %v938 = vmul.f32 %v919, %v936
        %v939 = vmul.f32 %v920, %v936
        %v940 = vmul.f32 %v921, %v936
        %v941 = vmul.f32 %v922, %v936
        %v942 = vmul.f32 %v923, %v936
        %v943 = vmul.f32 %v924, %v936
        %v944 = vmul.f32 %v925, %v936
        %v945 = vmul.f32 %v926, %v936
        %v946 = vmul.f32 %v927, %v936
        %v947 = vmul.f32 %v928, %v936
        %v948 = vmul.f32 %v929, %v936
        %v949 = vmul.f32 %v930, %v936
        %v950 = vmul.f32 %v931, %v936
        %v951 = vmul.f32 %v932, %v936
        %v952 = vmul.f32 %v933, %v936
        %v953 = vmul.f32 %v934, %v936
        %v955 = vperm.slane %v574, 0
        %v957 = vadd.f32 %v938, %v955
        %v958 = vadd.f32 %v939, %v955
        %v959 = vadd.f32 %v940, %v955
        %v960 = vadd.f32 %v941, %v955
        %v961 = vadd.f32 %v942, %v955
        %v962 = vadd.f32 %v943, %v955
        %v963 = vadd.f32 %v944, %v955
        %v964 = vadd.f32 %v945, %v955
        %v965 = vadd.f32 %v946, %v955
        %v966 = vadd.f32 %v947, %v955
        %v967 = vadd.f32 %v948, %v955
        %v968 = vadd.f32 %v949, %v955
        %v969 = vadd.f32 %v950, %v955
        %v970 = vadd.f32 %v951, %v955
        %v971 = vadd.f32 %v952, %v955
        %v972 = vadd.f32 %v953, %v955
        %v973 = vpack.c.bf16 %v958, %v957
        %v974 = vpack.c.bf16 %v960, %v959
        %v975 = vpack.c.bf16 %v962, %v961
        %v976 = vpack.c.bf16 %v964, %v963
        %v977 = vpack.c.bf16 %v966, %v965
        %v978 = vpack.c.bf16 %v968, %v967
        %v979 = vpack.c.bf16 %v970, %v969
        %v980 = vpack.c.bf16 %v972, %v971
        %v981 = vld [vmem:[%s3] sm:$0xf]
        %v982 = vld [vmem:[%s3 + $0x4] sm:$0xf]
        %v983 = vld [vmem:[%s3 + $0x8] sm:$0xf]
        %v984 = vld [vmem:[%s3 + $0xc] sm:$0xf]
        %v985 = vld [vmem:[%s3 + $0x10] sm:$0xf]
        %v986 = vld [vmem:[%s3 + $0x14] sm:$0xf]
        %v987 = vld [vmem:[%s3 + $0x18] sm:$0xf]
        %v988 = vld [vmem:[%s3 + $0x1c] sm:$0xf]
        %v989 = vld [vmem:[%s4] sm:$0x1]
        %v991 = vperm.slane %v989, 0
        %v1001 = vunpack.c.l.b16 %v981
        %v1002 = vunpack.c.l.b16 %v982
        %v1003 = vunpack.c.l.b16 %v983
        %v1004 = vunpack.c.l.b16 %v984
        %v1005 = vunpack.c.l.b16 %v985
        %v1006 = vunpack.c.l.b16 %v986
        %v1007 = vunpack.c.l.b16 %v987
        %v1008 = vunpack.c.l.b16 %v988
        %v1009 = vpack.c.b16 %v1002, %v1001
        %v1010 = vpack.c.b16 %v1004, %v1003
        %v1011 = vpack.c.b16 %v1006, %v1005
        %v1012 = vpack.c.b16 %v1008, %v1007
        %v1018 = vsel %vm575, %v973, 0
        %v1021 = vsel %vm575, %v974, 0
        %v1024 = vsel %vm575, %v975, 0
        %v1027 = vsel %vm575, %v976, 0
        %v1030 = vsel %vm575, %v977, 0
        %v1033 = vsel %vm575, %v978, 0
        %v1036 = vsel %vm575, %v979, 0
        %v1039 = vsel %vm575, %v980, 0
        %1041 = vmatpush.bf16.msra.mxu0 0
        %1042 = vmatpush.bf16.msra.mxu0 0
        %1043 = vmatpush.bf16.msra.mxu0 0
        %1044 = vmatpush.bf16.msra.mxu0 0
        %1045 = vmatpush.bf16.msra.mxu0 %v1012
        %1046 = vmatpush.bf16.msra.mxu0 %v1011
        %1047 = vmatpush.bf16.msra.mxu0 %v1010
        %1048 = vmatpush.bf16.msra.mxu0 %v1009
        %1049 = vmatmul.bf16.gmra.mxu0 %v1018
        %v1050 = vpop.f32.mrf.mxu0
        %v1051 = vadd.f32 %v991, %v1050
        %v1052 = vpop.f32.mrf.mxu0
        %v1053 = vadd.f32 %v991, %v1052
        %1054 = vmatmul.bf16.gmra.mxu0 %v1021
        %v1055 = vpop.f32.mrf.mxu0
        %v1056 = vadd.f32 %v991, %v1055
        %v1057 = vpop.f32.mrf.mxu0
        %v1058 = vadd.f32 %v991, %v1057
        %1059 = vmatmul.bf16.gmra.mxu0 %v1024
        %v1060 = vpop.f32.mrf.mxu0
        %v1061 = vadd.f32 %v991, %v1060
        %v1062 = vpop.f32.mrf.mxu0
        %v1063 = vadd.f32 %v991, %v1062
        %1064 = vmatmul.bf16.gmra.mxu0 %v1027
        %v1065 = vpop.f32.mrf.mxu0
        %v1066 = vadd.f32 %v991, %v1065
        %v1067 = vpop.f32.mrf.mxu0
        %v1068 = vadd.f32 %v991, %v1067
        %1069 = vmatmul.bf16.gmra.mxu0 %v1030
        %v1070 = vpop.f32.mrf.mxu0
        %v1071 = vadd.f32 %v991, %v1070
        %v1072 = vpop.f32.mrf.mxu0
        %v1073 = vadd.f32 %v991, %v1072
        %1074 = vmatmul.bf16.gmra.mxu0 %v1033
        %v1075 = vpop.f32.mrf.mxu0
        %v1076 = vadd.f32 %v991, %v1075
        %v1077 = vpop.f32.mrf.mxu0
        %v1078 = vadd.f32 %v991, %v1077
        %1079 = vmatmul.bf16.gmra.mxu0 %v1036
        %v1080 = vpop.f32.mrf.mxu0
        %v1081 = vadd.f32 %v991, %v1080
        %v1082 = vpop.f32.mrf.mxu0
        %v1083 = vadd.f32 %v991, %v1082
        %1084 = vmatmul.bf16.gmra.mxu0 %v1039
        %v1085 = vpop.f32.mrf.mxu0
        %v1086 = vadd.f32 %v991, %v1085
        %v1087 = vpop.f32.mrf.mxu0
        %v1088 = vadd.f32 %v991, %v1087
        %1089 = vdwg.mxu0
        %v1090 = vld [vmem:[%s5] sm:$0x7]
        %v1091 = vperm.slane %v1090, 0
        %v1092 = vmul.f32 %v1091, 0.0
        %v1093 = vmul.f32 %v1051, %v1091
        %v1094 = vmul.f32 %v1053, %v1091
        %v1095 = vmul.f32 %v1056, %v1091
        %v1096 = vmul.f32 %v1058, %v1091
        %v1097 = vmul.f32 %v1061, %v1091
        %v1098 = vmul.f32 %v1063, %v1091
        %v1099 = vmul.f32 %v1066, %v1091
        %v1100 = vmul.f32 %v1068, %v1091
        %v1101 = vmul.f32 %v1071, %v1091
        %v1102 = vmul.f32 %v1073, %v1091
        %v1103 = vmul.f32 %v1076, %v1091
        %v1104 = vmul.f32 %v1078, %v1091
        %v1105 = vmul.f32 %v1081, %v1091
        %v1106 = vmul.f32 %v1083, %v1091
        %v1107 = vperm.slane %v1090, 1
        %v1108 = vmul.f32 %v1051, %v1107
        %v1109 = vmul.f32 %v1053, %v1107
        %v1110 = vmul.f32 %v1056, %v1107
        %v1111 = vmul.f32 %v1058, %v1107
        %v1112 = vmul.f32 %v1061, %v1107
        %v1113 = vmul.f32 %v1063, %v1107
        %v1114 = vmul.f32 %v1066, %v1107
        %v1115 = vmul.f32 %v1068, %v1107
        %v1116 = vmul.f32 %v1071, %v1107
        %v1117 = vmul.f32 %v1073, %v1107
        %v1118 = vmul.f32 %v1076, %v1107
        %v1119 = vmul.f32 %v1078, %v1107
        %v1120 = vmul.f32 %v1081, %v1107
        %v1121 = vmul.f32 %v1083, %v1107
        %v1122 = vmul.f32 %v1086, %v1107
        %v1123 = vmul.f32 %v1088, %v1107
        %v1124 = vadd.f32 %v1092, %v1108
        %v1125 = vadd.f32 %v1092, %v1109
        %v1126 = vadd.f32 %v1093, %v1110
        %v1127 = vadd.f32 %v1094, %v1111
        %v1128 = vadd.f32 %v1095, %v1112
        %v1129 = vadd.f32 %v1096, %v1113
        %v1130 = vadd.f32 %v1097, %v1114
        %v1131 = vadd.f32 %v1098, %v1115
        %v1132 = vadd.f32 %v1099, %v1116
        %v1133 = vadd.f32 %v1100, %v1117
        %v1134 = vadd.f32 %v1101, %v1118
        %v1135 = vadd.f32 %v1102, %v1119
        %v1136 = vadd.f32 %v1103, %v1120
        %v1137 = vadd.f32 %v1104, %v1121
        %v1138 = vadd.f32 %v1105, %v1122
        %v1139 = vadd.f32 %v1106, %v1123
        %v1140 = vperm.slane %v1090, 2
        %v1141 = vmul.f32 %v1056, %v1140
        %v1142 = vmul.f32 %v1058, %v1140
        %v1143 = vmul.f32 %v1061, %v1140
        %v1144 = vmul.f32 %v1063, %v1140
        %v1145 = vmul.f32 %v1066, %v1140
        %v1146 = vmul.f32 %v1068, %v1140
        %v1147 = vmul.f32 %v1071, %v1140
        %v1148 = vmul.f32 %v1073, %v1140
        %v1149 = vmul.f32 %v1076, %v1140
        %v1150 = vmul.f32 %v1078, %v1140
        %v1151 = vmul.f32 %v1081, %v1140
        %v1152 = vmul.f32 %v1083, %v1140
        %v1153 = vmul.f32 %v1086, %v1140
        %v1154 = vmul.f32 %v1088, %v1140
        %v1155 = vmul.f32 %v1140, 0.0
        %v1156 = vadd.f32 %v1124, %v1141
        %v1157 = vadd.f32 %v1125, %v1142
        %v1158 = vadd.f32 %v1126, %v1143
        %v1159 = vadd.f32 %v1127, %v1144
        %v1160 = vadd.f32 %v1128, %v1145
        %v1161 = vadd.f32 %v1129, %v1146
        %v1162 = vadd.f32 %v1130, %v1147
        %v1163 = vadd.f32 %v1131, %v1148
        %v1164 = vadd.f32 %v1132, %v1149
        %v1165 = vadd.f32 %v1133, %v1150
        %v1166 = vadd.f32 %v1134, %v1151
        %v1167 = vadd.f32 %v1135, %v1152
        %v1168 = vadd.f32 %v1136, %v1153
        %v1169 = vadd.f32 %v1137, %v1154
        %v1170 = vadd.f32 %v1138, %v1155
        %v1171 = vadd.f32 %v1139, %v1155
        %v1172 = vld [vmem:[%s6] sm:$0x1]
        %v1174 = vperm.slane %v1172, 0
        %v1176 = vadd.f32 %v1156, %v1174
        %v1177 = vadd.f32 %v1157, %v1174
        %v1178 = vadd.f32 %v1158, %v1174
        %v1179 = vadd.f32 %v1159, %v1174
        %v1180 = vadd.f32 %v1160, %v1174
        %v1181 = vadd.f32 %v1161, %v1174
        %v1182 = vadd.f32 %v1162, %v1174
        %v1183 = vadd.f32 %v1163, %v1174
        %v1184 = vadd.f32 %v1164, %v1174
        %v1185 = vadd.f32 %v1165, %v1174
        %v1186 = vadd.f32 %v1166, %v1174
        %v1187 = vadd.f32 %v1167, %v1174
        %v1188 = vadd.f32 %v1168, %v1174
        %v1189 = vadd.f32 %v1169, %v1174
        %v1190 = vadd.f32 %v1170, %v1174
        %v1191 = vadd.f32 %v1171, %v1174
        %v1192 = vmul.f32 %v1176, 1.702
        %v1193 = vmul.f32 %v1177, 1.702
        %v1194 = vmul.f32 %v1178, 1.702
        %v1195 = vmul.f32 %v1179, 1.702
        %v1196 = vmul.f32 %v1180, 1.702
        %v1197 = vmul.f32 %v1181, 1.702
        %v1198 = vmul.f32 %v1182, 1.702
        %v1199 = vmul.f32 %v1183, 1.702
        %v1200 = vmul.f32 %v1184, 1.702
        %v1201 = vmul.f32 %v1185, 1.702
        %v1202 = vmul.f32 %v1186, 1.702
        %v1203 = vmul.f32 %v1187, 1.702
        %v1204 = vmul.f32 %v1188, 1.702
        %v1205 = vmul.f32 %v1189, 1.702
        %v1206 = vmul.f32 %v1190, 1.702
        %v1207 = vmul.f32 %v1191, 1.702
        %v1208 = vxor.u32 %v1192, 2147483648
        %v1209 = vxor.u32 %v1193, 2147483648
        %v1210 = vxor.u32 %v1194, 2147483648
        %v1211 = vxor.u32 %v1195, 2147483648
        %v1212 = vxor.u32 %v1196, 2147483648
        %v1213 = vxor.u32 %v1197, 2147483648
        %v1214 = vxor.u32 %v1198, 2147483648
        %v1215 = vxor.u32 %v1199, 2147483648
        %v1216 = vxor.u32 %v1200, 2147483648
        %v1217 = vxor.u32 %v1201, 2147483648
        %v1218 = vxor.u32 %v1202, 2147483648
        %v1219 = vxor.u32 %v1203, 2147483648
        %v1220 = vxor.u32 %v1204, 2147483648
        %v1221 = vxor.u32 %v1205, 2147483648
        %v1222 = vxor.u32 %v1206, 2147483648
        %v1223 = vxor.u32 %v1207, 2147483648
        %v1224 = vmul.f32 %v1208, 1.442695
        %v1225 = vpow.pop %v1224
        %v1226 = vmul.f32 %v1209, 1.442695
        %v1227 = vpow.pop %v1226
        %v1228 = vmul.f32 %v1210, 1.442695
        %v1229 = vpow.pop %v1228
        %v1230 = vmul.f32 %v1211, 1.442695
        %v1231 = vpow.pop %v1230
        %v1232 = vmul.f32 %v1212, 1.442695
        %v1233 = vpow.pop %v1232
        %v1234 = vmul.f32 %v1213, 1.442695
        %v1235 = vpow.pop %v1234
        %v1236 = vmul.f32 %v1214, 1.442695
        %v1237 = vpow.pop %v1236
        %v1238 = vmul.f32 %v1215, 1.442695
        %v1239 = vpow.pop %v1238
        %v1240 = vmul.f32 %v1216, 1.442695
        %v1241 = vpow.pop %v1240
        %v1242 = vmul.f32 %v1217, 1.442695
        %v1243 = vpow.pop %v1242
        %v1244 = vmul.f32 %v1218, 1.442695
        %v1245 = vpow.pop %v1244
        %v1246 = vmul.f32 %v1219, 1.442695
        %v1247 = vpow.pop %v1246
        %v1248 = vmul.f32 %v1220, 1.442695
        %v1249 = vpow.pop %v1248
        %v1250 = vmul.f32 %v1221, 1.442695
        %v1251 = vpow.pop %v1250
        %v1252 = vmul.f32 %v1222, 1.442695
        %v1253 = vpow.pop %v1252
        %v1254 = vmul.f32 %v1223, 1.442695
        %v1255 = vpow.pop %v1254
        %v1256 = vadd.f32 %v1225, 1.0
        %v1257 = vadd.f32 %v1227, 1.0
        %v1258 = vadd.f32 %v1229, 1.0
        %v1259 = vadd.f32 %v1231, 1.0
        %v1260 = vadd.f32 %v1233, 1.0
        %v1261 = vadd.f32 %v1235, 1.0
        %v1262 = vadd.f32 %v1237, 1.0
        %v1263 = vadd.f32 %v1239, 1.0
        %v1264 = vadd.f32 %v1241, 1.0
        %v1265 = vadd.f32 %v1243, 1.0
        %v1266 = vadd.f32 %v1245, 1.0
        %v1267 = vadd.f32 %v1247, 1.0
        %v1268 = vadd.f32 %v1249, 1.0
        %v1269 = vadd.f32 %v1251, 1.0
        %v1270 = vadd.f32 %v1253, 1.0
        %v1271 = vadd.f32 %v1255, 1.0
        %v1272 = vrcp.pop %v1256
        %v1273 = vmul.f32 %v1256, %v1272
        %v1274 = vsub.f32 1.0, %v1273
        %v1275 = vmul.f32 %v1272, %v1274
        %v1276 = vadd.f32 %v1272, %v1275
        %vm1277 = vweird.f32 %v1256
        %vm1278 = vweird.f32 %v1272
        %vm1279 = vmor %vm1277, %vm1278
        %v1280 = vsel %vm1279, %v1272, %v1276
        %v1281 = vand.u32 2147483647, %v1256
        %vm1282 = vcmp.eq.f32.partialorder %v1281, 8.507059e+37
        %v1283 = vand.u32 %v1256, 2147483648
        %v1284 = vor.u32 1.1754944e-38, %v1283
        %v1285 = vsel %vm1282, %v1284, %v1280
        %v1286 = vmul.f32 1.0, %v1285
        %v1287 = vrcp.pop %v1257
        %v1288 = vmul.f32 %v1257, %v1287
        %v1289 = vsub.f32 1.0, %v1288
        %v1290 = vmul.f32 %v1287, %v1289
        %v1291 = vadd.f32 %v1287, %v1290
        %vm1292 = vweird.f32 %v1257
        %vm1293 = vweird.f32 %v1287
        %vm1294 = vmor %vm1292, %vm1293
        %v1295 = vsel %vm1294, %v1287, %v1291
        %v1296 = vand.u32 2147483647, %v1257
        %vm1297 = vcmp.eq.f32.partialorder %v1296, 8.507059e+37
        %v1298 = vand.u32 %v1257, 2147483648
        %v1299 = vor.u32 1.1754944e-38, %v1298
        %v1300 = vsel %vm1297, %v1299, %v1295
        %v1301 = vmul.f32 1.0, %v1300
        %v1302 = vrcp.pop %v1258
        %v1303 = vmul.f32 %v1258, %v1302
        %v1304 = vsub.f32 1.0, %v1303
        %v1305 = vmul.f32 %v1302, %v1304
        %v1306 = vadd.f32 %v1302, %v1305
        %vm1307 = vweird.f32 %v1258
        %vm1308 = vweird.f32 %v1302
        %vm1309 = vmor %vm1307, %vm1308
        %v1310 = vsel %vm1309, %v1302, %v1306
        %v1311 = vand.u32 2147483647, %v1258
        %vm1312 = vcmp.eq.f32.partialorder %v1311, 8.507059e+37
        %v1313 = vand.u32 %v1258, 2147483648
        %v1314 = vor.u32 1.1754944e-38, %v1313
        %v1315 = vsel %vm1312, %v1314, %v1310
        %v1316 = vmul.f32 1.0, %v1315
        %v1317 = vrcp.pop %v1259
        %v1318 = vmul.f32 %v1259, %v1317
        %v1319 = vsub.f32 1.0, %v1318
        %v1320 = vmul.f32 %v1317, %v1319
        %v1321 = vadd.f32 %v1317, %v1320
        %vm1322 = vweird.f32 %v1259
        %vm1323 = vweird.f32 %v1317
        %vm1324 = vmor %vm1322, %vm1323
        %v1325 = vsel %vm1324, %v1317, %v1321
        %v1326 = vand.u32 2147483647, %v1259
        %vm1327 = vcmp.eq.f32.partialorder %v1326, 8.507059e+37
        %v1328 = vand.u32 %v1259, 2147483648
        %v1329 = vor.u32 1.1754944e-38, %v1328
        %v1330 = vsel %vm1327, %v1329, %v1325
        %v1331 = vmul.f32 1.0, %v1330
        %v1332 = vrcp.pop %v1260
        %v1333 = vmul.f32 %v1260, %v1332
        %v1334 = vsub.f32 1.0, %v1333
        %v1335 = vmul.f32 %v1332, %v1334
        %v1336 = vadd.f32 %v1332, %v1335
        %vm1337 = vweird.f32 %v1260
        %vm1338 = vweird.f32 %v1332
        %vm1339 = vmor %vm1337, %vm1338
        %v1340 = vsel %vm1339, %v1332, %v1336
        %v1341 = vand.u32 2147483647, %v1260
        %vm1342 = vcmp.eq.f32.partialorder %v1341, 8.507059e+37
        %v1343 = vand.u32 %v1260, 2147483648
        %v1344 = vor.u32 1.1754944e-38, %v1343
        %v1345 = vsel %vm1342, %v1344, %v1340
        %v1346 = vmul.f32 1.0, %v1345
        %v1347 = vrcp.pop %v1261
        %v1348 = vmul.f32 %v1261, %v1347
        %v1349 = vsub.f32 1.0, %v1348
        %v1350 = vmul.f32 %v1347, %v1349
        %v1351 = vadd.f32 %v1347, %v1350
        %vm1352 = vweird.f32 %v1261
        %vm1353 = vweird.f32 %v1347
        %vm1354 = vmor %vm1352, %vm1353
        %v1355 = vsel %vm1354, %v1347, %v1351
        %v1356 = vand.u32 2147483647, %v1261
        %vm1357 = vcmp.eq.f32.partialorder %v1356, 8.507059e+37
        %v1358 = vand.u32 %v1261, 2147483648
        %v1359 = vor.u32 1.1754944e-38, %v1358
        %v1360 = vsel %vm1357, %v1359, %v1355
        %v1361 = vmul.f32 1.0, %v1360
        %v1362 = vrcp.pop %v1262
        %v1363 = vmul.f32 %v1262, %v1362
        %v1364 = vsub.f32 1.0, %v1363
        %v1365 = vmul.f32 %v1362, %v1364
        %v1366 = vadd.f32 %v1362, %v1365
        %vm1367 = vweird.f32 %v1262
        %vm1368 = vweird.f32 %v1362
        %vm1369 = vmor %vm1367, %vm1368
        %v1370 = vsel %vm1369, %v1362, %v1366
        %v1371 = vand.u32 2147483647, %v1262
        %vm1372 = vcmp.eq.f32.partialorder %v1371, 8.507059e+37
        %v1373 = vand.u32 %v1262, 2147483648
        %v1374 = vor.u32 1.1754944e-38, %v1373
        %v1375 = vsel %vm1372, %v1374, %v1370
        %v1376 = vmul.f32 1.0, %v1375
        %v1377 = vrcp.pop %v1263
        %v1378 = vmul.f32 %v1263, %v1377
        %v1379 = vsub.f32 1.0, %v1378
        %v1380 = vmul.f32 %v1377, %v1379
        %v1381 = vadd.f32 %v1377, %v1380
        %vm1382 = vweird.f32 %v1263
        %vm1383 = vweird.f32 %v1377
        %vm1384 = vmor %vm1382, %vm1383
        %v1385 = vsel %vm1384, %v1377, %v1381
        %v1386 = vand.u32 2147483647, %v1263
        %vm1387 = vcmp.eq.f32.partialorder %v1386, 8.507059e+37
        %v1388 = vand.u32 %v1263, 2147483648
        %v1389 = vor.u32 1.1754944e-38, %v1388
        %v1390 = vsel %vm1387, %v1389, %v1385
        %v1391 = vmul.f32 1.0, %v1390
        %v1392 = vrcp.pop %v1264
        %v1393 = vmul.f32 %v1264, %v1392
        %v1394 = vsub.f32 1.0, %v1393
        %v1395 = vmul.f32 %v1392, %v1394
        %v1396 = vadd.f32 %v1392, %v1395
        %vm1397 = vweird.f32 %v1264
        %vm1398 = vweird.f32 %v1392
        %vm1399 = vmor %vm1397, %vm1398
        %v1400 = vsel %vm1399, %v1392, %v1396
        %v1401 = vand.u32 2147483647, %v1264
        %vm1402 = vcmp.eq.f32.partialorder %v1401, 8.507059e+37
        %v1403 = vand.u32 %v1264, 2147483648
        %v1404 = vor.u32 1.1754944e-38, %v1403
        %v1405 = vsel %vm1402, %v1404, %v1400
        %v1406 = vmul.f32 1.0, %v1405
        %v1407 = vrcp.pop %v1265
        %v1408 = vmul.f32 %v1265, %v1407
        %v1409 = vsub.f32 1.0, %v1408
        %v1410 = vmul.f32 %v1407, %v1409
        %v1411 = vadd.f32 %v1407, %v1410
        %vm1412 = vweird.f32 %v1265
        %vm1413 = vweird.f32 %v1407
        %vm1414 = vmor %vm1412, %vm1413
        %v1415 = vsel %vm1414, %v1407, %v1411
        %v1416 = vand.u32 2147483647, %v1265
        %vm1417 = vcmp.eq.f32.partialorder %v1416, 8.507059e+37
        %v1418 = vand.u32 %v1265, 2147483648
        %v1419 = vor.u32 1.1754944e-38, %v1418
        %v1420 = vsel %vm1417, %v1419, %v1415
        %v1421 = vmul.f32 1.0, %v1420
        %v1422 = vrcp.pop %v1266
        %v1423 = vmul.f32 %v1266, %v1422
        %v1424 = vsub.f32 1.0, %v1423
        %v1425 = vmul.f32 %v1422, %v1424
        %v1426 = vadd.f32 %v1422, %v1425
        %vm1427 = vweird.f32 %v1266
        %vm1428 = vweird.f32 %v1422
        %vm1429 = vmor %vm1427, %vm1428
        %v1430 = vsel %vm1429, %v1422, %v1426
        %v1431 = vand.u32 2147483647, %v1266
        %vm1432 = vcmp.eq.f32.partialorder %v1431, 8.507059e+37
        %v1433 = vand.u32 %v1266, 2147483648
        %v1434 = vor.u32 1.1754944e-38, %v1433
        %v1435 = vsel %vm1432, %v1434, %v1430
        %v1436 = vmul.f32 1.0, %v1435
        %v1437 = vrcp.pop %v1267
        %v1438 = vmul.f32 %v1267, %v1437
        %v1439 = vsub.f32 1.0, %v1438
        %v1440 = vmul.f32 %v1437, %v1439
        %v1441 = vadd.f32 %v1437, %v1440
        %vm1442 = vweird.f32 %v1267
        %vm1443 = vweird.f32 %v1437
        %vm1444 = vmor %vm1442, %vm1443
        %v1445 = vsel %vm1444, %v1437, %v1441
        %v1446 = vand.u32 2147483647, %v1267
        %vm1447 = vcmp.eq.f32.partialorder %v1446, 8.507059e+37
        %v1448 = vand.u32 %v1267, 2147483648
        %v1449 = vor.u32 1.1754944e-38, %v1448
        %v1450 = vsel %vm1447, %v1449, %v1445
        %v1451 = vmul.f32 1.0, %v1450
        %v1452 = vrcp.pop %v1268
        %v1453 = vmul.f32 %v1268, %v1452
        %v1454 = vsub.f32 1.0, %v1453
        %v1455 = vmul.f32 %v1452, %v1454
        %v1456 = vadd.f32 %v1452, %v1455
        %vm1457 = vweird.f32 %v1268
        %vm1458 = vweird.f32 %v1452
        %vm1459 = vmor %vm1457, %vm1458
        %v1460 = vsel %vm1459, %v1452, %v1456
        %v1461 = vand.u32 2147483647, %v1268
        %vm1462 = vcmp.eq.f32.partialorder %v1461, 8.507059e+37
        %v1463 = vand.u32 %v1268, 2147483648
        %v1464 = vor.u32 1.1754944e-38, %v1463
        %v1465 = vsel %vm1462, %v1464, %v1460
        %v1466 = vmul.f32 1.0, %v1465
        %v1467 = vrcp.pop %v1269
        %v1468 = vmul.f32 %v1269, %v1467
        %v1469 = vsub.f32 1.0, %v1468
        %v1470 = vmul.f32 %v1467, %v1469
        %v1471 = vadd.f32 %v1467, %v1470
        %vm1472 = vweird.f32 %v1269
        %vm1473 = vweird.f32 %v1467
        %vm1474 = vmor %vm1472, %vm1473
        %v1475 = vsel %vm1474, %v1467, %v1471
        %v1476 = vand.u32 2147483647, %v1269
        %vm1477 = vcmp.eq.f32.partialorder %v1476, 8.507059e+37
        %v1478 = vand.u32 %v1269, 2147483648
        %v1479 = vor.u32 1.1754944e-38, %v1478
        %v1480 = vsel %vm1477, %v1479, %v1475
        %v1481 = vmul.f32 1.0, %v1480
        %v1482 = vrcp.pop %v1270
        %v1483 = vmul.f32 %v1270, %v1482
        %v1484 = vsub.f32 1.0, %v1483
        %v1485 = vmul.f32 %v1482, %v1484
        %v1486 = vadd.f32 %v1482, %v1485
        %vm1487 = vweird.f32 %v1270
        %vm1488 = vweird.f32 %v1482
        %vm1489 = vmor %vm1487, %vm1488
        %v1490 = vsel %vm1489, %v1482, %v1486
        %v1491 = vand.u32 2147483647, %v1270
        %vm1492 = vcmp.eq.f32.partialorder %v1491, 8.507059e+37
        %v1493 = vand.u32 %v1270, 2147483648
        %v1494 = vor.u32 1.1754944e-38, %v1493
        %v1495 = vsel %vm1492, %v1494, %v1490
        %v1496 = vmul.f32 1.0, %v1495
        %v1497 = vrcp.pop %v1271
        %v1498 = vmul.f32 %v1271, %v1497
        %v1499 = vsub.f32 1.0, %v1498
        %v1500 = vmul.f32 %v1497, %v1499
        %v1501 = vadd.f32 %v1497, %v1500
        %vm1502 = vweird.f32 %v1271
        %vm1503 = vweird.f32 %v1497
        %vm1504 = vmor %vm1502, %vm1503
        %v1505 = vsel %vm1504, %v1497, %v1501
        %v1506 = vand.u32 2147483647, %v1271
        %vm1507 = vcmp.eq.f32.partialorder %v1506, 8.507059e+37
        %v1508 = vand.u32 %v1271, 2147483648
        %v1509 = vor.u32 1.1754944e-38, %v1508
        %v1510 = vsel %vm1507, %v1509, %v1505
        %v1511 = vmul.f32 1.0, %v1510
        %v1512 = vmul.f32 %v1176, %v1286
        %v1513 = vmul.f32 %v1177, %v1301
        %v1514 = vmul.f32 %v1178, %v1316
        %v1515 = vmul.f32 %v1179, %v1331
        %v1516 = vmul.f32 %v1180, %v1346
        %v1517 = vmul.f32 %v1181, %v1361
        %v1518 = vmul.f32 %v1182, %v1376
        %v1519 = vmul.f32 %v1183, %v1391
        %v1520 = vmul.f32 %v1184, %v1406
        %v1521 = vmul.f32 %v1185, %v1421
        %v1522 = vmul.f32 %v1186, %v1436
        %v1523 = vmul.f32 %v1187, %v1451
        %v1524 = vmul.f32 %v1188, %v1466
        %v1525 = vmul.f32 %v1189, %v1481
        %v1526 = vmul.f32 %v1190, %v1496
        %v1527 = vmul.f32 %v1191, %v1511
        %v1528 = vpack.c.bf16 %v1513, %v1512
        %v1529 = vpack.c.bf16 %v1515, %v1514
        %v1530 = vpack.c.bf16 %v1517, %v1516
        %v1531 = vpack.c.bf16 %v1519, %v1518
        %v1532 = vpack.c.bf16 %v1521, %v1520
        %v1533 = vpack.c.bf16 %v1523, %v1522
        %v1534 = vpack.c.bf16 %v1525, %v1524
        %v1535 = vpack.c.bf16 %v1527, %v1526
        %v1536 = vld [vmem:[%s7] sm:$0xf]
        %v1537 = vld [vmem:[%s7 + $0x4] sm:$0xf]
        %v1538 = vld [vmem:[%s7 + $0x8] sm:$0xf]
        %v1539 = vld [vmem:[%s7 + $0xc] sm:$0xf]
        %v1540 = vld [vmem:[%s8] sm:$0x1]
        %v1542 = vperm.slane %v1540, 0
        %v1548 = vunpack.c.l.b16 %v1536
        %v1549 = vunpack.c.l.b16 %v1537
        %v1550 = vunpack.c.l.b16 %v1538
        %v1551 = vunpack.c.l.b16 %v1539
        %v1552 = vpack.c.b16 %v1549, %v1548
        %v1553 = vpack.c.b16 %v1551, %v1550
        %vm1556 = vcmask 261120
        %v1558 = vsel %vm1556, %v1528, 0
        %v1561 = vsel %vm1556, %v1529, 0
        %v1564 = vsel %vm1556, %v1530, 0
        %v1567 = vsel %vm1556, %v1531, 0
        %v1570 = vsel %vm1556, %v1532, 0
        %v1573 = vsel %vm1556, %v1533, 0
        %v1576 = vsel %vm1556, %v1534, 0
        %v1579 = vsel %vm1556, %v1535, 0
        %1581 = vmatpush.bf16.msra.mxu0 0
        %1582 = vmatpush.bf16.msra.mxu0 0
        %1583 = vmatpush.bf16.msra.mxu0 0
        %1584 = vmatpush.bf16.msra.mxu0 0
        %1585 = vmatpush.bf16.msra.mxu0 0
        %1586 = vmatpush.bf16.msra.mxu0 0
        %1587 = vmatpush.bf16.msra.mxu0 %v1553
        %1588 = vmatpush.bf16.msra.mxu0 %v1552
        %1589 = vmatmul.bf16.gmra.mxu0 %v1558
        %v1590 = vpop.f32.mrf.mxu0
        %v1591 = vadd.f32 %v1542, %v1590
        %v1592 = vpop.f32.mrf.mxu0
        %v1593 = vadd.f32 %v1542, %v1592
        %1594 = vmatmul.bf16.gmra.mxu0 %v1561
        %v1595 = vpop.f32.mrf.mxu0
        %v1596 = vadd.f32 %v1542, %v1595
        %v1597 = vpop.f32.mrf.mxu0
        %v1598 = vadd.f32 %v1542, %v1597
        %1599 = vmatmul.bf16.gmra.mxu0 %v1564
        %v1600 = vpop.f32.mrf.mxu0
        %v1601 = vadd.f32 %v1542, %v1600
        %v1602 = vpop.f32.mrf.mxu0
        %v1603 = vadd.f32 %v1542, %v1602
        %1604 = vmatmul.bf16.gmra.mxu0 %v1567
        %v1605 = vpop.f32.mrf.mxu0
        %v1606 = vadd.f32 %v1542, %v1605
        %v1607 = vpop.f32.mrf.mxu0
        %v1608 = vadd.f32 %v1542, %v1607
        %1609 = vmatmul.bf16.gmra.mxu0 %v1570
        %v1610 = vpop.f32.mrf.mxu0
        %v1611 = vadd.f32 %v1542, %v1610
        %v1612 = vpop.f32.mrf.mxu0
        %v1613 = vadd.f32 %v1542, %v1612
        %1614 = vmatmul.bf16.gmra.mxu0 %v1573
        %v1615 = vpop.f32.mrf.mxu0
        %v1616 = vadd.f32 %v1542, %v1615
        %v1617 = vpop.f32.mrf.mxu0
        %v1618 = vadd.f32 %v1542, %v1617
        %1619 = vmatmul.bf16.gmra.mxu0 %v1576
        %v1620 = vpop.f32.mrf.mxu0
        %v1621 = vadd.f32 %v1542, %v1620
        %v1622 = vpop.f32.mrf.mxu0
        %v1623 = vadd.f32 %v1542, %v1622
        %1624 = vmatmul.bf16.gmra.mxu0 %v1579
        %v1625 = vpop.f32.mrf.mxu0
        %v1626 = vadd.f32 %v1542, %v1625
        %v1627 = vpop.f32.mrf.mxu0
        %v1628 = vadd.f32 %v1542, %v1627
        %1629 = vdwg.mxu0
        %s1630 = smul.u32 %s25, 16
        %v1631 = vlaneseq
        %v1632 = vshrl.u32 %v1631, 7
        %v1633 = vadd.s32 %v1632, 8
        %v1634 = vstv %s1630
        %v1635 = vadd.s32 %v1634, %v1632
        %v1636 = vadd.s32 %v1634, %v1633
        %vm1637 = vcmp.eq.s32.totalorder %v1635, 0
        %vm1638 = vcmp.eq.s32.totalorder %v1636, 0
        %v1639 = vsel %vm1637, 0.0, %v1591
        %v1640 = vsel %vm1638, 0.0, %v1593
        %v1641 = vsel %vm1637, 0.0, %v1596
        %v1642 = vsel %vm1638, 0.0, %v1598
        %v1643 = vsel %vm1637, 0.0, %v1601
        %v1644 = vsel %vm1638, 0.0, %v1603
        %v1645 = vsel %vm1637, 0.0, %v1606
        %v1646 = vsel %vm1638, 0.0, %v1608
        %v1647 = vsel %vm1637, 0.0, %v1611
        %v1648 = vsel %vm1638, 0.0, %v1613
        %v1649 = vsel %vm1637, 0.0, %v1616
        %v1650 = vsel %vm1638, 0.0, %v1618
        %v1651 = vsel %vm1637, 0.0, %v1621
        %v1652 = vsel %vm1638, 0.0, %v1623
        %v1653 = vsel %vm1637, 0.0, %v1626
        %v1654 = vsel %vm1638, 0.0, %v1628
        %v1655 = vadd.f32 %v557, %v1639
        %v1656 = vadd.f32 %v558, %v1640
        %v1657 = vadd.f32 %v559, %v1641
        %v1658 = vadd.f32 %v560, %v1642
        %v1659 = vadd.f32 %v561, %v1643
        %v1660 = vadd.f32 %v562, %v1644
        %v1661 = vadd.f32 %v563, %v1645
        %v1662 = vadd.f32 %v564, %v1646
        %v1663 = vadd.f32 %v565, %v1647
        %v1664 = vadd.f32 %v566, %v1648
        %v1665 = vadd.f32 %v567, %v1649
        %v1666 = vadd.f32 %v568, %v1650
        %v1667 = vadd.f32 %v569, %v1651
        %v1668 = vadd.f32 %v570, %v1652
        %v1669 = vadd.f32 %v571, %v1653
        %v1670 = vadd.f32 %v572, %v1654
        %1671 = vst.msk [vmem:[%s543] sm:$0xff] %vm575, %v1655
        %1672 = vst.msk [vmem:[%s543 + $0x8] sm:$0xff] %vm575, %v1656
        %1673 = vst.msk [vmem:[%s543 + $0x10] sm:$0xff] %vm575, %v1657
        %1674 = vst.msk [vmem:[%s543 + $0x18] sm:$0xff] %vm575, %v1658
        %1675 = vst.msk [vmem:[%s543 + $0x20] sm:$0xff] %vm575, %v1659
        %1676 = vst.msk [vmem:[%s543 + $0x28] sm:$0xff] %vm575, %v1660
        %1677 = vst.msk [vmem:[%s543 + $0x30] sm:$0xff] %vm575, %v1661
        %1678 = vst.msk [vmem:[%s543 + $0x38] sm:$0xff] %vm575, %v1662
        %1679 = vst.msk [vmem:[%s543 + $0x40] sm:$0xff] %vm575, %v1663
        %1680 = vst.msk [vmem:[%s543 + $0x48] sm:$0xff] %vm575, %v1664
        %1681 = vst.msk [vmem:[%s543 + $0x50] sm:$0xff] %vm575, %v1665
        %1682 = vst.msk [vmem:[%s543 + $0x58] sm:$0xff] %vm575, %v1666
        %1683 = vst.msk [vmem:[%s543 + $0x60] sm:$0xff] %vm575, %v1667
        %1684 = vst.msk [vmem:[%s543 + $0x68] sm:$0xff] %vm575, %v1668
        %1685 = vst.msk [vmem:[%s543 + $0x70] sm:$0xff] %vm575, %v1669
        %1686 = vst.msk [vmem:[%s543 + $0x78] sm:$0xff] %vm575, %v1670
        %s1687 = sand.u32 %s238, 1
        %s1688 = sand.u32 %s238, 1
        %s1689 = smul.addr %s1688, 128
        %s1690 = scalar_lea.vmem [#allocation3], %s1689
        // Predicated region
        $region109: #{_lambda_.4} parent=103 // pred_check
          %p1691 = pneg %p248
        $region110: #{_lambda_.4} parent=103 // pred_check_branch
          %1693 = sbr.rel (%p1691) target = $region112
        $region111: #{_lambda_.4} parent=103 // pred_region
          %s1694 = smul.u32 8, %s24
          %s1695 = smul.u32 2, %s25
          %s1696 = ssub.s32 3, %s1695
          %p1697 = scmp.lt.s32.totalorder %s1696, 2
          %s1698 = scalar_select %p1697, %s1696, 2
          %s1699 = smul.u32 64, %s1698
          %p1700 = scmp.ne.s32.totalorder 0, %s1699
          %s1701 = smul.addr %s1694, 3
          %s1702 = sadd.s32 %s1695, %s1701
          %s1703 = smul.addr %s1702, 8
          %s1704 = scalar_lea.vmem %s9, %s1703
          // Predicated region
          $region113: #{_lambda_.4} parent=111 // pred_check
            %p1705 = pneg %p1700
          $region114: #{_lambda_.4} parent=111 // pred_check_branch
            %1707 = sbr.rel (%p1705) target = $region116
          $region115: #{_lambda_.4} parent=111 // pred_region
            // Predicated region
            $region117: #{_lambda_.4} parent=115 // pred_check
              _
            $region118: #{_lambda_.4} parent=115 // pred_check_branch
              %1709 = sbr.rel (0) target = $region120
            $region119: #{_lambda_.4} parent=115 // pred_region
              // Predicated region
              $region139: #{_lambda_.4} parent=119 // pred_check
                _
              $region140: #{_lambda_.4} parent=119 // pred_check_branch
                %1803 = sbr.rel (0) target = $region142
              $region141: #{_lambda_.4} parent=119 // pred_region
                %s1804 = sshrl.u32 %s1698, 1
                // While loop
                $region143: #{_lambda_.4} parent=141 // loop_pre_header
                  _
                $region144: #{_lambda_.4} parent=141 // loop_header
                  %s1806 = sphi 0, %s1808
                  %p1807 = scmp.ge.s32.totalorder %s1806, %s1804
                  %s1811 = sphi 0, %s1848
                  %s1812 = sphi %s1690, %s1851
                  %s1813 = sphi %s1704, %s1852
                $region145: #{_lambda_.4} parent=141 // loop_header_branch
                  %1810 = sbr.rel (%p1807) target = $region149
                $region146: #{_lambda_.4} parent=141 // loop_body
                  %v1814 = vld [vmem:[%s1812] sm:$0xff]
                  %1815 = vst [vmem:[%s1813] sm:$0xff] %v1814
                  %v1816 = vld [vmem:[%s1812 + $0x8] sm:$0xff]
                  %1817 = vst [vmem:[%s1813 + $0x8] sm:$0xff] %v1816
                  %v1818 = vld [vmem:[%s1812 + $0x10] sm:$0xff]
                  %1819 = vst [vmem:[%s1813 + $0x18] sm:$0xff] %v1818
                  %v1820 = vld [vmem:[%s1812 + $0x18] sm:$0xff]
                  %1821 = vst [vmem:[%s1813 + $0x20] sm:$0xff] %v1820
                  %v1822 = vld [vmem:[%s1812 + $0x20] sm:$0xff]
                  %1823 = vst [vmem:[%s1813 + $0x30] sm:$0xff] %v1822
                  %v1824 = vld [vmem:[%s1812 + $0x28] sm:$0xff]
                  %1825 = vst [vmem:[%s1813 + $0x38] sm:$0xff] %v1824
                  %v1826 = vld [vmem:[%s1812 + $0x30] sm:$0xff]
                  %1827 = vst [vmem:[%s1813 + $0x48] sm:$0xff] %v1826
                  %v1828 = vld [vmem:[%s1812 + $0x38] sm:$0xff]
                  %1829 = vst [vmem:[%s1813 + $0x50] sm:$0xff] %v1828
                  %v1830 = vld [vmem:[%s1812 + $0x40] sm:$0xff]
                  %1831 = vst [vmem:[%s1813 + $0x60] sm:$0xff] %v1830
                  %v1832 = vld [vmem:[%s1812 + $0x48] sm:$0xff]
                  %1833 = vst [vmem:[%s1813 + $0x68] sm:$0xff] %v1832
                  %v1834 = vld [vmem:[%s1812 + $0x50] sm:$0xff]
                  %1835 = vst [vmem:[%s1813 + $0x78] sm:$0xff] %v1834
                  %v1836 = vld [vmem:[%s1812 + $0x58] sm:$0xff]
                  %1837 = vst [vmem:[%s1813 + $0x80] sm:$0xff] %v1836
                  %v1838 = vld [vmem:[%s1812 + $0x60] sm:$0xff]
                  %1839 = vst [vmem:[%s1813 + $0x90] sm:$0xff] %v1838
                  %v1840 = vld [vmem:[%s1812 + $0x68] sm:$0xff]
                  %1841 = vst [vmem:[%s1813 + $0x98] sm:$0xff] %v1840
                  %v1842 = vld [vmem:[%s1812 + $0x70] sm:$0xff]
                  %1843 = vst [vmem:[%s1813 + $0xa8] sm:$0xff] %v1842
                  %v1844 = vld [vmem:[%s1812 + $0x78] sm:$0xff]
                  %1845 = vst [vmem:[%s1813 + $0xb0] sm:$0xff] %v1844
                  %s1846 = sadd.s32 1, %s1811
                  %p1847 = scmp.ge.s32.totalorder %s1846, %s1804
                  %s1848 = scalar_select %p1847, 0, %s1846
                  %s1849 = smul.u32 %s1848, 16
                  %s1850 = smul.u32 %s1848, 16
                  %s1851 = scalar_lea.vmem %s1690, %s1849 [#allocation3]
                  %s1852 = scalar_lea.vmem %s1704, %s1850
                $region147: #{_lambda_.4} parent=141 // loop_footer
                  %s1808 = sadd.s32 %s1806, 1
                $region148: #{_lambda_.4} parent=141 // loop_footer_branch
                  %1805 = sbr.rel target = $region144
                $region149: #{_lambda_.4} parent=141 // loop_exit
                  _
                %s1853 = sshrl.u32 %s1698, 1
                %s1854 = sand.u32 %s1698, 1
                %s1855 = smul.u32 %s1853, 2
                %s1856 = smul.u32 8, %s1855
                %s1857 = scalar_lea.vmem %s1690, %s1856 [#allocation3]
                %s1858 = smul.u32 8, %s1855
                %s1859 = scalar_lea.vmem %s1704, %s1858
                // While loop
                $region150: #{_lambda_.4} parent=141 // loop_pre_header
                  _
                $region151: #{_lambda_.4} parent=141 // loop_header
                  %s1861 = sphi 0, %s1863
                  %p1862 = scmp.ge.s32.totalorder %s1861, %s1854
                  %s1866 = sphi 0, %s1887
                  %s1867 = sphi %s1857, %s1890
                  %s1868 = sphi %s1859, %s1891
                $region152: #{_lambda_.4} parent=141 // loop_header_branch
                  %1865 = sbr.rel (%p1862) target = $region156
                $region153: #{_lambda_.4} parent=141 // loop_body
                  %v1869 = vld [vmem:[%s1867] sm:$0xff]
                  %1870 = vst [vmem:[%s1868] sm:$0xff] %v1869
                  %v1871 = vld [vmem:[%s1867 + $0x10] sm:$0xff]
                  %1872 = vst [vmem:[%s1868 + $0x18] sm:$0xff] %v1871
                  %v1873 = vld [vmem:[%s1867 + $0x20] sm:$0xff]
                  %1874 = vst [vmem:[%s1868 + $0x30] sm:$0xff] %v1873
                  %v1875 = vld [vmem:[%s1867 + $0x30] sm:$0xff]
                  %1876 = vst [vmem:[%s1868 + $0x48] sm:$0xff] %v1875
                  %v1877 = vld [vmem:[%s1867 + $0x40] sm:$0xff]
                  %1878 = vst [vmem:[%s1868 + $0x60] sm:$0xff] %v1877
                  %v1879 = vld [vmem:[%s1867 + $0x50] sm:$0xff]
                  %1880 = vst [vmem:[%s1868 + $0x78] sm:$0xff] %v1879
                  %v1881 = vld [vmem:[%s1867 + $0x60] sm:$0xff]
                  %1882 = vst [vmem:[%s1868 + $0x90] sm:$0xff] %v1881
                  %v1883 = vld [vmem:[%s1867 + $0x70] sm:$0xff]
                  %1884 = vst [vmem:[%s1868 + $0xa8] sm:$0xff] %v1883
                  %s1885 = sadd.s32 1, %s1866
                  %p1886 = scmp.ge.s32.totalorder %s1885, %s1854
                  %s1887 = scalar_select %p1886, 0, %s1885
                  %s1888 = smul.u32 %s1887, 8
                  %s1889 = smul.u32 %s1887, 8
                  %s1890 = scalar_lea.vmem %s1857, %s1888 [#allocation3]
                  %s1891 = scalar_lea.vmem %s1859, %s1889
                $region154: #{_lambda_.4} parent=141 // loop_footer
                  %s1863 = sadd.s32 %s1861, 1
                $region155: #{_lambda_.4} parent=141 // loop_footer_branch
                  %1860 = sbr.rel target = $region151
                $region156: #{_lambda_.4} parent=141 // loop_exit
                  _
              $region142: #{_lambda_.4} parent=119 // pred_fallthru
                _
              // Predicated region
              $region157: #{_lambda_.4} parent=119 // pred_check
                _
              $region158: #{_lambda_.4} parent=119 // pred_check_branch
                %1893 = sbr.rel target = $region160
              $region159: #{_lambda_.4} parent=119 // pred_region
                _
              $region160: #{_lambda_.4} parent=119 // pred_fallthru
                _
            $region120: #{_lambda_.4} parent=115 // pred_fallthru
              _
            // Predicated region
            $region121: #{_lambda_.4} parent=115 // pred_check
              _
            $region122: #{_lambda_.4} parent=115 // pred_check_branch
              %1711 = sbr.rel target = $region124
            $region123: #{_lambda_.4} parent=115 // pred_region
              %s1713 = ssub.s32 256, 1
              %s1714 = sshrl.u32 %s1698, 1
              // While loop
              $region125: #{_lambda_.4} parent=123 // loop_pre_header
                _
              $region126: #{_lambda_.4} parent=123 // loop_header
                %s1716 = sphi 0, %s1718
                %p1717 = scmp.ge.s32.totalorder %s1716, %s1714
                %s1721 = sphi 0, %s1758
                %s1722 = sphi %s1690, %s1761
                %s1723 = sphi %s1704, %s1762
              $region127: #{_lambda_.4} parent=123 // loop_header_branch
                %1720 = sbr.rel (%p1717) target = $region131
              $region128: #{_lambda_.4} parent=123 // loop_body
                %v1724 = vld [vmem:[%s1722] sm:%s1713]
                %1725 = vst [vmem:[%s1723] sm:%s1713] %v1724
                %v1726 = vld [vmem:[%s1722 + $0x8] sm:%s1713]
                %1727 = vst [vmem:[%s1723 + $0x8] sm:%s1713] %v1726
                %v1728 = vld [vmem:[%s1722 + $0x10] sm:%s1713]
                %1729 = vst [vmem:[%s1723 + $0x18] sm:%s1713] %v1728
                %v1730 = vld [vmem:[%s1722 + $0x18] sm:%s1713]
                %1731 = vst [vmem:[%s1723 + $0x20] sm:%s1713] %v1730
                %v1732 = vld [vmem:[%s1722 + $0x20] sm:%s1713]
                %1733 = vst [vmem:[%s1723 + $0x30] sm:%s1713] %v1732
                %v1734 = vld [vmem:[%s1722 + $0x28] sm:%s1713]
                %1735 = vst [vmem:[%s1723 + $0x38] sm:%s1713] %v1734
                %v1736 = vld [vmem:[%s1722 + $0x30] sm:%s1713]
                %1737 = vst [vmem:[%s1723 + $0x48] sm:%s1713] %v1736
                %v1738 = vld [vmem:[%s1722 + $0x38] sm:%s1713]
                %1739 = vst [vmem:[%s1723 + $0x50] sm:%s1713] %v1738
                %v1740 = vld [vmem:[%s1722 + $0x40] sm:%s1713]
                %1741 = vst [vmem:[%s1723 + $0x60] sm:%s1713] %v1740
                %v1742 = vld [vmem:[%s1722 + $0x48] sm:%s1713]
                %1743 = vst [vmem:[%s1723 + $0x68] sm:%s1713] %v1742
                %v1744 = vld [vmem:[%s1722 + $0x50] sm:%s1713]
                %1745 = vst [vmem:[%s1723 + $0x78] sm:%s1713] %v1744
                %v1746 = vld [vmem:[%s1722 + $0x58] sm:%s1713]
                %1747 = vst [vmem:[%s1723 + $0x80] sm:%s1713] %v1746
                %v1748 = vld [vmem:[%s1722 + $0x60] sm:%s1713]
                %1749 = vst [vmem:[%s1723 + $0x90] sm:%s1713] %v1748
                %v1750 = vld [vmem:[%s1722 + $0x68] sm:%s1713]
                %1751 = vst [vmem:[%s1723 + $0x98] sm:%s1713] %v1750
                %v1752 = vld [vmem:[%s1722 + $0x70] sm:%s1713]
                %1753 = vst [vmem:[%s1723 + $0xa8] sm:%s1713] %v1752
                %v1754 = vld [vmem:[%s1722 + $0x78] sm:%s1713]
                %1755 = vst [vmem:[%s1723 + $0xb0] sm:%s1713] %v1754
                %s1756 = sadd.s32 1, %s1721
                %p1757 = scmp.ge.s32.totalorder %s1756, %s1714
                %s1758 = scalar_select %p1757, 0, %s1756
                %s1759 = smul.u32 %s1758, 16
                %s1760 = smul.u32 %s1758, 16
                %s1761 = scalar_lea.vmem %s1690, %s1759 [#allocation3]
                %s1762 = scalar_lea.vmem %s1704, %s1760
              $region129: #{_lambda_.4} parent=123 // loop_footer
                %s1718 = sadd.s32 %s1716, 1
              $region130: #{_lambda_.4} parent=123 // loop_footer_branch
                %1715 = sbr.rel target = $region126
              $region131: #{_lambda_.4} parent=123 // loop_exit
                _
              %s1763 = sshrl.u32 %s1698, 1
              %s1764 = sand.u32 %s1698, 1
              %s1765 = smul.u32 %s1763, 2
              %s1766 = smul.u32 8, %s1765
              %s1767 = scalar_lea.vmem %s1690, %s1766 [#allocation3]
              %s1768 = smul.u32 8, %s1765
              %s1769 = scalar_lea.vmem %s1704, %s1768
              // While loop
              $region132: #{_lambda_.4} parent=123 // loop_pre_header
                _
              $region133: #{_lambda_.4} parent=123 // loop_header
                %s1771 = sphi 0, %s1773
                %p1772 = scmp.ge.s32.totalorder %s1771, %s1764
                %s1776 = sphi 0, %s1797
                %s1777 = sphi %s1767, %s1800
                %s1778 = sphi %s1769, %s1801
              $region134: #{_lambda_.4} parent=123 // loop_header_branch
                %1775 = sbr.rel (%p1772) target = $region138
              $region135: #{_lambda_.4} parent=123 // loop_body
                %v1779 = vld [vmem:[%s1777] sm:%s1713]
                %1780 = vst [vmem:[%s1778] sm:%s1713] %v1779
                %v1781 = vld [vmem:[%s1777 + $0x10] sm:%s1713]
                %1782 = vst [vmem:[%s1778 + $0x18] sm:%s1713] %v1781
                %v1783 = vld [vmem:[%s1777 + $0x20] sm:%s1713]
                %1784 = vst [vmem:[%s1778 + $0x30] sm:%s1713] %v1783
                %v1785 = vld [vmem:[%s1777 + $0x30] sm:%s1713]
                %1786 = vst [vmem:[%s1778 + $0x48] sm:%s1713] %v1785
                %v1787 = vld [vmem:[%s1777 + $0x40] sm:%s1713]
                %1788 = vst [vmem:[%s1778 + $0x60] sm:%s1713] %v1787
                %v1789 = vld [vmem:[%s1777 + $0x50] sm:%s1713]
                %1790 = vst [vmem:[%s1778 + $0x78] sm:%s1713] %v1789
                %v1791 = vld [vmem:[%s1777 + $0x60] sm:%s1713]
                %1792 = vst [vmem:[%s1778 + $0x90] sm:%s1713] %v1791
                %v1793 = vld [vmem:[%s1777 + $0x70] sm:%s1713]
                %1794 = vst [vmem:[%s1778 + $0xa8] sm:%s1713] %v1793
                %s1795 = sadd.s32 1, %s1776
                %p1796 = scmp.ge.s32.totalorder %s1795, %s1764
                %s1797 = scalar_select %p1796, 0, %s1795
                %s1798 = smul.u32 %s1797, 8
                %s1799 = smul.u32 %s1797, 8
                %s1800 = scalar_lea.vmem %s1767, %s1798 [#allocation3]
                %s1801 = scalar_lea.vmem %s1769, %s1799
              $region136: #{_lambda_.4} parent=123 // loop_footer
                %s1773 = sadd.s32 %s1771, 1
              $region137: #{_lambda_.4} parent=123 // loop_footer_branch
                %1770 = sbr.rel target = $region133
              $region138: #{_lambda_.4} parent=123 // loop_exit
                _
            $region124: #{_lambda_.4} parent=115 // pred_fallthru
              _
          $region116: #{_lambda_.4} parent=111 // pred_fallthru
            _
          %1894 = vnop
        $region112: #{_lambda_.4} parent=103 // pred_fallthru
          _
      $region104: #{_lambda_.4} parent=5 // pred_fallthru
        _
      %p1895 = scmp.le.s32.totalorder 2, %s15
      // Predicated region
      $region161: #{_lambda_.4} parent=5 // pred_check
        %p1896 = pneg %p1895
      $region162: #{_lambda_.4} parent=5 // pred_check_branch
        %1898 = sbr.rel (%p1896) target = $region164
      $region163: #{_lambda_.4} parent=5 // pred_region
        %s1899 = ssub.s32 %s15, 2
        // Predicated region
        $region165: #{_lambda_.4} parent=163 // pred_check
          %p1900 = pneg %p254
        $region166: #{_lambda_.4} parent=163 // pred_check_branch
          %1902 = sbr.rel (%p1900) target = $region168
        $region167: #{_lambda_.4} parent=163 // pred_region
          %s1903 = sand.u32 %s239, 1
          %s1904 = sand.u32 %s239, 1
          %s1905 = smul.addr %s1904, 128
          %s1906 = scalar_lea.vmem [#allocation3], %s1905
        $region168: #{_lambda_.4} parent=163 // pred_fallthru
          _
      $region164: #{_lambda_.4} parent=5 // pred_fallthru
        _
    $region6: #{_lambda_.4} parent=1 // loop_footer
      %s19 = sadd.s32 1, %s15
    $region7: #{_lambda_.4} parent=1 // loop_footer_branch
      %14 = sbr.rel target = $region3
    $region8: #{_lambda_.4} parent=1 // loop_exit
      _

// kernel: _lambda_.7
$region0: #{_lambda_.7}
  #allocation0 [shape = 'u32[]', space=smem, size = 0x4, offset = 0x4, fixed_abs, tag = 'smem constant byte address 0x4 - core index']
  #allocation1 [shape = 'u32[72,128]{1,0:T(1,128)}', space=vmem, size = 0x9000, scoped, tag = 'internal scratch']
  %s0 = inlined_call_operand.vmem [shape: f32[272,64], index: 0, kind: input, shape index: {}]
  %s1 = inlined_call_operand.vmem [shape: f32[1,64], index: 1, kind: input, shape index: {}]
  %s2 = inlined_call_operand.vmem [shape: f32[1,64], index: 2, kind: input, shape index: {}]
  %s3 = inlined_call_operand.vmem [shape: bf16[64,256], index: 3, kind: input, shape index: {}]
  %s4 = inlined_call_operand.vmem [shape: f32[1,256], index: 4, kind: input, shape index: {}]
  %s5 = inlined_call_operand.vmem [shape: bf16[256,64], index: 5, kind: input, shape index: {}]
  %s6 = inlined_call_operand.vmem [shape: f32[1,64], index: 6, kind: input, shape index: {}]
  %s7 = inlined_call_operand.vmem [shape: f32[272,64], index: 7, kind: output, shape index: {}]
  %s8 = sld [smem:[#allocation0]]
  $region61: #{_lambda_.7} parent=0
    _
  %s10 = ssub.s32 1, %s8
  %s11 = scalar_select 0, %s10, %s8
  loop: start=0, step=1, limit=4
  $region2: #{_lambda_.7} parent=0 // loop_pre_header
    _
  $region3: #{_lambda_.7} parent=0 // loop_header
    %s13 = sphi 0, %s17
    %p14 = scmp.ge.s32.totalorder %s13, 4
    %s23 = sphi 0, %s25
    %s26 = sphi 0, %s23
    %s27 = sphi 0, %s26
    %s43 = sphi 0, %s27
    %s47 = sphi 0, %s47
    %s49 = sphi 0, %s47
    %s50 = sphi 0, %s49
    %s64 = sphi 0, %s50
    %s68 = sphi 0, %s68
    %s70 = sphi 0, %s68
    %s71 = sphi 0, %s70
    %s85 = sphi 0, %s71
    %s89 = sphi 0, %s89
    %s91 = sphi 0, %s89
    %s92 = sphi 0, %s91
    %s106 = sphi 0, %s92
    %s110 = sphi 0, %s110
    %s112 = sphi 0, %s110
    %s113 = sphi 0, %s112
    %s127 = sphi 0, %s113
    %s131 = sphi 0, %s131
    %s133 = sphi 0, %s131
    %s134 = sphi 0, %s133
    %s148 = sphi 0, %s134
    %s152 = sphi 0, %s152
    %s154 = sphi 0, %s152
    %s155 = sphi 0, %s154
    %s169 = sphi 0, %s155
    %s175 = sphi 0, %s177
    %s178 = sphi 0, %s175
    %s179 = sphi 0, %s178
    %s195 = sphi 0, %s179
  $region4: #{_lambda_.7} parent=0 // loop_header_branch
    %16 = sbr.rel (%p14) target = $region8
  $region5: #{_lambda_.7} parent=0 // loop_body
    %s18 = ssub.s32 %s13, 1
    %s19 = ssub.s32 %s13, 2
    %s20 = sadd.s32 %s13, 1
    %s21 = ssub.s32 %s13, %s20
    %p22 = scmp.eq.s32.totalorder %s21, 0
    %s24 = sadd.s32 %s23, 1
    %s25 = scalar_select %p22, %s23, %s24
    %p28 = pneg %p22
    %p29 = scmp.eq.s32.totalorder %s13, 1
    %p30 = por %p28, %p29
    %p31 = scmp.ne.s32.totalorder %s23, %s26
    %p32 = scmp.eq.s32.totalorder %s13, 0
    %p33 = por %p31, %p32
    %p34 = scmp.ne.s32.totalorder %s23, %s26
    %p35 = scmp.eq.s32.totalorder %s18, 1
    %p36 = por %p34, %p35
    %p37 = scmp.ne.s32.totalorder %s26, %s27
    %p38 = scmp.eq.s32.totalorder %s18, 0
    %p39 = por %p37, %p38
    %p40 = scmp.ne.s32.totalorder %s26, %s27
    %p41 = scmp.eq.s32.totalorder %s19, 1
    %p42 = por %p40, %p41
    %p44 = scmp.ne.s32.totalorder %s27, %s43
    %p45 = scmp.eq.s32.totalorder %s19, 0
    %p46 = por %p44, %p45
    %s48 = sadd.s32 %s47, 1
    %p51 = scmp.eq.s32.totalorder %s13, 1
    %p52 = scmp.ne.s32.totalorder %s47, %s49
    %p53 = scmp.eq.s32.totalorder %s13, 0
    %p54 = por %p52, %p53
    %p55 = scmp.ne.s32.totalorder %s47, %s49
    %p56 = scmp.eq.s32.totalorder %s18, 1
    %p57 = por %p55, %p56
    %p58 = scmp.ne.s32.totalorder %s49, %s50
    %p59 = scmp.eq.s32.totalorder %s18, 0
    %p60 = por %p58, %p59
    %p61 = scmp.ne.s32.totalorder %s49, %s50
    %p62 = scmp.eq.s32.totalorder %s19, 1
    %p63 = por %p61, %p62
    %p65 = scmp.ne.s32.totalorder %s50, %s64
    %p66 = scmp.eq.s32.totalorder %s19, 0
    %p67 = por %p65, %p66
    %s69 = sadd.s32 %s68, 1
    %p72 = scmp.eq.s32.totalorder %s13, 1
    %p73 = scmp.ne.s32.totalorder %s68, %s70
    %p74 = scmp.eq.s32.totalorder %s13, 0
    %p75 = por %p73, %p74
    %p76 = scmp.ne.s32.totalorder %s68, %s70
    %p77 = scmp.eq.s32.totalorder %s18, 1
    %p78 = por %p76, %p77
    %p79 = scmp.ne.s32.totalorder %s70, %s71
    %p80 = scmp.eq.s32.totalorder %s18, 0
    %p81 = por %p79, %p80
    %p82 = scmp.ne.s32.totalorder %s70, %s71
    %p83 = scmp.eq.s32.totalorder %s19, 1
    %p84 = por %p82, %p83
    %p86 = scmp.ne.s32.totalorder %s71, %s85
    %p87 = scmp.eq.s32.totalorder %s19, 0
    %p88 = por %p86, %p87
    %s90 = sadd.s32 %s89, 1
    %p93 = scmp.eq.s32.totalorder %s13, 1
    %p94 = scmp.ne.s32.totalorder %s89, %s91
    %p95 = scmp.eq.s32.totalorder %s13, 0
    %p96 = por %p94, %p95
    %p97 = scmp.ne.s32.totalorder %s89, %s91
    %p98 = scmp.eq.s32.totalorder %s18, 1
    %p99 = por %p97, %p98
    %p100 = scmp.ne.s32.totalorder %s91, %s92
    %p101 = scmp.eq.s32.totalorder %s18, 0
    %p102 = por %p100, %p101
    %p103 = scmp.ne.s32.totalorder %s91, %s92
    %p104 = scmp.eq.s32.totalorder %s19, 1
    %p105 = por %p103, %p104
    %p107 = scmp.ne.s32.totalorder %s92, %s106
    %p108 = scmp.eq.s32.totalorder %s19, 0
    %p109 = por %p107, %p108
    %s111 = sadd.s32 %s110, 1
    %p114 = scmp.eq.s32.totalorder %s13, 1
    %p115 = scmp.ne.s32.totalorder %s110, %s112
    %p116 = scmp.eq.s32.totalorder %s13, 0
    %p117 = por %p115, %p116
    %p118 = scmp.ne.s32.totalorder %s110, %s112
    %p119 = scmp.eq.s32.totalorder %s18, 1
    %p120 = por %p118, %p119
    %p121 = scmp.ne.s32.totalorder %s112, %s113
    %p122 = scmp.eq.s32.totalorder %s18, 0
    %p123 = por %p121, %p122
    %p124 = scmp.ne.s32.totalorder %s112, %s113
    %p125 = scmp.eq.s32.totalorder %s19, 1
    %p126 = por %p124, %p125
    %p128 = scmp.ne.s32.totalorder %s113, %s127
    %p129 = scmp.eq.s32.totalorder %s19, 0
    %p130 = por %p128, %p129
    %s132 = sadd.s32 %s131, 1
    %p135 = scmp.eq.s32.totalorder %s13, 1
    %p136 = scmp.ne.s32.totalorder %s131, %s133
    %p137 = scmp.eq.s32.totalorder %s13, 0
    %p138 = por %p136, %p137
    %p139 = scmp.ne.s32.totalorder %s131, %s133
    %p140 = scmp.eq.s32.totalorder %s18, 1
    %p141 = por %p139, %p140
    %p142 = scmp.ne.s32.totalorder %s133, %s134
    %p143 = scmp.eq.s32.totalorder %s18, 0
    %p144 = por %p142, %p143
    %p145 = scmp.ne.s32.totalorder %s133, %s134
    %p146 = scmp.eq.s32.totalorder %s19, 1
    %p147 = por %p145, %p146
    %p149 = scmp.ne.s32.totalorder %s134, %s148
    %p150 = scmp.eq.s32.totalorder %s19, 0
    %p151 = por %p149, %p150
    %s153 = sadd.s32 %s152, 1
    %p156 = scmp.eq.s32.totalorder %s13, 1
    %p157 = scmp.ne.s32.totalorder %s152, %s154
    %p158 = scmp.eq.s32.totalorder %s13, 0
    %p159 = por %p157, %p158
    %p160 = scmp.ne.s32.totalorder %s152, %s154
    %p161 = scmp.eq.s32.totalorder %s18, 1
    %p162 = por %p160, %p161
    %p163 = scmp.ne.s32.totalorder %s154, %s155
    %p164 = scmp.eq.s32.totalorder %s18, 0
    %p165 = por %p163, %p164
    %p166 = scmp.ne.s32.totalorder %s154, %s155
    %p167 = scmp.eq.s32.totalorder %s19, 1
    %p168 = por %p166, %p167
    %p170 = scmp.ne.s32.totalorder %s155, %s169
    %p171 = scmp.eq.s32.totalorder %s19, 0
    %p172 = por %p170, %p171
    %s173 = ssub.s32 %s13, %s20
    %p174 = scmp.eq.s32.totalorder %s173, 0
    %s176 = sadd.s32 %s175, 1
    %s177 = scalar_select %p174, %s175, %s176
    %p180 = pneg %p174
    %p181 = scmp.eq.s32.totalorder %s13, 1
    %p182 = por %p180, %p181
    %p183 = scmp.ne.s32.totalorder %s175, %s178
    %p184 = scmp.eq.s32.totalorder %s13, 0
    %p185 = por %p183, %p184
    %p186 = scmp.ne.s32.totalorder %s175, %s178
    %p187 = scmp.eq.s32.totalorder %s18, 1
    %p188 = por %p186, %p187
    %p189 = scmp.ne.s32.totalorder %s178, %s179
    %p190 = scmp.eq.s32.totalorder %s18, 0
    %p191 = por %p189, %p190
    %p192 = scmp.ne.s32.totalorder %s178, %s179
    %p193 = scmp.eq.s32.totalorder %s19, 1
    %p194 = por %p192, %p193
    %p196 = scmp.ne.s32.totalorder %s179, %s195
    %p197 = scmp.eq.s32.totalorder %s19, 0
    %p198 = por %p196, %p197
    %p199 = scmp.le.s32.totalorder 1, %s13
    %p200 = scmp.lt.s32.totalorder %s13, 3
    %p201 = pnand %p199, %p200
    %p202 = pneg %p201
    // Predicated region
    $region9: #{_lambda_.7} parent=5 // pred_check
      _
    $region10: #{_lambda_.7} parent=5 // pred_check_branch
      %204 = sbr.rel (%p201) target = $region12
    $region11: #{_lambda_.7} parent=5 // pred_region
      %s205 = ssub.s32 %s13, 1
      // Predicated region
      $region13: #{_lambda_.7} parent=11 // pred_check
        %p206 = pneg %p60
      $region14: #{_lambda_.7} parent=11 // pred_check_branch
        %208 = sbr.rel (%p206) target = $region16
      $region15: #{_lambda_.7} parent=11 // pred_region
        _
      $region16: #{_lambda_.7} parent=11 // pred_fallthru
        _
      // Predicated region
      $region17: #{_lambda_.7} parent=11 // pred_check
        %p209 = pneg %p81
      $region18: #{_lambda_.7} parent=11 // pred_check_branch
        %211 = sbr.rel (%p209) target = $region20
      $region19: #{_lambda_.7} parent=11 // pred_region
        _
      $region20: #{_lambda_.7} parent=11 // pred_fallthru
        _
      // Predicated region
      $region21: #{_lambda_.7} parent=11 // pred_check
        %p212 = pneg %p102
      $region22: #{_lambda_.7} parent=11 // pred_check_branch
        %214 = sbr.rel (%p212) target = $region24
      $region23: #{_lambda_.7} parent=11 // pred_region
        _
      $region24: #{_lambda_.7} parent=11 // pred_fallthru
        _
      // Predicated region
      $region25: #{_lambda_.7} parent=11 // pred_check
        %p215 = pneg %p123
      $region26: #{_lambda_.7} parent=11 // pred_check_branch
        %217 = sbr.rel (%p215) target = $region28
      $region27: #{_lambda_.7} parent=11 // pred_region
        _
      $region28: #{_lambda_.7} parent=11 // pred_fallthru
        _
      // Predicated region
      $region29: #{_lambda_.7} parent=11 // pred_check
        %p218 = pneg %p144
      $region30: #{_lambda_.7} parent=11 // pred_check_branch
        %220 = sbr.rel (%p218) target = $region32
      $region31: #{_lambda_.7} parent=11 // pred_region
        _
      $region32: #{_lambda_.7} parent=11 // pred_fallthru
        _
      // Predicated region
      $region33: #{_lambda_.7} parent=11 // pred_check
        %p221 = pneg %p165
      $region34: #{_lambda_.7} parent=11 // pred_check_branch
        %223 = sbr.rel (%p221) target = $region36
      $region35: #{_lambda_.7} parent=11 // pred_region
        _
      $region36: #{_lambda_.7} parent=11 // pred_fallthru
        _
    $region12: #{_lambda_.7} parent=5 // pred_fallthru
      _
    %p224 = scmp.lt.s32.totalorder %s13, 2
    // Predicated region
    $region37: #{_lambda_.7} parent=5 // pred_check
      %p225 = pneg %p224
    $region38: #{_lambda_.7} parent=5 // pred_check_branch
      %227 = sbr.rel (%p225) target = $region40
    $region39: #{_lambda_.7} parent=5 // pred_region
      // Predicated region
      $region41: #{_lambda_.7} parent=39 // pred_check
        %p228 = pneg %p33
      $region42: #{_lambda_.7} parent=39 // pred_check_branch
        %230 = sbr.rel (%p228) target = $region44
      $region43: #{_lambda_.7} parent=39 // pred_region
        %s231 = smul.u32 17, %s13
        %p232 = scmp.lt.s32.totalorder %s231, 33
        %s233 = scalar_select %p232, %s231, 33
        %s234 = smul.addr %s233, 8
        %s235 = scalar_lea.vmem %s0, %s234
        %s236 = smul.u32 17, %s13
      $region44: #{_lambda_.7} parent=39 // pred_fallthru
        _
    $region40: #{_lambda_.7} parent=5 // pred_fallthru
      _
    %p237 = scmp.le.s32.totalorder 1, %s13
    %p238 = scmp.lt.s32.totalorder %s13, 3
    %p239 = pnand %p237, %p238
    %p240 = pneg %p239
    // Predicated region
    $region45: #{_lambda_.7} parent=5 // pred_check
      _
    $region46: #{_lambda_.7} parent=5 // pred_check_branch
      %242 = sbr.rel (%p239) target = $region48
    $region47: #{_lambda_.7} parent=5 // pred_region
      %s243 = ssub.s32 %s13, 1
      %s244 = smul.u32 17, %s18
      %p245 = scmp.lt.s32.totalorder %s244, 33
      %s246 = scalar_select %p245, %s244, 33
      %s247 = smul.addr %s246, 8
      %s248 = scalar_lea.vmem %s0, %s247
      %p249 = pneg %p39
      %p250 = pneg %p36
      %p251 = pneg %p60
      %p252 = pneg %p57
      %p253 = pneg %p81
      %p254 = pneg %p78
      %p255 = pneg %p102
      %p256 = pneg %p99
      %p257 = pneg %p123
      %p258 = pneg %p120
      %p259 = pneg %p144
      %p260 = pneg %p141
      %p261 = pneg %p165
      %p262 = pneg %p162
      %p263 = pneg %p191
      %p264 = pneg %p188
      %s265 = smul.u32 17, %s18
      %p266 = scmp.lt.s32.totalorder %s265, 33
      %s267 = scalar_select %p266, %s265, 33
      %s268 = smul.addr %s267, 8
      %s269 = scalar_lea.vmem %s7, %s268
      %s270 = smul.u32 17, %s18
      %p271 = scmp.lt.s32.totalorder %s270, 33
      %s272 = scalar_select %p271, %s270, 33
      %s273 = smul.addr %s272, 8
      %s274 = scalar_lea.vmem %s0, %s273
      %s275 = smul.u32 17, %s18
      %s276 = smul.u32 17, %s18
      %p277 = scmp.lt.s32.totalorder %s276, 33
      %s278 = scalar_select %p277, %s276, 33
      %s279 = smul.addr %s278, 8
      %s280 = scalar_lea.vmem %s7, %s279
      %s281 = smul.u32 17, %s18
      %v283 = vld [vmem:[%s274] sm:$0xff]
      %v284 = vld [vmem:[%s274 + $0x8] sm:$0xff]
      %v285 = vld [vmem:[%s274 + $0x10] sm:$0xff]
      %v286 = vld [vmem:[%s274 + $0x18] sm:$0xff]
      %v287 = vld [vmem:[%s274 + $0x20] sm:$0xff]
      %v288 = vld [vmem:[%s274 + $0x28] sm:$0xff]
      %v289 = vld [vmem:[%s274 + $0x30] sm:$0xff]
      %v290 = vld [vmem:[%s274 + $0x38] sm:$0xff]
      %v291 = vld [vmem:[%s274 + $0x40] sm:$0xff]
      %v292 = vld [vmem:[%s274 + $0x48] sm:$0xff]
      %v293 = vld [vmem:[%s274 + $0x50] sm:$0xff]
      %v294 = vld [vmem:[%s274 + $0x58] sm:$0xff]
      %v295 = vld [vmem:[%s274 + $0x60] sm:$0xff]
      %v296 = vld [vmem:[%s274 + $0x68] sm:$0xff]
      %v297 = vld [vmem:[%s274 + $0x70] sm:$0xff]
      %v298 = vld [vmem:[%s274 + $0x78] sm:$0xff]
      %v299 = vld [vmem:[%s274 + $0x80] sm:$0xff]
      %v300 = vld [vmem:[%s1] sm:$0x1]
      %v301 = vld [vmem:[%s2] sm:$0x1]
      %vm302 = vcmask 523264
      %v303 = vsel %vm302, %v283, 0.0
      %304 = vadd.xlane.f32.xlu0 %v303
      %v305 = vpop.xlane.xlu0 %304
      %v306 = vsel %vm302, %v284, 0.0
      %307 = vadd.xlane.f32.xlu0 %v306
      %v308 = vpop.xlane.xlu0 %307
      %v309 = vsel %vm302, %v285, 0.0
      %310 = vadd.xlane.f32.xlu0 %v309
      %v311 = vpop.xlane.xlu0 %310
      %v312 = vsel %vm302, %v286, 0.0
      %313 = vadd.xlane.f32.xlu0 %v312
      %v314 = vpop.xlane.xlu0 %313
      %v315 = vsel %vm302, %v287, 0.0
      %316 = vadd.xlane.f32.xlu0 %v315
      %v317 = vpop.xlane.xlu0 %316
      %v318 = vsel %vm302, %v288, 0.0
      %319 = vadd.xlane.f32.xlu0 %v318
      %v320 = vpop.xlane.xlu0 %319
      %v321 = vsel %vm302, %v289, 0.0
      %322 = vadd.xlane.f32.xlu0 %v321
      %v323 = vpop.xlane.xlu0 %322
      %v324 = vsel %vm302, %v290, 0.0
      %325 = vadd.xlane.f32.xlu0 %v324
      %v326 = vpop.xlane.xlu0 %325
      %v327 = vsel %vm302, %v291, 0.0
      %328 = vadd.xlane.f32.xlu0 %v327
      %v329 = vpop.xlane.xlu0 %328
      %v330 = vsel %vm302, %v292, 0.0
      %331 = vadd.xlane.f32.xlu0 %v330
      %v332 = vpop.xlane.xlu0 %331
      %v333 = vsel %vm302, %v293, 0.0
      %334 = vadd.xlane.f32.xlu0 %v333
      %v335 = vpop.xlane.xlu0 %334
      %v336 = vsel %vm302, %v294, 0.0
      %337 = vadd.xlane.f32.xlu0 %v336
      %v338 = vpop.xlane.xlu0 %337
      %v339 = vsel %vm302, %v295, 0.0
      %340 = vadd.xlane.f32.xlu0 %v339
      %v341 = vpop.xlane.xlu0 %340
      %v342 = vsel %vm302, %v296, 0.0
      %343 = vadd.xlane.f32.xlu0 %v342
      %v344 = vpop.xlane.xlu0 %343
      %v345 = vsel %vm302, %v297, 0.0
      %346 = vadd.xlane.f32.xlu0 %v345
      %v347 = vpop.xlane.xlu0 %346
      %v348 = vsel %vm302, %v298, 0.0
      %349 = vadd.xlane.f32.xlu0 %v348
      %v350 = vpop.xlane.xlu0 %349
      %v351 = vsel %vm302, %v299, 0.0
      %352 = vadd.xlane.f32.xlu0 %v351
      %v353 = vpop.xlane.xlu0 %352
      %v354 = vrcp.pop 64.0
      %v355 = vmul.f32 64.0, %v354
      %v356 = vsub.f32 1.0, %v355
      %v357 = vmul.f32 %v354, %v356
      %v358 = vadd.f32 %v354, %v357
      %vm359 = vweird.f32 %v354
      %v360 = vsel %vm359, %v354, %v358
      %v361 = vmul.f32 %v305, %v360
      %v362 = vmul.f32 %v308, %v360
      %v363 = vmul.f32 %v311, %v360
      %v364 = vmul.f32 %v314, %v360
      %v365 = vmul.f32 %v317, %v360
      %v366 = vmul.f32 %v320, %v360
      %v367 = vmul.f32 %v323, %v360
      %v368 = vmul.f32 %v326, %v360
      %v369 = vmul.f32 %v329, %v360
      %v370 = vmul.f32 %v332, %v360
      %v371 = vmul.f32 %v335, %v360
      %v372 = vmul.f32 %v338, %v360
      %v373 = vmul.f32 %v341, %v360
      %v374 = vmul.f32 %v344, %v360
      %v375 = vmul.f32 %v347, %v360
      %v376 = vmul.f32 %v350, %v360
      %v377 = vmul.f32 %v353, %v360
      %v378 = vsub.f32 %v283, %v361
      %v379 = vsub.f32 %v284, %v362
      %v380 = vsub.f32 %v285, %v363
      %v381 = vsub.f32 %v286, %v364
      %v382 = vsub.f32 %v287, %v365
      %v383 = vsub.f32 %v288, %v366
      %v384 = vsub.f32 %v289, %v367
      %v385 = vsub.f32 %v290, %v368
      %v386 = vsub.f32 %v291, %v369
      %v387 = vsub.f32 %v292, %v370
      %v388 = vsub.f32 %v293, %v371
      %v389 = vsub.f32 %v294, %v372
      %v390 = vsub.f32 %v295, %v373
      %v391 = vsub.f32 %v296, %v374
      %v392 = vsub.f32 %v297, %v375
      %v393 = vsub.f32 %v298, %v376
      %v394 = vsub.f32 %v299, %v377
      %v395 = vmul.f32 %v378, %v378
      %v396 = vmul.f32 %v379, %v379
      %v397 = vmul.f32 %v380, %v380
      %v398 = vmul.f32 %v381, %v381
      %v399 = vmul.f32 %v382, %v382
      %v400 = vmul.f32 %v383, %v383
      %v401 = vmul.f32 %v384, %v384
      %v402 = vmul.f32 %v385, %v385
      %v403 = vmul.f32 %v386, %v386
      %v404 = vmul.f32 %v387, %v387
      %v405 = vmul.f32 %v388, %v388
      %v406 = vmul.f32 %v389, %v389
      %v407 = vmul.f32 %v390, %v390
      %v408 = vmul.f32 %v391, %v391
      %v409 = vmul.f32 %v392, %v392
      %v410 = vmul.f32 %v393, %v393
      %v411 = vmul.f32 %v394, %v394
      %v412 = vsel %vm302, %v395, 0.0
      %413 = vadd.xlane.f32.xlu0 %v412
      %v414 = vpop.xlane.xlu0 %413
      %v415 = vsel %vm302, %v396, 0.0
      %416 = vadd.xlane.f32.xlu0 %v415
      %v417 = vpop.xlane.xlu0 %416
      %v418 = vsel %vm302, %v397, 0.0
      %419 = vadd.xlane.f32.xlu0 %v418
      %v420 = vpop.xlane.xlu0 %419
      %v421 = vsel %vm302, %v398, 0.0
      %422 = vadd.xlane.f32.xlu0 %v421
      %v423 = vpop.xlane.xlu0 %422
      %v424 = vsel %vm302, %v399, 0.0
      %425 = vadd.xlane.f32.xlu0 %v424
      %v426 = vpop.xlane.xlu0 %425
      %v427 = vsel %vm302, %v400, 0.0
      %428 = vadd.xlane.f32.xlu0 %v427
      %v429 = vpop.xlane.xlu0 %428
      %v430 = vsel %vm302, %v401, 0.0
      %431 = vadd.xlane.f32.xlu0 %v430
      %v432 = vpop.xlane.xlu0 %431
      %v433 = vsel %vm302, %v402, 0.0
      %434 = vadd.xlane.f32.xlu0 %v433
      %v435 = vpop.xlane.xlu0 %434
      %v436 = vsel %vm302, %v403, 0.0
      %437 = vadd.xlane.f32.xlu0 %v436
      %v438 = vpop.xlane.xlu0 %437
      %v439 = vsel %vm302, %v404, 0.0
      %440 = vadd.xlane.f32.xlu0 %v439
      %v441 = vpop.xlane.xlu0 %440
      %v442 = vsel %vm302, %v405, 0.0
      %443 = vadd.xlane.f32.xlu0 %v442
      %v444 = vpop.xlane.xlu0 %443
      %v445 = vsel %vm302, %v406, 0.0
      %446 = vadd.xlane.f32.xlu0 %v445
      %v447 = vpop.xlane.xlu0 %446
      %v448 = vsel %vm302, %v407, 0.0
      %449 = vadd.xlane.f32.xlu0 %v448
      %v450 = vpop.xlane.xlu0 %449
      %v451 = vsel %vm302, %v408, 0.0
      %452 = vadd.xlane.f32.xlu0 %v451
      %v453 = vpop.xlane.xlu0 %452
      %v454 = vsel %vm302, %v409, 0.0
      %455 = vadd.xlane.f32.xlu0 %v454
      %v456 = vpop.xlane.xlu0 %455
      %v457 = vsel %vm302, %v410, 0.0
      %458 = vadd.xlane.f32.xlu0 %v457
      %v459 = vpop.xlane.xlu0 %458
      %v460 = vsel %vm302, %v411, 0.0
      %461 = vadd.xlane.f32.xlu0 %v460
      %v462 = vpop.xlane.xlu0 %461
      %v463 = vmul.f32 %v414, %v360
      %v464 = vmul.f32 %v417, %v360
      %v465 = vmul.f32 %v420, %v360
      %v466 = vmul.f32 %v423, %v360
      %v467 = vmul.f32 %v426, %v360
      %v468 = vmul.f32 %v429, %v360
      %v469 = vmul.f32 %v432, %v360
      %v470 = vmul.f32 %v435, %v360
      %v471 = vmul.f32 %v438, %v360
      %v472 = vmul.f32 %v441, %v360
      %v473 = vmul.f32 %v444, %v360
      %v474 = vmul.f32 %v447, %v360
      %v475 = vmul.f32 %v450, %v360
      %v476 = vmul.f32 %v453, %v360
      %v477 = vmul.f32 %v456, %v360
      %v478 = vmul.f32 %v459, %v360
      %v479 = vmul.f32 %v462, %v360
      %v480 = vadd.f32 %v463, 1e-05
      %v481 = vadd.f32 %v464, 1e-05
      %v482 = vadd.f32 %v465, 1e-05
      %v483 = vadd.f32 %v466, 1e-05
      %v484 = vadd.f32 %v467, 1e-05
      %v485 = vadd.f32 %v468, 1e-05
      %v486 = vadd.f32 %v469, 1e-05
      %v487 = vadd.f32 %v470, 1e-05
      %v488 = vadd.f32 %v471, 1e-05
      %v489 = vadd.f32 %v472, 1e-05
      %v490 = vadd.f32 %v473, 1e-05
      %v491 = vadd.f32 %v474, 1e-05
      %v492 = vadd.f32 %v475, 1e-05
      %v493 = vadd.f32 %v476, 1e-05
      %v494 = vadd.f32 %v477, 1e-05
      %v495 = vadd.f32 %v478, 1e-05
      %v496 = vadd.f32 %v479, 1e-05
      %v497 = vrsqrt.pop %v480
      %v498 = vmul.f32 %v497, %v480
      %v499 = vmul.f32 %v498, %v497
      %v500 = vmul.f32 0.5, %v499
      %v501 = vsub.f32 1.5, %v500
      %v502 = vmul.f32 %v497, %v501
      %vm503 = vweird.f32 %v480
      %vm504 = vweird.f32 %v497
      %vm505 = vmor %vm503, %vm504
      %v506 = vsel %vm505, %v497, %v502
      %v507 = vrsqrt.pop %v481
      %v508 = vmul.f32 %v507, %v481
      %v509 = vmul.f32 %v508, %v507
      %v510 = vmul.f32 0.5, %v509
      %v511 = vsub.f32 1.5, %v510
      %v512 = vmul.f32 %v507, %v511
      %vm513 = vweird.f32 %v481
      %vm514 = vweird.f32 %v507
      %vm515 = vmor %vm513, %vm514
      %v516 = vsel %vm515, %v507, %v512
      %v517 = vrsqrt.pop %v482
      %v518 = vmul.f32 %v517, %v482
      %v519 = vmul.f32 %v518, %v517
      %v520 = vmul.f32 0.5, %v519
      %v521 = vsub.f32 1.5, %v520
      %v522 = vmul.f32 %v517, %v521
      %vm523 = vweird.f32 %v482
      %vm524 = vweird.f32 %v517
      %vm525 = vmor %vm523, %vm524
      %v526 = vsel %vm525, %v517, %v522
      %v527 = vrsqrt.pop %v483
      %v528 = vmul.f32 %v527, %v483
      %v529 = vmul.f32 %v528, %v527
      %v530 = vmul.f32 0.5, %v529
      %v531 = vsub.f32 1.5, %v530
      %v532 = vmul.f32 %v527, %v531
      %vm533 = vweird.f32 %v483
      %vm534 = vweird.f32 %v527
      %vm535 = vmor %vm533, %vm534
      %v536 = vsel %vm535, %v527, %v532
      %v537 = vrsqrt.pop %v484
      %v538 = vmul.f32 %v537, %v484
      %v539 = vmul.f32 %v538, %v537
      %v540 = vmul.f32 0.5, %v539
      %v541 = vsub.f32 1.5, %v540
      %v542 = vmul.f32 %v537, %v541
      %vm543 = vweird.f32 %v484
      %vm544 = vweird.f32 %v537
      %vm545 = vmor %vm543, %vm544
      %v546 = vsel %vm545, %v537, %v542
      %v547 = vrsqrt.pop %v485
      %v548 = vmul.f32 %v547, %v485
      %v549 = vmul.f32 %v548, %v547
      %v550 = vmul.f32 0.5, %v549
      %v551 = vsub.f32 1.5, %v550
      %v552 = vmul.f32 %v547, %v551
      %vm553 = vweird.f32 %v485
      %vm554 = vweird.f32 %v547
      %vm555 = vmor %vm553, %vm554
      %v556 = vsel %vm555, %v547, %v552
      %v557 = vrsqrt.pop %v486
      %v558 = vmul.f32 %v557, %v486
      %v559 = vmul.f32 %v558, %v557
      %v560 = vmul.f32 0.5, %v559
      %v561 = vsub.f32 1.5, %v560
      %v562 = vmul.f32 %v557, %v561
      %vm563 = vweird.f32 %v486
      %vm564 = vweird.f32 %v557
      %vm565 = vmor %vm563, %vm564
      %v566 = vsel %vm565, %v557, %v562
      %v567 = vrsqrt.pop %v487
      %v568 = vmul.f32 %v567, %v487
      %v569 = vmul.f32 %v568, %v567
      %v570 = vmul.f32 0.5, %v569
      %v571 = vsub.f32 1.5, %v570
      %v572 = vmul.f32 %v567, %v571
      %vm573 = vweird.f32 %v487
      %vm574 = vweird.f32 %v567
      %vm575 = vmor %vm573, %vm574
      %v576 = vsel %vm575, %v567, %v572
      %v577 = vrsqrt.pop %v488
      %v578 = vmul.f32 %v577, %v488
      %v579 = vmul.f32 %v578, %v577
      %v580 = vmul.f32 0.5, %v579
      %v581 = vsub.f32 1.5, %v580
      %v582 = vmul.f32 %v577, %v581
      %vm583 = vweird.f32 %v488
      %vm584 = vweird.f32 %v577
      %vm585 = vmor %vm583, %vm584
      %v586 = vsel %vm585, %v577, %v582
      %v587 = vrsqrt.pop %v489
      %v588 = vmul.f32 %v587, %v489
      %v589 = vmul.f32 %v588, %v587
      %v590 = vmul.f32 0.5, %v589
      %v591 = vsub.f32 1.5, %v590
      %v592 = vmul.f32 %v587, %v591
      %vm593 = vweird.f32 %v489
      %vm594 = vweird.f32 %v587
      %vm595 = vmor %vm593, %vm594
      %v596 = vsel %vm595, %v587, %v592
      %v597 = vrsqrt.pop %v490
      %v598 = vmul.f32 %v597, %v490
      %v599 = vmul.f32 %v598, %v597
      %v600 = vmul.f32 0.5, %v599
      %v601 = vsub.f32 1.5, %v600
      %v602 = vmul.f32 %v597, %v601
      %vm603 = vweird.f32 %v490
      %vm604 = vweird.f32 %v597
      %vm605 = vmor %vm603, %vm604
      %v606 = vsel %vm605, %v597, %v602
      %v607 = vrsqrt.pop %v491
      %v608 = vmul.f32 %v607, %v491
      %v609 = vmul.f32 %v608, %v607
      %v610 = vmul.f32 0.5, %v609
      %v611 = vsub.f32 1.5, %v610
      %v612 = vmul.f32 %v607, %v611
      %vm613 = vweird.f32 %v491
      %vm614 = vweird.f32 %v607
      %vm615 = vmor %vm613, %vm614
      %v616 = vsel %vm615, %v607, %v612
      %v617 = vrsqrt.pop %v492
      %v618 = vmul.f32 %v617, %v492
      %v619 = vmul.f32 %v618, %v617
      %v620 = vmul.f32 0.5, %v619
      %v621 = vsub.f32 1.5, %v620
      %v622 = vmul.f32 %v617, %v621
      %vm623 = vweird.f32 %v492
      %vm624 = vweird.f32 %v617
      %vm625 = vmor %vm623, %vm624
      %v626 = vsel %vm625, %v617, %v622
      %v627 = vrsqrt.pop %v493
      %v628 = vmul.f32 %v627, %v493
      %v629 = vmul.f32 %v628, %v627
      %v630 = vmul.f32 0.5, %v629
      %v631 = vsub.f32 1.5, %v630
      %v632 = vmul.f32 %v627, %v631
      %vm633 = vweird.f32 %v493
      %vm634 = vweird.f32 %v627
      %vm635 = vmor %vm633, %vm634
      %v636 = vsel %vm635, %v627, %v632
      %v637 = vrsqrt.pop %v494
      %v638 = vmul.f32 %v637, %v494
      %v639 = vmul.f32 %v638, %v637
      %v640 = vmul.f32 0.5, %v639
      %v641 = vsub.f32 1.5, %v640
      %v642 = vmul.f32 %v637, %v641
      %vm643 = vweird.f32 %v494
      %vm644 = vweird.f32 %v637
      %vm645 = vmor %vm643, %vm644
      %v646 = vsel %vm645, %v637, %v642
      %v647 = vrsqrt.pop %v495
      %v648 = vmul.f32 %v647, %v495
      %v649 = vmul.f32 %v648, %v647
      %v650 = vmul.f32 0.5, %v649
      %v651 = vsub.f32 1.5, %v650
      %v652 = vmul.f32 %v647, %v651
      %vm653 = vweird.f32 %v495
      %vm654 = vweird.f32 %v647
      %vm655 = vmor %vm653, %vm654
      %v656 = vsel %vm655, %v647, %v652
      %v657 = vrsqrt.pop %v496
      %v658 = vmul.f32 %v657, %v496
      %v659 = vmul.f32 %v658, %v657
      %v660 = vmul.f32 0.5, %v659
      %v661 = vsub.f32 1.5, %v660
      %v662 = vmul.f32 %v657, %v661
      %vm663 = vweird.f32 %v496
      %vm664 = vweird.f32 %v657
      %vm665 = vmor %vm663, %vm664
      %v666 = vsel %vm665, %v657, %v662
      %v667 = vmul.f32 %v378, %v506
      %v668 = vmul.f32 %v379, %v516
      %v669 = vmul.f32 %v380, %v526
      %v670 = vmul.f32 %v381, %v536
      %v671 = vmul.f32 %v382, %v546
      %v672 = vmul.f32 %v383, %v556
      %v673 = vmul.f32 %v384, %v566
      %v674 = vmul.f32 %v385, %v576
      %v675 = vmul.f32 %v386, %v586
      %v676 = vmul.f32 %v387, %v596
      %v677 = vmul.f32 %v388, %v606
      %v678 = vmul.f32 %v389, %v616
      %v679 = vmul.f32 %v390, %v626
      %v680 = vmul.f32 %v391, %v636
      %v681 = vmul.f32 %v392, %v646
      %v682 = vmul.f32 %v393, %v656
      %v683 = vmul.f32 %v394, %v666
      %v685 = vperm.slane %v300, 0
      %v687 = vmul.f32 %v667, %v685
      %v688 = vmul.f32 %v668, %v685
      %v689 = vmul.f32 %v669, %v685
      %v690 = vmul.f32 %v670, %v685
      %v691 = vmul.f32 %v671, %v685
      %v692 = vmul.f32 %v672, %v685
      %v693 = vmul.f32 %v673, %v685
      %v694 = vmul.f32 %v674, %v685
      %v695 = vmul.f32 %v675, %v685
      %v696 = vmul.f32 %v676, %v685
      %v697 = vmul.f32 %v677, %v685
      %v698 = vmul.f32 %v678, %v685
      %v699 = vmul.f32 %v679, %v685
      %v700 = vmul.f32 %v680, %v685
      %v701 = vmul.f32 %v681, %v685
      %v702 = vmul.f32 %v682, %v685
      %v703 = vmul.f32 %v683, %v685
      %v705 = vperm.slane %v301, 0
      %v707 = vadd.f32 %v687, %v705
      %v708 = vadd.f32 %v688, %v705
      %v709 = vadd.f32 %v689, %v705
      %v710 = vadd.f32 %v690, %v705
      %v711 = vadd.f32 %v691, %v705
      %v712 = vadd.f32 %v692, %v705
      %v713 = vadd.f32 %v693, %v705
      %v714 = vadd.f32 %v694, %v705
      %v715 = vadd.f32 %v695, %v705
      %v716 = vadd.f32 %v696, %v705
      %v717 = vadd.f32 %v697, %v705
      %v718 = vadd.f32 %v698, %v705
      %v719 = vadd.f32 %v699, %v705
      %v720 = vadd.f32 %v700, %v705
      %v721 = vadd.f32 %v701, %v705
      %v722 = vadd.f32 %v702, %v705
      %v723 = vadd.f32 %v703, %v705
      %v724 = vpack.c.bf16 %v708, %v707
      %v725 = vpack.c.bf16 %v710, %v709
      %v726 = vpack.c.bf16 %v712, %v711
      %v727 = vpack.c.bf16 %v714, %v713
      %v728 = vpack.c.bf16 %v716, %v715
      %v729 = vpack.c.bf16 %v718, %v717
      %v730 = vpack.c.bf16 %v720, %v719
      %v731 = vpack.c.bf16 %v722, %v721
      %v732 = vpack.c.bf16 %v723, %v723
      %v733 = vld [vmem:[%s3] sm:$0xff]
      %v734 = vld [vmem:[%s3 + $0x8] sm:$0xff]
      %v735 = vld [vmem:[%s3 + $0x10] sm:$0xff]
      %v736 = vld [vmem:[%s3 + $0x18] sm:$0xff]
      %v737 = vld [vmem:[%s3 + $0x20] sm:$0xff]
      %v738 = vld [vmem:[%s3 + $0x28] sm:$0xff]
      %v739 = vld [vmem:[%s3 + $0x30] sm:$0xff]
      %v740 = vld [vmem:[%s3 + $0x38] sm:$0xff]
      %v741 = vld [vmem:[%s4] sm:$0x3]
      %v743 = vperm.slane %v741, 0
      %v744 = vperm.slane %v741, 1
      %v755 = vunpack.c.l.b16 %v733
      %v756 = vunpack.c.h.b16 %v733
      %v757 = vunpack.c.l.b16 %v734
      %v758 = vunpack.c.h.b16 %v734
      %v759 = vunpack.c.l.b16 %v735
      %v760 = vunpack.c.h.b16 %v735
      %v761 = vunpack.c.l.b16 %v736
      %v762 = vunpack.c.h.b16 %v736
      %v763 = vunpack.c.l.b16 %v737
      %v764 = vunpack.c.h.b16 %v737
      %v765 = vunpack.c.l.b16 %v738
      %v766 = vunpack.c.h.b16 %v738
      %v767 = vunpack.c.l.b16 %v739
      %v768 = vunpack.c.h.b16 %v739
      %v769 = vunpack.c.l.b16 %v740
      %v770 = vunpack.c.h.b16 %v740
      %v771 = vpack.c.b16 %v757, %v755
      %v772 = vpack.c.b16 %v758, %v756
      %v773 = vpack.c.b16 %v761, %v759
      %v774 = vpack.c.b16 %v762, %v760
      %v775 = vpack.c.b16 %v765, %v763
      %v776 = vpack.c.b16 %v766, %v764
      %v777 = vpack.c.b16 %v769, %v767
      %v778 = vpack.c.b16 %v770, %v768
      %v788 = vsel %vm302, %v724, 0
      %v791 = vsel %vm302, %v725, 0
      %v794 = vsel %vm302, %v726, 0
      %v797 = vsel %vm302, %v727, 0
      %v800 = vsel %vm302, %v728, 0
      %v803 = vsel %vm302, %v729, 0
      %v806 = vsel %vm302, %v730, 0
      %v809 = vsel %vm302, %v731, 0
      %v812 = vsel %vm302, %v732, 0
      %814 = vmatpush.bf16.msra.mxu0 0
      %815 = vmatpush.bf16.msra.mxu0 0
      %816 = vmatpush.bf16.msra.mxu0 0
      %817 = vmatpush.bf16.msra.mxu0 0
      %818 = vmatpush.bf16.msra.mxu0 %v777
      %819 = vmatpush.bf16.msra.mxu0 %v775
      %820 = vmatpush.bf16.msra.mxu0 %v773
      %821 = vmatpush.bf16.msra.mxu0 %v771
      %822 = vmatmul.bf16.gmra.mxu0 %v788
      %v823 = vpop.f32.mrf.mxu0
      %v824 = vadd.f32 %v743, %v823
      %v825 = vpop.f32.mrf.mxu0
      %v826 = vadd.f32 %v743, %v825
      %827 = vmatmul.bf16.gmra.mxu0 %v791
      %v828 = vpop.f32.mrf.mxu0
      %v829 = vadd.f32 %v743, %v828
      %v830 = vpop.f32.mrf.mxu0
      %v831 = vadd.f32 %v743, %v830
      %832 = vmatmul.bf16.gmra.mxu0 %v794
      %v833 = vpop.f32.mrf.mxu0
      %v834 = vadd.f32 %v743, %v833
      %v835 = vpop.f32.mrf.mxu0
      %v836 = vadd.f32 %v743, %v835
      %837 = vmatmul.bf16.gmra.mxu0 %v797
      %v838 = vpop.f32.mrf.mxu0
      %v839 = vadd.f32 %v743, %v838
      %v840 = vpop.f32.mrf.mxu0
      %v841 = vadd.f32 %v743, %v840
      %842 = vmatmul.bf16.gmra.mxu0 %v800
      %v843 = vpop.f32.mrf.mxu0
      %v844 = vadd.f32 %v743, %v843
      %v845 = vpop.f32.mrf.mxu0
      %v846 = vadd.f32 %v743, %v845
      %847 = vmatmul.bf16.gmra.mxu0 %v803
      %v848 = vpop.f32.mrf.mxu0
      %v849 = vadd.f32 %v743, %v848
      %v850 = vpop.f32.mrf.mxu0
      %v851 = vadd.f32 %v743, %v850
      %852 = vmatmul.bf16.gmra.mxu0 %v806
      %v853 = vpop.f32.mrf.mxu0
      %v854 = vadd.f32 %v743, %v853
      %v855 = vpop.f32.mrf.mxu0
      %v856 = vadd.f32 %v743, %v855
      %857 = vmatmul.bf16.gmra.mxu0 %v809
      %v858 = vpop.f32.mrf.mxu0
      %v859 = vadd.f32 %v743, %v858
      %v860 = vpop.f32.mrf.mxu0
      %v861 = vadd.f32 %v743, %v860
      %862 = vmatmul.bf16.gmra.mxu0 %v812
      %v863 = vpop.f32.mrf.mxu0
      %v864 = vadd.f32 %v743, %v863
      %v865 = vpop.f32.mrf.mxu0
      %866 = vdwg.mxu0
      %867 = vmatpush.bf16.msra.mxu0 0
      %868 = vmatpush.bf16.msra.mxu0 0
      %869 = vmatpush.bf16.msra.mxu0 0
      %870 = vmatpush.bf16.msra.mxu0 0
      %871 = vmatpush.bf16.msra.mxu0 %v778
      %872 = vmatpush.bf16.msra.mxu0 %v776
      %873 = vmatpush.bf16.msra.mxu0 %v774
      %874 = vmatpush.bf16.msra.mxu0 %v772
      %875 = vmatmul.bf16.gmra.mxu0 %v788
      %v876 = vpop.f32.mrf.mxu0
      %v877 = vadd.f32 %v744, %v876
      %v878 = vpop.f32.mrf.mxu0
      %v879 = vadd.f32 %v744, %v878
      %880 = vmatmul.bf16.gmra.mxu0 %v791
      %v881 = vpop.f32.mrf.mxu0
      %v882 = vadd.f32 %v744, %v881
      %v883 = vpop.f32.mrf.mxu0
      %v884 = vadd.f32 %v744, %v883
      %885 = vmatmul.bf16.gmra.mxu0 %v794
      %v886 = vpop.f32.mrf.mxu0
      %v887 = vadd.f32 %v744, %v886
      %v888 = vpop.f32.mrf.mxu0
      %v889 = vadd.f32 %v744, %v888
      %890 = vmatmul.bf16.gmra.mxu0 %v797
      %v891 = vpop.f32.mrf.mxu0
      %v892 = vadd.f32 %v744, %v891
      %v893 = vpop.f32.mrf.mxu0
      %v894 = vadd.f32 %v744, %v893
      %895 = vmatmul.bf16.gmra.mxu0 %v800
      %v896 = vpop.f32.mrf.mxu0
      %v897 = vadd.f32 %v744, %v896
      %v898 = vpop.f32.mrf.mxu0
      %v899 = vadd.f32 %v744, %v898
      %900 = vmatmul.bf16.gmra.mxu0 %v803
      %v901 = vpop.f32.mrf.mxu0
      %v902 = vadd.f32 %v744, %v901
      %v903 = vpop.f32.mrf.mxu0
      %v904 = vadd.f32 %v744, %v903
      %905 = vmatmul.bf16.gmra.mxu0 %v806
      %v906 = vpop.f32.mrf.mxu0
      %v907 = vadd.f32 %v744, %v906
      %v908 = vpop.f32.mrf.mxu0
      %v909 = vadd.f32 %v744, %v908
      %910 = vmatmul.bf16.gmra.mxu0 %v809
      %v911 = vpop.f32.mrf.mxu0
      %v912 = vadd.f32 %v744, %v911
      %v913 = vpop.f32.mrf.mxu0
      %v914 = vadd.f32 %v744, %v913
      %915 = vmatmul.bf16.gmra.mxu0 %v812
      %v916 = vpop.f32.mrf.mxu0
      %v917 = vadd.f32 %v744, %v916
      %v918 = vpop.f32.mrf.mxu0
      %919 = vdwg.mxu0
      %v920 = vmul.f32 %v824, 1.702
      %v921 = vmul.f32 %v877, 1.702
      %v922 = vmul.f32 %v826, 1.702
      %v923 = vmul.f32 %v879, 1.702
      %v924 = vmul.f32 %v829, 1.702
      %v925 = vmul.f32 %v882, 1.702
      %v926 = vmul.f32 %v831, 1.702
      %v927 = vmul.f32 %v884, 1.702
      %v928 = vmul.f32 %v834, 1.702
      %v929 = vmul.f32 %v887, 1.702
      %v930 = vmul.f32 %v836, 1.702
      %v931 = vmul.f32 %v889, 1.702
      %v932 = vmul.f32 %v839, 1.702
      %v933 = vmul.f32 %v892, 1.702
      %v934 = vmul.f32 %v841, 1.702
      %v935 = vmul.f32 %v894, 1.702
      %v936 = vmul.f32 %v844, 1.702
      %v937 = vmul.f32 %v897, 1.702
      %v938 = vmul.f32 %v846, 1.702
      %v939 = vmul.f32 %v899, 1.702
      %v940 = vmul.f32 %v849, 1.702
      %v941 = vmul.f32 %v902, 1.702
      %v942 = vmul.f32 %v851, 1.702
      %v943 = vmul.f32 %v904, 1.702
      %v944 = vmul.f32 %v854, 1.702
      %v945 = vmul.f32 %v907, 1.702
      %v946 = vmul.f32 %v856, 1.702
      %v947 = vmul.f32 %v909, 1.702
      %v948 = vmul.f32 %v859, 1.702
      %v949 = vmul.f32 %v912, 1.702
      %v950 = vmul.f32 %v861, 1.702
      %v951 = vmul.f32 %v914, 1.702
      %v952 = vmul.f32 %v864, 1.702
      %v953 = vmul.f32 %v917, 1.702
      %v954 = vxor.u32 %v920, 2147483648
      %v955 = vxor.u32 %v921, 2147483648
      %v956 = vxor.u32 %v922, 2147483648
      %v957 = vxor.u32 %v923, 2147483648
      %v958 = vxor.u32 %v924, 2147483648
      %v959 = vxor.u32 %v925, 2147483648
      %v960 = vxor.u32 %v926, 2147483648
      %v961 = vxor.u32 %v927, 2147483648
      %v962 = vxor.u32 %v928, 2147483648
      %v963 = vxor.u32 %v929, 2147483648
      %v964 = vxor.u32 %v930, 2147483648
      %v965 = vxor.u32 %v931, 2147483648
      %v966 = vxor.u32 %v932, 2147483648
      %v967 = vxor.u32 %v933, 2147483648
      %v968 = vxor.u32 %v934, 2147483648
      %v969 = vxor.u32 %v935, 2147483648
      %v970 = vxor.u32 %v936, 2147483648
      %v971 = vxor.u32 %v937, 2147483648
      %v972 = vxor.u32 %v938, 2147483648
      %v973 = vxor.u32 %v939, 2147483648
      %v974 = vxor.u32 %v940, 2147483648
      %v975 = vxor.u32 %v941, 2147483648
      %v976 = vxor.u32 %v942, 2147483648
      %v977 = vxor.u32 %v943, 2147483648
      %v978 = vxor.u32 %v944, 2147483648
      %v979 = vxor.u32 %v945, 2147483648
      %v980 = vxor.u32 %v946, 2147483648
      %v981 = vxor.u32 %v947, 2147483648
      %v982 = vxor.u32 %v948, 2147483648
      %v983 = vxor.u32 %v949, 2147483648
      %v984 = vxor.u32 %v950, 2147483648
      %v985 = vxor.u32 %v951, 2147483648
      %v986 = vxor.u32 %v952, 2147483648
      %v987 = vxor.u32 %v953, 2147483648
      %v988 = vmul.f32 %v954, 1.442695
      %v989 = vpow.pop %v988
      %v990 = vmul.f32 %v955, 1.442695
      %v991 = vpow.pop %v990
      %v992 = vmul.f32 %v956, 1.442695
      %v993 = vpow.pop %v992
      %v994 = vmul.f32 %v957, 1.442695
      %v995 = vpow.pop %v994
      %v996 = vmul.f32 %v958, 1.442695
      %v997 = vpow.pop %v996
      %v998 = vmul.f32 %v959, 1.442695
      %v999 = vpow.pop %v998
      %v1000 = vmul.f32 %v960, 1.442695
      %v1001 = vpow.pop %v1000
      %v1002 = vmul.f32 %v961, 1.442695
      %v1003 = vpow.pop %v1002
      %v1004 = vmul.f32 %v962, 1.442695
      %v1005 = vpow.pop %v1004
      %v1006 = vmul.f32 %v963, 1.442695
      %v1007 = vpow.pop %v1006
      %v1008 = vmul.f32 %v964, 1.442695
      %v1009 = vpow.pop %v1008
      %v1010 = vmul.f32 %v965, 1.442695
      %v1011 = vpow.pop %v1010
      %v1012 = vmul.f32 %v966, 1.442695
      %v1013 = vpow.pop %v1012
      %v1014 = vmul.f32 %v967, 1.442695
      %v1015 = vpow.pop %v1014
      %v1016 = vmul.f32 %v968, 1.442695
      %v1017 = vpow.pop %v1016
      %v1018 = vmul.f32 %v969, 1.442695
      %v1019 = vpow.pop %v1018
      %v1020 = vmul.f32 %v970, 1.442695
      %v1021 = vpow.pop %v1020
      %v1022 = vmul.f32 %v971, 1.442695
      %v1023 = vpow.pop %v1022
      %v1024 = vmul.f32 %v972, 1.442695
      %v1025 = vpow.pop %v1024
      %v1026 = vmul.f32 %v973, 1.442695
      %v1027 = vpow.pop %v1026
      %v1028 = vmul.f32 %v974, 1.442695
      %v1029 = vpow.pop %v1028
      %v1030 = vmul.f32 %v975, 1.442695
      %v1031 = vpow.pop %v1030
      %v1032 = vmul.f32 %v976, 1.442695
      %v1033 = vpow.pop %v1032
      %v1034 = vmul.f32 %v977, 1.442695
      %v1035 = vpow.pop %v1034
      %v1036 = vmul.f32 %v978, 1.442695
      %v1037 = vpow.pop %v1036
      %v1038 = vmul.f32 %v979, 1.442695
      %v1039 = vpow.pop %v1038
      %v1040 = vmul.f32 %v980, 1.442695
      %v1041 = vpow.pop %v1040
      %v1042 = vmul.f32 %v981, 1.442695
      %v1043 = vpow.pop %v1042
      %v1044 = vmul.f32 %v982, 1.442695
      %v1045 = vpow.pop %v1044
      %v1046 = vmul.f32 %v983, 1.442695
      %v1047 = vpow.pop %v1046
      %v1048 = vmul.f32 %v984, 1.442695
      %v1049 = vpow.pop %v1048
      %v1050 = vmul.f32 %v985, 1.442695
      %v1051 = vpow.pop %v1050
      %v1052 = vmul.f32 %v986, 1.442695
      %v1053 = vpow.pop %v1052
      %v1054 = vmul.f32 %v987, 1.442695
      %v1055 = vpow.pop %v1054
      %v1056 = vadd.f32 %v989, 1.0
      %v1057 = vadd.f32 %v991, 1.0
      %v1058 = vadd.f32 %v993, 1.0
      %v1059 = vadd.f32 %v995, 1.0
      %v1060 = vadd.f32 %v997, 1.0
      %v1061 = vadd.f32 %v999, 1.0
      %v1062 = vadd.f32 %v1001, 1.0
      %v1063 = vadd.f32 %v1003, 1.0
      %v1064 = vadd.f32 %v1005, 1.0
      %v1065 = vadd.f32 %v1007, 1.0
      %v1066 = vadd.f32 %v1009, 1.0
      %v1067 = vadd.f32 %v1011, 1.0
      %v1068 = vadd.f32 %v1013, 1.0
      %v1069 = vadd.f32 %v1015, 1.0
      %v1070 = vadd.f32 %v1017, 1.0
      %v1071 = vadd.f32 %v1019, 1.0
      %v1072 = vadd.f32 %v1021, 1.0
      %v1073 = vadd.f32 %v1023, 1.0
      %v1074 = vadd.f32 %v1025, 1.0
      %v1075 = vadd.f32 %v1027, 1.0
      %v1076 = vadd.f32 %v1029, 1.0
      %v1077 = vadd.f32 %v1031, 1.0
      %v1078 = vadd.f32 %v1033, 1.0
      %v1079 = vadd.f32 %v1035, 1.0
      %v1080 = vadd.f32 %v1037, 1.0
      %v1081 = vadd.f32 %v1039, 1.0
      %v1082 = vadd.f32 %v1041, 1.0
      %v1083 = vadd.f32 %v1043, 1.0
      %v1084 = vadd.f32 %v1045, 1.0
      %v1085 = vadd.f32 %v1047, 1.0
      %v1086 = vadd.f32 %v1049, 1.0
      %v1087 = vadd.f32 %v1051, 1.0
      %v1088 = vadd.f32 %v1053, 1.0
      %v1089 = vadd.f32 %v1055, 1.0
      %v1090 = vrcp.pop %v1056
      %v1091 = vmul.f32 %v1056, %v1090
      %v1092 = vsub.f32 1.0, %v1091
      %v1093 = vmul.f32 %v1090, %v1092
      %v1094 = vadd.f32 %v1090, %v1093
      %vm1095 = vweird.f32 %v1056
      %vm1096 = vweird.f32 %v1090
      %vm1097 = vmor %vm1095, %vm1096
      %v1098 = vsel %vm1097, %v1090, %v1094
      %v1099 = vand.u32 2147483647, %v1056
      %vm1100 = vcmp.eq.f32.partialorder %v1099, 8.507059e+37
      %v1101 = vand.u32 %v1056, 2147483648
      %v1102 = vor.u32 1.1754944e-38, %v1101
      %v1103 = vsel %vm1100, %v1102, %v1098
      %v1104 = vmul.f32 1.0, %v1103
      %v1105 = vrcp.pop %v1057
      %v1106 = vmul.f32 %v1057, %v1105
      %v1107 = vsub.f32 1.0, %v1106
      %v1108 = vmul.f32 %v1105, %v1107
      %v1109 = vadd.f32 %v1105, %v1108
      %vm1110 = vweird.f32 %v1057
      %vm1111 = vweird.f32 %v1105
      %vm1112 = vmor %vm1110, %vm1111
      %v1113 = vsel %vm1112, %v1105, %v1109
      %v1114 = vand.u32 2147483647, %v1057
      %vm1115 = vcmp.eq.f32.partialorder %v1114, 8.507059e+37
      %v1116 = vand.u32 %v1057, 2147483648
      %v1117 = vor.u32 1.1754944e-38, %v1116
      %v1118 = vsel %vm1115, %v1117, %v1113
      %v1119 = vmul.f32 1.0, %v1118
      %v1120 = vrcp.pop %v1058
      %v1121 = vmul.f32 %v1058, %v1120
      %v1122 = vsub.f32 1.0, %v1121
      %v1123 = vmul.f32 %v1120, %v1122
      %v1124 = vadd.f32 %v1120, %v1123
      %vm1125 = vweird.f32 %v1058
      %vm1126 = vweird.f32 %v1120
      %vm1127 = vmor %vm1125, %vm1126
      %v1128 = vsel %vm1127, %v1120, %v1124
      %v1129 = vand.u32 2147483647, %v1058
      %vm1130 = vcmp.eq.f32.partialorder %v1129, 8.507059e+37
      %v1131 = vand.u32 %v1058, 2147483648
      %v1132 = vor.u32 1.1754944e-38, %v1131
      %v1133 = vsel %vm1130, %v1132, %v1128
      %v1134 = vmul.f32 1.0, %v1133
      %v1135 = vrcp.pop %v1059
      %v1136 = vmul.f32 %v1059, %v1135
      %v1137 = vsub.f32 1.0, %v1136
      %v1138 = vmul.f32 %v1135, %v1137
      %v1139 = vadd.f32 %v1135, %v1138
      %vm1140 = vweird.f32 %v1059
      %vm1141 = vweird.f32 %v1135
      %vm1142 = vmor %vm1140, %vm1141
      %v1143 = vsel %vm1142, %v1135, %v1139
      %v1144 = vand.u32 2147483647, %v1059
      %vm1145 = vcmp.eq.f32.partialorder %v1144, 8.507059e+37
      %v1146 = vand.u32 %v1059, 2147483648
      %v1147 = vor.u32 1.1754944e-38, %v1146
      %v1148 = vsel %vm1145, %v1147, %v1143
      %v1149 = vmul.f32 1.0, %v1148
      %v1150 = vrcp.pop %v1060
      %v1151 = vmul.f32 %v1060, %v1150
      %v1152 = vsub.f32 1.0, %v1151
      %v1153 = vmul.f32 %v1150, %v1152
      %v1154 = vadd.f32 %v1150, %v1153
      %vm1155 = vweird.f32 %v1060
      %vm1156 = vweird.f32 %v1150
      %vm1157 = vmor %vm1155, %vm1156
      %v1158 = vsel %vm1157, %v1150, %v1154
      %v1159 = vand.u32 2147483647, %v1060
      %vm1160 = vcmp.eq.f32.partialorder %v1159, 8.507059e+37
      %v1161 = vand.u32 %v1060, 2147483648
      %v1162 = vor.u32 1.1754944e-38, %v1161
      %v1163 = vsel %vm1160, %v1162, %v1158
      %v1164 = vmul.f32 1.0, %v1163
      %v1165 = vrcp.pop %v1061
      %v1166 = vmul.f32 %v1061, %v1165
      %v1167 = vsub.f32 1.0, %v1166
      %v1168 = vmul.f32 %v1165, %v1167
      %v1169 = vadd.f32 %v1165, %v1168
      %vm1170 = vweird.f32 %v1061
      %vm1171 = vweird.f32 %v1165
      %vm1172 = vmor %vm1170, %vm1171
      %v1173 = vsel %vm1172, %v1165, %v1169
      %v1174 = vand.u32 2147483647, %v1061
      %vm1175 = vcmp.eq.f32.partialorder %v1174, 8.507059e+37
      %v1176 = vand.u32 %v1061, 2147483648
      %v1177 = vor.u32 1.1754944e-38, %v1176
      %v1178 = vsel %vm1175, %v1177, %v1173
      %v1179 = vmul.f32 1.0, %v1178
      %v1180 = vrcp.pop %v1062
      %v1181 = vmul.f32 %v1062, %v1180
      %v1182 = vsub.f32 1.0, %v1181
      %v1183 = vmul.f32 %v1180, %v1182
      %v1184 = vadd.f32 %v1180, %v1183
      %vm1185 = vweird.f32 %v1062
      %vm1186 = vweird.f32 %v1180
      %vm1187 = vmor %vm1185, %vm1186
      %v1188 = vsel %vm1187, %v1180, %v1184
      %v1189 = vand.u32 2147483647, %v1062
      %vm1190 = vcmp.eq.f32.partialorder %v1189, 8.507059e+37
      %v1191 = vand.u32 %v1062, 2147483648
      %v1192 = vor.u32 1.1754944e-38, %v1191
      %v1193 = vsel %vm1190, %v1192, %v1188
      %v1194 = vmul.f32 1.0, %v1193
      %v1195 = vrcp.pop %v1063
      %v1196 = vmul.f32 %v1063, %v1195
      %v1197 = vsub.f32 1.0, %v1196
      %v1198 = vmul.f32 %v1195, %v1197
      %v1199 = vadd.f32 %v1195, %v1198
      %vm1200 = vweird.f32 %v1063
      %vm1201 = vweird.f32 %v1195
      %vm1202 = vmor %vm1200, %vm1201
      %v1203 = vsel %vm1202, %v1195, %v1199
      %v1204 = vand.u32 2147483647, %v1063
      %vm1205 = vcmp.eq.f32.partialorder %v1204, 8.507059e+37
      %v1206 = vand.u32 %v1063, 2147483648
      %v1207 = vor.u32 1.1754944e-38, %v1206
      %v1208 = vsel %vm1205, %v1207, %v1203
      %v1209 = vmul.f32 1.0, %v1208
      %v1210 = vrcp.pop %v1064
      %v1211 = vmul.f32 %v1064, %v1210
      %v1212 = vsub.f32 1.0, %v1211
      %v1213 = vmul.f32 %v1210, %v1212
      %v1214 = vadd.f32 %v1210, %v1213
      %vm1215 = vweird.f32 %v1064
      %vm1216 = vweird.f32 %v1210
      %vm1217 = vmor %vm1215, %vm1216
      %v1218 = vsel %vm1217, %v1210, %v1214
      %v1219 = vand.u32 2147483647, %v1064
      %vm1220 = vcmp.eq.f32.partialorder %v1219, 8.507059e+37
      %v1221 = vand.u32 %v1064, 2147483648
      %v1222 = vor.u32 1.1754944e-38, %v1221
      %v1223 = vsel %vm1220, %v1222, %v1218
      %v1224 = vmul.f32 1.0, %v1223
      %v1225 = vrcp.pop %v1065
      %v1226 = vmul.f32 %v1065, %v1225
      %v1227 = vsub.f32 1.0, %v1226
      %v1228 = vmul.f32 %v1225, %v1227
      %v1229 = vadd.f32 %v1225, %v1228
      %vm1230 = vweird.f32 %v1065
      %vm1231 = vweird.f32 %v1225
      %vm1232 = vmor %vm1230, %vm1231
      %v1233 = vsel %vm1232, %v1225, %v1229
      %v1234 = vand.u32 2147483647, %v1065
      %vm1235 = vcmp.eq.f32.partialorder %v1234, 8.507059e+37
      %v1236 = vand.u32 %v1065, 2147483648
      %v1237 = vor.u32 1.1754944e-38, %v1236
      %v1238 = vsel %vm1235, %v1237, %v1233
      %v1239 = vmul.f32 1.0, %v1238
      %v1240 = vrcp.pop %v1066
      %v1241 = vmul.f32 %v1066, %v1240
      %v1242 = vsub.f32 1.0, %v1241
      %v1243 = vmul.f32 %v1240, %v1242
      %v1244 = vadd.f32 %v1240, %v1243
      %vm1245 = vweird.f32 %v1066
      %vm1246 = vweird.f32 %v1240
      %vm1247 = vmor %vm1245, %vm1246
      %v1248 = vsel %vm1247, %v1240, %v1244
      %v1249 = vand.u32 2147483647, %v1066
      %vm1250 = vcmp.eq.f32.partialorder %v1249, 8.507059e+37
      %v1251 = vand.u32 %v1066, 2147483648
      %v1252 = vor.u32 1.1754944e-38, %v1251
      %v1253 = vsel %vm1250, %v1252, %v1248
      %v1254 = vmul.f32 1.0, %v1253
      %v1255 = vrcp.pop %v1067
      %v1256 = vmul.f32 %v1067, %v1255
      %v1257 = vsub.f32 1.0, %v1256
      %v1258 = vmul.f32 %v1255, %v1257
      %v1259 = vadd.f32 %v1255, %v1258
      %vm1260 = vweird.f32 %v1067
      %vm1261 = vweird.f32 %v1255
      %vm1262 = vmor %vm1260, %vm1261
      %v1263 = vsel %vm1262, %v1255, %v1259
      %v1264 = vand.u32 2147483647, %v1067
      %vm1265 = vcmp.eq.f32.partialorder %v1264, 8.507059e+37
      %v1266 = vand.u32 %v1067, 2147483648
      %v1267 = vor.u32 1.1754944e-38, %v1266
      %v1268 = vsel %vm1265, %v1267, %v1263
      %v1269 = vmul.f32 1.0, %v1268
      %v1270 = vrcp.pop %v1068
      %v1271 = vmul.f32 %v1068, %v1270
      %v1272 = vsub.f32 1.0, %v1271
      %v1273 = vmul.f32 %v1270, %v1272
      %v1274 = vadd.f32 %v1270, %v1273
      %vm1275 = vweird.f32 %v1068
      %vm1276 = vweird.f32 %v1270
      %vm1277 = vmor %vm1275, %vm1276
      %v1278 = vsel %vm1277, %v1270, %v1274
      %v1279 = vand.u32 2147483647, %v1068
      %vm1280 = vcmp.eq.f32.partialorder %v1279, 8.507059e+37
      %v1281 = vand.u32 %v1068, 2147483648
      %v1282 = vor.u32 1.1754944e-38, %v1281
      %v1283 = vsel %vm1280, %v1282, %v1278
      %v1284 = vmul.f32 1.0, %v1283
      %v1285 = vrcp.pop %v1069
      %v1286 = vmul.f32 %v1069, %v1285
      %v1287 = vsub.f32 1.0, %v1286
      %v1288 = vmul.f32 %v1285, %v1287
      %v1289 = vadd.f32 %v1285, %v1288
      %vm1290 = vweird.f32 %v1069
      %vm1291 = vweird.f32 %v1285
      %vm1292 = vmor %vm1290, %vm1291
      %v1293 = vsel %vm1292, %v1285, %v1289
      %v1294 = vand.u32 2147483647, %v1069
      %vm1295 = vcmp.eq.f32.partialorder %v1294, 8.507059e+37
      %v1296 = vand.u32 %v1069, 2147483648
      %v1297 = vor.u32 1.1754944e-38, %v1296
      %v1298 = vsel %vm1295, %v1297, %v1293
      %v1299 = vmul.f32 1.0, %v1298
      %v1300 = vrcp.pop %v1070
      %v1301 = vmul.f32 %v1070, %v1300
      %v1302 = vsub.f32 1.0, %v1301
      %v1303 = vmul.f32 %v1300, %v1302
      %v1304 = vadd.f32 %v1300, %v1303
      %vm1305 = vweird.f32 %v1070
      %vm1306 = vweird.f32 %v1300
      %vm1307 = vmor %vm1305, %vm1306
      %v1308 = vsel %vm1307, %v1300, %v1304
      %v1309 = vand.u32 2147483647, %v1070
      %vm1310 = vcmp.eq.f32.partialorder %v1309, 8.507059e+37
      %v1311 = vand.u32 %v1070, 2147483648
      %v1312 = vor.u32 1.1754944e-38, %v1311
      %v1313 = vsel %vm1310, %v1312, %v1308
      %v1314 = vmul.f32 1.0, %v1313
      %v1315 = vrcp.pop %v1071
      %v1316 = vmul.f32 %v1071, %v1315
      %v1317 = vsub.f32 1.0, %v1316
      %v1318 = vmul.f32 %v1315, %v1317
      %v1319 = vadd.f32 %v1315, %v1318
      %vm1320 = vweird.f32 %v1071
      %vm1321 = vweird.f32 %v1315
      %vm1322 = vmor %vm1320, %vm1321
      %v1323 = vsel %vm1322, %v1315, %v1319
      %v1324 = vand.u32 2147483647, %v1071
      %vm1325 = vcmp.eq.f32.partialorder %v1324, 8.507059e+37
      %v1326 = vand.u32 %v1071, 2147483648
      %v1327 = vor.u32 1.1754944e-38, %v1326
      %v1328 = vsel %vm1325, %v1327, %v1323
      %v1329 = vmul.f32 1.0, %v1328
      %v1330 = vrcp.pop %v1072
      %v1331 = vmul.f32 %v1072, %v1330
      %v1332 = vsub.f32 1.0, %v1331
      %v1333 = vmul.f32 %v1330, %v1332
      %v1334 = vadd.f32 %v1330, %v1333
      %vm1335 = vweird.f32 %v1072
      %vm1336 = vweird.f32 %v1330
      %vm1337 = vmor %vm1335, %vm1336
      %v1338 = vsel %vm1337, %v1330, %v1334
      %v1339 = vand.u32 2147483647, %v1072
      %vm1340 = vcmp.eq.f32.partialorder %v1339, 8.507059e+37
      %v1341 = vand.u32 %v1072, 2147483648
      %v1342 = vor.u32 1.1754944e-38, %v1341
      %v1343 = vsel %vm1340, %v1342, %v1338
      %v1344 = vmul.f32 1.0, %v1343
      %v1345 = vrcp.pop %v1073
      %v1346 = vmul.f32 %v1073, %v1345
      %v1347 = vsub.f32 1.0, %v1346
      %v1348 = vmul.f32 %v1345, %v1347
      %v1349 = vadd.f32 %v1345, %v1348
      %vm1350 = vweird.f32 %v1073
      %vm1351 = vweird.f32 %v1345
      %vm1352 = vmor %vm1350, %vm1351
      %v1353 = vsel %vm1352, %v1345, %v1349
      %v1354 = vand.u32 2147483647, %v1073
      %vm1355 = vcmp.eq.f32.partialorder %v1354, 8.507059e+37
      %v1356 = vand.u32 %v1073, 2147483648
      %v1357 = vor.u32 1.1754944e-38, %v1356
      %v1358 = vsel %vm1355, %v1357, %v1353
      %v1359 = vmul.f32 1.0, %v1358
      %v1360 = vrcp.pop %v1074
      %v1361 = vmul.f32 %v1074, %v1360
      %v1362 = vsub.f32 1.0, %v1361
      %v1363 = vmul.f32 %v1360, %v1362
      %v1364 = vadd.f32 %v1360, %v1363
      %vm1365 = vweird.f32 %v1074
      %vm1366 = vweird.f32 %v1360
      %vm1367 = vmor %vm1365, %vm1366
      %v1368 = vsel %vm1367, %v1360, %v1364
      %v1369 = vand.u32 2147483647, %v1074
      %vm1370 = vcmp.eq.f32.partialorder %v1369, 8.507059e+37
      %v1371 = vand.u32 %v1074, 2147483648
      %v1372 = vor.u32 1.1754944e-38, %v1371
      %v1373 = vsel %vm1370, %v1372, %v1368
      %v1374 = vmul.f32 1.0, %v1373
      %v1375 = vrcp.pop %v1075
      %v1376 = vmul.f32 %v1075, %v1375
      %v1377 = vsub.f32 1.0, %v1376
      %v1378 = vmul.f32 %v1375, %v1377
      %v1379 = vadd.f32 %v1375, %v1378
      %vm1380 = vweird.f32 %v1075
      %vm1381 = vweird.f32 %v1375
      %vm1382 = vmor %vm1380, %vm1381
      %v1383 = vsel %vm1382, %v1375, %v1379
      %v1384 = vand.u32 2147483647, %v1075
      %vm1385 = vcmp.eq.f32.partialorder %v1384, 8.507059e+37
      %v1386 = vand.u32 %v1075, 2147483648
      %v1387 = vor.u32 1.1754944e-38, %v1386
      %v1388 = vsel %vm1385, %v1387, %v1383
      %v1389 = vmul.f32 1.0, %v1388
      %v1390 = vrcp.pop %v1076
      %v1391 = vmul.f32 %v1076, %v1390
      %v1392 = vsub.f32 1.0, %v1391
      %v1393 = vmul.f32 %v1390, %v1392
      %v1394 = vadd.f32 %v1390, %v1393
      %vm1395 = vweird.f32 %v1076
      %vm1396 = vweird.f32 %v1390
      %vm1397 = vmor %vm1395, %vm1396
      %v1398 = vsel %vm1397, %v1390, %v1394
      %v1399 = vand.u32 2147483647, %v1076
      %vm1400 = vcmp.eq.f32.partialorder %v1399, 8.507059e+37
      %v1401 = vand.u32 %v1076, 2147483648
      %v1402 = vor.u32 1.1754944e-38, %v1401
      %v1403 = vsel %vm1400, %v1402, %v1398
      %v1404 = vmul.f32 1.0, %v1403
      %v1405 = vrcp.pop %v1077
      %v1406 = vmul.f32 %v1077, %v1405
      %v1407 = vsub.f32 1.0, %v1406
      %v1408 = vmul.f32 %v1405, %v1407
      %v1409 = vadd.f32 %v1405, %v1408
      %vm1410 = vweird.f32 %v1077
      %vm1411 = vweird.f32 %v1405
      %vm1412 = vmor %vm1410, %vm1411
      %v1413 = vsel %vm1412, %v1405, %v1409
      %v1414 = vand.u32 2147483647, %v1077
      %vm1415 = vcmp.eq.f32.partialorder %v1414, 8.507059e+37
      %v1416 = vand.u32 %v1077, 2147483648
      %v1417 = vor.u32 1.1754944e-38, %v1416
      %v1418 = vsel %vm1415, %v1417, %v1413
      %v1419 = vmul.f32 1.0, %v1418
      %v1420 = vrcp.pop %v1078
      %v1421 = vmul.f32 %v1078, %v1420
      %v1422 = vsub.f32 1.0, %v1421
      %v1423 = vmul.f32 %v1420, %v1422
      %v1424 = vadd.f32 %v1420, %v1423
      %vm1425 = vweird.f32 %v1078
      %vm1426 = vweird.f32 %v1420
      %vm1427 = vmor %vm1425, %vm1426
      %v1428 = vsel %vm1427, %v1420, %v1424
      %v1429 = vand.u32 2147483647, %v1078
      %vm1430 = vcmp.eq.f32.partialorder %v1429, 8.507059e+37
      %v1431 = vand.u32 %v1078, 2147483648
      %v1432 = vor.u32 1.1754944e-38, %v1431
      %v1433 = vsel %vm1430, %v1432, %v1428
      %v1434 = vmul.f32 1.0, %v1433
      %v1435 = vrcp.pop %v1079
      %v1436 = vmul.f32 %v1079, %v1435
      %v1437 = vsub.f32 1.0, %v1436
      %v1438 = vmul.f32 %v1435, %v1437
      %v1439 = vadd.f32 %v1435, %v1438
      %vm1440 = vweird.f32 %v1079
      %vm1441 = vweird.f32 %v1435
      %vm1442 = vmor %vm1440, %vm1441
      %v1443 = vsel %vm1442, %v1435, %v1439
      %v1444 = vand.u32 2147483647, %v1079
      %vm1445 = vcmp.eq.f32.partialorder %v1444, 8.507059e+37
      %v1446 = vand.u32 %v1079, 2147483648
      %v1447 = vor.u32 1.1754944e-38, %v1446
      %v1448 = vsel %vm1445, %v1447, %v1443
      %v1449 = vmul.f32 1.0, %v1448
      %v1450 = vrcp.pop %v1080
      %v1451 = vmul.f32 %v1080, %v1450
      %v1452 = vsub.f32 1.0, %v1451
      %v1453 = vmul.f32 %v1450, %v1452
      %v1454 = vadd.f32 %v1450, %v1453
      %vm1455 = vweird.f32 %v1080
      %vm1456 = vweird.f32 %v1450
      %vm1457 = vmor %vm1455, %vm1456
      %v1458 = vsel %vm1457, %v1450, %v1454
      %v1459 = vand.u32 2147483647, %v1080
      %vm1460 = vcmp.eq.f32.partialorder %v1459, 8.507059e+37
      %v1461 = vand.u32 %v1080, 2147483648
      %v1462 = vor.u32 1.1754944e-38, %v1461
      %v1463 = vsel %vm1460, %v1462, %v1458
      %v1464 = vmul.f32 1.0, %v1463
      %v1465 = vrcp.pop %v1081
      %v1466 = vmul.f32 %v1081, %v1465
      %v1467 = vsub.f32 1.0, %v1466
      %v1468 = vmul.f32 %v1465, %v1467
      %v1469 = vadd.f32 %v1465, %v1468
      %vm1470 = vweird.f32 %v1081
      %vm1471 = vweird.f32 %v1465
      %vm1472 = vmor %vm1470, %vm1471
      %v1473 = vsel %vm1472, %v1465, %v1469
      %v1474 = vand.u32 2147483647, %v1081
      %vm1475 = vcmp.eq.f32.partialorder %v1474, 8.507059e+37
      %v1476 = vand.u32 %v1081, 2147483648
      %v1477 = vor.u32 1.1754944e-38, %v1476
      %v1478 = vsel %vm1475, %v1477, %v1473
      %v1479 = vmul.f32 1.0, %v1478
      %v1480 = vrcp.pop %v1082
      %v1481 = vmul.f32 %v1082, %v1480
      %v1482 = vsub.f32 1.0, %v1481
      %v1483 = vmul.f32 %v1480, %v1482
      %v1484 = vadd.f32 %v1480, %v1483
      %vm1485 = vweird.f32 %v1082
      %vm1486 = vweird.f32 %v1480
      %vm1487 = vmor %vm1485, %vm1486
      %v1488 = vsel %vm1487, %v1480, %v1484
      %v1489 = vand.u32 2147483647, %v1082
      %vm1490 = vcmp.eq.f32.partialorder %v1489, 8.507059e+37
      %v1491 = vand.u32 %v1082, 2147483648
      %v1492 = vor.u32 1.1754944e-38, %v1491
      %v1493 = vsel %vm1490, %v1492, %v1488
      %v1494 = vmul.f32 1.0, %v1493
      %v1495 = vrcp.pop %v1083
      %v1496 = vmul.f32 %v1083, %v1495
      %v1497 = vsub.f32 1.0, %v1496
      %v1498 = vmul.f32 %v1495, %v1497
      %v1499 = vadd.f32 %v1495, %v1498
      %vm1500 = vweird.f32 %v1083
      %vm1501 = vweird.f32 %v1495
      %vm1502 = vmor %vm1500, %vm1501
      %v1503 = vsel %vm1502, %v1495, %v1499
      %v1504 = vand.u32 2147483647, %v1083
      %vm1505 = vcmp.eq.f32.partialorder %v1504, 8.507059e+37
      %v1506 = vand.u32 %v1083, 2147483648
      %v1507 = vor.u32 1.1754944e-38, %v1506
      %v1508 = vsel %vm1505, %v1507, %v1503
      %v1509 = vmul.f32 1.0, %v1508
      %v1510 = vrcp.pop %v1084
      %v1511 = vmul.f32 %v1084, %v1510
      %v1512 = vsub.f32 1.0, %v1511
      %v1513 = vmul.f32 %v1510, %v1512
      %v1514 = vadd.f32 %v1510, %v1513
      %vm1515 = vweird.f32 %v1084
      %vm1516 = vweird.f32 %v1510
      %vm1517 = vmor %vm1515, %vm1516
      %v1518 = vsel %vm1517, %v1510, %v1514
      %v1519 = vand.u32 2147483647, %v1084
      %vm1520 = vcmp.eq.f32.partialorder %v1519, 8.507059e+37
      %v1521 = vand.u32 %v1084, 2147483648
      %v1522 = vor.u32 1.1754944e-38, %v1521
      %v1523 = vsel %vm1520, %v1522, %v1518
      %v1524 = vmul.f32 1.0, %v1523
      %v1525 = vrcp.pop %v1085
      %v1526 = vmul.f32 %v1085, %v1525
      %v1527 = vsub.f32 1.0, %v1526
      %v1528 = vmul.f32 %v1525, %v1527
      %v1529 = vadd.f32 %v1525, %v1528
      %vm1530 = vweird.f32 %v1085
      %vm1531 = vweird.f32 %v1525
      %vm1532 = vmor %vm1530, %vm1531
      %v1533 = vsel %vm1532, %v1525, %v1529
      %v1534 = vand.u32 2147483647, %v1085
      %vm1535 = vcmp.eq.f32.partialorder %v1534, 8.507059e+37
      %v1536 = vand.u32 %v1085, 2147483648
      %v1537 = vor.u32 1.1754944e-38, %v1536
      %v1538 = vsel %vm1535, %v1537, %v1533
      %v1539 = vmul.f32 1.0, %v1538
      %v1540 = vrcp.pop %v1086
      %v1541 = vmul.f32 %v1086, %v1540
      %v1542 = vsub.f32 1.0, %v1541
      %v1543 = vmul.f32 %v1540, %v1542
      %v1544 = vadd.f32 %v1540, %v1543
      %vm1545 = vweird.f32 %v1086
      %vm1546 = vweird.f32 %v1540
      %vm1547 = vmor %vm1545, %vm1546
      %v1548 = vsel %vm1547, %v1540, %v1544
      %v1549 = vand.u32 2147483647, %v1086
      %vm1550 = vcmp.eq.f32.partialorder %v1549, 8.507059e+37
      %v1551 = vand.u32 %v1086, 2147483648
      %v1552 = vor.u32 1.1754944e-38, %v1551
      %v1553 = vsel %vm1550, %v1552, %v1548
      %v1554 = vmul.f32 1.0, %v1553
      %v1555 = vrcp.pop %v1087
      %v1556 = vmul.f32 %v1087, %v1555
      %v1557 = vsub.f32 1.0, %v1556
      %v1558 = vmul.f32 %v1555, %v1557
      %v1559 = vadd.f32 %v1555, %v1558
      %vm1560 = vweird.f32 %v1087
      %vm1561 = vweird.f32 %v1555
      %vm1562 = vmor %vm1560, %vm1561
      %v1563 = vsel %vm1562, %v1555, %v1559
      %v1564 = vand.u32 2147483647, %v1087
      %vm1565 = vcmp.eq.f32.partialorder %v1564, 8.507059e+37
      %v1566 = vand.u32 %v1087, 2147483648
      %v1567 = vor.u32 1.1754944e-38, %v1566
      %v1568 = vsel %vm1565, %v1567, %v1563
      %v1569 = vmul.f32 1.0, %v1568
      %v1570 = vrcp.pop %v1088
      %v1571 = vmul.f32 %v1088, %v1570
      %v1572 = vsub.f32 1.0, %v1571
      %v1573 = vmul.f32 %v1570, %v1572
      %v1574 = vadd.f32 %v1570, %v1573
      %vm1575 = vweird.f32 %v1088
      %vm1576 = vweird.f32 %v1570
      %vm1577 = vmor %vm1575, %vm1576
      %v1578 = vsel %vm1577, %v1570, %v1574
      %v1579 = vand.u32 2147483647, %v1088
      %vm1580 = vcmp.eq.f32.partialorder %v1579, 8.507059e+37
      %v1581 = vand.u32 %v1088, 2147483648
      %v1582 = vor.u32 1.1754944e-38, %v1581
      %v1583 = vsel %vm1580, %v1582, %v1578
      %v1584 = vmul.f32 1.0, %v1583
      %v1585 = vrcp.pop %v1089
      %v1586 = vmul.f32 %v1089, %v1585
      %v1587 = vsub.f32 1.0, %v1586
      %v1588 = vmul.f32 %v1585, %v1587
      %v1589 = vadd.f32 %v1585, %v1588
      %vm1590 = vweird.f32 %v1089
      %vm1591 = vweird.f32 %v1585
      %vm1592 = vmor %vm1590, %vm1591
      %v1593 = vsel %vm1592, %v1585, %v1589
      %v1594 = vand.u32 2147483647, %v1089
      %vm1595 = vcmp.eq.f32.partialorder %v1594, 8.507059e+37
      %v1596 = vand.u32 %v1089, 2147483648
      %v1597 = vor.u32 1.1754944e-38, %v1596
      %v1598 = vsel %vm1595, %v1597, %v1593
      %v1599 = vmul.f32 1.0, %v1598
      %v1600 = vmul.f32 %v824, %v1104
      %v1601 = vmul.f32 %v877, %v1119
      %v1602 = vmul.f32 %v826, %v1134
      %v1603 = vmul.f32 %v879, %v1149
      %v1604 = vmul.f32 %v829, %v1164
      %v1605 = vmul.f32 %v882, %v1179
      %v1606 = vmul.f32 %v831, %v1194
      %v1607 = vmul.f32 %v884, %v1209
      %v1608 = vmul.f32 %v834, %v1224
      %v1609 = vmul.f32 %v887, %v1239
      %v1610 = vmul.f32 %v836, %v1254
      %v1611 = vmul.f32 %v889, %v1269
      %v1612 = vmul.f32 %v839, %v1284
      %v1613 = vmul.f32 %v892, %v1299
      %v1614 = vmul.f32 %v841, %v1314
      %v1615 = vmul.f32 %v894, %v1329
      %v1616 = vmul.f32 %v844, %v1344
      %v1617 = vmul.f32 %v897, %v1359
      %v1618 = vmul.f32 %v846, %v1374
      %v1619 = vmul.f32 %v899, %v1389
      %v1620 = vmul.f32 %v849, %v1404
      %v1621 = vmul.f32 %v902, %v1419
      %v1622 = vmul.f32 %v851, %v1434
      %v1623 = vmul.f32 %v904, %v1449
      %v1624 = vmul.f32 %v854, %v1464
      %v1625 = vmul.f32 %v907, %v1479
      %v1626 = vmul.f32 %v856, %v1494
      %v1627 = vmul.f32 %v909, %v1509
      %v1628 = vmul.f32 %v859, %v1524
      %v1629 = vmul.f32 %v912, %v1539
      %v1630 = vmul.f32 %v861, %v1554
      %v1631 = vmul.f32 %v914, %v1569
      %v1632 = vmul.f32 %v864, %v1584
      %v1633 = vmul.f32 %v917, %v1599
      %v1634 = vpack.c.bf16 %v1602, %v1600
      %v1635 = vpack.c.bf16 %v1603, %v1601
      %v1636 = vpack.c.bf16 %v1606, %v1604
      %v1637 = vpack.c.bf16 %v1607, %v1605
      %v1638 = vpack.c.bf16 %v1610, %v1608
      %v1639 = vpack.c.bf16 %v1611, %v1609
      %v1640 = vpack.c.bf16 %v1614, %v1612
      %v1641 = vpack.c.bf16 %v1615, %v1613
      %v1642 = vpack.c.bf16 %v1618, %v1616
      %v1643 = vpack.c.bf16 %v1619, %v1617
      %v1644 = vpack.c.bf16 %v1622, %v1620
      %v1645 = vpack.c.bf16 %v1623, %v1621
      %v1646 = vpack.c.bf16 %v1626, %v1624
      %v1647 = vpack.c.bf16 %v1627, %v1625
      %v1648 = vpack.c.bf16 %v1630, %v1628
      %v1649 = vpack.c.bf16 %v1631, %v1629
      %v1650 = vpack.c.bf16 %v1632, %v1632
      %v1651 = vpack.c.bf16 %v1633, %v1633
      %v1652 = vld [vmem:[%s5] sm:$0xf]
      %v1653 = vld [vmem:[%s5 + $0x4] sm:$0xf]
      %v1654 = vld [vmem:[%s5 + $0x8] sm:$0xf]
      %v1655 = vld [vmem:[%s5 + $0xc] sm:$0xf]
      %v1656 = vld [vmem:[%s5 + $0x10] sm:$0xf]
      %v1657 = vld [vmem:[%s5 + $0x14] sm:$0xf]
      %v1658 = vld [vmem:[%s5 + $0x18] sm:$0xf]
      %v1659 = vld [vmem:[%s5 + $0x1c] sm:$0xf]
      %v1660 = vld [vmem:[%s5 + $0x20] sm:$0xf]
      %v1661 = vld [vmem:[%s5 + $0x24] sm:$0xf]
      %v1662 = vld [vmem:[%s5 + $0x28] sm:$0xf]
      %v1663 = vld [vmem:[%s5 + $0x2c] sm:$0xf]
      %v1664 = vld [vmem:[%s5 + $0x30] sm:$0xf]
      %v1665 = vld [vmem:[%s5 + $0x34] sm:$0xf]
      %v1666 = vld [vmem:[%s5 + $0x38] sm:$0xf]
      %v1667 = vld [vmem:[%s5 + $0x3c] sm:$0xf]
      %v1668 = vld [vmem:[%s5 + $0x40] sm:$0xf]
      %v1669 = vld [vmem:[%s5 + $0x44] sm:$0xf]
      %v1670 = vld [vmem:[%s5 + $0x48] sm:$0xf]
      %v1671 = vld [vmem:[%s5 + $0x4c] sm:$0xf]
      %v1672 = vld [vmem:[%s5 + $0x50] sm:$0xf]
      %v1673 = vld [vmem:[%s5 + $0x54] sm:$0xf]
      %v1674 = vld [vmem:[%s5 + $0x58] sm:$0xf]
      %v1675 = vld [vmem:[%s5 + $0x5c] sm:$0xf]
      %v1676 = vld [vmem:[%s5 + $0x60] sm:$0xf]
      %v1677 = vld [vmem:[%s5 + $0x64] sm:$0xf]
      %v1678 = vld [vmem:[%s5 + $0x68] sm:$0xf]
      %v1679 = vld [vmem:[%s5 + $0x6c] sm:$0xf]
      %v1680 = vld [vmem:[%s5 + $0x70] sm:$0xf]
      %v1681 = vld [vmem:[%s5 + $0x74] sm:$0xf]
      %v1682 = vld [vmem:[%s5 + $0x78] sm:$0xf]
      %v1683 = vld [vmem:[%s5 + $0x7c] sm:$0xf]
      %v1684 = vld [vmem:[%s6] sm:$0x1]
      %v1686 = vperm.slane %v1684, 0
      %v1720 = vunpack.c.l.b16 %v1652
      %v1721 = vunpack.c.l.b16 %v1653
      %v1722 = vunpack.c.l.b16 %v1654
      %v1723 = vunpack.c.l.b16 %v1655
      %v1724 = vunpack.c.l.b16 %v1656
      %v1725 = vunpack.c.l.b16 %v1657
      %v1726 = vunpack.c.l.b16 %v1658
      %v1727 = vunpack.c.l.b16 %v1659
      %v1728 = vunpack.c.l.b16 %v1660
      %v1729 = vunpack.c.l.b16 %v1661
      %v1730 = vunpack.c.l.b16 %v1662
      %v1731 = vunpack.c.l.b16 %v1663
      %v1732 = vunpack.c.l.b16 %v1664
      %v1733 = vunpack.c.l.b16 %v1665
      %v1734 = vunpack.c.l.b16 %v1666
      %v1735 = vunpack.c.l.b16 %v1667
      %v1736 = vunpack.c.l.b16 %v1668
      %v1737 = vunpack.c.l.b16 %v1669
      %v1738 = vunpack.c.l.b16 %v1670
      %v1739 = vunpack.c.l.b16 %v1671
      %v1740 = vunpack.c.l.b16 %v1672
      %v1741 = vunpack.c.l.b16 %v1673
      %v1742 = vunpack.c.l.b16 %v1674
      %v1743 = vunpack.c.l.b16 %v1675
      %v1744 = vunpack.c.l.b16 %v1676
      %v1745 = vunpack.c.l.b16 %v1677
      %v1746 = vunpack.c.l.b16 %v1678
      %v1747 = vunpack.c.l.b16 %v1679
      %v1748 = vunpack.c.l.b16 %v1680
      %v1749 = vunpack.c.l.b16 %v1681
      %v1750 = vunpack.c.l.b16 %v1682
      %v1751 = vunpack.c.l.b16 %v1683
      %v1752 = vpack.c.b16 %v1721, %v1720
      %v1753 = vpack.c.b16 %v1723, %v1722
      %v1754 = vpack.c.b16 %v1725, %v1724
      %v1755 = vpack.c.b16 %v1727, %v1726
      %v1756 = vpack.c.b16 %v1729, %v1728
      %v1757 = vpack.c.b16 %v1731, %v1730
      %v1758 = vpack.c.b16 %v1733, %v1732
      %v1759 = vpack.c.b16 %v1735, %v1734
      %v1760 = vpack.c.b16 %v1737, %v1736
      %v1761 = vpack.c.b16 %v1739, %v1738
      %v1762 = vpack.c.b16 %v1741, %v1740
      %v1763 = vpack.c.b16 %v1743, %v1742
      %v1764 = vpack.c.b16 %v1745, %v1744
      %v1765 = vpack.c.b16 %v1747, %v1746
      %v1766 = vpack.c.b16 %v1749, %v1748
      %v1767 = vpack.c.b16 %v1751, %v1750
      %1784 = vmatpush.bf16.msra.mxu0 %v1759
      %1785 = vmatpush.bf16.msra.mxu0 %v1758
      %1786 = vmatpush.bf16.msra.mxu0 %v1757
      %1787 = vmatpush.bf16.msra.mxu0 %v1756
      %1788 = vmatpush.bf16.msra.mxu0 %v1755
      %1789 = vmatpush.bf16.msra.mxu0 %v1754
      %1790 = vmatpush.bf16.msra.mxu0 %v1753
      %1791 = vmatpush.bf16.msra.mxu0 %v1752
      %1792 = vmatmul.bf16.gmra.mxu0 %v1634
      %v1793 = vpop.f32.mrf.mxu0
      %v1794 = vadd.f32 %v1686, %v1793
      %v1795 = vpop.f32.mrf.mxu0
      %v1796 = vadd.f32 %v1686, %v1795
      %1797 = vmatmul.bf16.gmra.mxu0 %v1636
      %v1798 = vpop.f32.mrf.mxu0
      %v1799 = vadd.f32 %v1686, %v1798
      %v1800 = vpop.f32.mrf.mxu0
      %v1801 = vadd.f32 %v1686, %v1800
      %1802 = vmatmul.bf16.gmra.mxu0 %v1638
      %v1803 = vpop.f32.mrf.mxu0
      %v1804 = vadd.f32 %v1686, %v1803
      %v1805 = vpop.f32.mrf.mxu0
      %v1806 = vadd.f32 %v1686, %v1805
      %1807 = vmatmul.bf16.gmra.mxu0 %v1640
      %v1808 = vpop.f32.mrf.mxu0
      %v1809 = vadd.f32 %v1686, %v1808
      %v1810 = vpop.f32.mrf.mxu0
      %v1811 = vadd.f32 %v1686, %v1810
      %1812 = vmatmul.bf16.gmra.mxu0 %v1642
      %v1813 = vpop.f32.mrf.mxu0
      %v1814 = vadd.f32 %v1686, %v1813
      %v1815 = vpop.f32.mrf.mxu0
      %v1816 = vadd.f32 %v1686, %v1815
      %1817 = vmatmul.bf16.gmra.mxu0 %v1644
      %v1818 = vpop.f32.mrf.mxu0
      %v1819 = vadd.f32 %v1686, %v1818
      %v1820 = vpop.f32.mrf.mxu0
      %v1821 = vadd.f32 %v1686, %v1820
      %1822 = vmatmul.bf16.gmra.mxu0 %v1646
      %v1823 = vpop.f32.mrf.mxu0
      %v1824 = vadd.f32 %v1686, %v1823
      %v1825 = vpop.f32.mrf.mxu0
      %v1826 = vadd.f32 %v1686, %v1825
      %1827 = vmatmul.bf16.gmra.mxu0 %v1648
      %v1828 = vpop.f32.mrf.mxu0
      %v1829 = vadd.f32 %v1686, %v1828
      %v1830 = vpop.f32.mrf.mxu0
      %v1831 = vadd.f32 %v1686, %v1830
      %1832 = vmatmul.bf16.gmra.mxu0 %v1650
      %v1833 = vpop.f32.mrf.mxu0
      %v1834 = vadd.f32 %v1686, %v1833
      %v1835 = vpop.f32.mrf.mxu0
      %1836 = vdwg.mxu0
      %1837 = vmatpush.bf16.msra.mxu0 %v1767
      %1838 = vmatpush.bf16.msra.mxu0 %v1766
      %1839 = vmatpush.bf16.msra.mxu0 %v1765
      %1840 = vmatpush.bf16.msra.mxu0 %v1764
      %1841 = vmatpush.bf16.msra.mxu0 %v1763
      %1842 = vmatpush.bf16.msra.mxu0 %v1762
      %1843 = vmatpush.bf16.msra.mxu0 %v1761
      %1844 = vmatpush.bf16.msra.mxu0 %v1760
      %1845 = vmatmul.bf16.gmra.mxu0 %v1635
      %v1846 = vpop.f32.mrf.mxu0
      %v1847 = vadd.f32 %v1794, %v1846
      %v1848 = vpop.f32.mrf.mxu0
      %v1849 = vadd.f32 %v1796, %v1848
      %1850 = vmatmul.bf16.gmra.mxu0 %v1637
      %v1851 = vpop.f32.mrf.mxu0
      %v1852 = vadd.f32 %v1799, %v1851
      %v1853 = vpop.f32.mrf.mxu0
      %v1854 = vadd.f32 %v1801, %v1853
      %1855 = vmatmul.bf16.gmra.mxu0 %v1639
      %v1856 = vpop.f32.mrf.mxu0
      %v1857 = vadd.f32 %v1804, %v1856
      %v1858 = vpop.f32.mrf.mxu0
      %v1859 = vadd.f32 %v1806, %v1858
      %1860 = vmatmul.bf16.gmra.mxu0 %v1641
      %v1861 = vpop.f32.mrf.mxu0
      %v1862 = vadd.f32 %v1809, %v1861
      %v1863 = vpop.f32.mrf.mxu0
      %v1864 = vadd.f32 %v1811, %v1863
      %1865 = vmatmul.bf16.gmra.mxu0 %v1643
      %v1866 = vpop.f32.mrf.mxu0
      %v1867 = vadd.f32 %v1814, %v1866
      %v1868 = vpop.f32.mrf.mxu0
      %v1869 = vadd.f32 %v1816, %v1868
      %1870 = vmatmul.bf16.gmra.mxu0 %v1645
      %v1871 = vpop.f32.mrf.mxu0
      %v1872 = vadd.f32 %v1819, %v1871
      %v1873 = vpop.f32.mrf.mxu0
      %v1874 = vadd.f32 %v1821, %v1873
      %1875 = vmatmul.bf16.gmra.mxu0 %v1647
      %v1876 = vpop.f32.mrf.mxu0
      %v1877 = vadd.f32 %v1824, %v1876
      %v1878 = vpop.f32.mrf.mxu0
      %v1879 = vadd.f32 %v1826, %v1878
      %1880 = vmatmul.bf16.gmra.mxu0 %v1649
      %v1881 = vpop.f32.mrf.mxu0
      %v1882 = vadd.f32 %v1829, %v1881
      %v1883 = vpop.f32.mrf.mxu0
      %v1884 = vadd.f32 %v1831, %v1883
      %1885 = vmatmul.bf16.gmra.mxu0 %v1651
      %v1886 = vpop.f32.mrf.mxu0
      %v1887 = vadd.f32 %v1834, %v1886
      %v1888 = vpop.f32.mrf.mxu0
      %1889 = vdwg.mxu0
      %v1890 = vadd.f32 %v283, %v1847
      %v1891 = vadd.f32 %v284, %v1849
      %v1892 = vadd.f32 %v285, %v1852
      %v1893 = vadd.f32 %v286, %v1854
      %v1894 = vadd.f32 %v287, %v1857
      %v1895 = vadd.f32 %v288, %v1859
      %v1896 = vadd.f32 %v289, %v1862
      %v1897 = vadd.f32 %v290, %v1864
      %v1898 = vadd.f32 %v291, %v1867
      %v1899 = vadd.f32 %v292, %v1869
      %v1900 = vadd.f32 %v293, %v1872
      %v1901 = vadd.f32 %v294, %v1874
      %v1902 = vadd.f32 %v295, %v1877
      %v1903 = vadd.f32 %v296, %v1879
      %v1904 = vadd.f32 %v297, %v1882
      %v1905 = vadd.f32 %v298, %v1884
      %v1906 = vadd.f32 %v299, %v1887
      %1907 = vst.msk [vmem:[%s280] sm:$0xff] %vm302, %v1890
      %1908 = vst.msk [vmem:[%s280 + $0x8] sm:$0xff] %vm302, %v1891
      %1909 = vst.msk [vmem:[%s280 + $0x10] sm:$0xff] %vm302, %v1892
      %1910 = vst.msk [vmem:[%s280 + $0x18] sm:$0xff] %vm302, %v1893
      %1911 = vst.msk [vmem:[%s280 + $0x20] sm:$0xff] %vm302, %v1894
      %1912 = vst.msk [vmem:[%s280 + $0x28] sm:$0xff] %vm302, %v1895
      %1913 = vst.msk [vmem:[%s280 + $0x30] sm:$0xff] %vm302, %v1896
      %1914 = vst.msk [vmem:[%s280 + $0x38] sm:$0xff] %vm302, %v1897
      %1915 = vst.msk [vmem:[%s280 + $0x40] sm:$0xff] %vm302, %v1898
      %1916 = vst.msk [vmem:[%s280 + $0x48] sm:$0xff] %vm302, %v1899
      %1917 = vst.msk [vmem:[%s280 + $0x50] sm:$0xff] %vm302, %v1900
      %1918 = vst.msk [vmem:[%s280 + $0x58] sm:$0xff] %vm302, %v1901
      %1919 = vst.msk [vmem:[%s280 + $0x60] sm:$0xff] %vm302, %v1902
      %1920 = vst.msk [vmem:[%s280 + $0x68] sm:$0xff] %vm302, %v1903
      %1921 = vst.msk [vmem:[%s280 + $0x70] sm:$0xff] %vm302, %v1904
      %1922 = vst.msk [vmem:[%s280 + $0x78] sm:$0xff] %vm302, %v1905
      %1923 = vst.msk [vmem:[%s280 + $0x80] sm:$0xff] %vm302, %v1906
      %s1924 = smul.u32 17, %s18
      %p1925 = scmp.lt.s32.totalorder %s1924, 33
      %s1926 = scalar_select %p1925, %s1924, 33
      %s1927 = smul.addr %s1926, 8
      %s1928 = scalar_lea.vmem %s7, %s1927
      // Predicated region
      $region49: #{_lambda_.7} parent=47 // pred_check
        %p1929 = pneg %p188
      $region50: #{_lambda_.7} parent=47 // pred_check_branch
        %1931 = sbr.rel (%p1929) target = $region52
      $region51: #{_lambda_.7} parent=47 // pred_region
        %s1932 = smul.u32 17, %s18
      $region52: #{_lambda_.7} parent=47 // pred_fallthru
        _
    $region48: #{_lambda_.7} parent=5 // pred_fallthru
      _
    %p1933 = scmp.le.s32.totalorder 2, %s13
    // Predicated region
    $region53: #{_lambda_.7} parent=5 // pred_check
      %p1934 = pneg %p1933
    $region54: #{_lambda_.7} parent=5 // pred_check_branch
      %1936 = sbr.rel (%p1934) target = $region56
    $region55: #{_lambda_.7} parent=5 // pred_region
      %s1937 = ssub.s32 %s13, 2
      // Predicated region
      $region57: #{_lambda_.7} parent=55 // pred_check
        %p1938 = pneg %p194
      $region58: #{_lambda_.7} parent=55 // pred_check_branch
        %1940 = sbr.rel (%p1938) target = $region60
      $region59: #{_lambda_.7} parent=55 // pred_region
        %s1941 = smul.u32 17, %s19
        %p1942 = scmp.lt.s32.totalorder %s1941, 33
        %s1943 = scalar_select %p1942, %s1941, 33
        %s1944 = smul.addr %s1943, 8
        %s1945 = scalar_lea.vmem %s7, %s1944
      $region60: #{_lambda_.7} parent=55 // pred_fallthru
        _
    $region56: #{_lambda_.7} parent=5 // pred_fallthru
      _
  $region6: #{_lambda_.7} parent=0 // loop_footer
    %s17 = sadd.s32 1, %s13
  $region7: #{_lambda_.7} parent=0 // loop_footer_branch
    %12 = sbr.rel target = $region3
  $region8: #{_lambda_.7} parent=0 // loop_exit
    _

// kernel: _lambda_.5
$region0: #{_lambda_.5}
  #allocation0 [shape = 'u32[]', space=smem, size = 0x4, offset = 0x4, fixed_abs, tag = 'smem constant byte address 0x4 - core index']
  #allocation1 [shape = 'u32[72,128]{1,0:T(1,128)}', space=vmem, size = 0x9000, scoped, tag = 'internal scratch']
  %s0 = inlined_call_operand.vmem [shape: f32[16,17,64], index: 0, kind: input, shape index: {}]
  %s1 = inlined_call_operand.vmem [shape: f32[1,64], index: 1, kind: input, shape index: {}]
  %s2 = inlined_call_operand.vmem [shape: f32[1,64], index: 2, kind: input, shape index: {}]
  %s3 = inlined_call_operand.vmem [shape: bf16[64,192], index: 3, kind: input, shape index: {}]
  %s4 = inlined_call_operand.vmem [shape: f32[1,192], index: 4, kind: input, shape index: {}]
  %s5 = inlined_call_operand.vmem [shape: bf16[64,64], index: 5, kind: input, shape index: {}]
  %s6 = inlined_call_operand.vmem [shape: f32[1,64], index: 6, kind: input, shape index: {}]
  %s7 = inlined_call_operand.vmem [shape: f32[16,17,64], index: 7, kind: output, shape index: {}]
  %s8 = sld [smem:[#allocation0]]
  $region61: #{_lambda_.5} parent=0
    _
  %s10 = ssub.s32 1, %s8
  %s11 = scalar_select 0, %s10, %s8
  loop: start=0, step=1, limit=4
  $region2: #{_lambda_.5} parent=0 // loop_pre_header
    _
  $region3: #{_lambda_.5} parent=0 // loop_header
    %s13 = sphi 0, %s17
    %p14 = scmp.ge.s32.totalorder %s13, 4
    %s23 = sphi 0, %s25
    %s26 = sphi 0, %s23
    %s27 = sphi 0, %s26
    %s43 = sphi 0, %s27
    %s47 = sphi 0, %s47
    %s49 = sphi 0, %s47
    %s50 = sphi 0, %s49
    %s64 = sphi 0, %s50
    %s68 = sphi 0, %s68
    %s70 = sphi 0, %s68
    %s71 = sphi 0, %s70
    %s85 = sphi 0, %s71
    %s89 = sphi 0, %s89
    %s91 = sphi 0, %s89
    %s92 = sphi 0, %s91
    %s106 = sphi 0, %s92
    %s110 = sphi 0, %s110
    %s112 = sphi 0, %s110
    %s113 = sphi 0, %s112
    %s127 = sphi 0, %s113
    %s131 = sphi 0, %s131
    %s133 = sphi 0, %s131
    %s134 = sphi 0, %s133
    %s148 = sphi 0, %s134
    %s152 = sphi 0, %s152
    %s154 = sphi 0, %s152
    %s155 = sphi 0, %s154
    %s169 = sphi 0, %s155
    %s175 = sphi 0, %s177
    %s178 = sphi 0, %s175
    %s179 = sphi 0, %s178
    %s195 = sphi 0, %s179
  $region4: #{_lambda_.5} parent=0 // loop_header_branch
    %16 = sbr.rel (%p14) target = $region8
  $region5: #{_lambda_.5} parent=0 // loop_body
    %s18 = ssub.s32 %s13, 1
    %s19 = ssub.s32 %s13, 2
    %s20 = sadd.s32 %s13, 1
    %s21 = ssub.s32 %s13, %s20
    %p22 = scmp.eq.s32.totalorder %s21, 0
    %s24 = sadd.s32 %s23, 1
    %s25 = scalar_select %p22, %s23, %s24
    %p28 = pneg %p22
    %p29 = scmp.eq.s32.totalorder %s13, 1
    %p30 = por %p28, %p29
    %p31 = scmp.ne.s32.totalorder %s23, %s26
    %p32 = scmp.eq.s32.totalorder %s13, 0
    %p33 = por %p31, %p32
    %p34 = scmp.ne.s32.totalorder %s23, %s26
    %p35 = scmp.eq.s32.totalorder %s18, 1
    %p36 = por %p34, %p35
    %p37 = scmp.ne.s32.totalorder %s26, %s27
    %p38 = scmp.eq.s32.totalorder %s18, 0
    %p39 = por %p37, %p38
    %p40 = scmp.ne.s32.totalorder %s26, %s27
    %p41 = scmp.eq.s32.totalorder %s19, 1
    %p42 = por %p40, %p41
    %p44 = scmp.ne.s32.totalorder %s27, %s43
    %p45 = scmp.eq.s32.totalorder %s19, 0
    %p46 = por %p44, %p45
    %s48 = sadd.s32 %s47, 1
    %p51 = scmp.eq.s32.totalorder %s13, 1
    %p52 = scmp.ne.s32.totalorder %s47, %s49
    %p53 = scmp.eq.s32.totalorder %s13, 0
    %p54 = por %p52, %p53
    %p55 = scmp.ne.s32.totalorder %s47, %s49
    %p56 = scmp.eq.s32.totalorder %s18, 1
    %p57 = por %p55, %p56
    %p58 = scmp.ne.s32.totalorder %s49, %s50
    %p59 = scmp.eq.s32.totalorder %s18, 0
    %p60 = por %p58, %p59
    %p61 = scmp.ne.s32.totalorder %s49, %s50
    %p62 = scmp.eq.s32.totalorder %s19, 1
    %p63 = por %p61, %p62
    %p65 = scmp.ne.s32.totalorder %s50, %s64
    %p66 = scmp.eq.s32.totalorder %s19, 0
    %p67 = por %p65, %p66
    %s69 = sadd.s32 %s68, 1
    %p72 = scmp.eq.s32.totalorder %s13, 1
    %p73 = scmp.ne.s32.totalorder %s68, %s70
    %p74 = scmp.eq.s32.totalorder %s13, 0
    %p75 = por %p73, %p74
    %p76 = scmp.ne.s32.totalorder %s68, %s70
    %p77 = scmp.eq.s32.totalorder %s18, 1
    %p78 = por %p76, %p77
    %p79 = scmp.ne.s32.totalorder %s70, %s71
    %p80 = scmp.eq.s32.totalorder %s18, 0
    %p81 = por %p79, %p80
    %p82 = scmp.ne.s32.totalorder %s70, %s71
    %p83 = scmp.eq.s32.totalorder %s19, 1
    %p84 = por %p82, %p83
    %p86 = scmp.ne.s32.totalorder %s71, %s85
    %p87 = scmp.eq.s32.totalorder %s19, 0
    %p88 = por %p86, %p87
    %s90 = sadd.s32 %s89, 1
    %p93 = scmp.eq.s32.totalorder %s13, 1
    %p94 = scmp.ne.s32.totalorder %s89, %s91
    %p95 = scmp.eq.s32.totalorder %s13, 0
    %p96 = por %p94, %p95
    %p97 = scmp.ne.s32.totalorder %s89, %s91
    %p98 = scmp.eq.s32.totalorder %s18, 1
    %p99 = por %p97, %p98
    %p100 = scmp.ne.s32.totalorder %s91, %s92
    %p101 = scmp.eq.s32.totalorder %s18, 0
    %p102 = por %p100, %p101
    %p103 = scmp.ne.s32.totalorder %s91, %s92
    %p104 = scmp.eq.s32.totalorder %s19, 1
    %p105 = por %p103, %p104
    %p107 = scmp.ne.s32.totalorder %s92, %s106
    %p108 = scmp.eq.s32.totalorder %s19, 0
    %p109 = por %p107, %p108
    %s111 = sadd.s32 %s110, 1
    %p114 = scmp.eq.s32.totalorder %s13, 1
    %p115 = scmp.ne.s32.totalorder %s110, %s112
    %p116 = scmp.eq.s32.totalorder %s13, 0
    %p117 = por %p115, %p116
    %p118 = scmp.ne.s32.totalorder %s110, %s112
    %p119 = scmp.eq.s32.totalorder %s18, 1
    %p120 = por %p118, %p119
    %p121 = scmp.ne.s32.totalorder %s112, %s113
    %p122 = scmp.eq.s32.totalorder %s18, 0
    %p123 = por %p121, %p122
    %p124 = scmp.ne.s32.totalorder %s112, %s113
    %p125 = scmp.eq.s32.totalorder %s19, 1
    %p126 = por %p124, %p125
    %p128 = scmp.ne.s32.totalorder %s113, %s127
    %p129 = scmp.eq.s32.totalorder %s19, 0
    %p130 = por %p128, %p129
    %s132 = sadd.s32 %s131, 1
    %p135 = scmp.eq.s32.totalorder %s13, 1
    %p136 = scmp.ne.s32.totalorder %s131, %s133
    %p137 = scmp.eq.s32.totalorder %s13, 0
    %p138 = por %p136, %p137
    %p139 = scmp.ne.s32.totalorder %s131, %s133
    %p140 = scmp.eq.s32.totalorder %s18, 1
    %p141 = por %p139, %p140
    %p142 = scmp.ne.s32.totalorder %s133, %s134
    %p143 = scmp.eq.s32.totalorder %s18, 0
    %p144 = por %p142, %p143
    %p145 = scmp.ne.s32.totalorder %s133, %s134
    %p146 = scmp.eq.s32.totalorder %s19, 1
    %p147 = por %p145, %p146
    %p149 = scmp.ne.s32.totalorder %s134, %s148
    %p150 = scmp.eq.s32.totalorder %s19, 0
    %p151 = por %p149, %p150
    %s153 = sadd.s32 %s152, 1
    %p156 = scmp.eq.s32.totalorder %s13, 1
    %p157 = scmp.ne.s32.totalorder %s152, %s154
    %p158 = scmp.eq.s32.totalorder %s13, 0
    %p159 = por %p157, %p158
    %p160 = scmp.ne.s32.totalorder %s152, %s154
    %p161 = scmp.eq.s32.totalorder %s18, 1
    %p162 = por %p160, %p161
    %p163 = scmp.ne.s32.totalorder %s154, %s155
    %p164 = scmp.eq.s32.totalorder %s18, 0
    %p165 = por %p163, %p164
    %p166 = scmp.ne.s32.totalorder %s154, %s155
    %p167 = scmp.eq.s32.totalorder %s19, 1
    %p168 = por %p166, %p167
    %p170 = scmp.ne.s32.totalorder %s155, %s169
    %p171 = scmp.eq.s32.totalorder %s19, 0
    %p172 = por %p170, %p171
    %s173 = ssub.s32 %s13, %s20
    %p174 = scmp.eq.s32.totalorder %s173, 0
    %s176 = sadd.s32 %s175, 1
    %s177 = scalar_select %p174, %s175, %s176
    %p180 = pneg %p174
    %p181 = scmp.eq.s32.totalorder %s13, 1
    %p182 = por %p180, %p181
    %p183 = scmp.ne.s32.totalorder %s175, %s178
    %p184 = scmp.eq.s32.totalorder %s13, 0
    %p185 = por %p183, %p184
    %p186 = scmp.ne.s32.totalorder %s175, %s178
    %p187 = scmp.eq.s32.totalorder %s18, 1
    %p188 = por %p186, %p187
    %p189 = scmp.ne.s32.totalorder %s178, %s179
    %p190 = scmp.eq.s32.totalorder %s18, 0
    %p191 = por %p189, %p190
    %p192 = scmp.ne.s32.totalorder %s178, %s179
    %p193 = scmp.eq.s32.totalorder %s19, 1
    %p194 = por %p192, %p193
    %p196 = scmp.ne.s32.totalorder %s179, %s195
    %p197 = scmp.eq.s32.totalorder %s19, 0
    %p198 = por %p196, %p197
    %p199 = scmp.le.s32.totalorder 1, %s13
    %p200 = scmp.lt.s32.totalorder %s13, 3
    %p201 = pnand %p199, %p200
    %p202 = pneg %p201
    // Predicated region
    $region9: #{_lambda_.5} parent=5 // pred_check
      _
    $region10: #{_lambda_.5} parent=5 // pred_check_branch
      %204 = sbr.rel (%p201) target = $region12
    $region11: #{_lambda_.5} parent=5 // pred_region
      %s205 = ssub.s32 %s13, 1
      // Predicated region
      $region13: #{_lambda_.5} parent=11 // pred_check
        %p206 = pneg %p60
      $region14: #{_lambda_.5} parent=11 // pred_check_branch
        %208 = sbr.rel (%p206) target = $region16
      $region15: #{_lambda_.5} parent=11 // pred_region
        _
      $region16: #{_lambda_.5} parent=11 // pred_fallthru
        _
      // Predicated region
      $region17: #{_lambda_.5} parent=11 // pred_check
        %p209 = pneg %p81
      $region18: #{_lambda_.5} parent=11 // pred_check_branch
        %211 = sbr.rel (%p209) target = $region20
      $region19: #{_lambda_.5} parent=11 // pred_region
        _
      $region20: #{_lambda_.5} parent=11 // pred_fallthru
        _
      // Predicated region
      $region21: #{_lambda_.5} parent=11 // pred_check
        %p212 = pneg %p102
      $region22: #{_lambda_.5} parent=11 // pred_check_branch
        %214 = sbr.rel (%p212) target = $region24
      $region23: #{_lambda_.5} parent=11 // pred_region
        _
      $region24: #{_lambda_.5} parent=11 // pred_fallthru
        _
      // Predicated region
      $region25: #{_lambda_.5} parent=11 // pred_check
        %p215 = pneg %p123
      $region26: #{_lambda_.5} parent=11 // pred_check_branch
        %217 = sbr.rel (%p215) target = $region28
      $region27: #{_lambda_.5} parent=11 // pred_region
        _
      $region28: #{_lambda_.5} parent=11 // pred_fallthru
        _
      // Predicated region
      $region29: #{_lambda_.5} parent=11 // pred_check
        %p218 = pneg %p144
      $region30: #{_lambda_.5} parent=11 // pred_check_branch
        %220 = sbr.rel (%p218) target = $region32
      $region31: #{_lambda_.5} parent=11 // pred_region
        _
      $region32: #{_lambda_.5} parent=11 // pred_fallthru
        _
      // Predicated region
      $region33: #{_lambda_.5} parent=11 // pred_check
        %p221 = pneg %p165
      $region34: #{_lambda_.5} parent=11 // pred_check_branch
        %223 = sbr.rel (%p221) target = $region36
      $region35: #{_lambda_.5} parent=11 // pred_region
        _
      $region36: #{_lambda_.5} parent=11 // pred_fallthru
        _
    $region12: #{_lambda_.5} parent=5 // pred_fallthru
      _
    %p224 = scmp.lt.s32.totalorder %s13, 2
    // Predicated region
    $region37: #{_lambda_.5} parent=5 // pred_check
      %p225 = pneg %p224
    $region38: #{_lambda_.5} parent=5 // pred_check_branch
      %227 = sbr.rel (%p225) target = $region40
    $region39: #{_lambda_.5} parent=5 // pred_region
      // Predicated region
      $region41: #{_lambda_.5} parent=39 // pred_check
        %p228 = pneg %p33
      $region42: #{_lambda_.5} parent=39 // pred_check_branch
        %230 = sbr.rel (%p228) target = $region44
      $region43: #{_lambda_.5} parent=39 // pred_region
        %s231 = smul.u32 8, %s13
        %p232 = scmp.lt.s32.totalorder %s231, 15
        %s233 = scalar_select %p232, %s231, 15
        %s234 = smul.addr %s233, 3
        %s235 = smul.addr %s234, 8
        %s236 = scalar_lea.vmem %s0, %s235
        %s237 = smul.u32 8, %s13
      $region44: #{_lambda_.5} parent=39 // pred_fallthru
        _
    $region40: #{_lambda_.5} parent=5 // pred_fallthru
      _
    %p238 = scmp.le.s32.totalorder 1, %s13
    %p239 = scmp.lt.s32.totalorder %s13, 3
    %p240 = pnand %p238, %p239
    %p241 = pneg %p240
    // Predicated region
    $region45: #{_lambda_.5} parent=5 // pred_check
      _
    $region46: #{_lambda_.5} parent=5 // pred_check_branch
      %243 = sbr.rel (%p240) target = $region48
    $region47: #{_lambda_.5} parent=5 // pred_region
      %s244 = ssub.s32 %s13, 1
      %s245 = smul.u32 8, %s18
      %p246 = scmp.lt.s32.totalorder %s245, 15
      %s247 = scalar_select %p246, %s245, 15
      %s248 = smul.addr %s247, 3
      %s249 = smul.addr %s248, 8
      %s250 = scalar_lea.vmem %s0, %s249
      %p251 = pneg %p39
      %p252 = pneg %p36
      %p253 = pneg %p60
      %p254 = pneg %p57
      %p255 = pneg %p81
      %p256 = pneg %p78
      %p257 = pneg %p102
      %p258 = pneg %p99
      %p259 = pneg %p123
      %p260 = pneg %p120
      %p261 = pneg %p144
      %p262 = pneg %p141
      %p263 = pneg %p165
      %p264 = pneg %p162
      %p265 = pneg %p191
      %p266 = pneg %p188
      %s267 = smul.u32 8, %s18
      %p268 = scmp.lt.s32.totalorder %s267, 15
      %s269 = scalar_select %p268, %s267, 15
      %s270 = smul.addr %s269, 3
      %s271 = smul.addr %s270, 8
      %s272 = scalar_lea.vmem %s7, %s271
      %s273 = smul.u32 8, %s18
      %p274 = scmp.lt.s32.totalorder %s273, 15
      %s275 = scalar_select %p274, %s273, 15
      %s276 = smul.addr %s275, 3
      %s277 = smul.addr %s276, 8
      %s278 = scalar_lea.vmem %s0, %s277
      %s279 = smul.u32 8, %s18
      %s280 = smul.u32 8, %s18
      %p281 = scmp.lt.s32.totalorder %s280, 15
      %s282 = scalar_select %p281, %s280, 15
      %s283 = smul.addr %s282, 3
      %s284 = smul.addr %s283, 8
      %s285 = scalar_lea.vmem %s7, %s284
      %s286 = smul.u32 8, %s18
      %v288 = vld [vmem:[%s278] sm:$0xff]
      %v289 = vld [vmem:[%s278 + $0x8] sm:$0xff]
      %v290 = vld [vmem:[%s278 + $0x10] sm:$0x1]
      %v291 = vld [vmem:[%s278 + $0x18] sm:$0xff]
      %v292 = vld [vmem:[%s278 + $0x20] sm:$0xff]
      %v293 = vld [vmem:[%s278 + $0x28] sm:$0x1]
      %v294 = vld [vmem:[%s278 + $0x30] sm:$0xff]
      %v295 = vld [vmem:[%s278 + $0x38] sm:$0xff]
      %v296 = vld [vmem:[%s278 + $0x40] sm:$0x1]
      %v297 = vld [vmem:[%s278 + $0x48] sm:$0xff]
      %v298 = vld [vmem:[%s278 + $0x50] sm:$0xff]
      %v299 = vld [vmem:[%s278 + $0x58] sm:$0x1]
      %v300 = vld [vmem:[%s278 + $0x60] sm:$0xff]
      %v301 = vld [vmem:[%s278 + $0x68] sm:$0xff]
      %v302 = vld [vmem:[%s278 + $0x70] sm:$0x1]
      %v303 = vld [vmem:[%s278 + $0x78] sm:$0xff]
      %v304 = vld [vmem:[%s278 + $0x80] sm:$0xff]
      %v305 = vld [vmem:[%s278 + $0x88] sm:$0x1]
      %v306 = vld [vmem:[%s278 + $0x90] sm:$0xff]
      %v307 = vld [vmem:[%s278 + $0x98] sm:$0xff]
      %v308 = vld [vmem:[%s278 + $0xa0] sm:$0x1]
      %v309 = vld [vmem:[%s278 + $0xa8] sm:$0xff]
      %v310 = vld [vmem:[%s278 + $0xb0] sm:$0xff]
      %v311 = vld [vmem:[%s278 + $0xb8] sm:$0x1]
      %vm312 = vcmask 1040384
      %v313 = vsel %vm312, %v290, 0.0
      %v314 = vsel %vm312, %v293, 0.0
      %v315 = vsel %vm312, %v296, 0.0
      %v316 = vsel %vm312, %v299, 0.0
      %v317 = vsel %vm312, %v302, 0.0
      %v318 = vsel %vm312, %v305, 0.0
      %v319 = vsel %vm312, %v308, 0.0
      %v320 = vsel %vm312, %v311, 0.0
      %v321 = vld [vmem:[%s1] sm:$0x1]
      %v322 = vld [vmem:[%s2] sm:$0x1]
      %vm323 = vcmask 523264
      %v324 = vsel %vm323, %v288, 0.0
      %325 = vadd.xlane.f32.xlu0 %v324
      %v326 = vpop.xlane.xlu0 %325
      %v327 = vsel %vm323, %v289, 0.0
      %328 = vadd.xlane.f32.xlu0 %v327
      %v329 = vpop.xlane.xlu0 %328
      %v330 = vsel %vm323, %v313, 0.0
      %331 = vadd.xlane.f32.xlu0 %v330
      %v332 = vpop.xlane.xlu0 %331
      %v333 = vsel %vm323, %v291, 0.0
      %334 = vadd.xlane.f32.xlu0 %v333
      %v335 = vpop.xlane.xlu0 %334
      %v336 = vsel %vm323, %v292, 0.0
      %337 = vadd.xlane.f32.xlu0 %v336
      %v338 = vpop.xlane.xlu0 %337
      %v339 = vsel %vm323, %v314, 0.0
      %340 = vadd.xlane.f32.xlu0 %v339
      %v341 = vpop.xlane.xlu0 %340
      %v342 = vsel %vm323, %v294, 0.0
      %343 = vadd.xlane.f32.xlu0 %v342
      %v344 = vpop.xlane.xlu0 %343
      %v345 = vsel %vm323, %v295, 0.0
      %346 = vadd.xlane.f32.xlu0 %v345
      %v347 = vpop.xlane.xlu0 %346
      %v348 = vsel %vm323, %v315, 0.0
      %349 = vadd.xlane.f32.xlu0 %v348
      %v350 = vpop.xlane.xlu0 %349
      %v351 = vsel %vm323, %v297, 0.0
      %352 = vadd.xlane.f32.xlu0 %v351
      %v353 = vpop.xlane.xlu0 %352
      %v354 = vsel %vm323, %v298, 0.0
      %355 = vadd.xlane.f32.xlu0 %v354
      %v356 = vpop.xlane.xlu0 %355
      %v357 = vsel %vm323, %v316, 0.0
      %358 = vadd.xlane.f32.xlu0 %v357
      %v359 = vpop.xlane.xlu0 %358
      %v360 = vsel %vm323, %v300, 0.0
      %361 = vadd.xlane.f32.xlu0 %v360
      %v362 = vpop.xlane.xlu0 %361
      %v363 = vsel %vm323, %v301, 0.0
      %364 = vadd.xlane.f32.xlu0 %v363
      %v365 = vpop.xlane.xlu0 %364
      %v366 = vsel %vm323, %v317, 0.0
      %367 = vadd.xlane.f32.xlu0 %v366
      %v368 = vpop.xlane.xlu0 %367
      %v369 = vsel %vm323, %v303, 0.0
      %370 = vadd.xlane.f32.xlu0 %v369
      %v371 = vpop.xlane.xlu0 %370
      %v372 = vsel %vm323, %v304, 0.0
      %373 = vadd.xlane.f32.xlu0 %v372
      %v374 = vpop.xlane.xlu0 %373
      %v375 = vsel %vm323, %v318, 0.0
      %376 = vadd.xlane.f32.xlu0 %v375
      %v377 = vpop.xlane.xlu0 %376
      %v378 = vsel %vm323, %v306, 0.0
      %379 = vadd.xlane.f32.xlu0 %v378
      %v380 = vpop.xlane.xlu0 %379
      %v381 = vsel %vm323, %v307, 0.0
      %382 = vadd.xlane.f32.xlu0 %v381
      %v383 = vpop.xlane.xlu0 %382
      %v384 = vsel %vm323, %v319, 0.0
      %385 = vadd.xlane.f32.xlu0 %v384
      %v386 = vpop.xlane.xlu0 %385
      %v387 = vsel %vm323, %v309, 0.0
      %388 = vadd.xlane.f32.xlu0 %v387
      %v389 = vpop.xlane.xlu0 %388
      %v390 = vsel %vm323, %v310, 0.0
      %391 = vadd.xlane.f32.xlu0 %v390
      %v392 = vpop.xlane.xlu0 %391
      %v393 = vsel %vm323, %v320, 0.0
      %394 = vadd.xlane.f32.xlu0 %v393
      %v395 = vpop.xlane.xlu0 %394
      %v396 = vrcp.pop 64.0
      %v397 = vmul.f32 64.0, %v396
      %v398 = vsub.f32 1.0, %v397
      %v399 = vmul.f32 %v396, %v398
      %v400 = vadd.f32 %v396, %v399
      %vm401 = vweird.f32 %v396
      %v402 = vsel %vm401, %v396, %v400
      %v403 = vmul.f32 %v326, %v402
      %v404 = vmul.f32 %v329, %v402
      %v405 = vmul.f32 %v332, %v402
      %v406 = vmul.f32 %v335, %v402
      %v407 = vmul.f32 %v338, %v402
      %v408 = vmul.f32 %v341, %v402
      %v409 = vmul.f32 %v344, %v402
      %v410 = vmul.f32 %v347, %v402
      %v411 = vmul.f32 %v350, %v402
      %v412 = vmul.f32 %v353, %v402
      %v413 = vmul.f32 %v356, %v402
      %v414 = vmul.f32 %v359, %v402
      %v415 = vmul.f32 %v362, %v402
      %v416 = vmul.f32 %v365, %v402
      %v417 = vmul.f32 %v368, %v402
      %v418 = vmul.f32 %v371, %v402
      %v419 = vmul.f32 %v374, %v402
      %v420 = vmul.f32 %v377, %v402
      %v421 = vmul.f32 %v380, %v402
      %v422 = vmul.f32 %v383, %v402
      %v423 = vmul.f32 %v386, %v402
      %v424 = vmul.f32 %v389, %v402
      %v425 = vmul.f32 %v392, %v402
      %v426 = vmul.f32 %v395, %v402
      %v427 = vsub.f32 %v288, %v403
      %v428 = vsub.f32 %v289, %v404
      %v429 = vsub.f32 %v313, %v405
      %v430 = vsub.f32 %v291, %v406
      %v431 = vsub.f32 %v292, %v407
      %v432 = vsub.f32 %v314, %v408
      %v433 = vsub.f32 %v294, %v409
      %v434 = vsub.f32 %v295, %v410
      %v435 = vsub.f32 %v315, %v411
      %v436 = vsub.f32 %v297, %v412
      %v437 = vsub.f32 %v298, %v413
      %v438 = vsub.f32 %v316, %v414
      %v439 = vsub.f32 %v300, %v415
      %v440 = vsub.f32 %v301, %v416
      %v441 = vsub.f32 %v317, %v417
      %v442 = vsub.f32 %v303, %v418
      %v443 = vsub.f32 %v304, %v419
      %v444 = vsub.f32 %v318, %v420
      %v445 = vsub.f32 %v306, %v421
      %v446 = vsub.f32 %v307, %v422
      %v447 = vsub.f32 %v319, %v423
      %v448 = vsub.f32 %v309, %v424
      %v449 = vsub.f32 %v310, %v425
      %v450 = vsub.f32 %v320, %v426
      %v451 = vmul.f32 %v427, %v427
      %v452 = vmul.f32 %v428, %v428
      %v453 = vmul.f32 %v429, %v429
      %v454 = vmul.f32 %v430, %v430
      %v455 = vmul.f32 %v431, %v431
      %v456 = vmul.f32 %v432, %v432
      %v457 = vmul.f32 %v433, %v433
      %v458 = vmul.f32 %v434, %v434
      %v459 = vmul.f32 %v435, %v435
      %v460 = vmul.f32 %v436, %v436
      %v461 = vmul.f32 %v437, %v437
      %v462 = vmul.f32 %v438, %v438
      %v463 = vmul.f32 %v439, %v439
      %v464 = vmul.f32 %v440, %v440
      %v465 = vmul.f32 %v441, %v441
      %v466 = vmul.f32 %v442, %v442
      %v467 = vmul.f32 %v443, %v443
      %v468 = vmul.f32 %v444, %v444
      %v469 = vmul.f32 %v445, %v445
      %v470 = vmul.f32 %v446, %v446
      %v471 = vmul.f32 %v447, %v447
      %v472 = vmul.f32 %v448, %v448
      %v473 = vmul.f32 %v449, %v449
      %v474 = vmul.f32 %v450, %v450
      %v475 = vsel %vm323, %v451, 0.0
      %476 = vadd.xlane.f32.xlu0 %v475
      %v477 = vpop.xlane.xlu0 %476
      %v478 = vsel %vm323, %v452, 0.0
      %479 = vadd.xlane.f32.xlu0 %v478
      %v480 = vpop.xlane.xlu0 %479
      %v481 = vsel %vm323, %v453, 0.0
      %482 = vadd.xlane.f32.xlu0 %v481
      %v483 = vpop.xlane.xlu0 %482
      %v484 = vsel %vm323, %v454, 0.0
      %485 = vadd.xlane.f32.xlu0 %v484
      %v486 = vpop.xlane.xlu0 %485
      %v487 = vsel %vm323, %v455, 0.0
      %488 = vadd.xlane.f32.xlu0 %v487
      %v489 = vpop.xlane.xlu0 %488
      %v490 = vsel %vm323, %v456, 0.0
      %491 = vadd.xlane.f32.xlu0 %v490
      %v492 = vpop.xlane.xlu0 %491
      %v493 = vsel %vm323, %v457, 0.0
      %494 = vadd.xlane.f32.xlu0 %v493
      %v495 = vpop.xlane.xlu0 %494
      %v496 = vsel %vm323, %v458, 0.0
      %497 = vadd.xlane.f32.xlu0 %v496
      %v498 = vpop.xlane.xlu0 %497
      %v499 = vsel %vm323, %v459, 0.0
      %500 = vadd.xlane.f32.xlu0 %v499
      %v501 = vpop.xlane.xlu0 %500
      %v502 = vsel %vm323, %v460, 0.0
      %503 = vadd.xlane.f32.xlu0 %v502
      %v504 = vpop.xlane.xlu0 %503
      %v505 = vsel %vm323, %v461, 0.0
      %506 = vadd.xlane.f32.xlu0 %v505
      %v507 = vpop.xlane.xlu0 %506
      %v508 = vsel %vm323, %v462, 0.0
      %509 = vadd.xlane.f32.xlu0 %v508
      %v510 = vpop.xlane.xlu0 %509
      %v511 = vsel %vm323, %v463, 0.0
      %512 = vadd.xlane.f32.xlu0 %v511
      %v513 = vpop.xlane.xlu0 %512
      %v514 = vsel %vm323, %v464, 0.0
      %515 = vadd.xlane.f32.xlu0 %v514
      %v516 = vpop.xlane.xlu0 %515
      %v517 = vsel %vm323, %v465, 0.0
      %518 = vadd.xlane.f32.xlu0 %v517
      %v519 = vpop.xlane.xlu0 %518
      %v520 = vsel %vm323, %v466, 0.0
      %521 = vadd.xlane.f32.xlu0 %v520
      %v522 = vpop.xlane.xlu0 %521
      %v523 = vsel %vm323, %v467, 0.0
      %524 = vadd.xlane.f32.xlu0 %v523
      %v525 = vpop.xlane.xlu0 %524
      %v526 = vsel %vm323, %v468, 0.0
      %527 = vadd.xlane.f32.xlu0 %v526
      %v528 = vpop.xlane.xlu0 %527
      %v529 = vsel %vm323, %v469, 0.0
      %530 = vadd.xlane.f32.xlu0 %v529
      %v531 = vpop.xlane.xlu0 %530
      %v532 = vsel %vm323, %v470, 0.0
      %533 = vadd.xlane.f32.xlu0 %v532
      %v534 = vpop.xlane.xlu0 %533
      %v535 = vsel %vm323, %v471, 0.0
      %536 = vadd.xlane.f32.xlu0 %v535
      %v537 = vpop.xlane.xlu0 %536
      %v538 = vsel %vm323, %v472, 0.0
      %539 = vadd.xlane.f32.xlu0 %v538
      %v540 = vpop.xlane.xlu0 %539
      %v541 = vsel %vm323, %v473, 0.0
      %542 = vadd.xlane.f32.xlu0 %v541
      %v543 = vpop.xlane.xlu0 %542
      %v544 = vsel %vm323, %v474, 0.0
      %545 = vadd.xlane.f32.xlu0 %v544
      %v546 = vpop.xlane.xlu0 %545
      %v547 = vmul.f32 %v477, %v402
      %v548 = vmul.f32 %v480, %v402
      %v549 = vmul.f32 %v483, %v402
      %v550 = vmul.f32 %v486, %v402
      %v551 = vmul.f32 %v489, %v402
      %v552 = vmul.f32 %v492, %v402
      %v553 = vmul.f32 %v495, %v402
      %v554 = vmul.f32 %v498, %v402
      %v555 = vmul.f32 %v501, %v402
      %v556 = vmul.f32 %v504, %v402
      %v557 = vmul.f32 %v507, %v402
      %v558 = vmul.f32 %v510, %v402
      %v559 = vmul.f32 %v513, %v402
      %v560 = vmul.f32 %v516, %v402
      %v561 = vmul.f32 %v519, %v402
      %v562 = vmul.f32 %v522, %v402
      %v563 = vmul.f32 %v525, %v402
      %v564 = vmul.f32 %v528, %v402
      %v565 = vmul.f32 %v531, %v402
      %v566 = vmul.f32 %v534, %v402
      %v567 = vmul.f32 %v537, %v402
      %v568 = vmul.f32 %v540, %v402
      %v569 = vmul.f32 %v543, %v402
      %v570 = vmul.f32 %v546, %v402
      %v571 = vadd.f32 %v547, 1e-05
      %v572 = vadd.f32 %v548, 1e-05
      %v573 = vadd.f32 %v549, 1e-05
      %v574 = vadd.f32 %v550, 1e-05
      %v575 = vadd.f32 %v551, 1e-05
      %v576 = vadd.f32 %v552, 1e-05
      %v577 = vadd.f32 %v553, 1e-05
      %v578 = vadd.f32 %v554, 1e-05
      %v579 = vadd.f32 %v555, 1e-05
      %v580 = vadd.f32 %v556, 1e-05
      %v581 = vadd.f32 %v557, 1e-05
      %v582 = vadd.f32 %v558, 1e-05
      %v583 = vadd.f32 %v559, 1e-05
      %v584 = vadd.f32 %v560, 1e-05
      %v585 = vadd.f32 %v561, 1e-05
      %v586 = vadd.f32 %v562, 1e-05
      %v587 = vadd.f32 %v563, 1e-05
      %v588 = vadd.f32 %v564, 1e-05
      %v589 = vadd.f32 %v565, 1e-05
      %v590 = vadd.f32 %v566, 1e-05
      %v591 = vadd.f32 %v567, 1e-05
      %v592 = vadd.f32 %v568, 1e-05
      %v593 = vadd.f32 %v569, 1e-05
      %v594 = vadd.f32 %v570, 1e-05
      %v595 = vrsqrt.pop %v571
      %v596 = vmul.f32 %v595, %v571
      %v597 = vmul.f32 %v596, %v595
      %v598 = vmul.f32 0.5, %v597
      %v599 = vsub.f32 1.5, %v598
      %v600 = vmul.f32 %v595, %v599
      %vm601 = vweird.f32 %v571
      %vm602 = vweird.f32 %v595
      %vm603 = vmor %vm601, %vm602
      %v604 = vsel %vm603, %v595, %v600
      %v605 = vrsqrt.pop %v572
      %v606 = vmul.f32 %v605, %v572
      %v607 = vmul.f32 %v606, %v605
      %v608 = vmul.f32 0.5, %v607
      %v609 = vsub.f32 1.5, %v608
      %v610 = vmul.f32 %v605, %v609
      %vm611 = vweird.f32 %v572
      %vm612 = vweird.f32 %v605
      %vm613 = vmor %vm611, %vm612
      %v614 = vsel %vm613, %v605, %v610
      %v615 = vrsqrt.pop %v573
      %v616 = vmul.f32 %v615, %v573
      %v617 = vmul.f32 %v616, %v615
      %v618 = vmul.f32 0.5, %v617
      %v619 = vsub.f32 1.5, %v618
      %v620 = vmul.f32 %v615, %v619
      %vm621 = vweird.f32 %v573
      %vm622 = vweird.f32 %v615
      %vm623 = vmor %vm621, %vm622
      %v624 = vsel %vm623, %v615, %v620
      %v625 = vrsqrt.pop %v574
      %v626 = vmul.f32 %v625, %v574
      %v627 = vmul.f32 %v626, %v625
      %v628 = vmul.f32 0.5, %v627
      %v629 = vsub.f32 1.5, %v628
      %v630 = vmul.f32 %v625, %v629
      %vm631 = vweird.f32 %v574
      %vm632 = vweird.f32 %v625
      %vm633 = vmor %vm631, %vm632
      %v634 = vsel %vm633, %v625, %v630
      %v635 = vrsqrt.pop %v575
      %v636 = vmul.f32 %v635, %v575
      %v637 = vmul.f32 %v636, %v635
      %v638 = vmul.f32 0.5, %v637
      %v639 = vsub.f32 1.5, %v638
      %v640 = vmul.f32 %v635, %v639
      %vm641 = vweird.f32 %v575
      %vm642 = vweird.f32 %v635
      %vm643 = vmor %vm641, %vm642
      %v644 = vsel %vm643, %v635, %v640
      %v645 = vrsqrt.pop %v576
      %v646 = vmul.f32 %v645, %v576
      %v647 = vmul.f32 %v646, %v645
      %v648 = vmul.f32 0.5, %v647
      %v649 = vsub.f32 1.5, %v648
      %v650 = vmul.f32 %v645, %v649
      %vm651 = vweird.f32 %v576
      %vm652 = vweird.f32 %v645
      %vm653 = vmor %vm651, %vm652
      %v654 = vsel %vm653, %v645, %v650
      %v655 = vrsqrt.pop %v577
      %v656 = vmul.f32 %v655, %v577
      %v657 = vmul.f32 %v656, %v655
      %v658 = vmul.f32 0.5, %v657
      %v659 = vsub.f32 1.5, %v658
      %v660 = vmul.f32 %v655, %v659
      %vm661 = vweird.f32 %v577
      %vm662 = vweird.f32 %v655
      %vm663 = vmor %vm661, %vm662
      %v664 = vsel %vm663, %v655, %v660
      %v665 = vrsqrt.pop %v578
      %v666 = vmul.f32 %v665, %v578
      %v667 = vmul.f32 %v666, %v665
      %v668 = vmul.f32 0.5, %v667
      %v669 = vsub.f32 1.5, %v668
      %v670 = vmul.f32 %v665, %v669
      %vm671 = vweird.f32 %v578
      %vm672 = vweird.f32 %v665
      %vm673 = vmor %vm671, %vm672
      %v674 = vsel %vm673, %v665, %v670
      %v675 = vrsqrt.pop %v579
      %v676 = vmul.f32 %v675, %v579
      %v677 = vmul.f32 %v676, %v675
      %v678 = vmul.f32 0.5, %v677
      %v679 = vsub.f32 1.5, %v678
      %v680 = vmul.f32 %v675, %v679
      %vm681 = vweird.f32 %v579
      %vm682 = vweird.f32 %v675
      %vm683 = vmor %vm681, %vm682
      %v684 = vsel %vm683, %v675, %v680
      %v685 = vrsqrt.pop %v580
      %v686 = vmul.f32 %v685, %v580
      %v687 = vmul.f32 %v686, %v685
      %v688 = vmul.f32 0.5, %v687
      %v689 = vsub.f32 1.5, %v688
      %v690 = vmul.f32 %v685, %v689
      %vm691 = vweird.f32 %v580
      %vm692 = vweird.f32 %v685
      %vm693 = vmor %vm691, %vm692
      %v694 = vsel %vm693, %v685, %v690
      %v695 = vrsqrt.pop %v581
      %v696 = vmul.f32 %v695, %v581
      %v697 = vmul.f32 %v696, %v695
      %v698 = vmul.f32 0.5, %v697
      %v699 = vsub.f32 1.5, %v698
      %v700 = vmul.f32 %v695, %v699
      %vm701 = vweird.f32 %v581
      %vm702 = vweird.f32 %v695
      %vm703 = vmor %vm701, %vm702
      %v704 = vsel %vm703, %v695, %v700
      %v705 = vrsqrt.pop %v582
      %v706 = vmul.f32 %v705, %v582
      %v707 = vmul.f32 %v706, %v705
      %v708 = vmul.f32 0.5, %v707
      %v709 = vsub.f32 1.5, %v708
      %v710 = vmul.f32 %v705, %v709
      %vm711 = vweird.f32 %v582
      %vm712 = vweird.f32 %v705
      %vm713 = vmor %vm711, %vm712
      %v714 = vsel %vm713, %v705, %v710
      %v715 = vrsqrt.pop %v583
      %v716 = vmul.f32 %v715, %v583
      %v717 = vmul.f32 %v716, %v715
      %v718 = vmul.f32 0.5, %v717
      %v719 = vsub.f32 1.5, %v718
      %v720 = vmul.f32 %v715, %v719
      %vm721 = vweird.f32 %v583
      %vm722 = vweird.f32 %v715
      %vm723 = vmor %vm721, %vm722
      %v724 = vsel %vm723, %v715, %v720
      %v725 = vrsqrt.pop %v584
      %v726 = vmul.f32 %v725, %v584
      %v727 = vmul.f32 %v726, %v725
      %v728 = vmul.f32 0.5, %v727
      %v729 = vsub.f32 1.5, %v728
      %v730 = vmul.f32 %v725, %v729
      %vm731 = vweird.f32 %v584
      %vm732 = vweird.f32 %v725
      %vm733 = vmor %vm731, %vm732
      %v734 = vsel %vm733, %v725, %v730
      %v735 = vrsqrt.pop %v585
      %v736 = vmul.f32 %v735, %v585
      %v737 = vmul.f32 %v736, %v735
      %v738 = vmul.f32 0.5, %v737
      %v739 = vsub.f32 1.5, %v738
      %v740 = vmul.f32 %v735, %v739
      %vm741 = vweird.f32 %v585
      %vm742 = vweird.f32 %v735
      %vm743 = vmor %vm741, %vm742
      %v744 = vsel %vm743, %v735, %v740
      %v745 = vrsqrt.pop %v586
      %v746 = vmul.f32 %v745, %v586
      %v747 = vmul.f32 %v746, %v745
      %v748 = vmul.f32 0.5, %v747
      %v749 = vsub.f32 1.5, %v748
      %v750 = vmul.f32 %v745, %v749
      %vm751 = vweird.f32 %v586
      %vm752 = vweird.f32 %v745
      %vm753 = vmor %vm751, %vm752
      %v754 = vsel %vm753, %v745, %v750
      %v755 = vrsqrt.pop %v587
      %v756 = vmul.f32 %v755, %v587
      %v757 = vmul.f32 %v756, %v755
      %v758 = vmul.f32 0.5, %v757
      %v759 = vsub.f32 1.5, %v758
      %v760 = vmul.f32 %v755, %v759
      %vm761 = vweird.f32 %v587
      %vm762 = vweird.f32 %v755
      %vm763 = vmor %vm761, %vm762
      %v764 = vsel %vm763, %v755, %v760
      %v765 = vrsqrt.pop %v588
      %v766 = vmul.f32 %v765, %v588
      %v767 = vmul.f32 %v766, %v765
      %v768 = vmul.f32 0.5, %v767
      %v769 = vsub.f32 1.5, %v768
      %v770 = vmul.f32 %v765, %v769
      %vm771 = vweird.f32 %v588
      %vm772 = vweird.f32 %v765
      %vm773 = vmor %vm771, %vm772
      %v774 = vsel %vm773, %v765, %v770
      %v775 = vrsqrt.pop %v589
      %v776 = vmul.f32 %v775, %v589
      %v777 = vmul.f32 %v776, %v775
      %v778 = vmul.f32 0.5, %v777
      %v779 = vsub.f32 1.5, %v778
      %v780 = vmul.f32 %v775, %v779
      %vm781 = vweird.f32 %v589
      %vm782 = vweird.f32 %v775
      %vm783 = vmor %vm781, %vm782
      %v784 = vsel %vm783, %v775, %v780
      %v785 = vrsqrt.pop %v590
      %v786 = vmul.f32 %v785, %v590
      %v787 = vmul.f32 %v786, %v785
      %v788 = vmul.f32 0.5, %v787
      %v789 = vsub.f32 1.5, %v788
      %v790 = vmul.f32 %v785, %v789
      %vm791 = vweird.f32 %v590
      %vm792 = vweird.f32 %v785
      %vm793 = vmor %vm791, %vm792
      %v794 = vsel %vm793, %v785, %v790
      %v795 = vrsqrt.pop %v591
      %v796 = vmul.f32 %v795, %v591
      %v797 = vmul.f32 %v796, %v795
      %v798 = vmul.f32 0.5, %v797
      %v799 = vsub.f32 1.5, %v798
      %v800 = vmul.f32 %v795, %v799
      %vm801 = vweird.f32 %v591
      %vm802 = vweird.f32 %v795
      %vm803 = vmor %vm801, %vm802
      %v804 = vsel %vm803, %v795, %v800
      %v805 = vrsqrt.pop %v592
      %v806 = vmul.f32 %v805, %v592
      %v807 = vmul.f32 %v806, %v805
      %v808 = vmul.f32 0.5, %v807
      %v809 = vsub.f32 1.5, %v808
      %v810 = vmul.f32 %v805, %v809
      %vm811 = vweird.f32 %v592
      %vm812 = vweird.f32 %v805
      %vm813 = vmor %vm811, %vm812
      %v814 = vsel %vm813, %v805, %v810
      %v815 = vrsqrt.pop %v593
      %v816 = vmul.f32 %v815, %v593
      %v817 = vmul.f32 %v816, %v815
      %v818 = vmul.f32 0.5, %v817
      %v819 = vsub.f32 1.5, %v818
      %v820 = vmul.f32 %v815, %v819
      %vm821 = vweird.f32 %v593
      %vm822 = vweird.f32 %v815
      %vm823 = vmor %vm821, %vm822
      %v824 = vsel %vm823, %v815, %v820
      %v825 = vrsqrt.pop %v594
      %v826 = vmul.f32 %v825, %v594
      %v827 = vmul.f32 %v826, %v825
      %v828 = vmul.f32 0.5, %v827
      %v829 = vsub.f32 1.5, %v828
      %v830 = vmul.f32 %v825, %v829
      %vm831 = vweird.f32 %v594
      %vm832 = vweird.f32 %v825
      %vm833 = vmor %vm831, %vm832
      %v834 = vsel %vm833, %v825, %v830
      %v835 = vmul.f32 %v427, %v604
      %v836 = vmul.f32 %v428, %v614
      %v837 = vmul.f32 %v429, %v624
      %v838 = vmul.f32 %v430, %v634
      %v839 = vmul.f32 %v431, %v644
      %v840 = vmul.f32 %v432, %v654
      %v841 = vmul.f32 %v433, %v664
      %v842 = vmul.f32 %v434, %v674
      %v843 = vmul.f32 %v435, %v684
      %v844 = vmul.f32 %v436, %v694
      %v845 = vmul.f32 %v437, %v704
      %v846 = vmul.f32 %v438, %v714
      %v847 = vmul.f32 %v439, %v724
      %v848 = vmul.f32 %v440, %v734
      %v849 = vmul.f32 %v441, %v744
      %v850 = vmul.f32 %v442, %v754
      %v851 = vmul.f32 %v443, %v764
      %v852 = vmul.f32 %v444, %v774
      %v853 = vmul.f32 %v445, %v784
      %v854 = vmul.f32 %v446, %v794
      %v855 = vmul.f32 %v447, %v804
      %v856 = vmul.f32 %v448, %v814
      %v857 = vmul.f32 %v449, %v824
      %v858 = vmul.f32 %v450, %v834
      %v860 = vperm.slane %v321, 0
      %v862 = vmul.f32 %v835, %v860
      %v863 = vmul.f32 %v836, %v860
      %v864 = vmul.f32 %v837, %v860
      %v865 = vmul.f32 %v838, %v860
      %v866 = vmul.f32 %v839, %v860
      %v867 = vmul.f32 %v840, %v860
      %v868 = vmul.f32 %v841, %v860
      %v869 = vmul.f32 %v842, %v860
      %v870 = vmul.f32 %v843, %v860
      %v871 = vmul.f32 %v844, %v860
      %v872 = vmul.f32 %v845, %v860
      %v873 = vmul.f32 %v846, %v860
      %v874 = vmul.f32 %v847, %v860
      %v875 = vmul.f32 %v848, %v860
      %v876 = vmul.f32 %v849, %v860
      %v877 = vmul.f32 %v850, %v860
      %v878 = vmul.f32 %v851, %v860
      %v879 = vmul.f32 %v852, %v860
      %v880 = vmul.f32 %v853, %v860
      %v881 = vmul.f32 %v854, %v860
      %v882 = vmul.f32 %v855, %v860
      %v883 = vmul.f32 %v856, %v860
      %v884 = vmul.f32 %v857, %v860
      %v885 = vmul.f32 %v858, %v860
      %v887 = vperm.slane %v322, 0
      %v889 = vadd.f32 %v862, %v887
      %v890 = vadd.f32 %v863, %v887
      %v891 = vadd.f32 %v864, %v887
      %v892 = vadd.f32 %v865, %v887
      %v893 = vadd.f32 %v866, %v887
      %v894 = vadd.f32 %v867, %v887
      %v895 = vadd.f32 %v868, %v887
      %v896 = vadd.f32 %v869, %v887
      %v897 = vadd.f32 %v870, %v887
      %v898 = vadd.f32 %v871, %v887
      %v899 = vadd.f32 %v872, %v887
      %v900 = vadd.f32 %v873, %v887
      %v901 = vadd.f32 %v874, %v887
      %v902 = vadd.f32 %v875, %v887
      %v903 = vadd.f32 %v876, %v887
      %v904 = vadd.f32 %v877, %v887
      %v905 = vadd.f32 %v878, %v887
      %v906 = vadd.f32 %v879, %v887
      %v907 = vadd.f32 %v880, %v887
      %v908 = vadd.f32 %v881, %v887
      %v909 = vadd.f32 %v882, %v887
      %v910 = vadd.f32 %v883, %v887
      %v911 = vadd.f32 %v884, %v887
      %v912 = vadd.f32 %v885, %v887
      %v913 = vpack.c.bf16 %v890, %v889
      %v914 = vpack.c.bf16 %v892, %v891
      %v915 = vpack.c.bf16 %v894, %v893
      %v916 = vpack.c.bf16 %v896, %v895
      %v917 = vpack.c.bf16 %v898, %v897
      %v918 = vpack.c.bf16 %v900, %v899
      %v919 = vpack.c.bf16 %v902, %v901
      %v920 = vpack.c.bf16 %v904, %v903
      %v921 = vpack.c.bf16 %v906, %v905
      %v922 = vpack.c.bf16 %v908, %v907
      %v923 = vpack.c.bf16 %v910, %v909
      %v924 = vpack.c.bf16 %v912, %v911
      %v925 = vld [vmem:[%s3] sm:$0xff]
      %v926 = vld [vmem:[%s3 + $0x8] sm:$0xff]
      %v927 = vld [vmem:[%s3 + $0x10] sm:$0xff]
      %v928 = vld [vmem:[%s3 + $0x18] sm:$0xff]
      %v929 = vld [vmem:[%s3 + $0x20] sm:$0xff]
      %v930 = vld [vmem:[%s3 + $0x28] sm:$0xff]
      %v931 = vld [vmem:[%s3 + $0x30] sm:$0xff]
      %v932 = vld [vmem:[%s3 + $0x38] sm:$0xff]
      %v933 = vld [vmem:[%s4] sm:$0x3]
      %v935 = vperm.slane %v933, 0
      %v936 = vperm.slane %v933, 1
      %v947 = vunpack.c.l.b16 %v925
      %v948 = vunpack.c.h.b16 %v925
      %v949 = vunpack.c.l.b16 %v926
      %v950 = vunpack.c.h.b16 %v926
      %v951 = vunpack.c.l.b16 %v927
      %v952 = vunpack.c.h.b16 %v927
      %v953 = vunpack.c.l.b16 %v928
      %v954 = vunpack.c.h.b16 %v928
      %v955 = vunpack.c.l.b16 %v929
      %v956 = vunpack.c.h.b16 %v929
      %v957 = vunpack.c.l.b16 %v930
      %v958 = vunpack.c.h.b16 %v930
      %v959 = vunpack.c.l.b16 %v931
      %v960 = vunpack.c.h.b16 %v931
      %v961 = vunpack.c.l.b16 %v932
      %v962 = vunpack.c.h.b16 %v932
      %v963 = vpack.c.b16 %v949, %v947
      %v964 = vpack.c.b16 %v950, %v948
      %v965 = vpack.c.b16 %v953, %v951
      %v966 = vpack.c.b16 %v954, %v952
      %v967 = vpack.c.b16 %v957, %v955
      %v968 = vpack.c.b16 %v958, %v956
      %v969 = vpack.c.b16 %v961, %v959
      %v970 = vpack.c.b16 %v962, %v960
      %v980 = vsel %vm323, %v913, 0
      %v983 = vsel %vm323, %v914, 0
      %v986 = vsel %vm323, %v915, 0
      %v989 = vsel %vm323, %v916, 0
      %v992 = vsel %vm323, %v917, 0
      %v995 = vsel %vm323, %v918, 0
      %v998 = vsel %vm323, %v919, 0
      %v1001 = vsel %vm323, %v920, 0
      %v1004 = vsel %vm323, %v921, 0
      %v1007 = vsel %vm323, %v922, 0
      %v1010 = vsel %vm323, %v923, 0
      %v1013 = vsel %vm323, %v924, 0
      %1015 = vmatpush.bf16.msra.mxu0 0
      %1016 = vmatpush.bf16.msra.mxu0 0
      %1017 = vmatpush.bf16.msra.mxu0 0
      %1018 = vmatpush.bf16.msra.mxu0 0
      %1019 = vmatpush.bf16.msra.mxu0 %v969
      %1020 = vmatpush.bf16.msra.mxu0 %v967
      %1021 = vmatpush.bf16.msra.mxu0 %v965
      %1022 = vmatpush.bf16.msra.mxu0 %v963
      %1023 = vmatmul.bf16.gmra.mxu0 %v980
      %v1024 = vpop.f32.mrf.mxu0
      %v1025 = vadd.f32 %v935, %v1024
      %v1026 = vpop.f32.mrf.mxu0
      %v1027 = vadd.f32 %v935, %v1026
      %1028 = vmatmul.bf16.gmra.mxu0 %v983
      %v1029 = vpop.f32.mrf.mxu0
      %v1030 = vadd.f32 %v935, %v1029
      %v1031 = vpop.f32.mrf.mxu0
      %v1032 = vadd.f32 %v935, %v1031
      %1033 = vmatmul.bf16.gmra.mxu0 %v986
      %v1034 = vpop.f32.mrf.mxu0
      %v1035 = vadd.f32 %v935, %v1034
      %v1036 = vpop.f32.mrf.mxu0
      %v1037 = vadd.f32 %v935, %v1036
      %1038 = vmatmul.bf16.gmra.mxu0 %v989
      %v1039 = vpop.f32.mrf.mxu0
      %v1040 = vadd.f32 %v935, %v1039
      %v1041 = vpop.f32.mrf.mxu0
      %v1042 = vadd.f32 %v935, %v1041
      %1043 = vmatmul.bf16.gmra.mxu0 %v992
      %v1044 = vpop.f32.mrf.mxu0
      %v1045 = vadd.f32 %v935, %v1044
      %v1046 = vpop.f32.mrf.mxu0
      %v1047 = vadd.f32 %v935, %v1046
      %1048 = vmatmul.bf16.gmra.mxu0 %v995
      %v1049 = vpop.f32.mrf.mxu0
      %v1050 = vadd.f32 %v935, %v1049
      %v1051 = vpop.f32.mrf.mxu0
      %v1052 = vadd.f32 %v935, %v1051
      %1053 = vmatmul.bf16.gmra.mxu0 %v998
      %v1054 = vpop.f32.mrf.mxu0
      %v1055 = vadd.f32 %v935, %v1054
      %v1056 = vpop.f32.mrf.mxu0
      %v1057 = vadd.f32 %v935, %v1056
      %1058 = vmatmul.bf16.gmra.mxu0 %v1001
      %v1059 = vpop.f32.mrf.mxu0
      %v1060 = vadd.f32 %v935, %v1059
      %v1061 = vpop.f32.mrf.mxu0
      %v1062 = vadd.f32 %v935, %v1061
      %1063 = vmatmul.bf16.gmra.mxu0 %v1004
      %v1064 = vpop.f32.mrf.mxu0
      %v1065 = vadd.f32 %v935, %v1064
      %v1066 = vpop.f32.mrf.mxu0
      %v1067 = vadd.f32 %v935, %v1066
      %1068 = vmatmul.bf16.gmra.mxu0 %v1007
      %v1069 = vpop.f32.mrf.mxu0
      %v1070 = vadd.f32 %v935, %v1069
      %v1071 = vpop.f32.mrf.mxu0
      %v1072 = vadd.f32 %v935, %v1071
      %1073 = vmatmul.bf16.gmra.mxu0 %v1010
      %v1074 = vpop.f32.mrf.mxu0
      %v1075 = vadd.f32 %v935, %v1074
      %v1076 = vpop.f32.mrf.mxu0
      %v1077 = vadd.f32 %v935, %v1076
      %1078 = vmatmul.bf16.gmra.mxu0 %v1013
      %v1079 = vpop.f32.mrf.mxu0
      %v1080 = vadd.f32 %v935, %v1079
      %v1081 = vpop.f32.mrf.mxu0
      %v1082 = vadd.f32 %v935, %v1081
      %1083 = vdwg.mxu0
      %1084 = vmatpush.bf16.msra.mxu0 0
      %1085 = vmatpush.bf16.msra.mxu0 0
      %1086 = vmatpush.bf16.msra.mxu0 0
      %1087 = vmatpush.bf16.msra.mxu0 0
      %1088 = vmatpush.bf16.msra.mxu0 %v970
      %1089 = vmatpush.bf16.msra.mxu0 %v968
      %1090 = vmatpush.bf16.msra.mxu0 %v966
      %1091 = vmatpush.bf16.msra.mxu0 %v964
      %1092 = vmatmul.bf16.gmra.mxu0 %v980
      %v1093 = vpop.f32.mrf.mxu0
      %v1094 = vadd.f32 %v936, %v1093
      %v1095 = vpop.f32.mrf.mxu0
      %v1096 = vadd.f32 %v936, %v1095
      %1097 = vmatmul.bf16.gmra.mxu0 %v983
      %v1098 = vpop.f32.mrf.mxu0
      %v1099 = vadd.f32 %v936, %v1098
      %v1100 = vpop.f32.mrf.mxu0
      %v1101 = vadd.f32 %v936, %v1100
      %1102 = vmatmul.bf16.gmra.mxu0 %v986
      %v1103 = vpop.f32.mrf.mxu0
      %v1104 = vadd.f32 %v936, %v1103
      %v1105 = vpop.f32.mrf.mxu0
      %v1106 = vadd.f32 %v936, %v1105
      %1107 = vmatmul.bf16.gmra.mxu0 %v989
      %v1108 = vpop.f32.mrf.mxu0
      %v1109 = vadd.f32 %v936, %v1108
      %v1110 = vpop.f32.mrf.mxu0
      %v1111 = vadd.f32 %v936, %v1110
      %1112 = vmatmul.bf16.gmra.mxu0 %v992
      %v1113 = vpop.f32.mrf.mxu0
      %v1114 = vadd.f32 %v936, %v1113
      %v1115 = vpop.f32.mrf.mxu0
      %v1116 = vadd.f32 %v936, %v1115
      %1117 = vmatmul.bf16.gmra.mxu0 %v995
      %v1118 = vpop.f32.mrf.mxu0
      %v1119 = vadd.f32 %v936, %v1118
      %v1120 = vpop.f32.mrf.mxu0
      %v1121 = vadd.f32 %v936, %v1120
      %1122 = vmatmul.bf16.gmra.mxu0 %v998
      %v1123 = vpop.f32.mrf.mxu0
      %v1124 = vadd.f32 %v936, %v1123
      %v1125 = vpop.f32.mrf.mxu0
      %v1126 = vadd.f32 %v936, %v1125
      %1127 = vmatmul.bf16.gmra.mxu0 %v1001
      %v1128 = vpop.f32.mrf.mxu0
      %v1129 = vadd.f32 %v936, %v1128
      %v1130 = vpop.f32.mrf.mxu0
      %v1131 = vadd.f32 %v936, %v1130
      %1132 = vmatmul.bf16.gmra.mxu0 %v1004
      %v1133 = vpop.f32.mrf.mxu0
      %v1134 = vadd.f32 %v936, %v1133
      %v1135 = vpop.f32.mrf.mxu0
      %v1136 = vadd.f32 %v936, %v1135
      %1137 = vmatmul.bf16.gmra.mxu0 %v1007
      %v1138 = vpop.f32.mrf.mxu0
      %v1139 = vadd.f32 %v936, %v1138
      %v1140 = vpop.f32.mrf.mxu0
      %v1141 = vadd.f32 %v936, %v1140
      %1142 = vmatmul.bf16.gmra.mxu0 %v1010
      %v1143 = vpop.f32.mrf.mxu0
      %v1144 = vadd.f32 %v936, %v1143
      %v1145 = vpop.f32.mrf.mxu0
      %v1146 = vadd.f32 %v936, %v1145
      %1147 = vmatmul.bf16.gmra.mxu0 %v1013
      %v1148 = vpop.f32.mrf.mxu0
      %v1149 = vadd.f32 %v936, %v1148
      %v1150 = vpop.f32.mrf.mxu0
      %v1151 = vadd.f32 %v936, %v1150
      %1152 = vdwg.mxu0
      %v1153 = vlaneseq
      %v1154 = vand.u32 %v1153, 127
      %vm1155 = vcmp.lt.s32.totalorder %v1154, 17
      %v1156 = vmul.f32 %v1025, 0.25
      %v1157 = vmul.f32 %v1027, 0.25
      %v1158 = vmul.f32 %v1030, 0.25
      %v1159 = vmul.f32 %v1032, 0.25
      %v1160 = vmul.f32 %v1035, 0.25
      %v1161 = vmul.f32 %v1037, 0.25
      %v1162 = vmul.f32 %v1040, 0.25
      %v1163 = vmul.f32 %v1042, 0.25
      %v1164 = vmul.f32 %v1045, 0.25
      %v1165 = vmul.f32 %v1047, 0.25
      %v1166 = vmul.f32 %v1050, 0.25
      %v1167 = vmul.f32 %v1052, 0.25
      %v1168 = vmul.f32 %v1055, 0.25
      %v1169 = vmul.f32 %v1057, 0.25
      %v1170 = vmul.f32 %v1060, 0.25
      %v1171 = vmul.f32 %v1062, 0.25
      %v1172 = vmul.f32 %v1065, 0.25
      %v1173 = vmul.f32 %v1067, 0.25
      %v1174 = vmul.f32 %v1070, 0.25
      %v1175 = vmul.f32 %v1072, 0.25
      %v1176 = vmul.f32 %v1075, 0.25
      %v1177 = vmul.f32 %v1077, 0.25
      %v1178 = vmul.f32 %v1080, 0.25
      %v1179 = vmul.f32 %v1082, 0.25
      %v1180 = vpack.c.bf16 %v1156, %v1156
      %v1181 = vpack.c.bf16 %v1157, %v1157
      %v1182 = vpack.c.bf16 %v1158, %v1158
      %v1183 = vpack.c.bf16 %v1159, %v1159
      %v1184 = vpack.c.bf16 %v1160, %v1160
      %v1185 = vpack.c.bf16 %v1161, %v1161
      %v1186 = vpack.c.bf16 %v1162, %v1162
      %v1187 = vpack.c.bf16 %v1163, %v1163
      %v1188 = vpack.c.bf16 %v1164, %v1164
      %v1189 = vpack.c.bf16 %v1165, %v1165
      %v1190 = vpack.c.bf16 %v1166, %v1166
      %v1191 = vpack.c.bf16 %v1167, %v1167
      %v1192 = vpack.c.bf16 %v1168, %v1168
      %v1193 = vpack.c.bf16 %v1169, %v1169
      %v1194 = vpack.c.bf16 %v1170, %v1170
      %v1195 = vpack.c.bf16 %v1171, %v1171
      %v1196 = vpack.c.bf16 %v1172, %v1172
      %v1197 = vpack.c.bf16 %v1173, %v1173
      %v1198 = vpack.c.bf16 %v1174, %v1174
      %v1199 = vpack.c.bf16 %v1175, %v1175
      %v1200 = vpack.c.bf16 %v1176, %v1176
      %v1201 = vpack.c.bf16 %v1177, %v1177
      %v1202 = vpack.c.bf16 %v1178, %v1178
      %v1203 = vpack.c.bf16 %v1179, %v1179
      %v1204 = vpack.c.bf16 %v1025, %v1025
      %v1205 = vpack.c.bf16 %v1027, %v1027
      %v1206 = vpack.c.bf16 %v1030, %v1030
      %v1207 = vpack.c.bf16 %v1032, %v1032
      %v1208 = vpack.c.bf16 %v1035, %v1035
      %v1209 = vpack.c.bf16 %v1037, %v1037
      %v1210 = vpack.c.bf16 %v1040, %v1040
      %v1211 = vpack.c.bf16 %v1042, %v1042
      %v1212 = vpack.c.bf16 %v1045, %v1045
      %v1213 = vpack.c.bf16 %v1047, %v1047
      %v1214 = vpack.c.bf16 %v1050, %v1050
      %v1215 = vpack.c.bf16 %v1052, %v1052
      %v1216 = vpack.c.bf16 %v1055, %v1055
      %v1217 = vpack.c.bf16 %v1057, %v1057
      %v1218 = vpack.c.bf16 %v1060, %v1060
      %v1219 = vpack.c.bf16 %v1062, %v1062
      %v1220 = vpack.c.bf16 %v1065, %v1065
      %v1221 = vpack.c.bf16 %v1067, %v1067
      %v1222 = vpack.c.bf16 %v1070, %v1070
      %v1223 = vpack.c.bf16 %v1072, %v1072
      %v1224 = vpack.c.bf16 %v1075, %v1075
      %v1225 = vpack.c.bf16 %v1077, %v1077
      %v1226 = vpack.c.bf16 %v1080, %v1080
      %v1227 = vpack.c.bf16 %v1082, %v1082
      %v1228 = vpack.c.bf16 %v1094, %v1094
      %v1229 = vpack.c.bf16 %v1096, %v1096
      %v1230 = vpack.c.bf16 %v1099, %v1099
      %v1231 = vpack.c.bf16 %v1101, %v1101
      %v1232 = vpack.c.bf16 %v1104, %v1104
      %v1233 = vpack.c.bf16 %v1106, %v1106
      %v1234 = vpack.c.bf16 %v1109, %v1109
      %v1235 = vpack.c.bf16 %v1111, %v1111
      %v1236 = vpack.c.bf16 %v1114, %v1114
      %v1237 = vpack.c.bf16 %v1116, %v1116
      %v1238 = vpack.c.bf16 %v1119, %v1119
      %v1239 = vpack.c.bf16 %v1121, %v1121
      %v1240 = vpack.c.bf16 %v1124, %v1124
      %v1241 = vpack.c.bf16 %v1126, %v1126
      %v1242 = vpack.c.bf16 %v1129, %v1129
      %v1243 = vpack.c.bf16 %v1131, %v1131
      %v1244 = vpack.c.bf16 %v1134, %v1134
      %v1245 = vpack.c.bf16 %v1136, %v1136
      %v1246 = vpack.c.bf16 %v1139, %v1139
      %v1247 = vpack.c.bf16 %v1141, %v1141
      %v1248 = vpack.c.bf16 %v1144, %v1144
      %v1249 = vpack.c.bf16 %v1146, %v1146
      %v1250 = vpack.c.bf16 %v1149, %v1149
      %v1251 = vpack.c.bf16 %v1151, %v1151
      %v1255 = vunpack.c.l.b16 %v1180
      %v1256 = vunpack.c.l.b16 %v1181
      %v1257 = vunpack.c.l.b16 %v1182
      %v1258 = vpack.c.b16 %v1256, %v1255
      %v1259 = vpack.c.b16 %v1257, %v1257
      %v1263 = vunpack.c.l.b16 %v1204
      %v1264 = vunpack.c.l.b16 %v1205
      %v1265 = vunpack.c.l.b16 %v1206
      %v1266 = vpack.c.b16 %v1264, %v1263
      %v1267 = vpack.c.b16 %v1265, %v1265
      %1268 = vrot.lane.b32.xlu0 %v1266, 64
      %v1269 = vpop.permute.xlu0 %1268
      %1270 = vrot.lane.b32.xlu0 %v1267, 64
      %v1271 = vpop.permute.xlu0 %1270
      %vm1272 = vcmask 130048
      %v1274 = vsel %vm1272, %v1258, 0
      %v1277 = vsel %vm1272, %v1259, 0
      %v1280 = vsel %vm1272, %v1269, 0
      %v1283 = vsel %vm1272, %v1271, 0
      %1285 = vmatpush.bf16.xpose.msra.mxu0 0
      %1286 = vmatpush.bf16.xpose.msra.mxu0 0
      %1287 = vmatpush.bf16.xpose.msra.mxu0 0
      %1288 = vmatpush.bf16.xpose.msra.mxu0 0
      %1289 = vmatpush.bf16.xpose.msra.mxu0 0
      %1290 = vmatpush.bf16.xpose.msra.mxu0 0
      %1291 = vmatpush.bf16.xpose.msra.mxu0 %v1283
      %1292 = vmatpush.bf16.xpose.msra.mxu0 %v1280
      %1293 = vmatmul.bf16.gmra.mxu0 %v1274
      %v1294 = vpop.f32.mrf.mxu0
      %v1295 = vadd.f32 0.0, %v1294
      %v1296 = vpop.f32.mrf.mxu0
      %v1297 = vadd.f32 0.0, %v1296
      %1298 = vmatmul.bf16.gmra.mxu0 %v1277
      %v1299 = vpop.f32.mrf.mxu0
      %v1300 = vadd.f32 0.0, %v1299
      %v1301 = vpop.f32.mrf.mxu0
      %1302 = vdwg.mxu0
      %v1306 = vunpack.c.l.b16 %v1183
      %v1307 = vunpack.c.l.b16 %v1184
      %v1308 = vunpack.c.l.b16 %v1185
      %v1309 = vpack.c.b16 %v1307, %v1306
      %v1310 = vpack.c.b16 %v1308, %v1308
      %v1314 = vunpack.c.l.b16 %v1207
      %v1315 = vunpack.c.l.b16 %v1208
      %v1316 = vunpack.c.l.b16 %v1209
      %v1317 = vpack.c.b16 %v1315, %v1314
      %v1318 = vpack.c.b16 %v1316, %v1316
      %1319 = vrot.lane.b32.xlu0 %v1317, 64
      %v1320 = vpop.permute.xlu0 %1319
      %1321 = vrot.lane.b32.xlu0 %v1318, 64
      %v1322 = vpop.permute.xlu0 %1321
      %v1324 = vsel %vm1272, %v1309, 0
      %v1327 = vsel %vm1272, %v1310, 0
      %v1330 = vsel %vm1272, %v1320, 0
      %v1333 = vsel %vm1272, %v1322, 0
      %1335 = vmatpush.bf16.xpose.msra.mxu0 0
      %1336 = vmatpush.bf16.xpose.msra.mxu0 0
      %1337 = vmatpush.bf16.xpose.msra.mxu0 0
      %1338 = vmatpush.bf16.xpose.msra.mxu0 0
      %1339 = vmatpush.bf16.xpose.msra.mxu0 0
      %1340 = vmatpush.bf16.xpose.msra.mxu0 0
      %1341 = vmatpush.bf16.xpose.msra.mxu0 %v1333
      %1342 = vmatpush.bf16.xpose.msra.mxu0 %v1330
      %1343 = vmatmul.bf16.gmra.mxu0 %v1324
      %v1344 = vpop.f32.mrf.mxu0
      %v1345 = vadd.f32 0.0, %v1344
      %v1346 = vpop.f32.mrf.mxu0
      %v1347 = vadd.f32 0.0, %v1346
      %1348 = vmatmul.bf16.gmra.mxu0 %v1327
      %v1349 = vpop.f32.mrf.mxu0
      %v1350 = vadd.f32 0.0, %v1349
      %v1351 = vpop.f32.mrf.mxu0
      %1352 = vdwg.mxu0
      %v1356 = vunpack.c.l.b16 %v1186
      %v1357 = vunpack.c.l.b16 %v1187
      %v1358 = vunpack.c.l.b16 %v1188
      %v1359 = vpack.c.b16 %v1357, %v1356
      %v1360 = vpack.c.b16 %v1358, %v1358
      %v1364 = vunpack.c.l.b16 %v1210
      %v1365 = vunpack.c.l.b16 %v1211
      %v1366 = vunpack.c.l.b16 %v1212
      %v1367 = vpack.c.b16 %v1365, %v1364
      %v1368 = vpack.c.b16 %v1366, %v1366
      %1369 = vrot.lane.b32.xlu0 %v1367, 64
      %v1370 = vpop.permute.xlu0 %1369
      %1371 = vrot.lane.b32.xlu0 %v1368, 64
      %v1372 = vpop.permute.xlu0 %1371
      %v1374 = vsel %vm1272, %v1359, 0
      %v1377 = vsel %vm1272, %v1360, 0
      %v1380 = vsel %vm1272, %v1370, 0
      %v1383 = vsel %vm1272, %v1372, 0
      %1385 = vmatpush.bf16.xpose.msra.mxu0 0
      %1386 = vmatpush.bf16.xpose.msra.mxu0 0
      %1387 = vmatpush.bf16.xpose.msra.mxu0 0
      %1388 = vmatpush.bf16.xpose.msra.mxu0 0
      %1389 = vmatpush.bf16.xpose.msra.mxu0 0
      %1390 = vmatpush.bf16.xpose.msra.mxu0 0
      %1391 = vmatpush.bf16.xpose.msra.mxu0 %v1383
      %1392 = vmatpush.bf16.xpose.msra.mxu0 %v1380
      %1393 = vmatmul.bf16.gmra.mxu0 %v1374
      %v1394 = vpop.f32.mrf.mxu0
      %v1395 = vadd.f32 0.0, %v1394
      %v1396 = vpop.f32.mrf.mxu0
      %v1397 = vadd.f32 0.0, %v1396
      %1398 = vmatmul.bf16.gmra.mxu0 %v1377
      %v1399 = vpop.f32.mrf.mxu0
      %v1400 = vadd.f32 0.0, %v1399
      %v1401 = vpop.f32.mrf.mxu0
      %1402 = vdwg.mxu0
      %v1406 = vunpack.c.l.b16 %v1189
      %v1407 = vunpack.c.l.b16 %v1190
      %v1408 = vunpack.c.l.b16 %v1191
      %v1409 = vpack.c.b16 %v1407, %v1406
      %v1410 = vpack.c.b16 %v1408, %v1408
      %v1414 = vunpack.c.l.b16 %v1213
      %v1415 = vunpack.c.l.b16 %v1214
      %v1416 = vunpack.c.l.b16 %v1215
      %v1417 = vpack.c.b16 %v1415, %v1414
      %v1418 = vpack.c.b16 %v1416, %v1416
      %1419 = vrot.lane.b32.xlu0 %v1417, 64
      %v1420 = vpop.permute.xlu0 %1419
      %1421 = vrot.lane.b32.xlu0 %v1418, 64
      %v1422 = vpop.permute.xlu0 %1421
      %v1424 = vsel %vm1272, %v1409, 0
      %v1427 = vsel %vm1272, %v1410, 0
      %v1430 = vsel %vm1272, %v1420, 0
      %v1433 = vsel %vm1272, %v1422, 0
      %1435 = vmatpush.bf16.xpose.msra.mxu0 0
      %1436 = vmatpush.bf16.xpose.msra.mxu0 0
      %1437 = vmatpush.bf16.xpose.msra.mxu0 0
      %1438 = vmatpush.bf16.xpose.msra.mxu0 0
      %1439 = vmatpush.bf16.xpose.msra.mxu0 0
      %1440 = vmatpush.bf16.xpose.msra.mxu0 0
      %1441 = vmatpush.bf16.xpose.msra.mxu0 %v1433
      %1442 = vmatpush.bf16.xpose.msra.mxu0 %v1430
      %1443 = vmatmul.bf16.gmra.mxu0 %v1424
      %v1444 = vpop.f32.mrf.mxu0
      %v1445 = vadd.f32 0.0, %v1444
      %v1446 = vpop.f32.mrf.mxu0
      %v1447 = vadd.f32 0.0, %v1446
      %1448 = vmatmul.bf16.gmra.mxu0 %v1427
      %v1449 = vpop.f32.mrf.mxu0
      %v1450 = vadd.f32 0.0, %v1449
      %v1451 = vpop.f32.mrf.mxu0
      %1452 = vdwg.mxu0
      %v1456 = vunpack.c.l.b16 %v1192
      %v1457 = vunpack.c.l.b16 %v1193
      %v1458 = vunpack.c.l.b16 %v1194
      %v1459 = vpack.c.b16 %v1457, %v1456
      %v1460 = vpack.c.b16 %v1458, %v1458
      %v1464 = vunpack.c.l.b16 %v1216
      %v1465 = vunpack.c.l.b16 %v1217
      %v1466 = vunpack.c.l.b16 %v1218
      %v1467 = vpack.c.b16 %v1465, %v1464
      %v1468 = vpack.c.b16 %v1466, %v1466
      %1469 = vrot.lane.b32.xlu0 %v1467, 64
      %v1470 = vpop.permute.xlu0 %1469
      %1471 = vrot.lane.b32.xlu0 %v1468, 64
      %v1472 = vpop.permute.xlu0 %1471
      %v1474 = vsel %vm1272, %v1459, 0
      %v1477 = vsel %vm1272, %v1460, 0
      %v1480 = vsel %vm1272, %v1470, 0
      %v1483 = vsel %vm1272, %v1472, 0
      %1485 = vmatpush.bf16.xpose.msra.mxu0 0
      %1486 = vmatpush.bf16.xpose.msra.mxu0 0
      %1487 = vmatpush.bf16.xpose.msra.mxu0 0
      %1488 = vmatpush.bf16.xpose.msra.mxu0 0
      %1489 = vmatpush.bf16.xpose.msra.mxu0 0
      %1490 = vmatpush.bf16.xpose.msra.mxu0 0
      %1491 = vmatpush.bf16.xpose.msra.mxu0 %v1483
      %1492 = vmatpush.bf16.xpose.msra.mxu0 %v1480
      %1493 = vmatmul.bf16.gmra.mxu0 %v1474
      %v1494 = vpop.f32.mrf.mxu0
      %v1495 = vadd.f32 0.0, %v1494
      %v1496 = vpop.f32.mrf.mxu0
      %v1497 = vadd.f32 0.0, %v1496
      %1498 = vmatmul.bf16.gmra.mxu0 %v1477
      %v1499 = vpop.f32.mrf.mxu0
      %v1500 = vadd.f32 0.0, %v1499
      %v1501 = vpop.f32.mrf.mxu0
      %1502 = vdwg.mxu0
      %v1506 = vunpack.c.l.b16 %v1195
      %v1507 = vunpack.c.l.b16 %v1196
      %v1508 = vunpack.c.l.b16 %v1197
      %v1509 = vpack.c.b16 %v1507, %v1506
      %v1510 = vpack.c.b16 %v1508, %v1508
      %v1514 = vunpack.c.l.b16 %v1219
      %v1515 = vunpack.c.l.b16 %v1220
      %v1516 = vunpack.c.l.b16 %v1221
      %v1517 = vpack.c.b16 %v1515, %v1514
      %v1518 = vpack.c.b16 %v1516, %v1516
      %1519 = vrot.lane.b32.xlu0 %v1517, 64
      %v1520 = vpop.permute.xlu0 %1519
      %1521 = vrot.lane.b32.xlu0 %v1518, 64
      %v1522 = vpop.permute.xlu0 %1521
      %v1524 = vsel %vm1272, %v1509, 0
      %v1527 = vsel %vm1272, %v1510, 0
      %v1530 = vsel %vm1272, %v1520, 0
      %v1533 = vsel %vm1272, %v1522, 0
      %1535 = vmatpush.bf16.xpose.msra.mxu0 0
      %1536 = vmatpush.bf16.xpose.msra.mxu0 0
      %1537 = vmatpush.bf16.xpose.msra.mxu0 0
      %1538 = vmatpush.bf16.xpose.msra.mxu0 0
      %1539 = vmatpush.bf16.xpose.msra.mxu0 0
      %1540 = vmatpush.bf16.xpose.msra.mxu0 0
      %1541 = vmatpush.bf16.xpose.msra.mxu0 %v1533
      %1542 = vmatpush.bf16.xpose.msra.mxu0 %v1530
      %1543 = vmatmul.bf16.gmra.mxu0 %v1524
      %v1544 = vpop.f32.mrf.mxu0
      %v1545 = vadd.f32 0.0, %v1544
      %v1546 = vpop.f32.mrf.mxu0
      %v1547 = vadd.f32 0.0, %v1546
      %1548 = vmatmul.bf16.gmra.mxu0 %v1527
      %v1549 = vpop.f32.mrf.mxu0
      %v1550 = vadd.f32 0.0, %v1549
      %v1551 = vpop.f32.mrf.mxu0
      %1552 = vdwg.mxu0
      %v1556 = vunpack.c.l.b16 %v1198
      %v1557 = vunpack.c.l.b16 %v1199
      %v1558 = vunpack.c.l.b16 %v1200
      %v1559 = vpack.c.b16 %v1557, %v1556
      %v1560 = vpack.c.b16 %v1558, %v1558
      %v1564 = vunpack.c.l.b16 %v1222
      %v1565 = vunpack.c.l.b16 %v1223
      %v1566 = vunpack.c.l.b16 %v1224
      %v1567 = vpack.c.b16 %v1565, %v1564
      %v1568 = vpack.c.b16 %v1566, %v1566
      %1569 = vrot.lane.b32.xlu0 %v1567, 64
      %v1570 = vpop.permute.xlu0 %1569
      %1571 = vrot.lane.b32.xlu0 %v1568, 64
      %v1572 = vpop.permute.xlu0 %1571
      %v1574 = vsel %vm1272, %v1559, 0
      %v1577 = vsel %vm1272, %v1560, 0
      %v1580 = vsel %vm1272, %v1570, 0
      %v1583 = vsel %vm1272, %v1572, 0
      %1585 = vmatpush.bf16.xpose.msra.mxu0 0
      %1586 = vmatpush.bf16.xpose.msra.mxu0 0
      %1587 = vmatpush.bf16.xpose.msra.mxu0 0
      %1588 = vmatpush.bf16.xpose.msra.mxu0 0
      %1589 = vmatpush.bf16.xpose.msra.mxu0 0
      %1590 = vmatpush.bf16.xpose.msra.mxu0 0
      %1591 = vmatpush.bf16.xpose.msra.mxu0 %v1583
      %1592 = vmatpush.bf16.xpose.msra.mxu0 %v1580
      %1593 = vmatmul.bf16.gmra.mxu0 %v1574
      %v1594 = vpop.f32.mrf.mxu0
      %v1595 = vadd.f32 0.0, %v1594
      %v1596 = vpop.f32.mrf.mxu0
      %v1597 = vadd.f32 0.0, %v1596
      %1598 = vmatmul.bf16.gmra.mxu0 %v1577
      %v1599 = vpop.f32.mrf.mxu0
      %v1600 = vadd.f32 0.0, %v1599
      %v1601 = vpop.f32.mrf.mxu0
      %1602 = vdwg.mxu0
      %v1606 = vunpack.c.l.b16 %v1201
      %v1607 = vunpack.c.l.b16 %v1202
      %v1608 = vunpack.c.l.b16 %v1203
      %v1609 = vpack.c.b16 %v1607, %v1606
      %v1610 = vpack.c.b16 %v1608, %v1608
      %v1614 = vunpack.c.l.b16 %v1225
      %v1615 = vunpack.c.l.b16 %v1226
      %v1616 = vunpack.c.l.b16 %v1227
      %v1617 = vpack.c.b16 %v1615, %v1614
      %v1618 = vpack.c.b16 %v1616, %v1616
      %1619 = vrot.lane.b32.xlu0 %v1617, 64
      %v1620 = vpop.permute.xlu0 %1619
      %1621 = vrot.lane.b32.xlu0 %v1618, 64
      %v1622 = vpop.permute.xlu0 %1621
      %v1624 = vsel %vm1272, %v1609, 0
      %v1627 = vsel %vm1272, %v1610, 0
      %v1630 = vsel %vm1272, %v1620, 0
      %v1633 = vsel %vm1272, %v1622, 0
      %1635 = vmatpush.bf16.xpose.msra.mxu0 0
      %1636 = vmatpush.bf16.xpose.msra.mxu0 0
      %1637 = vmatpush.bf16.xpose.msra.mxu0 0
      %1638 = vmatpush.bf16.xpose.msra.mxu0 0
      %1639 = vmatpush.bf16.xpose.msra.mxu0 0
      %1640 = vmatpush.bf16.xpose.msra.mxu0 0
      %1641 = vmatpush.bf16.xpose.msra.mxu0 %v1633
      %1642 = vmatpush.bf16.xpose.msra.mxu0 %v1630
      %1643 = vmatmul.bf16.gmra.mxu0 %v1624
      %v1644 = vpop.f32.mrf.mxu0
      %v1645 = vadd.f32 0.0, %v1644
      %v1646 = vpop.f32.mrf.mxu0
      %v1647 = vadd.f32 0.0, %v1646
      %1648 = vmatmul.bf16.gmra.mxu0 %v1627
      %v1649 = vpop.f32.mrf.mxu0
      %v1650 = vadd.f32 0.0, %v1649
      %v1651 = vpop.f32.mrf.mxu0
      %1652 = vdwg.mxu0
      %v1653 = vsel %vm1155, %v1295, -1e+30
      %v1654 = vsel %vm1155, %v1297, -1e+30
      %v1655 = vsel %vm1155, %v1300, -1e+30
      %v1656 = vsel %vm1155, %v1345, -1e+30
      %v1657 = vsel %vm1155, %v1347, -1e+30
      %v1658 = vsel %vm1155, %v1350, -1e+30
      %v1659 = vsel %vm1155, %v1395, -1e+30
      %v1660 = vsel %vm1155, %v1397, -1e+30
      %v1661 = vsel %vm1155, %v1400, -1e+30
      %v1662 = vsel %vm1155, %v1445, -1e+30
      %v1663 = vsel %vm1155, %v1447, -1e+30
      %v1664 = vsel %vm1155, %v1450, -1e+30
      %v1665 = vsel %vm1155, %v1495, -1e+30
      %v1666 = vsel %vm1155, %v1497, -1e+30
      %v1667 = vsel %vm1155, %v1500, -1e+30
      %v1668 = vsel %vm1155, %v1545, -1e+30
      %v1669 = vsel %vm1155, %v1547, -1e+30
      %v1670 = vsel %vm1155, %v1550, -1e+30
      %v1671 = vsel %vm1155, %v1595, -1e+30
      %v1672 = vsel %vm1155, %v1597, -1e+30
      %v1673 = vsel %vm1155, %v1600, -1e+30
      %v1674 = vsel %vm1155, %v1645, -1e+30
      %v1675 = vsel %vm1155, %v1647, -1e+30
      %v1676 = vsel %vm1155, %v1650, -1e+30
      %vm1677 = vcmask 195584
      %v1678 = vsel %vm1677, %v1653, -inf
      %1679 = vmax.xlane.f32.xlu0 %v1678
      %v1680 = vpop.xlane.xlu0 %1679
      %v1681 = vsel %vm1677, %v1654, -inf
      %1682 = vmax.xlane.f32.xlu0 %v1681
      %v1683 = vpop.xlane.xlu0 %1682
      %v1684 = vsel %vm1677, %v1655, -inf
      %1685 = vmax.xlane.f32.xlu0 %v1684
      %v1686 = vpop.xlane.xlu0 %1685
      %v1687 = vsel %vm1677, %v1656, -inf
      %1688 = vmax.xlane.f32.xlu0 %v1687
      %v1689 = vpop.xlane.xlu0 %1688
      %v1690 = vsel %vm1677, %v1657, -inf
      %1691 = vmax.xlane.f32.xlu0 %v1690
      %v1692 = vpop.xlane.xlu0 %1691
      %v1693 = vsel %vm1677, %v1658, -inf
      %1694 = vmax.xlane.f32.xlu0 %v1693
      %v1695 = vpop.xlane.xlu0 %1694
      %v1696 = vsel %vm1677, %v1659, -inf
      %1697 = vmax.xlane.f32.xlu0 %v1696
      %v1698 = vpop.xlane.xlu0 %1697
      %v1699 = vsel %vm1677, %v1660, -inf
      %1700 = vmax.xlane.f32.xlu0 %v1699
      %v1701 = vpop.xlane.xlu0 %1700
      %v1702 = vsel %vm1677, %v1661, -inf
      %1703 = vmax.xlane.f32.xlu0 %v1702
      %v1704 = vpop.xlane.xlu0 %1703
      %v1705 = vsel %vm1677, %v1662, -inf
      %1706 = vmax.xlane.f32.xlu0 %v1705
      %v1707 = vpop.xlane.xlu0 %1706
      %v1708 = vsel %vm1677, %v1663, -inf
      %1709 = vmax.xlane.f32.xlu0 %v1708
      %v1710 = vpop.xlane.xlu0 %1709
      %v1711 = vsel %vm1677, %v1664, -inf
      %1712 = vmax.xlane.f32.xlu0 %v1711
      %v1713 = vpop.xlane.xlu0 %1712
      %v1714 = vsel %vm1677, %v1665, -inf
      %1715 = vmax.xlane.f32.xlu0 %v1714
      %v1716 = vpop.xlane.xlu0 %1715
      %v1717 = vsel %vm1677, %v1666, -inf
      %1718 = vmax.xlane.f32.xlu0 %v1717
      %v1719 = vpop.xlane.xlu0 %1718
      %v1720 = vsel %vm1677, %v1667, -inf
      %1721 = vmax.xlane.f32.xlu0 %v1720
      %v1722 = vpop.xlane.xlu0 %1721
      %v1723 = vsel %vm1677, %v1668, -inf
      %1724 = vmax.xlane.f32.xlu0 %v1723
      %v1725 = vpop.xlane.xlu0 %1724
      %v1726 = vsel %vm1677, %v1669, -inf
      %1727 = vmax.xlane.f32.xlu0 %v1726
      %v1728 = vpop.xlane.xlu0 %1727
      %v1729 = vsel %vm1677, %v1670, -inf
      %1730 = vmax.xlane.f32.xlu0 %v1729
      %v1731 = vpop.xlane.xlu0 %1730
      %v1732 = vsel %vm1677, %v1671, -inf
      %1733 = vmax.xlane.f32.xlu0 %v1732
      %v1734 = vpop.xlane.xlu0 %1733
      %v1735 = vsel %vm1677, %v1672, -inf
      %1736 = vmax.xlane.f32.xlu0 %v1735
      %v1737 = vpop.xlane.xlu0 %1736
      %v1738 = vsel %vm1677, %v1673, -inf
      %1739 = vmax.xlane.f32.xlu0 %v1738
      %v1740 = vpop.xlane.xlu0 %1739
      %v1741 = vsel %vm1677, %v1674, -inf
      %1742 = vmax.xlane.f32.xlu0 %v1741
      %v1743 = vpop.xlane.xlu0 %1742
      %v1744 = vsel %vm1677, %v1675, -inf
      %1745 = vmax.xlane.f32.xlu0 %v1744
      %v1746 = vpop.xlane.xlu0 %1745
      %v1747 = vsel %vm1677, %v1676, -inf
      %1748 = vmax.xlane.f32.xlu0 %v1747
      %v1749 = vpop.xlane.xlu0 %1748
      %v1750 = vsub.f32 %v1653, %v1680
      %v1751 = vsub.f32 %v1654, %v1683
      %v1752 = vsub.f32 %v1655, %v1686
      %v1753 = vsub.f32 %v1656, %v1689
      %v1754 = vsub.f32 %v1657, %v1692
      %v1755 = vsub.f32 %v1658, %v1695
      %v1756 = vsub.f32 %v1659, %v1698
      %v1757 = vsub.f32 %v1660, %v1701
      %v1758 = vsub.f32 %v1661, %v1704
      %v1759 = vsub.f32 %v1662, %v1707
      %v1760 = vsub.f32 %v1663, %v1710
      %v1761 = vsub.f32 %v1664, %v1713
      %v1762 = vsub.f32 %v1665, %v1716
      %v1763 = vsub.f32 %v1666, %v1719
      %v1764 = vsub.f32 %v1667, %v1722
      %v1765 = vsub.f32 %v1668, %v1725
      %v1766 = vsub.f32 %v1669, %v1728
      %v1767 = vsub.f32 %v1670, %v1731
      %v1768 = vsub.f32 %v1671, %v1734
      %v1769 = vsub.f32 %v1672, %v1737
      %v1770 = vsub.f32 %v1673, %v1740
      %v1771 = vsub.f32 %v1674, %v1743
      %v1772 = vsub.f32 %v1675, %v1746
      %v1773 = vsub.f32 %v1676, %v1749
      %v1774 = vmul.f32 %v1750, 1.442695
      %v1775 = vpow.pop %v1774
      %v1776 = vmul.f32 %v1751, 1.442695
      %v1777 = vpow.pop %v1776
      %v1778 = vmul.f32 %v1752, 1.442695
      %v1779 = vpow.pop %v1778
      %v1780 = vmul.f32 %v1753, 1.442695
      %v1781 = vpow.pop %v1780
      %v1782 = vmul.f32 %v1754, 1.442695
      %v1783 = vpow.pop %v1782
      %v1784 = vmul.f32 %v1755, 1.442695
      %v1785 = vpow.pop %v1784
      %v1786 = vmul.f32 %v1756, 1.442695
      %v1787 = vpow.pop %v1786
      %v1788 = vmul.f32 %v1757, 1.442695
      %v1789 = vpow.pop %v1788
      %v1790 = vmul.f32 %v1758, 1.442695
      %v1791 = vpow.pop %v1790
      %v1792 = vmul.f32 %v1759, 1.442695
      %v1793 = vpow.pop %v1792
      %v1794 = vmul.f32 %v1760, 1.442695
      %v1795 = vpow.pop %v1794
      %v1796 = vmul.f32 %v1761, 1.442695
      %v1797 = vpow.pop %v1796
      %v1798 = vmul.f32 %v1762, 1.442695
      %v1799 = vpow.pop %v1798
      %v1800 = vmul.f32 %v1763, 1.442695
      %v1801 = vpow.pop %v1800
      %v1802 = vmul.f32 %v1764, 1.442695
      %v1803 = vpow.pop %v1802
      %v1804 = vmul.f32 %v1765, 1.442695
      %v1805 = vpow.pop %v1804
      %v1806 = vmul.f32 %v1766, 1.442695
      %v1807 = vpow.pop %v1806
      %v1808 = vmul.f32 %v1767, 1.442695
      %v1809 = vpow.pop %v1808
      %v1810 = vmul.f32 %v1768, 1.442695
      %v1811 = vpow.pop %v1810
      %v1812 = vmul.f32 %v1769, 1.442695
      %v1813 = vpow.pop %v1812
      %v1814 = vmul.f32 %v1770, 1.442695
      %v1815 = vpow.pop %v1814
      %v1816 = vmul.f32 %v1771, 1.442695
      %v1817 = vpow.pop %v1816
      %v1818 = vmul.f32 %v1772, 1.442695
      %v1819 = vpow.pop %v1818
      %v1820 = vmul.f32 %v1773, 1.442695
      %v1821 = vpow.pop %v1820
      %v1822 = vsel %vm1677, %v1775, 0.0
      %1823 = vadd.xlane.f32.xlu0 %v1822
      %v1824 = vpop.xlane.xlu0 %1823
      %v1825 = vsel %vm1677, %v1777, 0.0
      %1826 = vadd.xlane.f32.xlu0 %v1825
      %v1827 = vpop.xlane.xlu0 %1826
      %v1828 = vsel %vm1677, %v1779, 0.0
      %1829 = vadd.xlane.f32.xlu0 %v1828
      %v1830 = vpop.xlane.xlu0 %1829
      %v1831 = vsel %vm1677, %v1781, 0.0
      %1832 = vadd.xlane.f32.xlu0 %v1831
      %v1833 = vpop.xlane.xlu0 %1832
      %v1834 = vsel %vm1677, %v1783, 0.0
      %1835 = vadd.xlane.f32.xlu0 %v1834
      %v1836 = vpop.xlane.xlu0 %1835
      %v1837 = vsel %vm1677, %v1785, 0.0
      %1838 = vadd.xlane.f32.xlu0 %v1837
      %v1839 = vpop.xlane.xlu0 %1838
      %v1840 = vsel %vm1677, %v1787, 0.0
      %1841 = vadd.xlane.f32.xlu0 %v1840
      %v1842 = vpop.xlane.xlu0 %1841
      %v1843 = vsel %vm1677, %v1789, 0.0
      %1844 = vadd.xlane.f32.xlu0 %v1843
      %v1845 = vpop.xlane.xlu0 %1844
      %v1846 = vsel %vm1677, %v1791, 0.0
      %1847 = vadd.xlane.f32.xlu0 %v1846
      %v1848 = vpop.xlane.xlu0 %1847
      %v1849 = vsel %vm1677, %v1793, 0.0
      %1850 = vadd.xlane.f32.xlu0 %v1849
      %v1851 = vpop.xlane.xlu0 %1850
      %v1852 = vsel %vm1677, %v1795, 0.0
      %1853 = vadd.xlane.f32.xlu0 %v1852
      %v1854 = vpop.xlane.xlu0 %1853
      %v1855 = vsel %vm1677, %v1797, 0.0
      %1856 = vadd.xlane.f32.xlu0 %v1855
      %v1857 = vpop.xlane.xlu0 %1856
      %v1858 = vsel %vm1677, %v1799, 0.0
      %1859 = vadd.xlane.f32.xlu0 %v1858
      %v1860 = vpop.xlane.xlu0 %1859
      %v1861 = vsel %vm1677, %v1801, 0.0
      %1862 = vadd.xlane.f32.xlu0 %v1861
      %v1863 = vpop.xlane.xlu0 %1862
      %v1864 = vsel %vm1677, %v1803, 0.0
      %1865 = vadd.xlane.f32.xlu0 %v1864
      %v1866 = vpop.xlane.xlu0 %1865
      %v1867 = vsel %vm1677, %v1805, 0.0
      %1868 = vadd.xlane.f32.xlu0 %v1867
      %v1869 = vpop.xlane.xlu0 %1868
      %v1870 = vsel %vm1677, %v1807, 0.0
      %1871 = vadd.xlane.f32.xlu0 %v1870
      %v1872 = vpop.xlane.xlu0 %1871
      %v1873 = vsel %vm1677, %v1809, 0.0
      %1874 = vadd.xlane.f32.xlu0 %v1873
      %v1875 = vpop.xlane.xlu0 %1874
      %v1876 = vsel %vm1677, %v1811, 0.0
      %1877 = vadd.xlane.f32.xlu0 %v1876
      %v1878 = vpop.xlane.xlu0 %1877
      %v1879 = vsel %vm1677, %v1813, 0.0
      %1880 = vadd.xlane.f32.xlu0 %v1879
      %v1881 = vpop.xlane.xlu0 %1880
      %v1882 = vsel %vm1677, %v1815, 0.0
      %1883 = vadd.xlane.f32.xlu0 %v1882
      %v1884 = vpop.xlane.xlu0 %1883
      %v1885 = vsel %vm1677, %v1817, 0.0
      %1886 = vadd.xlane.f32.xlu0 %v1885
      %v1887 = vpop.xlane.xlu0 %1886
      %v1888 = vsel %vm1677, %v1819, 0.0
      %1889 = vadd.xlane.f32.xlu0 %v1888
      %v1890 = vpop.xlane.xlu0 %1889
      %v1891 = vsel %vm1677, %v1821, 0.0
      %1892 = vadd.xlane.f32.xlu0 %v1891
      %v1893 = vpop.xlane.xlu0 %1892
      %v1894 = vrcp.pop %v1824
      %v1895 = vrcp.pop %v1827
      %v1896 = vrcp.pop %v1830
      %v1897 = vrcp.pop %v1833
      %v1898 = vrcp.pop %v1836
      %v1899 = vrcp.pop %v1839
      %v1900 = vrcp.pop %v1842
      %v1901 = vrcp.pop %v1845
      %v1902 = vrcp.pop %v1848
      %v1903 = vrcp.pop %v1851
      %v1904 = vrcp.pop %v1854
      %v1905 = vrcp.pop %v1857
      %v1906 = vrcp.pop %v1860
      %v1907 = vrcp.pop %v1863
      %v1908 = vrcp.pop %v1866
      %v1909 = vrcp.pop %v1869
      %v1910 = vrcp.pop %v1872
      %v1911 = vrcp.pop %v1875
      %v1912 = vrcp.pop %v1878
      %v1913 = vrcp.pop %v1881
      %v1914 = vrcp.pop %v1884
      %v1915 = vrcp.pop %v1887
      %v1916 = vrcp.pop %v1890
      %v1917 = vrcp.pop %v1893
      %v1918 = vmul.f32 %v1775, %v1894
      %v1919 = vmul.f32 %v1777, %v1895
      %v1920 = vmul.f32 %v1779, %v1896
      %v1921 = vmul.f32 %v1781, %v1897
      %v1922 = vmul.f32 %v1783, %v1898
      %v1923 = vmul.f32 %v1785, %v1899
      %v1924 = vmul.f32 %v1787, %v1900
      %v1925 = vmul.f32 %v1789, %v1901
      %v1926 = vmul.f32 %v1791, %v1902
      %v1927 = vmul.f32 %v1793, %v1903
      %v1928 = vmul.f32 %v1795, %v1904
      %v1929 = vmul.f32 %v1797, %v1905
      %v1930 = vmul.f32 %v1799, %v1906
      %v1931 = vmul.f32 %v1801, %v1907
      %v1932 = vmul.f32 %v1803, %v1908
      %v1933 = vmul.f32 %v1805, %v1909
      %v1934 = vmul.f32 %v1807, %v1910
      %v1935 = vmul.f32 %v1809, %v1911
      %v1936 = vmul.f32 %v1811, %v1912
      %v1937 = vmul.f32 %v1813, %v1913
      %v1938 = vmul.f32 %v1815, %v1914
      %v1939 = vmul.f32 %v1817, %v1915
      %v1940 = vmul.f32 %v1819, %v1916
      %v1941 = vmul.f32 %v1821, %v1917
      %v1942 = vpack.c.bf16 %v1918, %v1918
      %v1943 = vpack.c.bf16 %v1919, %v1919
      %v1944 = vpack.c.bf16 %v1920, %v1920
      %v1945 = vpack.c.bf16 %v1921, %v1921
      %v1946 = vpack.c.bf16 %v1922, %v1922
      %v1947 = vpack.c.bf16 %v1923, %v1923
      %v1948 = vpack.c.bf16 %v1924, %v1924
      %v1949 = vpack.c.bf16 %v1925, %v1925
      %v1950 = vpack.c.bf16 %v1926, %v1926
      %v1951 = vpack.c.bf16 %v1927, %v1927
      %v1952 = vpack.c.bf16 %v1928, %v1928
      %v1953 = vpack.c.bf16 %v1929, %v1929
      %v1954 = vpack.c.bf16 %v1930, %v1930
      %v1955 = vpack.c.bf16 %v1931, %v1931
      %v1956 = vpack.c.bf16 %v1932, %v1932
      %v1957 = vpack.c.bf16 %v1933, %v1933
      %v1958 = vpack.c.bf16 %v1934, %v1934
      %v1959 = vpack.c.bf16 %v1935, %v1935
      %v1960 = vpack.c.bf16 %v1936, %v1936
      %v1961 = vpack.c.bf16 %v1937, %v1937
      %v1962 = vpack.c.bf16 %v1938, %v1938
      %v1963 = vpack.c.bf16 %v1939, %v1939
      %v1964 = vpack.c.bf16 %v1940, %v1940
      %v1965 = vpack.c.bf16 %v1941, %v1941
      %v1969 = vunpack.c.l.b16 %v1942
      %v1970 = vunpack.c.l.b16 %v1943
      %v1971 = vunpack.c.l.b16 %v1944
      %v1972 = vpack.c.b16 %v1970, %v1969
      %v1973 = vpack.c.b16 %v1971, %v1971
      %v1977 = vunpack.c.l.b16 %v1228
      %v1978 = vunpack.c.l.b16 %v1229
      %v1979 = vunpack.c.l.b16 %v1230
      %v1980 = vpack.c.b16 %v1978, %v1977
      %v1981 = vpack.c.b16 %v1979, %v1979
      %v1984 = vsel %vm1677, %v1972, 0
      %v1987 = vsel %vm1677, %v1973, 0
      %vm1989 = vcmask 1043456
      %v1991 = vsel %vm1989, %v1981, 0
      %1993 = vmatpush.bf16.msra.mxu0 0
      %1994 = vmatpush.bf16.msra.mxu0 0
      %1995 = vmatpush.bf16.msra.mxu0 0
      %1996 = vmatpush.bf16.msra.mxu0 0
      %1997 = vmatpush.bf16.msra.mxu0 0
      %1998 = vmatpush.bf16.msra.mxu0 0
      %1999 = vmatpush.bf16.msra.mxu0 %v1991
      %2000 = vmatpush.bf16.msra.mxu0 %v1980
      %2001 = vmatmul.bf16.gmra.mxu0 %v1984
      %v2002 = vpop.f32.mrf.mxu0
      %v2003 = vadd.f32 0.0, %v2002
      %v2004 = vpop.f32.mrf.mxu0
      %v2005 = vadd.f32 0.0, %v2004
      %2006 = vmatmul.bf16.gmra.mxu0 %v1987
      %v2007 = vpop.f32.mrf.mxu0
      %v2008 = vadd.f32 0.0, %v2007
      %v2009 = vpop.f32.mrf.mxu0
      %2010 = vdwg.mxu0
      %v2014 = vunpack.c.l.b16 %v1945
      %v2015 = vunpack.c.l.b16 %v1946
      %v2016 = vunpack.c.l.b16 %v1947
      %v2017 = vpack.c.b16 %v2015, %v2014
      %v2018 = vpack.c.b16 %v2016, %v2016
      %v2022 = vunpack.c.l.b16 %v1231
      %v2023 = vunpack.c.l.b16 %v1232
      %v2024 = vunpack.c.l.b16 %v1233
      %v2025 = vpack.c.b16 %v2023, %v2022
      %v2026 = vpack.c.b16 %v2024, %v2024
      %v2029 = vsel %vm1677, %v2017, 0
      %v2032 = vsel %vm1677, %v2018, 0
      %v2035 = vsel %vm1989, %v2026, 0
      %2037 = vmatpush.bf16.msra.mxu0 0
      %2038 = vmatpush.bf16.msra.mxu0 0
      %2039 = vmatpush.bf16.msra.mxu0 0
      %2040 = vmatpush.bf16.msra.mxu0 0
      %2041 = vmatpush.bf16.msra.mxu0 0
      %2042 = vmatpush.bf16.msra.mxu0 0
      %2043 = vmatpush.bf16.msra.mxu0 %v2035
      %2044 = vmatpush.bf16.msra.mxu0 %v2025
      %2045 = vmatmul.bf16.gmra.mxu0 %v2029
      %v2046 = vpop.f32.mrf.mxu0
      %v2047 = vadd.f32 0.0, %v2046
      %v2048 = vpop.f32.mrf.mxu0
      %v2049 = vadd.f32 0.0, %v2048
      %2050 = vmatmul.bf16.gmra.mxu0 %v2032
      %v2051 = vpop.f32.mrf.mxu0
      %v2052 = vadd.f32 0.0, %v2051
      %v2053 = vpop.f32.mrf.mxu0
      %2054 = vdwg.mxu0
      %v2058 = vunpack.c.l.b16 %v1948
      %v2059 = vunpack.c.l.b16 %v1949
      %v2060 = vunpack.c.l.b16 %v1950
      %v2061 = vpack.c.b16 %v2059, %v2058
      %v2062 = vpack.c.b16 %v2060, %v2060
      %v2066 = vunpack.c.l.b16 %v1234
      %v2067 = vunpack.c.l.b16 %v1235
      %v2068 = vunpack.c.l.b16 %v1236
      %v2069 = vpack.c.b16 %v2067, %v2066
      %v2070 = vpack.c.b16 %v2068, %v2068
      %v2073 = vsel %vm1677, %v2061, 0
      %v2076 = vsel %vm1677, %v2062, 0
      %v2079 = vsel %vm1989, %v2070, 0
      %2081 = vmatpush.bf16.msra.mxu0 0
      %2082 = vmatpush.bf16.msra.mxu0 0
      %2083 = vmatpush.bf16.msra.mxu0 0
      %2084 = vmatpush.bf16.msra.mxu0 0
      %2085 = vmatpush.bf16.msra.mxu0 0
      %2086 = vmatpush.bf16.msra.mxu0 0
      %2087 = vmatpush.bf16.msra.mxu0 %v2079
      %2088 = vmatpush.bf16.msra.mxu0 %v2069
      %2089 = vmatmul.bf16.gmra.mxu0 %v2073
      %v2090 = vpop.f32.mrf.mxu0
      %v2091 = vadd.f32 0.0, %v2090
      %v2092 = vpop.f32.mrf.mxu0
      %v2093 = vadd.f32 0.0, %v2092
      %2094 = vmatmul.bf16.gmra.mxu0 %v2076
      %v2095 = vpop.f32.mrf.mxu0
      %v2096 = vadd.f32 0.0, %v2095
      %v2097 = vpop.f32.mrf.mxu0
      %2098 = vdwg.mxu0
      %v2102 = vunpack.c.l.b16 %v1951
      %v2103 = vunpack.c.l.b16 %v1952
      %v2104 = vunpack.c.l.b16 %v1953
      %v2105 = vpack.c.b16 %v2103, %v2102
      %v2106 = vpack.c.b16 %v2104, %v2104
      %v2110 = vunpack.c.l.b16 %v1237
      %v2111 = vunpack.c.l.b16 %v1238
      %v2112 = vunpack.c.l.b16 %v1239
      %v2113 = vpack.c.b16 %v2111, %v2110
      %v2114 = vpack.c.b16 %v2112, %v2112
      %v2117 = vsel %vm1677, %v2105, 0
      %v2120 = vsel %vm1677, %v2106, 0
      %v2123 = vsel %vm1989, %v2114, 0
      %2125 = vmatpush.bf16.msra.mxu0 0
      %2126 = vmatpush.bf16.msra.mxu0 0
      %2127 = vmatpush.bf16.msra.mxu0 0
      %2128 = vmatpush.bf16.msra.mxu0 0
      %2129 = vmatpush.bf16.msra.mxu0 0
      %2130 = vmatpush.bf16.msra.mxu0 0
      %2131 = vmatpush.bf16.msra.mxu0 %v2123
      %2132 = vmatpush.bf16.msra.mxu0 %v2113
      %2133 = vmatmul.bf16.gmra.mxu0 %v2117
      %v2134 = vpop.f32.mrf.mxu0
      %v2135 = vadd.f32 0.0, %v2134
      %v2136 = vpop.f32.mrf.mxu0
      %v2137 = vadd.f32 0.0, %v2136
      %2138 = vmatmul.bf16.gmra.mxu0 %v2120
      %v2139 = vpop.f32.mrf.mxu0
      %v2140 = vadd.f32 0.0, %v2139
      %v2141 = vpop.f32.mrf.mxu0
      %2142 = vdwg.mxu0
      %v2146 = vunpack.c.l.b16 %v1954
      %v2147 = vunpack.c.l.b16 %v1955
      %v2148 = vunpack.c.l.b16 %v1956
      %v2149 = vpack.c.b16 %v2147, %v2146
      %v2150 = vpack.c.b16 %v2148, %v2148
      %v2154 = vunpack.c.l.b16 %v1240
      %v2155 = vunpack.c.l.b16 %v1241
      %v2156 = vunpack.c.l.b16 %v1242
      %v2157 = vpack.c.b16 %v2155, %v2154
      %v2158 = vpack.c.b16 %v2156, %v2156
      %v2161 = vsel %vm1677, %v2149, 0
      %v2164 = vsel %vm1677, %v2150, 0
      %v2167 = vsel %vm1989, %v2158, 0
      %2169 = vmatpush.bf16.msra.mxu0 0
      %2170 = vmatpush.bf16.msra.mxu0 0
      %2171 = vmatpush.bf16.msra.mxu0 0
      %2172 = vmatpush.bf16.msra.mxu0 0
      %2173 = vmatpush.bf16.msra.mxu0 0
      %2174 = vmatpush.bf16.msra.mxu0 0
      %2175 = vmatpush.bf16.msra.mxu0 %v2167
      %2176 = vmatpush.bf16.msra.mxu0 %v2157
      %2177 = vmatmul.bf16.gmra.mxu0 %v2161
      %v2178 = vpop.f32.mrf.mxu0
      %v2179 = vadd.f32 0.0, %v2178
      %v2180 = vpop.f32.mrf.mxu0
      %v2181 = vadd.f32 0.0, %v2180
      %2182 = vmatmul.bf16.gmra.mxu0 %v2164
      %v2183 = vpop.f32.mrf.mxu0
      %v2184 = vadd.f32 0.0, %v2183
      %v2185 = vpop.f32.mrf.mxu0
      %2186 = vdwg.mxu0
      %v2190 = vunpack.c.l.b16 %v1957
      %v2191 = vunpack.c.l.b16 %v1958
      %v2192 = vunpack.c.l.b16 %v1959
      %v2193 = vpack.c.b16 %v2191, %v2190
      %v2194 = vpack.c.b16 %v2192, %v2192
      %v2198 = vunpack.c.l.b16 %v1243
      %v2199 = vunpack.c.l.b16 %v1244
      %v2200 = vunpack.c.l.b16 %v1245
      %v2201 = vpack.c.b16 %v2199, %v2198
      %v2202 = vpack.c.b16 %v2200, %v2200
      %v2205 = vsel %vm1677, %v2193, 0
      %v2208 = vsel %vm1677, %v2194, 0
      %v2211 = vsel %vm1989, %v2202, 0
      %2213 = vmatpush.bf16.msra.mxu0 0
      %2214 = vmatpush.bf16.msra.mxu0 0
      %2215 = vmatpush.bf16.msra.mxu0 0
      %2216 = vmatpush.bf16.msra.mxu0 0
      %2217 = vmatpush.bf16.msra.mxu0 0
      %2218 = vmatpush.bf16.msra.mxu0 0
      %2219 = vmatpush.bf16.msra.mxu0 %v2211
      %2220 = vmatpush.bf16.msra.mxu0 %v2201
      %2221 = vmatmul.bf16.gmra.mxu0 %v2205
      %v2222 = vpop.f32.mrf.mxu0
      %v2223 = vadd.f32 0.0, %v2222
      %v2224 = vpop.f32.mrf.mxu0
      %v2225 = vadd.f32 0.0, %v2224
      %2226 = vmatmul.bf16.gmra.mxu0 %v2208
      %v2227 = vpop.f32.mrf.mxu0
      %v2228 = vadd.f32 0.0, %v2227
      %v2229 = vpop.f32.mrf.mxu0
      %2230 = vdwg.mxu0
      %v2234 = vunpack.c.l.b16 %v1960
      %v2235 = vunpack.c.l.b16 %v1961
      %v2236 = vunpack.c.l.b16 %v1962
      %v2237 = vpack.c.b16 %v2235, %v2234
      %v2238 = vpack.c.b16 %v2236, %v2236
      %v2242 = vunpack.c.l.b16 %v1246
      %v2243 = vunpack.c.l.b16 %v1247
      %v2244 = vunpack.c.l.b16 %v1248
      %v2245 = vpack.c.b16 %v2243, %v2242
      %v2246 = vpack.c.b16 %v2244, %v2244
      %v2249 = vsel %vm1677, %v2237, 0
      %v2252 = vsel %vm1677, %v2238, 0
      %v2255 = vsel %vm1989, %v2246, 0
      %2257 = vmatpush.bf16.msra.mxu0 0
      %2258 = vmatpush.bf16.msra.mxu0 0
      %2259 = vmatpush.bf16.msra.mxu0 0
      %2260 = vmatpush.bf16.msra.mxu0 0
      %2261 = vmatpush.bf16.msra.mxu0 0
      %2262 = vmatpush.bf16.msra.mxu0 0
      %2263 = vmatpush.bf16.msra.mxu0 %v2255
      %2264 = vmatpush.bf16.msra.mxu0 %v2245
      %2265 = vmatmul.bf16.gmra.mxu0 %v2249
      %v2266 = vpop.f32.mrf.mxu0
      %v2267 = vadd.f32 0.0, %v2266
      %v2268 = vpop.f32.mrf.mxu0
      %v2269 = vadd.f32 0.0, %v2268
      %2270 = vmatmul.bf16.gmra.mxu0 %v2252
      %v2271 = vpop.f32.mrf.mxu0
      %v2272 = vadd.f32 0.0, %v2271
      %v2273 = vpop.f32.mrf.mxu0
      %2274 = vdwg.mxu0
      %v2278 = vunpack.c.l.b16 %v1963
      %v2279 = vunpack.c.l.b16 %v1964
      %v2280 = vunpack.c.l.b16 %v1965
      %v2281 = vpack.c.b16 %v2279, %v2278
      %v2282 = vpack.c.b16 %v2280, %v2280
      %v2286 = vunpack.c.l.b16 %v1249
      %v2287 = vunpack.c.l.b16 %v1250
      %v2288 = vunpack.c.l.b16 %v1251
      %v2289 = vpack.c.b16 %v2287, %v2286
      %v2290 = vpack.c.b16 %v2288, %v2288
      %v2293 = vsel %vm1677, %v2281, 0
      %v2296 = vsel %vm1677, %v2282, 0
      %v2299 = vsel %vm1989, %v2290, 0
      %2301 = vmatpush.bf16.msra.mxu0 0
      %2302 = vmatpush.bf16.msra.mxu0 0
      %2303 = vmatpush.bf16.msra.mxu0 0
      %2304 = vmatpush.bf16.msra.mxu0 0
      %2305 = vmatpush.bf16.msra.mxu0 0
      %2306 = vmatpush.bf16.msra.mxu0 0
      %2307 = vmatpush.bf16.msra.mxu0 %v2299
      %2308 = vmatpush.bf16.msra.mxu0 %v2289
      %2309 = vmatmul.bf16.gmra.mxu0 %v2293
      %v2310 = vpop.f32.mrf.mxu0
      %v2311 = vadd.f32 0.0, %v2310
      %v2312 = vpop.f32.mrf.mxu0
      %v2313 = vadd.f32 0.0, %v2312
      %2314 = vmatmul.bf16.gmra.mxu0 %v2296
      %v2315 = vpop.f32.mrf.mxu0
      %v2316 = vadd.f32 0.0, %v2315
      %v2317 = vpop.f32.mrf.mxu0
      %2318 = vdwg.mxu0
      %v2319 = vpack.c.bf16 %v2005, %v2003
      %v2320 = vpack.c.bf16 %v2047, %v2008
      %v2321 = vpack.c.bf16 %v2052, %v2049
      %v2322 = vpack.c.bf16 %v2093, %v2091
      %v2323 = vpack.c.bf16 %v2135, %v2096
      %v2324 = vpack.c.bf16 %v2140, %v2137
      %v2325 = vpack.c.bf16 %v2181, %v2179
      %v2326 = vpack.c.bf16 %v2223, %v2184
      %v2327 = vpack.c.bf16 %v2228, %v2225
      %v2328 = vpack.c.bf16 %v2269, %v2267
      %v2329 = vpack.c.bf16 %v2311, %v2272
      %v2330 = vpack.c.bf16 %v2316, %v2313
      %v2331 = vld [vmem:[%s5] sm:$0xf]
      %v2332 = vld [vmem:[%s5 + $0x4] sm:$0xf]
      %2333 = vrot.lane.b32.xlu0 %v1258, 112
      %v2334 = vpop.permute.xlu0 %2333
      %2335 = vrot.lane.b32.xlu0 %v1259, 112
      %v2336 = vpop.permute.xlu0 %2335
      %2337 = vrot.lane.b32.xlu0 %v1266, 48
      %v2338 = vpop.permute.xlu0 %2337
      %2339 = vrot.lane.b32.xlu0 %v1267, 48
      %v2340 = vpop.permute.xlu0 %2339
      %v2342 = vsel %vm1272, %v2334, 0
      %v2345 = vsel %vm1272, %v2336, 0
      %v2348 = vsel %vm1272, %v2338, 0
      %v2351 = vsel %vm1272, %v2340, 0
      %2353 = vmatpush.bf16.xpose.msra.mxu0 0
      %2354 = vmatpush.bf16.xpose.msra.mxu0 0
      %2355 = vmatpush.bf16.xpose.msra.mxu0 0
      %2356 = vmatpush.bf16.xpose.msra.mxu0 0
      %2357 = vmatpush.bf16.xpose.msra.mxu0 0
      %2358 = vmatpush.bf16.xpose.msra.mxu0 0
      %2359 = vmatpush.bf16.xpose.msra.mxu0 %v2351
      %2360 = vmatpush.bf16.xpose.msra.mxu0 %v2348
      %2361 = vmatmul.bf16.gmra.mxu0 %v2342
      %v2362 = vpop.f32.mrf.mxu0
      %v2363 = vadd.f32 0.0, %v2362
      %v2364 = vpop.f32.mrf.mxu0
      %v2365 = vadd.f32 0.0, %v2364
      %2366 = vmatmul.bf16.gmra.mxu0 %v2345
      %v2367 = vpop.f32.mrf.mxu0
      %v2368 = vadd.f32 0.0, %v2367
      %v2369 = vpop.f32.mrf.mxu0
      %2370 = vdwg.mxu0
      %2371 = vrot.lane.b32.xlu0 %v1309, 112
      %v2372 = vpop.permute.xlu0 %2371
      %2373 = vrot.lane.b32.xlu0 %v1310, 112
      %v2374 = vpop.permute.xlu0 %2373
      %2375 = vrot.lane.b32.xlu0 %v1317, 48
      %v2376 = vpop.permute.xlu0 %2375
      %2377 = vrot.lane.b32.xlu0 %v1318, 48
      %v2378 = vpop.permute.xlu0 %2377
      %v2380 = vsel %vm1272, %v2372, 0
      %v2383 = vsel %vm1272, %v2374, 0
      %v2386 = vsel %vm1272, %v2376, 0
      %v2389 = vsel %vm1272, %v2378, 0
      %2391 = vmatpush.bf16.xpose.msra.mxu0 0
      %2392 = vmatpush.bf16.xpose.msra.mxu0 0
      %2393 = vmatpush.bf16.xpose.msra.mxu0 0
      %2394 = vmatpush.bf16.xpose.msra.mxu0 0
      %2395 = vmatpush.bf16.xpose.msra.mxu0 0
      %2396 = vmatpush.bf16.xpose.msra.mxu0 0
      %2397 = vmatpush.bf16.xpose.msra.mxu0 %v2389
      %2398 = vmatpush.bf16.xpose.msra.mxu0 %v2386
      %2399 = vmatmul.bf16.gmra.mxu0 %v2380
      %v2400 = vpop.f32.mrf.mxu0
      %v2401 = vadd.f32 0.0, %v2400
      %v2402 = vpop.f32.mrf.mxu0
      %v2403 = vadd.f32 0.0, %v2402
      %2404 = vmatmul.bf16.gmra.mxu0 %v2383
      %v2405 = vpop.f32.mrf.mxu0
      %v2406 = vadd.f32 0.0, %v2405
      %v2407 = vpop.f32.mrf.mxu0
      %2408 = vdwg.mxu0
      %2409 = vrot.lane.b32.xlu0 %v1359, 112
      %v2410 = vpop.permute.xlu0 %2409
      %2411 = vrot.lane.b32.xlu0 %v1360, 112
      %v2412 = vpop.permute.xlu0 %2411
      %2413 = vrot.lane.b32.xlu0 %v1367, 48
      %v2414 = vpop.permute.xlu0 %2413
      %2415 = vrot.lane.b32.xlu0 %v1368, 48
      %v2416 = vpop.permute.xlu0 %2415
      %v2418 = vsel %vm1272, %v2410, 0
      %v2421 = vsel %vm1272, %v2412, 0
      %v2424 = vsel %vm1272, %v2414, 0
      %v2427 = vsel %vm1272, %v2416, 0
      %2429 = vmatpush.bf16.xpose.msra.mxu0 0
      %2430 = vmatpush.bf16.xpose.msra.mxu0 0
      %2431 = vmatpush.bf16.xpose.msra.mxu0 0
      %2432 = vmatpush.bf16.xpose.msra.mxu0 0
      %2433 = vmatpush.bf16.xpose.msra.mxu0 0
      %2434 = vmatpush.bf16.xpose.msra.mxu0 0
      %2435 = vmatpush.bf16.xpose.msra.mxu0 %v2427
      %2436 = vmatpush.bf16.xpose.msra.mxu0 %v2424
      %2437 = vmatmul.bf16.gmra.mxu0 %v2418
      %v2438 = vpop.f32.mrf.mxu0
      %v2439 = vadd.f32 0.0, %v2438
      %v2440 = vpop.f32.mrf.mxu0
      %v2441 = vadd.f32 0.0, %v2440
      %2442 = vmatmul.bf16.gmra.mxu0 %v2421
      %v2443 = vpop.f32.mrf.mxu0
      %v2444 = vadd.f32 0.0, %v2443
      %v2445 = vpop.f32.mrf.mxu0
      %2446 = vdwg.mxu0
      %2447 = vrot.lane.b32.xlu0 %v1409, 112
      %v2448 = vpop.permute.xlu0 %2447
      %2449 = vrot.lane.b32.xlu0 %v1410, 112
      %v2450 = vpop.permute.xlu0 %2449
      %2451 = vrot.lane.b32.xlu0 %v1417, 48
      %v2452 = vpop.permute.xlu0 %2451
      %2453 = vrot.lane.b32.xlu0 %v1418, 48
      %v2454 = vpop.permute.xlu0 %2453
      %v2456 = vsel %vm1272, %v2448, 0
      %v2459 = vsel %vm1272, %v2450, 0
      %v2462 = vsel %vm1272, %v2452, 0
      %v2465 = vsel %vm1272, %v2454, 0
      %2467 = vmatpush.bf16.xpose.msra.mxu0 0
      %2468 = vmatpush.bf16.xpose.msra.mxu0 0
      %2469 = vmatpush.bf16.xpose.msra.mxu0 0
      %2470 = vmatpush.bf16.xpose.msra.mxu0 0
      %2471 = vmatpush.bf16.xpose.msra.mxu0 0
      %2472 = vmatpush.bf16.xpose.msra.mxu0 0
      %2473 = vmatpush.bf16.xpose.msra.mxu0 %v2465
      %2474 = vmatpush.bf16.xpose.msra.mxu0 %v2462
      %2475 = vmatmul.bf16.gmra.mxu0 %v2456
      %v2476 = vpop.f32.mrf.mxu0
      %v2477 = vadd.f32 0.0, %v2476
      %v2478 = vpop.f32.mrf.mxu0
      %v2479 = vadd.f32 0.0, %v2478
      %2480 = vmatmul.bf16.gmra.mxu0 %v2459
      %v2481 = vpop.f32.mrf.mxu0
      %v2482 = vadd.f32 0.0, %v2481
      %v2483 = vpop.f32.mrf.mxu0
      %2484 = vdwg.mxu0
      %2485 = vrot.lane.b32.xlu0 %v1459, 112
      %v2486 = vpop.permute.xlu0 %2485
      %2487 = vrot.lane.b32.xlu0 %v1460, 112
      %v2488 = vpop.permute.xlu0 %2487
      %2489 = vrot.lane.b32.xlu0 %v1467, 48
      %v2490 = vpop.permute.xlu0 %2489
      %2491 = vrot.lane.b32.xlu0 %v1468, 48
      %v2492 = vpop.permute.xlu0 %2491
      %v2494 = vsel %vm1272, %v2486, 0
      %v2497 = vsel %vm1272, %v2488, 0
      %v2500 = vsel %vm1272, %v2490, 0
      %v2503 = vsel %vm1272, %v2492, 0
      %2505 = vmatpush.bf16.xpose.msra.mxu0 0
      %2506 = vmatpush.bf16.xpose.msra.mxu0 0
      %2507 = vmatpush.bf16.xpose.msra.mxu0 0
      %2508 = vmatpush.bf16.xpose.msra.mxu0 0
      %2509 = vmatpush.bf16.xpose.msra.mxu0 0
      %2510 = vmatpush.bf16.xpose.msra.mxu0 0
      %2511 = vmatpush.bf16.xpose.msra.mxu0 %v2503
      %2512 = vmatpush.bf16.xpose.msra.mxu0 %v2500
      %2513 = vmatmul.bf16.gmra.mxu0 %v2494
      %v2514 = vpop.f32.mrf.mxu0
      %v2515 = vadd.f32 0.0, %v2514
      %v2516 = vpop.f32.mrf.mxu0
      %v2517 = vadd.f32 0.0, %v2516
      %2518 = vmatmul.bf16.gmra.mxu0 %v2497
      %v2519 = vpop.f32.mrf.mxu0
      %v2520 = vadd.f32 0.0, %v2519
      %v2521 = vpop.f32.mrf.mxu0
      %2522 = vdwg.mxu0
      %2523 = vrot.lane.b32.xlu0 %v1509, 112
      %v2524 = vpop.permute.xlu0 %2523
      %2525 = vrot.lane.b32.xlu0 %v1510, 112
      %v2526 = vpop.permute.xlu0 %2525
      %2527 = vrot.lane.b32.xlu0 %v1517, 48
      %v2528 = vpop.permute.xlu0 %2527
      %2529 = vrot.lane.b32.xlu0 %v1518, 48
      %v2530 = vpop.permute.xlu0 %2529
      %v2532 = vsel %vm1272, %v2524, 0
      %v2535 = vsel %vm1272, %v2526, 0
      %v2538 = vsel %vm1272, %v2528, 0
      %v2541 = vsel %vm1272, %v2530, 0
      %2543 = vmatpush.bf16.xpose.msra.mxu0 0
      %2544 = vmatpush.bf16.xpose.msra.mxu0 0
      %2545 = vmatpush.bf16.xpose.msra.mxu0 0
      %2546 = vmatpush.bf16.xpose.msra.mxu0 0
      %2547 = vmatpush.bf16.xpose.msra.mxu0 0
      %2548 = vmatpush.bf16.xpose.msra.mxu0 0
      %2549 = vmatpush.bf16.xpose.msra.mxu0 %v2541
      %2550 = vmatpush.bf16.xpose.msra.mxu0 %v2538
      %2551 = vmatmul.bf16.gmra.mxu0 %v2532
      %v2552 = vpop.f32.mrf.mxu0
      %v2553 = vadd.f32 0.0, %v2552
      %v2554 = vpop.f32.mrf.mxu0
      %v2555 = vadd.f32 0.0, %v2554
      %2556 = vmatmul.bf16.gmra.mxu0 %v2535
      %v2557 = vpop.f32.mrf.mxu0
      %v2558 = vadd.f32 0.0, %v2557
      %v2559 = vpop.f32.mrf.mxu0
      %2560 = vdwg.mxu0
      %2561 = vrot.lane.b32.xlu0 %v1559, 112
      %v2562 = vpop.permute.xlu0 %2561
      %2563 = vrot.lane.b32.xlu0 %v1560, 112
      %v2564 = vpop.permute.xlu0 %2563
      %2565 = vrot.lane.b32.xlu0 %v1567, 48
      %v2566 = vpop.permute.xlu0 %2565
      %2567 = vrot.lane.b32.xlu0 %v1568, 48
      %v2568 = vpop.permute.xlu0 %2567
      %v2570 = vsel %vm1272, %v2562, 0
      %v2573 = vsel %vm1272, %v2564, 0
      %v2576 = vsel %vm1272, %v2566, 0
      %v2579 = vsel %vm1272, %v2568, 0
      %2581 = vmatpush.bf16.xpose.msra.mxu0 0
      %2582 = vmatpush.bf16.xpose.msra.mxu0 0
      %2583 = vmatpush.bf16.xpose.msra.mxu0 0
      %2584 = vmatpush.bf16.xpose.msra.mxu0 0
      %2585 = vmatpush.bf16.xpose.msra.mxu0 0
      %2586 = vmatpush.bf16.xpose.msra.mxu0 0
      %2587 = vmatpush.bf16.xpose.msra.mxu0 %v2579
      %2588 = vmatpush.bf16.xpose.msra.mxu0 %v2576
      %2589 = vmatmul.bf16.gmra.mxu0 %v2570
      %v2590 = vpop.f32.mrf.mxu0
      %v2591 = vadd.f32 0.0, %v2590
      %v2592 = vpop.f32.mrf.mxu0
      %v2593 = vadd.f32 0.0, %v2592
      %2594 = vmatmul.bf16.gmra.mxu0 %v2573
      %v2595 = vpop.f32.mrf.mxu0
      %v2596 = vadd.f32 0.0, %v2595
      %v2597 = vpop.f32.mrf.mxu0
      %2598 = vdwg.mxu0
      %2599 = vrot.lane.b32.xlu0 %v1609, 112
      %v2600 = vpop.permute.xlu0 %2599
      %2601 = vrot.lane.b32.xlu0 %v1610, 112
      %v2602 = vpop.permute.xlu0 %2601
      %2603 = vrot.lane.b32.xlu0 %v1617, 48
      %v2604 = vpop.permute.xlu0 %2603
      %2605 = vrot.lane.b32.xlu0 %v1618, 48
      %v2606 = vpop.permute.xlu0 %2605
      %v2608 = vsel %vm1272, %v2600, 0
      %v2611 = vsel %vm1272, %v2602, 0
      %v2614 = vsel %vm1272, %v2604, 0
      %v2617 = vsel %vm1272, %v2606, 0
      %2619 = vmatpush.bf16.xpose.msra.mxu0 0
      %2620 = vmatpush.bf16.xpose.msra.mxu0 0
      %2621 = vmatpush.bf16.xpose.msra.mxu0 0
      %2622 = vmatpush.bf16.xpose.msra.mxu0 0
      %2623 = vmatpush.bf16.xpose.msra.mxu0 0
      %2624 = vmatpush.bf16.xpose.msra.mxu0 0
      %2625 = vmatpush.bf16.xpose.msra.mxu0 %v2617
      %2626 = vmatpush.bf16.xpose.msra.mxu0 %v2614
      %2627 = vmatmul.bf16.gmra.mxu0 %v2608
      %v2628 = vpop.f32.mrf.mxu0
      %v2629 = vadd.f32 0.0, %v2628
      %v2630 = vpop.f32.mrf.mxu0
      %v2631 = vadd.f32 0.0, %v2630
      %2632 = vmatmul.bf16.gmra.mxu0 %v2611
      %v2633 = vpop.f32.mrf.mxu0
      %v2634 = vadd.f32 0.0, %v2633
      %v2635 = vpop.f32.mrf.mxu0
      %2636 = vdwg.mxu0
      %v2637 = vsel %vm1155, %v2363, -1e+30
      %v2638 = vsel %vm1155, %v2365, -1e+30
      %v2639 = vsel %vm1155, %v2368, -1e+30
      %v2640 = vsel %vm1155, %v2401, -1e+30
      %v2641 = vsel %vm1155, %v2403, -1e+30
      %v2642 = vsel %vm1155, %v2406, -1e+30
      %v2643 = vsel %vm1155, %v2439, -1e+30
      %v2644 = vsel %vm1155, %v2441, -1e+30
      %v2645 = vsel %vm1155, %v2444, -1e+30
      %v2646 = vsel %vm1155, %v2477, -1e+30
      %v2647 = vsel %vm1155, %v2479, -1e+30
      %v2648 = vsel %vm1155, %v2482, -1e+30
      %v2649 = vsel %vm1155, %v2515, -1e+30
      %v2650 = vsel %vm1155, %v2517, -1e+30
      %v2651 = vsel %vm1155, %v2520, -1e+30
      %v2652 = vsel %vm1155, %v2553, -1e+30
      %v2653 = vsel %vm1155, %v2555, -1e+30
      %v2654 = vsel %vm1155, %v2558, -1e+30
      %v2655 = vsel %vm1155, %v2591, -1e+30
      %v2656 = vsel %vm1155, %v2593, -1e+30
      %v2657 = vsel %vm1155, %v2596, -1e+30
      %v2658 = vsel %vm1155, %v2629, -1e+30
      %v2659 = vsel %vm1155, %v2631, -1e+30
      %v2660 = vsel %vm1155, %v2634, -1e+30
      %v2661 = vsel %vm1677, %v2637, -inf
      %2662 = vmax.xlane.f32.xlu0 %v2661
      %v2663 = vpop.xlane.xlu0 %2662
      %v2664 = vsel %vm1677, %v2638, -inf
      %2665 = vmax.xlane.f32.xlu0 %v2664
      %v2666 = vpop.xlane.xlu0 %2665
      %v2667 = vsel %vm1677, %v2639, -inf
      %2668 = vmax.xlane.f32.xlu0 %v2667
      %v2669 = vpop.xlane.xlu0 %2668
      %v2670 = vsel %vm1677, %v2640, -inf
      %2671 = vmax.xlane.f32.xlu0 %v2670
      %v2672 = vpop.xlane.xlu0 %2671
      %v2673 = vsel %vm1677, %v2641, -inf
      %2674 = vmax.xlane.f32.xlu0 %v2673
      %v2675 = vpop.xlane.xlu0 %2674
      %v2676 = vsel %vm1677, %v2642, -inf
      %2677 = vmax.xlane.f32.xlu0 %v2676
      %v2678 = vpop.xlane.xlu0 %2677
      %v2679 = vsel %vm1677, %v2643, -inf
      %2680 = vmax.xlane.f32.xlu0 %v2679
      %v2681 = vpop.xlane.xlu0 %2680
      %v2682 = vsel %vm1677, %v2644, -inf
      %2683 = vmax.xlane.f32.xlu0 %v2682
      %v2684 = vpop.xlane.xlu0 %2683
      %v2685 = vsel %vm1677, %v2645, -inf
      %2686 = vmax.xlane.f32.xlu0 %v2685
      %v2687 = vpop.xlane.xlu0 %2686
      %v2688 = vsel %vm1677, %v2646, -inf
      %2689 = vmax.xlane.f32.xlu0 %v2688
      %v2690 = vpop.xlane.xlu0 %2689
      %v2691 = vsel %vm1677, %v2647, -inf
      %2692 = vmax.xlane.f32.xlu0 %v2691
      %v2693 = vpop.xlane.xlu0 %2692
      %v2694 = vsel %vm1677, %v2648, -inf
      %2695 = vmax.xlane.f32.xlu0 %v2694
      %v2696 = vpop.xlane.xlu0 %2695
      %v2697 = vsel %vm1677, %v2649, -inf
      %2698 = vmax.xlane.f32.xlu0 %v2697
      %v2699 = vpop.xlane.xlu0 %2698
      %v2700 = vsel %vm1677, %v2650, -inf
      %2701 = vmax.xlane.f32.xlu0 %v2700
      %v2702 = vpop.xlane.xlu0 %2701
      %v2703 = vsel %vm1677, %v2651, -inf
      %2704 = vmax.xlane.f32.xlu0 %v2703
      %v2705 = vpop.xlane.xlu0 %2704
      %v2706 = vsel %vm1677, %v2652, -inf
      %2707 = vmax.xlane.f32.xlu0 %v2706
      %v2708 = vpop.xlane.xlu0 %2707
      %v2709 = vsel %vm1677, %v2653, -inf
      %2710 = vmax.xlane.f32.xlu0 %v2709
      %v2711 = vpop.xlane.xlu0 %2710
      %v2712 = vsel %vm1677, %v2654, -inf
      %2713 = vmax.xlane.f32.xlu0 %v2712
      %v2714 = vpop.xlane.xlu0 %2713
      %v2715 = vsel %vm1677, %v2655, -inf
      %2716 = vmax.xlane.f32.xlu0 %v2715
      %v2717 = vpop.xlane.xlu0 %2716
      %v2718 = vsel %vm1677, %v2656, -inf
      %2719 = vmax.xlane.f32.xlu0 %v2718
      %v2720 = vpop.xlane.xlu0 %2719
      %v2721 = vsel %vm1677, %v2657, -inf
      %2722 = vmax.xlane.f32.xlu0 %v2721
      %v2723 = vpop.xlane.xlu0 %2722
      %v2724 = vsel %vm1677, %v2658, -inf
      %2725 = vmax.xlane.f32.xlu0 %v2724
      %v2726 = vpop.xlane.xlu0 %2725
      %v2727 = vsel %vm1677, %v2659, -inf
      %2728 = vmax.xlane.f32.xlu0 %v2727
      %v2729 = vpop.xlane.xlu0 %2728
      %v2730 = vsel %vm1677, %v2660, -inf
      %2731 = vmax.xlane.f32.xlu0 %v2730
      %v2732 = vpop.xlane.xlu0 %2731
      %v2733 = vsub.f32 %v2637, %v2663
      %v2734 = vsub.f32 %v2638, %v2666
      %v2735 = vsub.f32 %v2639, %v2669
      %v2736 = vsub.f32 %v2640, %v2672
      %v2737 = vsub.f32 %v2641, %v2675
      %v2738 = vsub.f32 %v2642, %v2678
      %v2739 = vsub.f32 %v2643, %v2681
      %v2740 = vsub.f32 %v2644, %v2684
      %v2741 = vsub.f32 %v2645, %v2687
      %v2742 = vsub.f32 %v2646, %v2690
      %v2743 = vsub.f32 %v2647, %v2693
      %v2744 = vsub.f32 %v2648, %v2696
      %v2745 = vsub.f32 %v2649, %v2699
      %v2746 = vsub.f32 %v2650, %v2702
      %v2747 = vsub.f32 %v2651, %v2705
      %v2748 = vsub.f32 %v2652, %v2708
      %v2749 = vsub.f32 %v2653, %v2711
      %v2750 = vsub.f32 %v2654, %v2714
      %v2751 = vsub.f32 %v2655, %v2717
      %v2752 = vsub.f32 %v2656, %v2720
      %v2753 = vsub.f32 %v2657, %v2723
      %v2754 = vsub.f32 %v2658, %v2726
      %v2755 = vsub.f32 %v2659, %v2729
      %v2756 = vsub.f32 %v2660, %v2732
      %v2757 = vmul.f32 %v2733, 1.442695
      %v2758 = vpow.pop %v2757
      %v2759 = vmul.f32 %v2734, 1.442695
      %v2760 = vpow.pop %v2759
      %v2761 = vmul.f32 %v2735, 1.442695
      %v2762 = vpow.pop %v2761
      %v2763 = vmul.f32 %v2736, 1.442695
      %v2764 = vpow.pop %v2763
      %v2765 = vmul.f32 %v2737, 1.442695
      %v2766 = vpow.pop %v2765
      %v2767 = vmul.f32 %v2738, 1.442695
      %v2768 = vpow.pop %v2767
      %v2769 = vmul.f32 %v2739, 1.442695
      %v2770 = vpow.pop %v2769
      %v2771 = vmul.f32 %v2740, 1.442695
      %v2772 = vpow.pop %v2771
      %v2773 = vmul.f32 %v2741, 1.442695
      %v2774 = vpow.pop %v2773
      %v2775 = vmul.f32 %v2742, 1.442695
      %v2776 = vpow.pop %v2775
      %v2777 = vmul.f32 %v2743, 1.442695
      %v2778 = vpow.pop %v2777
      %v2779 = vmul.f32 %v2744, 1.442695
      %v2780 = vpow.pop %v2779
      %v2781 = vmul.f32 %v2745, 1.442695
      %v2782 = vpow.pop %v2781
      %v2783 = vmul.f32 %v2746, 1.442695
      %v2784 = vpow.pop %v2783
      %v2785 = vmul.f32 %v2747, 1.442695
      %v2786 = vpow.pop %v2785
      %v2787 = vmul.f32 %v2748, 1.442695
      %v2788 = vpow.pop %v2787
      %v2789 = vmul.f32 %v2749, 1.442695
      %v2790 = vpow.pop %v2789
      %v2791 = vmul.f32 %v2750, 1.442695
      %v2792 = vpow.pop %v2791
      %v2793 = vmul.f32 %v2751, 1.442695
      %v2794 = vpow.pop %v2793
      %v2795 = vmul.f32 %v2752, 1.442695
      %v2796 = vpow.pop %v2795
      %v2797 = vmul.f32 %v2753, 1.442695
      %v2798 = vpow.pop %v2797
      %v2799 = vmul.f32 %v2754, 1.442695
      %v2800 = vpow.pop %v2799
      %v2801 = vmul.f32 %v2755, 1.442695
      %v2802 = vpow.pop %v2801
      %v2803 = vmul.f32 %v2756, 1.442695
      %v2804 = vpow.pop %v2803
      %v2805 = vsel %vm1677, %v2758, 0.0
      %2806 = vadd.xlane.f32.xlu0 %v2805
      %v2807 = vpop.xlane.xlu0 %2806
      %v2808 = vsel %vm1677, %v2760, 0.0
      %2809 = vadd.xlane.f32.xlu0 %v2808
      %v2810 = vpop.xlane.xlu0 %2809
      %v2811 = vsel %vm1677, %v2762, 0.0
      %2812 = vadd.xlane.f32.xlu0 %v2811
      %v2813 = vpop.xlane.xlu0 %2812
      %v2814 = vsel %vm1677, %v2764, 0.0
      %2815 = vadd.xlane.f32.xlu0 %v2814
      %v2816 = vpop.xlane.xlu0 %2815
      %v2817 = vsel %vm1677, %v2766, 0.0
      %2818 = vadd.xlane.f32.xlu0 %v2817
      %v2819 = vpop.xlane.xlu0 %2818
      %v2820 = vsel %vm1677, %v2768, 0.0
      %2821 = vadd.xlane.f32.xlu0 %v2820
      %v2822 = vpop.xlane.xlu0 %2821
      %v2823 = vsel %vm1677, %v2770, 0.0
      %2824 = vadd.xlane.f32.xlu0 %v2823
      %v2825 = vpop.xlane.xlu0 %2824
      %v2826 = vsel %vm1677, %v2772, 0.0
      %2827 = vadd.xlane.f32.xlu0 %v2826
      %v2828 = vpop.xlane.xlu0 %2827
      %v2829 = vsel %vm1677, %v2774, 0.0
      %2830 = vadd.xlane.f32.xlu0 %v2829
      %v2831 = vpop.xlane.xlu0 %2830
      %v2832 = vsel %vm1677, %v2776, 0.0
      %2833 = vadd.xlane.f32.xlu0 %v2832
      %v2834 = vpop.xlane.xlu0 %2833
      %v2835 = vsel %vm1677, %v2778, 0.0
      %2836 = vadd.xlane.f32.xlu0 %v2835
      %v2837 = vpop.xlane.xlu0 %2836
      %v2838 = vsel %vm1677, %v2780, 0.0
      %2839 = vadd.xlane.f32.xlu0 %v2838
      %v2840 = vpop.xlane.xlu0 %2839
      %v2841 = vsel %vm1677, %v2782, 0.0
      %2842 = vadd.xlane.f32.xlu0 %v2841
      %v2843 = vpop.xlane.xlu0 %2842
      %v2844 = vsel %vm1677, %v2784, 0.0
      %2845 = vadd.xlane.f32.xlu0 %v2844
      %v2846 = vpop.xlane.xlu0 %2845
      %v2847 = vsel %vm1677, %v2786, 0.0
      %2848 = vadd.xlane.f32.xlu0 %v2847
      %v2849 = vpop.xlane.xlu0 %2848
      %v2850 = vsel %vm1677, %v2788, 0.0
      %2851 = vadd.xlane.f32.xlu0 %v2850
      %v2852 = vpop.xlane.xlu0 %2851
      %v2853 = vsel %vm1677, %v2790, 0.0
      %2854 = vadd.xlane.f32.xlu0 %v2853
      %v2855 = vpop.xlane.xlu0 %2854
      %v2856 = vsel %vm1677, %v2792, 0.0
      %2857 = vadd.xlane.f32.xlu0 %v2856
      %v2858 = vpop.xlane.xlu0 %2857
      %v2859 = vsel %vm1677, %v2794, 0.0
      %2860 = vadd.xlane.f32.xlu0 %v2859
      %v2861 = vpop.xlane.xlu0 %2860
      %v2862 = vsel %vm1677, %v2796, 0.0
      %2863 = vadd.xlane.f32.xlu0 %v2862
      %v2864 = vpop.xlane.xlu0 %2863
      %v2865 = vsel %vm1677, %v2798, 0.0
      %2866 = vadd.xlane.f32.xlu0 %v2865
      %v2867 = vpop.xlane.xlu0 %2866
      %v2868 = vsel %vm1677, %v2800, 0.0
      %2869 = vadd.xlane.f32.xlu0 %v2868
      %v2870 = vpop.xlane.xlu0 %2869
      %v2871 = vsel %vm1677, %v2802, 0.0
      %2872 = vadd.xlane.f32.xlu0 %v2871
      %v2873 = vpop.xlane.xlu0 %2872
      %v2874 = vsel %vm1677, %v2804, 0.0
      %2875 = vadd.xlane.f32.xlu0 %v2874
      %v2876 = vpop.xlane.xlu0 %2875
      %v2877 = vrcp.pop %v2807
      %v2878 = vrcp.pop %v2810
      %v2879 = vrcp.pop %v2813
      %v2880 = vrcp.pop %v2816
      %v2881 = vrcp.pop %v2819
      %v2882 = vrcp.pop %v2822
      %v2883 = vrcp.pop %v2825
      %v2884 = vrcp.pop %v2828
      %v2885 = vrcp.pop %v2831
      %v2886 = vrcp.pop %v2834
      %v2887 = vrcp.pop %v2837
      %v2888 = vrcp.pop %v2840
      %v2889 = vrcp.pop %v2843
      %v2890 = vrcp.pop %v2846
      %v2891 = vrcp.pop %v2849
      %v2892 = vrcp.pop %v2852
      %v2893 = vrcp.pop %v2855
      %v2894 = vrcp.pop %v2858
      %v2895 = vrcp.pop %v2861
      %v2896 = vrcp.pop %v2864
      %v2897 = vrcp.pop %v2867
      %v2898 = vrcp.pop %v2870
      %v2899 = vrcp.pop %v2873
      %v2900 = vrcp.pop %v2876
      %v2901 = vmul.f32 %v2758, %v2877
      %v2902 = vmul.f32 %v2760, %v2878
      %v2903 = vmul.f32 %v2762, %v2879
      %v2904 = vmul.f32 %v2764, %v2880
      %v2905 = vmul.f32 %v2766, %v2881
      %v2906 = vmul.f32 %v2768, %v2882
      %v2907 = vmul.f32 %v2770, %v2883
      %v2908 = vmul.f32 %v2772, %v2884
      %v2909 = vmul.f32 %v2774, %v2885
      %v2910 = vmul.f32 %v2776, %v2886
      %v2911 = vmul.f32 %v2778, %v2887
      %v2912 = vmul.f32 %v2780, %v2888
      %v2913 = vmul.f32 %v2782, %v2889
      %v2914 = vmul.f32 %v2784, %v2890
      %v2915 = vmul.f32 %v2786, %v2891
      %v2916 = vmul.f32 %v2788, %v2892
      %v2917 = vmul.f32 %v2790, %v2893
      %v2918 = vmul.f32 %v2792, %v2894
      %v2919 = vmul.f32 %v2794, %v2895
      %v2920 = vmul.f32 %v2796, %v2896
      %v2921 = vmul.f32 %v2798, %v2897
      %v2922 = vmul.f32 %v2800, %v2898
      %v2923 = vmul.f32 %v2802, %v2899
      %v2924 = vmul.f32 %v2804, %v2900
      %v2925 = vpack.c.bf16 %v2901, %v2901
      %v2926 = vpack.c.bf16 %v2902, %v2902
      %v2927 = vpack.c.bf16 %v2903, %v2903
      %v2928 = vpack.c.bf16 %v2904, %v2904
      %v2929 = vpack.c.bf16 %v2905, %v2905
      %v2930 = vpack.c.bf16 %v2906, %v2906
      %v2931 = vpack.c.bf16 %v2907, %v2907
      %v2932 = vpack.c.bf16 %v2908, %v2908
      %v2933 = vpack.c.bf16 %v2909, %v2909
      %v2934 = vpack.c.bf16 %v2910, %v2910
      %v2935 = vpack.c.bf16 %v2911, %v2911
      %v2936 = vpack.c.bf16 %v2912, %v2912
      %v2937 = vpack.c.bf16 %v2913, %v2913
      %v2938 = vpack.c.bf16 %v2914, %v2914
      %v2939 = vpack.c.bf16 %v2915, %v2915
      %v2940 = vpack.c.bf16 %v2916, %v2916
      %v2941 = vpack.c.bf16 %v2917, %v2917
      %v2942 = vpack.c.bf16 %v2918, %v2918
      %v2943 = vpack.c.bf16 %v2919, %v2919
      %v2944 = vpack.c.bf16 %v2920, %v2920
      %v2945 = vpack.c.bf16 %v2921, %v2921
      %v2946 = vpack.c.bf16 %v2922, %v2922
      %v2947 = vpack.c.bf16 %v2923, %v2923
      %v2948 = vpack.c.bf16 %v2924, %v2924
      %v2952 = vunpack.c.l.b16 %v2925
      %v2953 = vunpack.c.l.b16 %v2926
      %v2954 = vunpack.c.l.b16 %v2927
      %v2955 = vpack.c.b16 %v2953, %v2952
      %v2956 = vpack.c.b16 %v2954, %v2954
      %2957 = vrot.lane.b32.xlu0 %v1980, 112
      %v2958 = vpop.permute.xlu0 %2957
      %2959 = vrot.lane.b32.xlu0 %v1981, 112
      %v2960 = vpop.permute.xlu0 %2959
      %v2963 = vsel %vm1677, %v2955, 0
      %v2966 = vsel %vm1677, %v2956, 0
      %v2969 = vsel %vm1989, %v2960, 0
      %2971 = vmatpush.bf16.msra.mxu0 0
      %2972 = vmatpush.bf16.msra.mxu0 0
      %2973 = vmatpush.bf16.msra.mxu0 0
      %2974 = vmatpush.bf16.msra.mxu0 0
      %2975 = vmatpush.bf16.msra.mxu0 0
      %2976 = vmatpush.bf16.msra.mxu0 0
      %2977 = vmatpush.bf16.msra.mxu0 %v2969
      %2978 = vmatpush.bf16.msra.mxu0 %v2958
      %2979 = vmatmul.bf16.gmra.mxu0 %v2963
      %v2980 = vpop.f32.mrf.mxu0
      %v2981 = vadd.f32 0.0, %v2980
      %v2982 = vpop.f32.mrf.mxu0
      %v2983 = vadd.f32 0.0, %v2982
      %2984 = vmatmul.bf16.gmra.mxu0 %v2966
      %v2985 = vpop.f32.mrf.mxu0
      %v2986 = vadd.f32 0.0, %v2985
      %v2987 = vpop.f32.mrf.mxu0
      %2988 = vdwg.mxu0
      %v2992 = vunpack.c.l.b16 %v2928
      %v2993 = vunpack.c.l.b16 %v2929
      %v2994 = vunpack.c.l.b16 %v2930
      %v2995 = vpack.c.b16 %v2993, %v2992
      %v2996 = vpack.c.b16 %v2994, %v2994
      %2997 = vrot.lane.b32.xlu0 %v2025, 112
      %v2998 = vpop.permute.xlu0 %2997
      %2999 = vrot.lane.b32.xlu0 %v2026, 112
      %v3000 = vpop.permute.xlu0 %2999
      %v3003 = vsel %vm1677, %v2995, 0
      %v3006 = vsel %vm1677, %v2996, 0
      %v3009 = vsel %vm1989, %v3000, 0
      %3011 = vmatpush.bf16.msra.mxu0 0
      %3012 = vmatpush.bf16.msra.mxu0 0
      %3013 = vmatpush.bf16.msra.mxu0 0
      %3014 = vmatpush.bf16.msra.mxu0 0
      %3015 = vmatpush.bf16.msra.mxu0 0
      %3016 = vmatpush.bf16.msra.mxu0 0
      %3017 = vmatpush.bf16.msra.mxu0 %v3009
      %3018 = vmatpush.bf16.msra.mxu0 %v2998
      %3019 = vmatmul.bf16.gmra.mxu0 %v3003
      %v3020 = vpop.f32.mrf.mxu0
      %v3021 = vadd.f32 0.0, %v3020
      %v3022 = vpop.f32.mrf.mxu0
      %v3023 = vadd.f32 0.0, %v3022
      %3024 = vmatmul.bf16.gmra.mxu0 %v3006
      %v3025 = vpop.f32.mrf.mxu0
      %v3026 = vadd.f32 0.0, %v3025
      %v3027 = vpop.f32.mrf.mxu0
      %3028 = vdwg.mxu0
      %v3032 = vunpack.c.l.b16 %v2931
      %v3033 = vunpack.c.l.b16 %v2932
      %v3034 = vunpack.c.l.b16 %v2933
      %v3035 = vpack.c.b16 %v3033, %v3032
      %v3036 = vpack.c.b16 %v3034, %v3034
      %3037 = vrot.lane.b32.xlu0 %v2069, 112
      %v3038 = vpop.permute.xlu0 %3037
      %3039 = vrot.lane.b32.xlu0 %v2070, 112
      %v3040 = vpop.permute.xlu0 %3039
      %v3043 = vsel %vm1677, %v3035, 0
      %v3046 = vsel %vm1677, %v3036, 0
      %v3049 = vsel %vm1989, %v3040, 0
      %3051 = vmatpush.bf16.msra.mxu0 0
      %3052 = vmatpush.bf16.msra.mxu0 0
      %3053 = vmatpush.bf16.msra.mxu0 0
      %3054 = vmatpush.bf16.msra.mxu0 0
      %3055 = vmatpush.bf16.msra.mxu0 0
      %3056 = vmatpush.bf16.msra.mxu0 0
      %3057 = vmatpush.bf16.msra.mxu0 %v3049
      %3058 = vmatpush.bf16.msra.mxu0 %v3038
      %3059 = vmatmul.bf16.gmra.mxu0 %v3043
      %v3060 = vpop.f32.mrf.mxu0
      %v3061 = vadd.f32 0.0, %v3060
      %v3062 = vpop.f32.mrf.mxu0
      %v3063 = vadd.f32 0.0, %v3062
      %3064 = vmatmul.bf16.gmra.mxu0 %v3046
      %v3065 = vpop.f32.mrf.mxu0
      %v3066 = vadd.f32 0.0, %v3065
      %v3067 = vpop.f32.mrf.mxu0
      %3068 = vdwg.mxu0
      %v3072 = vunpack.c.l.b16 %v2934
      %v3073 = vunpack.c.l.b16 %v2935
      %v3074 = vunpack.c.l.b16 %v2936
      %v3075 = vpack.c.b16 %v3073, %v3072
      %v3076 = vpack.c.b16 %v3074, %v3074
      %3077 = vrot.lane.b32.xlu0 %v2113, 112
      %v3078 = vpop.permute.xlu0 %3077
      %3079 = vrot.lane.b32.xlu0 %v2114, 112
      %v3080 = vpop.permute.xlu0 %3079
      %v3083 = vsel %vm1677, %v3075, 0
      %v3086 = vsel %vm1677, %v3076, 0
      %v3089 = vsel %vm1989, %v3080, 0
      %3091 = vmatpush.bf16.msra.mxu0 0
      %3092 = vmatpush.bf16.msra.mxu0 0
      %3093 = vmatpush.bf16.msra.mxu0 0
      %3094 = vmatpush.bf16.msra.mxu0 0
      %3095 = vmatpush.bf16.msra.mxu0 0
      %3096 = vmatpush.bf16.msra.mxu0 0
      %3097 = vmatpush.bf16.msra.mxu0 %v3089
      %3098 = vmatpush.bf16.msra.mxu0 %v3078
      %3099 = vmatmul.bf16.gmra.mxu0 %v3083
      %v3100 = vpop.f32.mrf.mxu0
      %v3101 = vadd.f32 0.0, %v3100
      %v3102 = vpop.f32.mrf.mxu0
      %v3103 = vadd.f32 0.0, %v3102
      %3104 = vmatmul.bf16.gmra.mxu0 %v3086
      %v3105 = vpop.f32.mrf.mxu0
      %v3106 = vadd.f32 0.0, %v3105
      %v3107 = vpop.f32.mrf.mxu0
      %3108 = vdwg.mxu0
      %v3112 = vunpack.c.l.b16 %v2937
      %v3113 = vunpack.c.l.b16 %v2938
      %v3114 = vunpack.c.l.b16 %v2939
      %v3115 = vpack.c.b16 %v3113, %v3112
      %v3116 = vpack.c.b16 %v3114, %v3114
      %3117 = vrot.lane.b32.xlu0 %v2157, 112
      %v3118 = vpop.permute.xlu0 %3117
      %3119 = vrot.lane.b32.xlu0 %v2158, 112
      %v3120 = vpop.permute.xlu0 %3119
      %v3123 = vsel %vm1677, %v3115, 0
      %v3126 = vsel %vm1677, %v3116, 0
      %v3129 = vsel %vm1989, %v3120, 0
      %3131 = vmatpush.bf16.msra.mxu0 0
      %3132 = vmatpush.bf16.msra.mxu0 0
      %3133 = vmatpush.bf16.msra.mxu0 0
      %3134 = vmatpush.bf16.msra.mxu0 0
      %3135 = vmatpush.bf16.msra.mxu0 0
      %3136 = vmatpush.bf16.msra.mxu0 0
      %3137 = vmatpush.bf16.msra.mxu0 %v3129
      %3138 = vmatpush.bf16.msra.mxu0 %v3118
      %3139 = vmatmul.bf16.gmra.mxu0 %v3123
      %v3140 = vpop.f32.mrf.mxu0
      %v3141 = vadd.f32 0.0, %v3140
      %v3142 = vpop.f32.mrf.mxu0
      %v3143 = vadd.f32 0.0, %v3142
      %3144 = vmatmul.bf16.gmra.mxu0 %v3126
      %v3145 = vpop.f32.mrf.mxu0
      %v3146 = vadd.f32 0.0, %v3145
      %v3147 = vpop.f32.mrf.mxu0
      %3148 = vdwg.mxu0
      %v3152 = vunpack.c.l.b16 %v2940
      %v3153 = vunpack.c.l.b16 %v2941
      %v3154 = vunpack.c.l.b16 %v2942
      %v3155 = vpack.c.b16 %v3153, %v3152
      %v3156 = vpack.c.b16 %v3154, %v3154
      %3157 = vrot.lane.b32.xlu0 %v2201, 112
      %v3158 = vpop.permute.xlu0 %3157
      %3159 = vrot.lane.b32.xlu0 %v2202, 112
      %v3160 = vpop.permute.xlu0 %3159
      %v3163 = vsel %vm1677, %v3155, 0
      %v3166 = vsel %vm1677, %v3156, 0
      %v3169 = vsel %vm1989, %v3160, 0
      %3171 = vmatpush.bf16.msra.mxu0 0
      %3172 = vmatpush.bf16.msra.mxu0 0
      %3173 = vmatpush.bf16.msra.mxu0 0
      %3174 = vmatpush.bf16.msra.mxu0 0
      %3175 = vmatpush.bf16.msra.mxu0 0
      %3176 = vmatpush.bf16.msra.mxu0 0
      %3177 = vmatpush.bf16.msra.mxu0 %v3169
      %3178 = vmatpush.bf16.msra.mxu0 %v3158
      %3179 = vmatmul.bf16.gmra.mxu0 %v3163
      %v3180 = vpop.f32.mrf.mxu0
      %v3181 = vadd.f32 0.0, %v3180
      %v3182 = vpop.f32.mrf.mxu0
      %v3183 = vadd.f32 0.0, %v3182
      %3184 = vmatmul.bf16.gmra.mxu0 %v3166
      %v3185 = vpop.f32.mrf.mxu0
      %v3186 = vadd.f32 0.0, %v3185
      %v3187 = vpop.f32.mrf.mxu0
      %3188 = vdwg.mxu0
      %v3192 = vunpack.c.l.b16 %v2943
      %v3193 = vunpack.c.l.b16 %v2944
      %v3194 = vunpack.c.l.b16 %v2945
      %v3195 = vpack.c.b16 %v3193, %v3192
      %v3196 = vpack.c.b16 %v3194, %v3194
      %3197 = vrot.lane.b32.xlu0 %v2245, 112
      %v3198 = vpop.permute.xlu0 %3197
      %3199 = vrot.lane.b32.xlu0 %v2246, 112
      %v3200 = vpop.permute.xlu0 %3199
      %v3203 = vsel %vm1677, %v3195, 0
      %v3206 = vsel %vm1677, %v3196, 0
      %v3209 = vsel %vm1989, %v3200, 0
      %3211 = vmatpush.bf16.msra.mxu0 0
      %3212 = vmatpush.bf16.msra.mxu0 0
      %3213 = vmatpush.bf16.msra.mxu0 0
      %3214 = vmatpush.bf16.msra.mxu0 0
      %3215 = vmatpush.bf16.msra.mxu0 0
      %3216 = vmatpush.bf16.msra.mxu0 0
      %3217 = vmatpush.bf16.msra.mxu0 %v3209
      %3218 = vmatpush.bf16.msra.mxu0 %v3198
      %3219 = vmatmul.bf16.gmra.mxu0 %v3203
      %v3220 = vpop.f32.mrf.mxu0
      %v3221 = vadd.f32 0.0, %v3220
      %v3222 = vpop.f32.mrf.mxu0
      %v3223 = vadd.f32 0.0, %v3222
      %3224 = vmatmul.bf16.gmra.mxu0 %v3206
      %v3225 = vpop.f32.mrf.mxu0
      %v3226 = vadd.f32 0.0, %v3225
      %v3227 = vpop.f32.mrf.mxu0
      %3228 = vdwg.mxu0
      %v3232 = vunpack.c.l.b16 %v2946
      %v3233 = vunpack.c.l.b16 %v2947
      %v3234 = vunpack.c.l.b16 %v2948
      %v3235 = vpack.c.b16 %v3233, %v3232
      %v3236 = vpack.c.b16 %v3234, %v3234
      %3237 = vrot.lane.b32.xlu0 %v2289, 112
      %v3238 = vpop.permute.xlu0 %3237
      %3239 = vrot.lane.b32.xlu0 %v2290, 112
      %v3240 = vpop.permute.xlu0 %3239
      %v3243 = vsel %vm1677, %v3235, 0
      %v3246 = vsel %vm1677, %v3236, 0
      %v3249 = vsel %vm1989, %v3240, 0
      %3251 = vmatpush.bf16.msra.mxu0 0
      %3252 = vmatpush.bf16.msra.mxu0 0
      %3253 = vmatpush.bf16.msra.mxu0 0
      %3254 = vmatpush.bf16.msra.mxu0 0
      %3255 = vmatpush.bf16.msra.mxu0 0
      %3256 = vmatpush.bf16.msra.mxu0 0
      %3257 = vmatpush.bf16.msra.mxu0 %v3249
      %3258 = vmatpush.bf16.msra.mxu0 %v3238
      %3259 = vmatmul.bf16.gmra.mxu0 %v3243
      %v3260 = vpop.f32.mrf.mxu0
      %v3261 = vadd.f32 0.0, %v3260
      %v3262 = vpop.f32.mrf.mxu0
      %v3263 = vadd.f32 0.0, %v3262
      %3264 = vmatmul.bf16.gmra.mxu0 %v3246
      %v3265 = vpop.f32.mrf.mxu0
      %v3266 = vadd.f32 0.0, %v3265
      %v3267 = vpop.f32.mrf.mxu0
      %3268 = vdwg.mxu0
      %v3269 = vpack.c.bf16 %v2983, %v2981
      %v3270 = vpack.c.bf16 %v3021, %v2986
      %v3271 = vpack.c.bf16 %v3026, %v3023
      %v3272 = vpack.c.bf16 %v3063, %v3061
      %v3273 = vpack.c.bf16 %v3101, %v3066
      %v3274 = vpack.c.bf16 %v3106, %v3103
      %v3275 = vpack.c.bf16 %v3143, %v3141
      %v3276 = vpack.c.bf16 %v3181, %v3146
      %v3277 = vpack.c.bf16 %v3186, %v3183
      %v3278 = vpack.c.bf16 %v3223, %v3221
      %v3279 = vpack.c.bf16 %v3261, %v3226
      %v3280 = vpack.c.bf16 %v3266, %v3263
      %v3281 = vld [vmem:[%s5 + $0x8] sm:$0xf]
      %v3282 = vld [vmem:[%s5 + $0xc] sm:$0xf]
      %v3285 = vunpack.c.l.b16 %v3281
      %v3286 = vunpack.c.l.b16 %v3282
      %v3287 = vpack.c.b16 %v3286, %v3285
      %v3290 = vsel %vm1272, %v3269, 0
      %v3293 = vsel %vm1272, %v3270, 0
      %v3296 = vsel %vm1272, %v3271, 0
      %v3299 = vsel %vm1272, %v3272, 0
      %v3302 = vsel %vm1272, %v3273, 0
      %v3305 = vsel %vm1272, %v3274, 0
      %v3308 = vsel %vm1272, %v3275, 0
      %v3311 = vsel %vm1272, %v3276, 0
      %v3314 = vsel %vm1272, %v3277, 0
      %v3317 = vsel %vm1272, %v3278, 0
      %v3320 = vsel %vm1272, %v3279, 0
      %v3323 = vsel %vm1272, %v3280, 0
      %3325 = vmatpush.bf16.msra.mxu0 0
      %3326 = vmatpush.bf16.msra.mxu0 0
      %3327 = vmatpush.bf16.msra.mxu0 0
      %3328 = vmatpush.bf16.msra.mxu0 0
      %3329 = vmatpush.bf16.msra.mxu0 0
      %3330 = vmatpush.bf16.msra.mxu0 0
      %3331 = vmatpush.bf16.msra.mxu0 0
      %3332 = vmatpush.bf16.msra.mxu0 %v3287
      %3333 = vmatmul.bf16.gmra.mxu0 %v3290
      %v3334 = vpop.f32.mrf.mxu0
      %v3335 = vadd.f32 0.0, %v3334
      %v3336 = vpop.f32.mrf.mxu0
      %v3337 = vadd.f32 0.0, %v3336
      %3338 = vmatmul.bf16.gmra.mxu0 %v3293
      %v3339 = vpop.f32.mrf.mxu0
      %v3340 = vadd.f32 0.0, %v3339
      %v3341 = vpop.f32.mrf.mxu0
      %v3342 = vadd.f32 0.0, %v3341
      %3343 = vmatmul.bf16.gmra.mxu0 %v3296
      %v3344 = vpop.f32.mrf.mxu0
      %v3345 = vadd.f32 0.0, %v3344
      %v3346 = vpop.f32.mrf.mxu0
      %v3347 = vadd.f32 0.0, %v3346
      %3348 = vmatmul.bf16.gmra.mxu0 %v3299
      %v3349 = vpop.f32.mrf.mxu0
      %v3350 = vadd.f32 0.0, %v3349
      %v3351 = vpop.f32.mrf.mxu0
      %v3352 = vadd.f32 0.0, %v3351
      %3353 = vmatmul.bf16.gmra.mxu0 %v3302
      %v3354 = vpop.f32.mrf.mxu0
      %v3355 = vadd.f32 0.0, %v3354
      %v3356 = vpop.f32.mrf.mxu0
      %v3357 = vadd.f32 0.0, %v3356
      %3358 = vmatmul.bf16.gmra.mxu0 %v3305
      %v3359 = vpop.f32.mrf.mxu0
      %v3360 = vadd.f32 0.0, %v3359
      %v3361 = vpop.f32.mrf.mxu0
      %v3362 = vadd.f32 0.0, %v3361
      %3363 = vmatmul.bf16.gmra.mxu0 %v3308
      %v3364 = vpop.f32.mrf.mxu0
      %v3365 = vadd.f32 0.0, %v3364
      %v3366 = vpop.f32.mrf.mxu0
      %v3367 = vadd.f32 0.0, %v3366
      %3368 = vmatmul.bf16.gmra.mxu0 %v3311
      %v3369 = vpop.f32.mrf.mxu0
      %v3370 = vadd.f32 0.0, %v3369
      %v3371 = vpop.f32.mrf.mxu0
      %v3372 = vadd.f32 0.0, %v3371
      %3373 = vmatmul.bf16.gmra.mxu0 %v3314
      %v3374 = vpop.f32.mrf.mxu0
      %v3375 = vadd.f32 0.0, %v3374
      %v3376 = vpop.f32.mrf.mxu0
      %v3377 = vadd.f32 0.0, %v3376
      %3378 = vmatmul.bf16.gmra.mxu0 %v3317
      %v3379 = vpop.f32.mrf.mxu0
      %v3380 = vadd.f32 0.0, %v3379
      %v3381 = vpop.f32.mrf.mxu0
      %v3382 = vadd.f32 0.0, %v3381
      %3383 = vmatmul.bf16.gmra.mxu0 %v3320
      %v3384 = vpop.f32.mrf.mxu0
      %v3385 = vadd.f32 0.0, %v3384
      %v3386 = vpop.f32.mrf.mxu0
      %v3387 = vadd.f32 0.0, %v3386
      %3388 = vmatmul.bf16.gmra.mxu0 %v3323
      %v3389 = vpop.f32.mrf.mxu0
      %v3390 = vadd.f32 0.0, %v3389
      %v3391 = vpop.f32.mrf.mxu0
      %v3392 = vadd.f32 0.0, %v3391
      %3393 = vdwg.mxu0
      %v3396 = vunpack.c.l.b16 %v2331
      %v3397 = vunpack.c.l.b16 %v2332
      %v3398 = vpack.c.b16 %v3397, %v3396
      %v3401 = vsel %vm1272, %v2319, 0
      %v3404 = vsel %vm1272, %v2320, 0
      %v3407 = vsel %vm1272, %v2321, 0
      %v3410 = vsel %vm1272, %v2322, 0
      %v3413 = vsel %vm1272, %v2323, 0
      %v3416 = vsel %vm1272, %v2324, 0
      %v3419 = vsel %vm1272, %v2325, 0
      %v3422 = vsel %vm1272, %v2326, 0
      %v3425 = vsel %vm1272, %v2327, 0
      %v3428 = vsel %vm1272, %v2328, 0
      %v3431 = vsel %vm1272, %v2329, 0
      %v3434 = vsel %vm1272, %v2330, 0
      %3436 = vmatpush.bf16.msra.mxu0 0
      %3437 = vmatpush.bf16.msra.mxu0 0
      %3438 = vmatpush.bf16.msra.mxu0 0
      %3439 = vmatpush.bf16.msra.mxu0 0
      %3440 = vmatpush.bf16.msra.mxu0 0
      %3441 = vmatpush.bf16.msra.mxu0 0
      %3442 = vmatpush.bf16.msra.mxu0 0
      %3443 = vmatpush.bf16.msra.mxu0 %v3398
      %3444 = vmatmul.bf16.gmra.mxu0 %v3401
      %v3445 = vpop.f32.mrf.mxu0
      %v3446 = vadd.f32 %v3335, %v3445
      %v3447 = vpop.f32.mrf.mxu0
      %v3448 = vadd.f32 %v3337, %v3447
      %3449 = vmatmul.bf16.gmra.mxu0 %v3404
      %v3450 = vpop.f32.mrf.mxu0
      %v3451 = vadd.f32 %v3340, %v3450
      %v3452 = vpop.f32.mrf.mxu0
      %v3453 = vadd.f32 %v3342, %v3452
      %3454 = vmatmul.bf16.gmra.mxu0 %v3407
      %v3455 = vpop.f32.mrf.mxu0
      %v3456 = vadd.f32 %v3345, %v3455
      %v3457 = vpop.f32.mrf.mxu0
      %v3458 = vadd.f32 %v3347, %v3457
      %3459 = vmatmul.bf16.gmra.mxu0 %v3410
      %v3460 = vpop.f32.mrf.mxu0
      %v3461 = vadd.f32 %v3350, %v3460
      %v3462 = vpop.f32.mrf.mxu0
      %v3463 = vadd.f32 %v3352, %v3462
      %3464 = vmatmul.bf16.gmra.mxu0 %v3413
      %v3465 = vpop.f32.mrf.mxu0
      %v3466 = vadd.f32 %v3355, %v3465
      %v3467 = vpop.f32.mrf.mxu0
      %v3468 = vadd.f32 %v3357, %v3467
      %3469 = vmatmul.bf16.gmra.mxu0 %v3416
      %v3470 = vpop.f32.mrf.mxu0
      %v3471 = vadd.f32 %v3360, %v3470
      %v3472 = vpop.f32.mrf.mxu0
      %v3473 = vadd.f32 %v3362, %v3472
      %3474 = vmatmul.bf16.gmra.mxu0 %v3419
      %v3475 = vpop.f32.mrf.mxu0
      %v3476 = vadd.f32 %v3365, %v3475
      %v3477 = vpop.f32.mrf.mxu0
      %v3478 = vadd.f32 %v3367, %v3477
      %3479 = vmatmul.bf16.gmra.mxu0 %v3422
      %v3480 = vpop.f32.mrf.mxu0
      %v3481 = vadd.f32 %v3370, %v3480
      %v3482 = vpop.f32.mrf.mxu0
      %v3483 = vadd.f32 %v3372, %v3482
      %3484 = vmatmul.bf16.gmra.mxu0 %v3425
      %v3485 = vpop.f32.mrf.mxu0
      %v3486 = vadd.f32 %v3375, %v3485
      %v3487 = vpop.f32.mrf.mxu0
      %v3488 = vadd.f32 %v3377, %v3487
      %3489 = vmatmul.bf16.gmra.mxu0 %v3428
      %v3490 = vpop.f32.mrf.mxu0
      %v3491 = vadd.f32 %v3380, %v3490
      %v3492 = vpop.f32.mrf.mxu0
      %v3493 = vadd.f32 %v3382, %v3492
      %3494 = vmatmul.bf16.gmra.mxu0 %v3431
      %v3495 = vpop.f32.mrf.mxu0
      %v3496 = vadd.f32 %v3385, %v3495
      %v3497 = vpop.f32.mrf.mxu0
      %v3498 = vadd.f32 %v3387, %v3497
      %3499 = vmatmul.bf16.gmra.mxu0 %v3434
      %v3500 = vpop.f32.mrf.mxu0
      %v3501 = vadd.f32 %v3390, %v3500
      %v3502 = vpop.f32.mrf.mxu0
      %v3503 = vadd.f32 %v3392, %v3502
      %3504 = vdwg.mxu0
      %3505 = vrot.lane.b32.xlu0 %v1258, 96
      %v3506 = vpop.permute.xlu0 %3505
      %3507 = vrot.lane.b32.xlu0 %v1259, 96
      %v3508 = vpop.permute.xlu0 %3507
      %3509 = vrot.lane.b32.xlu0 %v1266, 32
      %v3510 = vpop.permute.xlu0 %3509
      %3511 = vrot.lane.b32.xlu0 %v1267, 32
      %v3512 = vpop.permute.xlu0 %3511
      %v3514 = vsel %vm1272, %v3506, 0
      %v3517 = vsel %vm1272, %v3508, 0
      %v3520 = vsel %vm1272, %v3510, 0
      %v3523 = vsel %vm1272, %v3512, 0
      %3525 = vmatpush.bf16.xpose.msra.mxu0 0
      %3526 = vmatpush.bf16.xpose.msra.mxu0 0
      %3527 = vmatpush.bf16.xpose.msra.mxu0 0
      %3528 = vmatpush.bf16.xpose.msra.mxu0 0
      %3529 = vmatpush.bf16.xpose.msra.mxu0 0
      %3530 = vmatpush.bf16.xpose.msra.mxu0 0
      %3531 = vmatpush.bf16.xpose.msra.mxu0 %v3523
      %3532 = vmatpush.bf16.xpose.msra.mxu0 %v3520
      %3533 = vmatmul.bf16.gmra.mxu0 %v3514
      %v3534 = vpop.f32.mrf.mxu0
      %v3535 = vadd.f32 0.0, %v3534
      %v3536 = vpop.f32.mrf.mxu0
      %v3537 = vadd.f32 0.0, %v3536
      %3538 = vmatmul.bf16.gmra.mxu0 %v3517
      %v3539 = vpop.f32.mrf.mxu0
      %v3540 = vadd.f32 0.0, %v3539
      %v3541 = vpop.f32.mrf.mxu0
      %3542 = vdwg.mxu0
      %3543 = vrot.lane.b32.xlu0 %v1309, 96
      %v3544 = vpop.permute.xlu0 %3543
      %3545 = vrot.lane.b32.xlu0 %v1310, 96
      %v3546 = vpop.permute.xlu0 %3545
      %3547 = vrot.lane.b32.xlu0 %v1317, 32
      %v3548 = vpop.permute.xlu0 %3547
      %3549 = vrot.lane.b32.xlu0 %v1318, 32
      %v3550 = vpop.permute.xlu0 %3549
      %v3552 = vsel %vm1272, %v3544, 0
      %v3555 = vsel %vm1272, %v3546, 0
      %v3558 = vsel %vm1272, %v3548, 0
      %v3561 = vsel %vm1272, %v3550, 0
      %3563 = vmatpush.bf16.xpose.msra.mxu0 0
      %3564 = vmatpush.bf16.xpose.msra.mxu0 0
      %3565 = vmatpush.bf16.xpose.msra.mxu0 0
      %3566 = vmatpush.bf16.xpose.msra.mxu0 0
      %3567 = vmatpush.bf16.xpose.msra.mxu0 0
      %3568 = vmatpush.bf16.xpose.msra.mxu0 0
      %3569 = vmatpush.bf16.xpose.msra.mxu0 %v3561
      %3570 = vmatpush.bf16.xpose.msra.mxu0 %v3558
      %3571 = vmatmul.bf16.gmra.mxu0 %v3552
      %v3572 = vpop.f32.mrf.mxu0
      %v3573 = vadd.f32 0.0, %v3572
      %v3574 = vpop.f32.mrf.mxu0
      %v3575 = vadd.f32 0.0, %v3574
      %3576 = vmatmul.bf16.gmra.mxu0 %v3555
      %v3577 = vpop.f32.mrf.mxu0
      %v3578 = vadd.f32 0.0, %v3577
      %v3579 = vpop.f32.mrf.mxu0
      %3580 = vdwg.mxu0
      %3581 = vrot.lane.b32.xlu0 %v1359, 96
      %v3582 = vpop.permute.xlu0 %3581
      %3583 = vrot.lane.b32.xlu0 %v1360, 96
      %v3584 = vpop.permute.xlu0 %3583
      %3585 = vrot.lane.b32.xlu0 %v1367, 32
      %v3586 = vpop.permute.xlu0 %3585
      %3587 = vrot.lane.b32.xlu0 %v1368, 32
      %v3588 = vpop.permute.xlu0 %3587
      %v3590 = vsel %vm1272, %v3582, 0
      %v3593 = vsel %vm1272, %v3584, 0
      %v3596 = vsel %vm1272, %v3586, 0
      %v3599 = vsel %vm1272, %v3588, 0
      %3601 = vmatpush.bf16.xpose.msra.mxu0 0
      %3602 = vmatpush.bf16.xpose.msra.mxu0 0
      %3603 = vmatpush.bf16.xpose.msra.mxu0 0
      %3604 = vmatpush.bf16.xpose.msra.mxu0 0
      %3605 = vmatpush.bf16.xpose.msra.mxu0 0
      %3606 = vmatpush.bf16.xpose.msra.mxu0 0
      %3607 = vmatpush.bf16.xpose.msra.mxu0 %v3599
      %3608 = vmatpush.bf16.xpose.msra.mxu0 %v3596
      %3609 = vmatmul.bf16.gmra.mxu0 %v3590
      %v3610 = vpop.f32.mrf.mxu0
      %v3611 = vadd.f32 0.0, %v3610
      %v3612 = vpop.f32.mrf.mxu0
      %v3613 = vadd.f32 0.0, %v3612
      %3614 = vmatmul.bf16.gmra.mxu0 %v3593
      %v3615 = vpop.f32.mrf.mxu0
      %v3616 = vadd.f32 0.0, %v3615
      %v3617 = vpop.f32.mrf.mxu0
      %3618 = vdwg.mxu0
      %3619 = vrot.lane.b32.xlu0 %v1409, 96
      %v3620 = vpop.permute.xlu0 %3619
      %3621 = vrot.lane.b32.xlu0 %v1410, 96
      %v3622 = vpop.permute.xlu0 %3621
      %3623 = vrot.lane.b32.xlu0 %v1417, 32
      %v3624 = vpop.permute.xlu0 %3623
      %3625 = vrot.lane.b32.xlu0 %v1418, 32
      %v3626 = vpop.permute.xlu0 %3625
      %v3628 = vsel %vm1272, %v3620, 0
      %v3631 = vsel %vm1272, %v3622, 0
      %v3634 = vsel %vm1272, %v3624, 0
      %v3637 = vsel %vm1272, %v3626, 0
      %3639 = vmatpush.bf16.xpose.msra.mxu0 0
      %3640 = vmatpush.bf16.xpose.msra.mxu0 0
      %3641 = vmatpush.bf16.xpose.msra.mxu0 0
      %3642 = vmatpush.bf16.xpose.msra.mxu0 0
      %3643 = vmatpush.bf16.xpose.msra.mxu0 0
      %3644 = vmatpush.bf16.xpose.msra.mxu0 0
      %3645 = vmatpush.bf16.xpose.msra.mxu0 %v3637
      %3646 = vmatpush.bf16.xpose.msra.mxu0 %v3634
      %3647 = vmatmul.bf16.gmra.mxu0 %v3628
      %v3648 = vpop.f32.mrf.mxu0
      %v3649 = vadd.f32 0.0, %v3648
      %v3650 = vpop.f32.mrf.mxu0
      %v3651 = vadd.f32 0.0, %v3650
      %3652 = vmatmul.bf16.gmra.mxu0 %v3631
      %v3653 = vpop.f32.mrf.mxu0
      %v3654 = vadd.f32 0.0, %v3653
      %v3655 = vpop.f32.mrf.mxu0
      %3656 = vdwg.mxu0
      %3657 = vrot.lane.b32.xlu0 %v1459, 96
      %v3658 = vpop.permute.xlu0 %3657
      %3659 = vrot.lane.b32.xlu0 %v1460, 96
      %v3660 = vpop.permute.xlu0 %3659
      %3661 = vrot.lane.b32.xlu0 %v1467, 32
      %v3662 = vpop.permute.xlu0 %3661
      %3663 = vrot.lane.b32.xlu0 %v1468, 32
      %v3664 = vpop.permute.xlu0 %3663
      %v3666 = vsel %vm1272, %v3658, 0
      %v3669 = vsel %vm1272, %v3660, 0
      %v3672 = vsel %vm1272, %v3662, 0
      %v3675 = vsel %vm1272, %v3664, 0
      %3677 = vmatpush.bf16.xpose.msra.mxu0 0
      %3678 = vmatpush.bf16.xpose.msra.mxu0 0
      %3679 = vmatpush.bf16.xpose.msra.mxu0 0
      %3680 = vmatpush.bf16.xpose.msra.mxu0 0
      %3681 = vmatpush.bf16.xpose.msra.mxu0 0
      %3682 = vmatpush.bf16.xpose.msra.mxu0 0
      %3683 = vmatpush.bf16.xpose.msra.mxu0 %v3675
      %3684 = vmatpush.bf16.xpose.msra.mxu0 %v3672
      %3685 = vmatmul.bf16.gmra.mxu0 %v3666
      %v3686 = vpop.f32.mrf.mxu0
      %v3687 = vadd.f32 0.0, %v3686
      %v3688 = vpop.f32.mrf.mxu0
      %v3689 = vadd.f32 0.0, %v3688
      %3690 = vmatmul.bf16.gmra.mxu0 %v3669
      %v3691 = vpop.f32.mrf.mxu0
      %v3692 = vadd.f32 0.0, %v3691
      %v3693 = vpop.f32.mrf.mxu0
      %3694 = vdwg.mxu0
      %3695 = vrot.lane.b32.xlu0 %v1509, 96
      %v3696 = vpop.permute.xlu0 %3695
      %3697 = vrot.lane.b32.xlu0 %v1510, 96
      %v3698 = vpop.permute.xlu0 %3697
      %3699 = vrot.lane.b32.xlu0 %v1517, 32
      %v3700 = vpop.permute.xlu0 %3699
      %3701 = vrot.lane.b32.xlu0 %v1518, 32
      %v3702 = vpop.permute.xlu0 %3701
      %v3704 = vsel %vm1272, %v3696, 0
      %v3707 = vsel %vm1272, %v3698, 0
      %v3710 = vsel %vm1272, %v3700, 0
      %v3713 = vsel %vm1272, %v3702, 0
      %3715 = vmatpush.bf16.xpose.msra.mxu0 0
      %3716 = vmatpush.bf16.xpose.msra.mxu0 0
      %3717 = vmatpush.bf16.xpose.msra.mxu0 0
      %3718 = vmatpush.bf16.xpose.msra.mxu0 0
      %3719 = vmatpush.bf16.xpose.msra.mxu0 0
      %3720 = vmatpush.bf16.xpose.msra.mxu0 0
      %3721 = vmatpush.bf16.xpose.msra.mxu0 %v3713
      %3722 = vmatpush.bf16.xpose.msra.mxu0 %v3710
      %3723 = vmatmul.bf16.gmra.mxu0 %v3704
      %v3724 = vpop.f32.mrf.mxu0
      %v3725 = vadd.f32 0.0, %v3724
      %v3726 = vpop.f32.mrf.mxu0
      %v3727 = vadd.f32 0.0, %v3726
      %3728 = vmatmul.bf16.gmra.mxu0 %v3707
      %v3729 = vpop.f32.mrf.mxu0
      %v3730 = vadd.f32 0.0, %v3729
      %v3731 = vpop.f32.mrf.mxu0
      %3732 = vdwg.mxu0
      %3733 = vrot.lane.b32.xlu0 %v1559, 96
      %v3734 = vpop.permute.xlu0 %3733
      %3735 = vrot.lane.b32.xlu0 %v1560, 96
      %v3736 = vpop.permute.xlu0 %3735
      %3737 = vrot.lane.b32.xlu0 %v1567, 32
      %v3738 = vpop.permute.xlu0 %3737
      %3739 = vrot.lane.b32.xlu0 %v1568, 32
      %v3740 = vpop.permute.xlu0 %3739
      %v3742 = vsel %vm1272, %v3734, 0
      %v3745 = vsel %vm1272, %v3736, 0
      %v3748 = vsel %vm1272, %v3738, 0
      %v3751 = vsel %vm1272, %v3740, 0
      %3753 = vmatpush.bf16.xpose.msra.mxu0 0
      %3754 = vmatpush.bf16.xpose.msra.mxu0 0
      %3755 = vmatpush.bf16.xpose.msra.mxu0 0
      %3756 = vmatpush.bf16.xpose.msra.mxu0 0
      %3757 = vmatpush.bf16.xpose.msra.mxu0 0
      %3758 = vmatpush.bf16.xpose.msra.mxu0 0
      %3759 = vmatpush.bf16.xpose.msra.mxu0 %v3751
      %3760 = vmatpush.bf16.xpose.msra.mxu0 %v3748
      %3761 = vmatmul.bf16.gmra.mxu0 %v3742
      %v3762 = vpop.f32.mrf.mxu0
      %v3763 = vadd.f32 0.0, %v3762
      %v3764 = vpop.f32.mrf.mxu0
      %v3765 = vadd.f32 0.0, %v3764
      %3766 = vmatmul.bf16.gmra.mxu0 %v3745
      %v3767 = vpop.f32.mrf.mxu0
      %v3768 = vadd.f32 0.0, %v3767
      %v3769 = vpop.f32.mrf.mxu0
      %3770 = vdwg.mxu0
      %3771 = vrot.lane.b32.xlu0 %v1609, 96
      %v3772 = vpop.permute.xlu0 %3771
      %3773 = vrot.lane.b32.xlu0 %v1610, 96
      %v3774 = vpop.permute.xlu0 %3773
      %3775 = vrot.lane.b32.xlu0 %v1617, 32
      %v3776 = vpop.permute.xlu0 %3775
      %3777 = vrot.lane.b32.xlu0 %v1618, 32
      %v3778 = vpop.permute.xlu0 %3777
      %v3780 = vsel %vm1272, %v3772, 0
      %v3783 = vsel %vm1272, %v3774, 0
      %v3786 = vsel %vm1272, %v3776, 0
      %v3789 = vsel %vm1272, %v3778, 0
      %3791 = vmatpush.bf16.xpose.msra.mxu0 0
      %3792 = vmatpush.bf16.xpose.msra.mxu0 0
      %3793 = vmatpush.bf16.xpose.msra.mxu0 0
      %3794 = vmatpush.bf16.xpose.msra.mxu0 0
      %3795 = vmatpush.bf16.xpose.msra.mxu0 0
      %3796 = vmatpush.bf16.xpose.msra.mxu0 0
      %3797 = vmatpush.bf16.xpose.msra.mxu0 %v3789
      %3798 = vmatpush.bf16.xpose.msra.mxu0 %v3786
      %3799 = vmatmul.bf16.gmra.mxu0 %v3780
      %v3800 = vpop.f32.mrf.mxu0
      %v3801 = vadd.f32 0.0, %v3800
      %v3802 = vpop.f32.mrf.mxu0
      %v3803 = vadd.f32 0.0, %v3802
      %3804 = vmatmul.bf16.gmra.mxu0 %v3783
      %v3805 = vpop.f32.mrf.mxu0
      %v3806 = vadd.f32 0.0, %v3805
      %v3807 = vpop.f32.mrf.mxu0
      %3808 = vdwg.mxu0
      %v3809 = vsel %vm1155, %v3535, -1e+30
      %v3810 = vsel %vm1155, %v3537, -1e+30
      %v3811 = vsel %vm1155, %v3540, -1e+30
      %v3812 = vsel %vm1155, %v3573, -1e+30
      %v3813 = vsel %vm1155, %v3575, -1e+30
      %v3814 = vsel %vm1155, %v3578, -1e+30
      %v3815 = vsel %vm1155, %v3611, -1e+30
      %v3816 = vsel %vm1155, %v3613, -1e+30
      %v3817 = vsel %vm1155, %v3616, -1e+30
      %v3818 = vsel %vm1155, %v3649, -1e+30
      %v3819 = vsel %vm1155, %v3651, -1e+30
      %v3820 = vsel %vm1155, %v3654, -1e+30
      %v3821 = vsel %vm1155, %v3687, -1e+30
      %v3822 = vsel %vm1155, %v3689, -1e+30
      %v3823 = vsel %vm1155, %v3692, -1e+30
      %v3824 = vsel %vm1155, %v3725, -1e+30
      %v3825 = vsel %vm1155, %v3727, -1e+30
      %v3826 = vsel %vm1155, %v3730, -1e+30
      %v3827 = vsel %vm1155, %v3763, -1e+30
      %v3828 = vsel %vm1155, %v3765, -1e+30
      %v3829 = vsel %vm1155, %v3768, -1e+30
      %v3830 = vsel %vm1155, %v3801, -1e+30
      %v3831 = vsel %vm1155, %v3803, -1e+30
      %v3832 = vsel %vm1155, %v3806, -1e+30
      %v3833 = vsel %vm1677, %v3809, -inf
      %3834 = vmax.xlane.f32.xlu0 %v3833
      %v3835 = vpop.xlane.xlu0 %3834
      %v3836 = vsel %vm1677, %v3810, -inf
      %3837 = vmax.xlane.f32.xlu0 %v3836
      %v3838 = vpop.xlane.xlu0 %3837
      %v3839 = vsel %vm1677, %v3811, -inf
      %3840 = vmax.xlane.f32.xlu0 %v3839
      %v3841 = vpop.xlane.xlu0 %3840
      %v3842 = vsel %vm1677, %v3812, -inf
      %3843 = vmax.xlane.f32.xlu0 %v3842
      %v3844 = vpop.xlane.xlu0 %3843
      %v3845 = vsel %vm1677, %v3813, -inf
      %3846 = vmax.xlane.f32.xlu0 %v3845
      %v3847 = vpop.xlane.xlu0 %3846
      %v3848 = vsel %vm1677, %v3814, -inf
      %3849 = vmax.xlane.f32.xlu0 %v3848
      %v3850 = vpop.xlane.xlu0 %3849
      %v3851 = vsel %vm1677, %v3815, -inf
      %3852 = vmax.xlane.f32.xlu0 %v3851
      %v3853 = vpop.xlane.xlu0 %3852
      %v3854 = vsel %vm1677, %v3816, -inf
      %3855 = vmax.xlane.f32.xlu0 %v3854
      %v3856 = vpop.xlane.xlu0 %3855
      %v3857 = vsel %vm1677, %v3817, -inf
      %3858 = vmax.xlane.f32.xlu0 %v3857
      %v3859 = vpop.xlane.xlu0 %3858
      %v3860 = vsel %vm1677, %v3818, -inf
      %3861 = vmax.xlane.f32.xlu0 %v3860
      %v3862 = vpop.xlane.xlu0 %3861
      %v3863 = vsel %vm1677, %v3819, -inf
      %3864 = vmax.xlane.f32.xlu0 %v3863
      %v3865 = vpop.xlane.xlu0 %3864
      %v3866 = vsel %vm1677, %v3820, -inf
      %3867 = vmax.xlane.f32.xlu0 %v3866
      %v3868 = vpop.xlane.xlu0 %3867
      %v3869 = vsel %vm1677, %v3821, -inf
      %3870 = vmax.xlane.f32.xlu0 %v3869
      %v3871 = vpop.xlane.xlu0 %3870
      %v3872 = vsel %vm1677, %v3822, -inf
      %3873 = vmax.xlane.f32.xlu0 %v3872
      %v3874 = vpop.xlane.xlu0 %3873
      %v3875 = vsel %vm1677, %v3823, -inf
      %3876 = vmax.xlane.f32.xlu0 %v3875
      %v3877 = vpop.xlane.xlu0 %3876
      %v3878 = vsel %vm1677, %v3824, -inf
      %3879 = vmax.xlane.f32.xlu0 %v3878
      %v3880 = vpop.xlane.xlu0 %3879
      %v3881 = vsel %vm1677, %v3825, -inf
      %3882 = vmax.xlane.f32.xlu0 %v3881
      %v3883 = vpop.xlane.xlu0 %3882
      %v3884 = vsel %vm1677, %v3826, -inf
      %3885 = vmax.xlane.f32.xlu0 %v3884
      %v3886 = vpop.xlane.xlu0 %3885
      %v3887 = vsel %vm1677, %v3827, -inf
      %3888 = vmax.xlane.f32.xlu0 %v3887
      %v3889 = vpop.xlane.xlu0 %3888
      %v3890 = vsel %vm1677, %v3828, -inf
      %3891 = vmax.xlane.f32.xlu0 %v3890
      %v3892 = vpop.xlane.xlu0 %3891
      %v3893 = vsel %vm1677, %v3829, -inf
      %3894 = vmax.xlane.f32.xlu0 %v3893
      %v3895 = vpop.xlane.xlu0 %3894
      %v3896 = vsel %vm1677, %v3830, -inf
      %3897 = vmax.xlane.f32.xlu0 %v3896
      %v3898 = vpop.xlane.xlu0 %3897
      %v3899 = vsel %vm1677, %v3831, -inf
      %3900 = vmax.xlane.f32.xlu0 %v3899
      %v3901 = vpop.xlane.xlu0 %3900
      %v3902 = vsel %vm1677, %v3832, -inf
      %3903 = vmax.xlane.f32.xlu0 %v3902
      %v3904 = vpop.xlane.xlu0 %3903
      %v3905 = vsub.f32 %v3809, %v3835
      %v3906 = vsub.f32 %v3810, %v3838
      %v3907 = vsub.f32 %v3811, %v3841
      %v3908 = vsub.f32 %v3812, %v3844
      %v3909 = vsub.f32 %v3813, %v3847
      %v3910 = vsub.f32 %v3814, %v3850
      %v3911 = vsub.f32 %v3815, %v3853
      %v3912 = vsub.f32 %v3816, %v3856
      %v3913 = vsub.f32 %v3817, %v3859
      %v3914 = vsub.f32 %v3818, %v3862
      %v3915 = vsub.f32 %v3819, %v3865
      %v3916 = vsub.f32 %v3820, %v3868
      %v3917 = vsub.f32 %v3821, %v3871
      %v3918 = vsub.f32 %v3822, %v3874
      %v3919 = vsub.f32 %v3823, %v3877
      %v3920 = vsub.f32 %v3824, %v3880
      %v3921 = vsub.f32 %v3825, %v3883
      %v3922 = vsub.f32 %v3826, %v3886
      %v3923 = vsub.f32 %v3827, %v3889
      %v3924 = vsub.f32 %v3828, %v3892
      %v3925 = vsub.f32 %v3829, %v3895
      %v3926 = vsub.f32 %v3830, %v3898
      %v3927 = vsub.f32 %v3831, %v3901
      %v3928 = vsub.f32 %v3832, %v3904
      %v3929 = vmul.f32 %v3905, 1.442695
      %v3930 = vpow.pop %v3929
      %v3931 = vmul.f32 %v3906, 1.442695
      %v3932 = vpow.pop %v3931
      %v3933 = vmul.f32 %v3907, 1.442695
      %v3934 = vpow.pop %v3933
      %v3935 = vmul.f32 %v3908, 1.442695
      %v3936 = vpow.pop %v3935
      %v3937 = vmul.f32 %v3909, 1.442695
      %v3938 = vpow.pop %v3937
      %v3939 = vmul.f32 %v3910, 1.442695
      %v3940 = vpow.pop %v3939
      %v3941 = vmul.f32 %v3911, 1.442695
      %v3942 = vpow.pop %v3941
      %v3943 = vmul.f32 %v3912, 1.442695
      %v3944 = vpow.pop %v3943
      %v3945 = vmul.f32 %v3913, 1.442695
      %v3946 = vpow.pop %v3945
      %v3947 = vmul.f32 %v3914, 1.442695
      %v3948 = vpow.pop %v3947
      %v3949 = vmul.f32 %v3915, 1.442695
      %v3950 = vpow.pop %v3949
      %v3951 = vmul.f32 %v3916, 1.442695
      %v3952 = vpow.pop %v3951
      %v3953 = vmul.f32 %v3917, 1.442695
      %v3954 = vpow.pop %v3953
      %v3955 = vmul.f32 %v3918, 1.442695
      %v3956 = vpow.pop %v3955
      %v3957 = vmul.f32 %v3919, 1.442695
      %v3958 = vpow.pop %v3957
      %v3959 = vmul.f32 %v3920, 1.442695
      %v3960 = vpow.pop %v3959
      %v3961 = vmul.f32 %v3921, 1.442695
      %v3962 = vpow.pop %v3961
      %v3963 = vmul.f32 %v3922, 1.442695
      %v3964 = vpow.pop %v3963
      %v3965 = vmul.f32 %v3923, 1.442695
      %v3966 = vpow.pop %v3965
      %v3967 = vmul.f32 %v3924, 1.442695
      %v3968 = vpow.pop %v3967
      %v3969 = vmul.f32 %v3925, 1.442695
      %v3970 = vpow.pop %v3969
      %v3971 = vmul.f32 %v3926, 1.442695
      %v3972 = vpow.pop %v3971
      %v3973 = vmul.f32 %v3927, 1.442695
      %v3974 = vpow.pop %v3973
      %v3975 = vmul.f32 %v3928, 1.442695
      %v3976 = vpow.pop %v3975
      %v3977 = vsel %vm1677, %v3930, 0.0
      %3978 = vadd.xlane.f32.xlu0 %v3977
      %v3979 = vpop.xlane.xlu0 %3978
      %v3980 = vsel %vm1677, %v3932, 0.0
      %3981 = vadd.xlane.f32.xlu0 %v3980
      %v3982 = vpop.xlane.xlu0 %3981
      %v3983 = vsel %vm1677, %v3934, 0.0
      %3984 = vadd.xlane.f32.xlu0 %v3983
      %v3985 = vpop.xlane.xlu0 %3984
      %v3986 = vsel %vm1677, %v3936, 0.0
      %3987 = vadd.xlane.f32.xlu0 %v3986
      %v3988 = vpop.xlane.xlu0 %3987
      %v3989 = vsel %vm1677, %v3938, 0.0
      %3990 = vadd.xlane.f32.xlu0 %v3989
      %v3991 = vpop.xlane.xlu0 %3990
      %v3992 = vsel %vm1677, %v3940, 0.0
      %3993 = vadd.xlane.f32.xlu0 %v3992
      %v3994 = vpop.xlane.xlu0 %3993
      %v3995 = vsel %vm1677, %v3942, 0.0
      %3996 = vadd.xlane.f32.xlu0 %v3995
      %v3997 = vpop.xlane.xlu0 %3996
      %v3998 = vsel %vm1677, %v3944, 0.0
      %3999 = vadd.xlane.f32.xlu0 %v3998
      %v4000 = vpop.xlane.xlu0 %3999
      %v4001 = vsel %vm1677, %v3946, 0.0
      %4002 = vadd.xlane.f32.xlu0 %v4001
      %v4003 = vpop.xlane.xlu0 %4002
      %v4004 = vsel %vm1677, %v3948, 0.0
      %4005 = vadd.xlane.f32.xlu0 %v4004
      %v4006 = vpop.xlane.xlu0 %4005
      %v4007 = vsel %vm1677, %v3950, 0.0
      %4008 = vadd.xlane.f32.xlu0 %v4007
      %v4009 = vpop.xlane.xlu0 %4008
      %v4010 = vsel %vm1677, %v3952, 0.0
      %4011 = vadd.xlane.f32.xlu0 %v4010
      %v4012 = vpop.xlane.xlu0 %4011
      %v4013 = vsel %vm1677, %v3954, 0.0
      %4014 = vadd.xlane.f32.xlu0 %v4013
      %v4015 = vpop.xlane.xlu0 %4014
      %v4016 = vsel %vm1677, %v3956, 0.0
      %4017 = vadd.xlane.f32.xlu0 %v4016
      %v4018 = vpop.xlane.xlu0 %4017
      %v4019 = vsel %vm1677, %v3958, 0.0
      %4020 = vadd.xlane.f32.xlu0 %v4019
      %v4021 = vpop.xlane.xlu0 %4020
      %v4022 = vsel %vm1677, %v3960, 0.0
      %4023 = vadd.xlane.f32.xlu0 %v4022
      %v4024 = vpop.xlane.xlu0 %4023
      %v4025 = vsel %vm1677, %v3962, 0.0
      %4026 = vadd.xlane.f32.xlu0 %v4025
      %v4027 = vpop.xlane.xlu0 %4026
      %v4028 = vsel %vm1677, %v3964, 0.0
      %4029 = vadd.xlane.f32.xlu0 %v4028
      %v4030 = vpop.xlane.xlu0 %4029
      %v4031 = vsel %vm1677, %v3966, 0.0
      %4032 = vadd.xlane.f32.xlu0 %v4031
      %v4033 = vpop.xlane.xlu0 %4032
      %v4034 = vsel %vm1677, %v3968, 0.0
      %4035 = vadd.xlane.f32.xlu0 %v4034
      %v4036 = vpop.xlane.xlu0 %4035
      %v4037 = vsel %vm1677, %v3970, 0.0
      %4038 = vadd.xlane.f32.xlu0 %v4037
      %v4039 = vpop.xlane.xlu0 %4038
      %v4040 = vsel %vm1677, %v3972, 0.0
      %4041 = vadd.xlane.f32.xlu0 %v4040
      %v4042 = vpop.xlane.xlu0 %4041
      %v4043 = vsel %vm1677, %v3974, 0.0
      %4044 = vadd.xlane.f32.xlu0 %v4043
      %v4045 = vpop.xlane.xlu0 %4044
      %v4046 = vsel %vm1677, %v3976, 0.0
      %4047 = vadd.xlane.f32.xlu0 %v4046
      %v4048 = vpop.xlane.xlu0 %4047
      %v4049 = vrcp.pop %v3979
      %v4050 = vrcp.pop %v3982
      %v4051 = vrcp.pop %v3985
      %v4052 = vrcp.pop %v3988
      %v4053 = vrcp.pop %v3991
      %v4054 = vrcp.pop %v3994
      %v4055 = vrcp.pop %v3997
      %v4056 = vrcp.pop %v4000
      %v4057 = vrcp.pop %v4003
      %v4058 = vrcp.pop %v4006
      %v4059 = vrcp.pop %v4009
      %v4060 = vrcp.pop %v4012
      %v4061 = vrcp.pop %v4015
      %v4062 = vrcp.pop %v4018
      %v4063 = vrcp.pop %v4021
      %v4064 = vrcp.pop %v4024
      %v4065 = vrcp.pop %v4027
      %v4066 = vrcp.pop %v4030
      %v4067 = vrcp.pop %v4033
      %v4068 = vrcp.pop %v4036
      %v4069 = vrcp.pop %v4039
      %v4070 = vrcp.pop %v4042
      %v4071 = vrcp.pop %v4045
      %v4072 = vrcp.pop %v4048
      %v4073 = vmul.f32 %v3930, %v4049
      %v4074 = vmul.f32 %v3932, %v4050
      %v4075 = vmul.f32 %v3934, %v4051
      %v4076 = vmul.f32 %v3936, %v4052
      %v4077 = vmul.f32 %v3938, %v4053
      %v4078 = vmul.f32 %v3940, %v4054
      %v4079 = vmul.f32 %v3942, %v4055
      %v4080 = vmul.f32 %v3944, %v4056
      %v4081 = vmul.f32 %v3946, %v4057
      %v4082 = vmul.f32 %v3948, %v4058
      %v4083 = vmul.f32 %v3950, %v4059
      %v4084 = vmul.f32 %v3952, %v4060
      %v4085 = vmul.f32 %v3954, %v4061
      %v4086 = vmul.f32 %v3956, %v4062
      %v4087 = vmul.f32 %v3958, %v4063
      %v4088 = vmul.f32 %v3960, %v4064
      %v4089 = vmul.f32 %v3962, %v4065
      %v4090 = vmul.f32 %v3964, %v4066
      %v4091 = vmul.f32 %v3966, %v4067
      %v4092 = vmul.f32 %v3968, %v4068
      %v4093 = vmul.f32 %v3970, %v4069
      %v4094 = vmul.f32 %v3972, %v4070
      %v4095 = vmul.f32 %v3974, %v4071
      %v4096 = vmul.f32 %v3976, %v4072
      %v4097 = vpack.c.bf16 %v4073, %v4073
      %v4098 = vpack.c.bf16 %v4074, %v4074
      %v4099 = vpack.c.bf16 %v4075, %v4075
      %v4100 = vpack.c.bf16 %v4076, %v4076
      %v4101 = vpack.c.bf16 %v4077, %v4077
      %v4102 = vpack.c.bf16 %v4078, %v4078
      %v4103 = vpack.c.bf16 %v4079, %v4079
      %v4104 = vpack.c.bf16 %v4080, %v4080
      %v4105 = vpack.c.bf16 %v4081, %v4081
      %v4106 = vpack.c.bf16 %v4082, %v4082
      %v4107 = vpack.c.bf16 %v4083, %v4083
      %v4108 = vpack.c.bf16 %v4084, %v4084
      %v4109 = vpack.c.bf16 %v4085, %v4085
      %v4110 = vpack.c.bf16 %v4086, %v4086
      %v4111 = vpack.c.bf16 %v4087, %v4087
      %v4112 = vpack.c.bf16 %v4088, %v4088
      %v4113 = vpack.c.bf16 %v4089, %v4089
      %v4114 = vpack.c.bf16 %v4090, %v4090
      %v4115 = vpack.c.bf16 %v4091, %v4091
      %v4116 = vpack.c.bf16 %v4092, %v4092
      %v4117 = vpack.c.bf16 %v4093, %v4093
      %v4118 = vpack.c.bf16 %v4094, %v4094
      %v4119 = vpack.c.bf16 %v4095, %v4095
      %v4120 = vpack.c.bf16 %v4096, %v4096
      %v4124 = vunpack.c.l.b16 %v4097
      %v4125 = vunpack.c.l.b16 %v4098
      %v4126 = vunpack.c.l.b16 %v4099
      %v4127 = vpack.c.b16 %v4125, %v4124
      %v4128 = vpack.c.b16 %v4126, %v4126
      %4129 = vrot.lane.b32.xlu0 %v1980, 96
      %v4130 = vpop.permute.xlu0 %4129
      %4131 = vrot.lane.b32.xlu0 %v1981, 96
      %v4132 = vpop.permute.xlu0 %4131
      %v4135 = vsel %vm1677, %v4127, 0
      %v4138 = vsel %vm1677, %v4128, 0
      %v4141 = vsel %vm1989, %v4132, 0
      %4143 = vmatpush.bf16.msra.mxu0 0
      %4144 = vmatpush.bf16.msra.mxu0 0
      %4145 = vmatpush.bf16.msra.mxu0 0
      %4146 = vmatpush.bf16.msra.mxu0 0
      %4147 = vmatpush.bf16.msra.mxu0 0
      %4148 = vmatpush.bf16.msra.mxu0 0
      %4149 = vmatpush.bf16.msra.mxu0 %v4141
      %4150 = vmatpush.bf16.msra.mxu0 %v4130
      %4151 = vmatmul.bf16.gmra.mxu0 %v4135
      %v4152 = vpop.f32.mrf.mxu0
      %v4153 = vadd.f32 0.0, %v4152
      %v4154 = vpop.f32.mrf.mxu0
      %v4155 = vadd.f32 0.0, %v4154
      %4156 = vmatmul.bf16.gmra.mxu0 %v4138
      %v4157 = vpop.f32.mrf.mxu0
      %v4158 = vadd.f32 0.0, %v4157
      %v4159 = vpop.f32.mrf.mxu0
      %4160 = vdwg.mxu0
      %v4164 = vunpack.c.l.b16 %v4100
      %v4165 = vunpack.c.l.b16 %v4101
      %v4166 = vunpack.c.l.b16 %v4102
      %v4167 = vpack.c.b16 %v4165, %v4164
      %v4168 = vpack.c.b16 %v4166, %v4166
      %4169 = vrot.lane.b32.xlu0 %v2025, 96
      %v4170 = vpop.permute.xlu0 %4169
      %4171 = vrot.lane.b32.xlu0 %v2026, 96
      %v4172 = vpop.permute.xlu0 %4171
      %v4175 = vsel %vm1677, %v4167, 0
      %v4178 = vsel %vm1677, %v4168, 0
      %v4181 = vsel %vm1989, %v4172, 0
      %4183 = vmatpush.bf16.msra.mxu0 0
      %4184 = vmatpush.bf16.msra.mxu0 0
      %4185 = vmatpush.bf16.msra.mxu0 0
      %4186 = vmatpush.bf16.msra.mxu0 0
      %4187 = vmatpush.bf16.msra.mxu0 0
      %4188 = vmatpush.bf16.msra.mxu0 0
      %4189 = vmatpush.bf16.msra.mxu0 %v4181
      %4190 = vmatpush.bf16.msra.mxu0 %v4170
      %4191 = vmatmul.bf16.gmra.mxu0 %v4175
      %v4192 = vpop.f32.mrf.mxu0
      %v4193 = vadd.f32 0.0, %v4192
      %v4194 = vpop.f32.mrf.mxu0
      %v4195 = vadd.f32 0.0, %v4194
      %4196 = vmatmul.bf16.gmra.mxu0 %v4178
      %v4197 = vpop.f32.mrf.mxu0
      %v4198 = vadd.f32 0.0, %v4197
      %v4199 = vpop.f32.mrf.mxu0
      %4200 = vdwg.mxu0
      %v4204 = vunpack.c.l.b16 %v4103
      %v4205 = vunpack.c.l.b16 %v4104
      %v4206 = vunpack.c.l.b16 %v4105
      %v4207 = vpack.c.b16 %v4205, %v4204
      %v4208 = vpack.c.b16 %v4206, %v4206
      %4209 = vrot.lane.b32.xlu0 %v2069, 96
      %v4210 = vpop.permute.xlu0 %4209
      %4211 = vrot.lane.b32.xlu0 %v2070, 96
      %v4212 = vpop.permute.xlu0 %4211
      %v4215 = vsel %vm1677, %v4207, 0
      %v4218 = vsel %vm1677, %v4208, 0
      %v4221 = vsel %vm1989, %v4212, 0
      %4223 = vmatpush.bf16.msra.mxu0 0
      %4224 = vmatpush.bf16.msra.mxu0 0
      %4225 = vmatpush.bf16.msra.mxu0 0
      %4226 = vmatpush.bf16.msra.mxu0 0
      %4227 = vmatpush.bf16.msra.mxu0 0
      %4228 = vmatpush.bf16.msra.mxu0 0
      %4229 = vmatpush.bf16.msra.mxu0 %v4221
      %4230 = vmatpush.bf16.msra.mxu0 %v4210
      %4231 = vmatmul.bf16.gmra.mxu0 %v4215
      %v4232 = vpop.f32.mrf.mxu0
      %v4233 = vadd.f32 0.0, %v4232
      %v4234 = vpop.f32.mrf.mxu0
      %v4235 = vadd.f32 0.0, %v4234
      %4236 = vmatmul.bf16.gmra.mxu0 %v4218
      %v4237 = vpop.f32.mrf.mxu0
      %v4238 = vadd.f32 0.0, %v4237
      %v4239 = vpop.f32.mrf.mxu0
      %4240 = vdwg.mxu0
      %v4244 = vunpack.c.l.b16 %v4106
      %v4245 = vunpack.c.l.b16 %v4107
      %v4246 = vunpack.c.l.b16 %v4108
      %v4247 = vpack.c.b16 %v4245, %v4244
      %v4248 = vpack.c.b16 %v4246, %v4246
      %4249 = vrot.lane.b32.xlu0 %v2113, 96
      %v4250 = vpop.permute.xlu0 %4249
      %4251 = vrot.lane.b32.xlu0 %v2114, 96
      %v4252 = vpop.permute.xlu0 %4251
      %v4255 = vsel %vm1677, %v4247, 0
      %v4258 = vsel %vm1677, %v4248, 0
      %v4261 = vsel %vm1989, %v4252, 0
      %4263 = vmatpush.bf16.msra.mxu0 0
      %4264 = vmatpush.bf16.msra.mxu0 0
      %4265 = vmatpush.bf16.msra.mxu0 0
      %4266 = vmatpush.bf16.msra.mxu0 0
      %4267 = vmatpush.bf16.msra.mxu0 0
      %4268 = vmatpush.bf16.msra.mxu0 0
      %4269 = vmatpush.bf16.msra.mxu0 %v4261
      %4270 = vmatpush.bf16.msra.mxu0 %v4250
      %4271 = vmatmul.bf16.gmra.mxu0 %v4255
      %v4272 = vpop.f32.mrf.mxu0
      %v4273 = vadd.f32 0.0, %v4272
      %v4274 = vpop.f32.mrf.mxu0
      %v4275 = vadd.f32 0.0, %v4274
      %4276 = vmatmul.bf16.gmra.mxu0 %v4258
      %v4277 = vpop.f32.mrf.mxu0
      %v4278 = vadd.f32 0.0, %v4277
      %v4279 = vpop.f32.mrf.mxu0
      %4280 = vdwg.mxu0
      %v4284 = vunpack.c.l.b16 %v4109
      %v4285 = vunpack.c.l.b16 %v4110
      %v4286 = vunpack.c.l.b16 %v4111
      %v4287 = vpack.c.b16 %v4285, %v4284
      %v4288 = vpack.c.b16 %v4286, %v4286
      %4289 = vrot.lane.b32.xlu0 %v2157, 96
      %v4290 = vpop.permute.xlu0 %4289
      %4291 = vrot.lane.b32.xlu0 %v2158, 96
      %v4292 = vpop.permute.xlu0 %4291
      %v4295 = vsel %vm1677, %v4287, 0
      %v4298 = vsel %vm1677, %v4288, 0
      %v4301 = vsel %vm1989, %v4292, 0
      %4303 = vmatpush.bf16.msra.mxu0 0
      %4304 = vmatpush.bf16.msra.mxu0 0
      %4305 = vmatpush.bf16.msra.mxu0 0
      %4306 = vmatpush.bf16.msra.mxu0 0
      %4307 = vmatpush.bf16.msra.mxu0 0
      %4308 = vmatpush.bf16.msra.mxu0 0
      %4309 = vmatpush.bf16.msra.mxu0 %v4301
      %4310 = vmatpush.bf16.msra.mxu0 %v4290
      %4311 = vmatmul.bf16.gmra.mxu0 %v4295
      %v4312 = vpop.f32.mrf.mxu0
      %v4313 = vadd.f32 0.0, %v4312
      %v4314 = vpop.f32.mrf.mxu0
      %v4315 = vadd.f32 0.0, %v4314
      %4316 = vmatmul.bf16.gmra.mxu0 %v4298
      %v4317 = vpop.f32.mrf.mxu0
      %v4318 = vadd.f32 0.0, %v4317
      %v4319 = vpop.f32.mrf.mxu0
      %4320 = vdwg.mxu0
      %v4324 = vunpack.c.l.b16 %v4112
      %v4325 = vunpack.c.l.b16 %v4113
      %v4326 = vunpack.c.l.b16 %v4114
      %v4327 = vpack.c.b16 %v4325, %v4324
      %v4328 = vpack.c.b16 %v4326, %v4326
      %4329 = vrot.lane.b32.xlu0 %v2201, 96
      %v4330 = vpop.permute.xlu0 %4329
      %4331 = vrot.lane.b32.xlu0 %v2202, 96
      %v4332 = vpop.permute.xlu0 %4331
      %v4335 = vsel %vm1677, %v4327, 0
      %v4338 = vsel %vm1677, %v4328, 0
      %v4341 = vsel %vm1989, %v4332, 0
      %4343 = vmatpush.bf16.msra.mxu0 0
      %4344 = vmatpush.bf16.msra.mxu0 0
      %4345 = vmatpush.bf16.msra.mxu0 0
      %4346 = vmatpush.bf16.msra.mxu0 0
      %4347 = vmatpush.bf16.msra.mxu0 0
      %4348 = vmatpush.bf16.msra.mxu0 0
      %4349 = vmatpush.bf16.msra.mxu0 %v4341
      %4350 = vmatpush.bf16.msra.mxu0 %v4330
      %4351 = vmatmul.bf16.gmra.mxu0 %v4335
      %v4352 = vpop.f32.mrf.mxu0
      %v4353 = vadd.f32 0.0, %v4352
      %v4354 = vpop.f32.mrf.mxu0
      %v4355 = vadd.f32 0.0, %v4354
      %4356 = vmatmul.bf16.gmra.mxu0 %v4338
      %v4357 = vpop.f32.mrf.mxu0
      %v4358 = vadd.f32 0.0, %v4357
      %v4359 = vpop.f32.mrf.mxu0
      %4360 = vdwg.mxu0
      %v4364 = vunpack.c.l.b16 %v4115
      %v4365 = vunpack.c.l.b16 %v4116
      %v4366 = vunpack.c.l.b16 %v4117
      %v4367 = vpack.c.b16 %v4365, %v4364
      %v4368 = vpack.c.b16 %v4366, %v4366
      %4369 = vrot.lane.b32.xlu0 %v2245, 96
      %v4370 = vpop.permute.xlu0 %4369
      %4371 = vrot.lane.b32.xlu0 %v2246, 96
      %v4372 = vpop.permute.xlu0 %4371
      %v4375 = vsel %vm1677, %v4367, 0
      %v4378 = vsel %vm1677, %v4368, 0
      %v4381 = vsel %vm1989, %v4372, 0
      %4383 = vmatpush.bf16.msra.mxu0 0
      %4384 = vmatpush.bf16.msra.mxu0 0
      %4385 = vmatpush.bf16.msra.mxu0 0
      %4386 = vmatpush.bf16.msra.mxu0 0
      %4387 = vmatpush.bf16.msra.mxu0 0
      %4388 = vmatpush.bf16.msra.mxu0 0
      %4389 = vmatpush.bf16.msra.mxu0 %v4381
      %4390 = vmatpush.bf16.msra.mxu0 %v4370
      %4391 = vmatmul.bf16.gmra.mxu0 %v4375
      %v4392 = vpop.f32.mrf.mxu0
      %v4393 = vadd.f32 0.0, %v4392
      %v4394 = vpop.f32.mrf.mxu0
      %v4395 = vadd.f32 0.0, %v4394
      %4396 = vmatmul.bf16.gmra.mxu0 %v4378
      %v4397 = vpop.f32.mrf.mxu0
      %v4398 = vadd.f32 0.0, %v4397
      %v4399 = vpop.f32.mrf.mxu0
      %4400 = vdwg.mxu0
      %v4404 = vunpack.c.l.b16 %v4118
      %v4405 = vunpack.c.l.b16 %v4119
      %v4406 = vunpack.c.l.b16 %v4120
      %v4407 = vpack.c.b16 %v4405, %v4404
      %v4408 = vpack.c.b16 %v4406, %v4406
      %4409 = vrot.lane.b32.xlu0 %v2289, 96
      %v4410 = vpop.permute.xlu0 %4409
      %4411 = vrot.lane.b32.xlu0 %v2290, 96
      %v4412 = vpop.permute.xlu0 %4411
      %v4415 = vsel %vm1677, %v4407, 0
      %v4418 = vsel %vm1677, %v4408, 0
      %v4421 = vsel %vm1989, %v4412, 0
      %4423 = vmatpush.bf16.msra.mxu0 0
      %4424 = vmatpush.bf16.msra.mxu0 0
      %4425 = vmatpush.bf16.msra.mxu0 0
      %4426 = vmatpush.bf16.msra.mxu0 0
      %4427 = vmatpush.bf16.msra.mxu0 0
      %4428 = vmatpush.bf16.msra.mxu0 0
      %4429 = vmatpush.bf16.msra.mxu0 %v4421
      %4430 = vmatpush.bf16.msra.mxu0 %v4410
      %4431 = vmatmul.bf16.gmra.mxu0 %v4415
      %v4432 = vpop.f32.mrf.mxu0
      %v4433 = vadd.f32 0.0, %v4432
      %v4434 = vpop.f32.mrf.mxu0
      %v4435 = vadd.f32 0.0, %v4434
      %4436 = vmatmul.bf16.gmra.mxu0 %v4418
      %v4437 = vpop.f32.mrf.mxu0
      %v4438 = vadd.f32 0.0, %v4437
      %v4439 = vpop.f32.mrf.mxu0
      %4440 = vdwg.mxu0
      %v4441 = vpack.c.bf16 %v4155, %v4153
      %v4442 = vpack.c.bf16 %v4193, %v4158
      %v4443 = vpack.c.bf16 %v4198, %v4195
      %v4444 = vpack.c.bf16 %v4235, %v4233
      %v4445 = vpack.c.bf16 %v4273, %v4238
      %v4446 = vpack.c.bf16 %v4278, %v4275
      %v4447 = vpack.c.bf16 %v4315, %v4313
      %v4448 = vpack.c.bf16 %v4353, %v4318
      %v4449 = vpack.c.bf16 %v4358, %v4355
      %v4450 = vpack.c.bf16 %v4395, %v4393
      %v4451 = vpack.c.bf16 %v4433, %v4398
      %v4452 = vpack.c.bf16 %v4438, %v4435
      %v4453 = vld [vmem:[%s5 + $0x10] sm:$0xf]
      %v4454 = vld [vmem:[%s5 + $0x14] sm:$0xf]
      %v4457 = vunpack.c.l.b16 %v4453
      %v4458 = vunpack.c.l.b16 %v4454
      %v4459 = vpack.c.b16 %v4458, %v4457
      %v4462 = vsel %vm1272, %v4441, 0
      %v4465 = vsel %vm1272, %v4442, 0
      %v4468 = vsel %vm1272, %v4443, 0
      %v4471 = vsel %vm1272, %v4444, 0
      %v4474 = vsel %vm1272, %v4445, 0
      %v4477 = vsel %vm1272, %v4446, 0
      %v4480 = vsel %vm1272, %v4447, 0
      %v4483 = vsel %vm1272, %v4448, 0
      %v4486 = vsel %vm1272, %v4449, 0
      %v4489 = vsel %vm1272, %v4450, 0
      %v4492 = vsel %vm1272, %v4451, 0
      %v4495 = vsel %vm1272, %v4452, 0
      %4497 = vmatpush.bf16.msra.mxu0 0
      %4498 = vmatpush.bf16.msra.mxu0 0
      %4499 = vmatpush.bf16.msra.mxu0 0
      %4500 = vmatpush.bf16.msra.mxu0 0
      %4501 = vmatpush.bf16.msra.mxu0 0
      %4502 = vmatpush.bf16.msra.mxu0 0
      %4503 = vmatpush.bf16.msra.mxu0 0
      %4504 = vmatpush.bf16.msra.mxu0 %v4459
      %4505 = vmatmul.bf16.gmra.mxu0 %v4462
      %v4506 = vpop.f32.mrf.mxu0
      %v4507 = vadd.f32 0.0, %v4506
      %v4508 = vpop.f32.mrf.mxu0
      %v4509 = vadd.f32 0.0, %v4508
      %4510 = vmatmul.bf16.gmra.mxu0 %v4465
      %v4511 = vpop.f32.mrf.mxu0
      %v4512 = vadd.f32 0.0, %v4511
      %v4513 = vpop.f32.mrf.mxu0
      %v4514 = vadd.f32 0.0, %v4513
      %4515 = vmatmul.bf16.gmra.mxu0 %v4468
      %v4516 = vpop.f32.mrf.mxu0
      %v4517 = vadd.f32 0.0, %v4516
      %v4518 = vpop.f32.mrf.mxu0
      %v4519 = vadd.f32 0.0, %v4518
      %4520 = vmatmul.bf16.gmra.mxu0 %v4471
      %v4521 = vpop.f32.mrf.mxu0
      %v4522 = vadd.f32 0.0, %v4521
      %v4523 = vpop.f32.mrf.mxu0
      %v4524 = vadd.f32 0.0, %v4523
      %4525 = vmatmul.bf16.gmra.mxu0 %v4474
      %v4526 = vpop.f32.mrf.mxu0
      %v4527 = vadd.f32 0.0, %v4526
      %v4528 = vpop.f32.mrf.mxu0
      %v4529 = vadd.f32 0.0, %v4528
      %4530 = vmatmul.bf16.gmra.mxu0 %v4477
      %v4531 = vpop.f32.mrf.mxu0
      %v4532 = vadd.f32 0.0, %v4531
      %v4533 = vpop.f32.mrf.mxu0
      %v4534 = vadd.f32 0.0, %v4533
      %4535 = vmatmul.bf16.gmra.mxu0 %v4480
      %v4536 = vpop.f32.mrf.mxu0
      %v4537 = vadd.f32 0.0, %v4536
      %v4538 = vpop.f32.mrf.mxu0
      %v4539 = vadd.f32 0.0, %v4538
      %4540 = vmatmul.bf16.gmra.mxu0 %v4483
      %v4541 = vpop.f32.mrf.mxu0
      %v4542 = vadd.f32 0.0, %v4541
      %v4543 = vpop.f32.mrf.mxu0
      %v4544 = vadd.f32 0.0, %v4543
      %4545 = vmatmul.bf16.gmra.mxu0 %v4486
      %v4546 = vpop.f32.mrf.mxu0
      %v4547 = vadd.f32 0.0, %v4546
      %v4548 = vpop.f32.mrf.mxu0
      %v4549 = vadd.f32 0.0, %v4548
      %4550 = vmatmul.bf16.gmra.mxu0 %v4489
      %v4551 = vpop.f32.mrf.mxu0
      %v4552 = vadd.f32 0.0, %v4551
      %v4553 = vpop.f32.mrf.mxu0
      %v4554 = vadd.f32 0.0, %v4553
      %4555 = vmatmul.bf16.gmra.mxu0 %v4492
      %v4556 = vpop.f32.mrf.mxu0
      %v4557 = vadd.f32 0.0, %v4556
      %v4558 = vpop.f32.mrf.mxu0
      %v4559 = vadd.f32 0.0, %v4558
      %4560 = vmatmul.bf16.gmra.mxu0 %v4495
      %v4561 = vpop.f32.mrf.mxu0
      %v4562 = vadd.f32 0.0, %v4561
      %v4563 = vpop.f32.mrf.mxu0
      %v4564 = vadd.f32 0.0, %v4563
      %4565 = vdwg.mxu0
      %v4566 = vadd.f32 %v3446, %v4507
      %v4567 = vadd.f32 %v3448, %v4509
      %v4568 = vadd.f32 %v3451, %v4512
      %v4569 = vadd.f32 %v3453, %v4514
      %v4570 = vadd.f32 %v3456, %v4517
      %v4571 = vadd.f32 %v3458, %v4519
      %v4572 = vadd.f32 %v3461, %v4522
      %v4573 = vadd.f32 %v3463, %v4524
      %v4574 = vadd.f32 %v3466, %v4527
      %v4575 = vadd.f32 %v3468, %v4529
      %v4576 = vadd.f32 %v3471, %v4532
      %v4577 = vadd.f32 %v3473, %v4534
      %v4578 = vadd.f32 %v3476, %v4537
      %v4579 = vadd.f32 %v3478, %v4539
      %v4580 = vadd.f32 %v3481, %v4542
      %v4581 = vadd.f32 %v3483, %v4544
      %v4582 = vadd.f32 %v3486, %v4547
      %v4583 = vadd.f32 %v3488, %v4549
      %v4584 = vadd.f32 %v3491, %v4552
      %v4585 = vadd.f32 %v3493, %v4554
      %v4586 = vadd.f32 %v3496, %v4557
      %v4587 = vadd.f32 %v3498, %v4559
      %v4588 = vadd.f32 %v3501, %v4562
      %v4589 = vadd.f32 %v3503, %v4564
      %4590 = vrot.lane.b32.xlu0 %v1258, 80
      %v4591 = vpop.permute.xlu0 %4590
      %4592 = vrot.lane.b32.xlu0 %v1259, 80
      %v4593 = vpop.permute.xlu0 %4592
      %4594 = vrot.lane.b32.xlu0 %v1266, 16
      %v4595 = vpop.permute.xlu0 %4594
      %4596 = vrot.lane.b32.xlu0 %v1267, 16
      %v4597 = vpop.permute.xlu0 %4596
      %v4599 = vsel %vm1272, %v4591, 0
      %v4602 = vsel %vm1272, %v4593, 0
      %v4605 = vsel %vm1272, %v4595, 0
      %v4608 = vsel %vm1272, %v4597, 0
      %4610 = vmatpush.bf16.xpose.msra.mxu0 0
      %4611 = vmatpush.bf16.xpose.msra.mxu0 0
      %4612 = vmatpush.bf16.xpose.msra.mxu0 0
      %4613 = vmatpush.bf16.xpose.msra.mxu0 0
      %4614 = vmatpush.bf16.xpose.msra.mxu0 0
      %4615 = vmatpush.bf16.xpose.msra.mxu0 0
      %4616 = vmatpush.bf16.xpose.msra.mxu0 %v4608
      %4617 = vmatpush.bf16.xpose.msra.mxu0 %v4605
      %4618 = vmatmul.bf16.gmra.mxu0 %v4599
      %v4619 = vpop.f32.mrf.mxu0
      %v4620 = vadd.f32 0.0, %v4619
      %v4621 = vpop.f32.mrf.mxu0
      %v4622 = vadd.f32 0.0, %v4621
      %4623 = vmatmul.bf16.gmra.mxu0 %v4602
      %v4624 = vpop.f32.mrf.mxu0
      %v4625 = vadd.f32 0.0, %v4624
      %v4626 = vpop.f32.mrf.mxu0
      %4627 = vdwg.mxu0
      %4628 = vrot.lane.b32.xlu0 %v1309, 80
      %v4629 = vpop.permute.xlu0 %4628
      %4630 = vrot.lane.b32.xlu0 %v1310, 80
      %v4631 = vpop.permute.xlu0 %4630
      %4632 = vrot.lane.b32.xlu0 %v1317, 16
      %v4633 = vpop.permute.xlu0 %4632
      %4634 = vrot.lane.b32.xlu0 %v1318, 16
      %v4635 = vpop.permute.xlu0 %4634
      %v4637 = vsel %vm1272, %v4629, 0
      %v4640 = vsel %vm1272, %v4631, 0
      %v4643 = vsel %vm1272, %v4633, 0
      %v4646 = vsel %vm1272, %v4635, 0
      %4648 = vmatpush.bf16.xpose.msra.mxu0 0
      %4649 = vmatpush.bf16.xpose.msra.mxu0 0
      %4650 = vmatpush.bf16.xpose.msra.mxu0 0
      %4651 = vmatpush.bf16.xpose.msra.mxu0 0
      %4652 = vmatpush.bf16.xpose.msra.mxu0 0
      %4653 = vmatpush.bf16.xpose.msra.mxu0 0
      %4654 = vmatpush.bf16.xpose.msra.mxu0 %v4646
      %4655 = vmatpush.bf16.xpose.msra.mxu0 %v4643
      %4656 = vmatmul.bf16.gmra.mxu0 %v4637
      %v4657 = vpop.f32.mrf.mxu0
      %v4658 = vadd.f32 0.0, %v4657
      %v4659 = vpop.f32.mrf.mxu0
      %v4660 = vadd.f32 0.0, %v4659
      %4661 = vmatmul.bf16.gmra.mxu0 %v4640
      %v4662 = vpop.f32.mrf.mxu0
      %v4663 = vadd.f32 0.0, %v4662
      %v4664 = vpop.f32.mrf.mxu0
      %4665 = vdwg.mxu0
      %4666 = vrot.lane.b32.xlu0 %v1359, 80
      %v4667 = vpop.permute.xlu0 %4666
      %4668 = vrot.lane.b32.xlu0 %v1360, 80
      %v4669 = vpop.permute.xlu0 %4668
      %4670 = vrot.lane.b32.xlu0 %v1367, 16
      %v4671 = vpop.permute.xlu0 %4670
      %4672 = vrot.lane.b32.xlu0 %v1368, 16
      %v4673 = vpop.permute.xlu0 %4672
      %v4675 = vsel %vm1272, %v4667, 0
      %v4678 = vsel %vm1272, %v4669, 0
      %v4681 = vsel %vm1272, %v4671, 0
      %v4684 = vsel %vm1272, %v4673, 0
      %4686 = vmatpush.bf16.xpose.msra.mxu0 0
      %4687 = vmatpush.bf16.xpose.msra.mxu0 0
      %4688 = vmatpush.bf16.xpose.msra.mxu0 0
      %4689 = vmatpush.bf16.xpose.msra.mxu0 0
      %4690 = vmatpush.bf16.xpose.msra.mxu0 0
      %4691 = vmatpush.bf16.xpose.msra.mxu0 0
      %4692 = vmatpush.bf16.xpose.msra.mxu0 %v4684
      %4693 = vmatpush.bf16.xpose.msra.mxu0 %v4681
      %4694 = vmatmul.bf16.gmra.mxu0 %v4675
      %v4695 = vpop.f32.mrf.mxu0
      %v4696 = vadd.f32 0.0, %v4695
      %v4697 = vpop.f32.mrf.mxu0
      %v4698 = vadd.f32 0.0, %v4697
      %4699 = vmatmul.bf16.gmra.mxu0 %v4678
      %v4700 = vpop.f32.mrf.mxu0
      %v4701 = vadd.f32 0.0, %v4700
      %v4702 = vpop.f32.mrf.mxu0
      %4703 = vdwg.mxu0
      %4704 = vrot.lane.b32.xlu0 %v1409, 80
      %v4705 = vpop.permute.xlu0 %4704
      %4706 = vrot.lane.b32.xlu0 %v1410, 80
      %v4707 = vpop.permute.xlu0 %4706
      %4708 = vrot.lane.b32.xlu0 %v1417, 16
      %v4709 = vpop.permute.xlu0 %4708
      %4710 = vrot.lane.b32.xlu0 %v1418, 16
      %v4711 = vpop.permute.xlu0 %4710
      %v4713 = vsel %vm1272, %v4705, 0
      %v4716 = vsel %vm1272, %v4707, 0
      %v4719 = vsel %vm1272, %v4709, 0
      %v4722 = vsel %vm1272, %v4711, 0
      %4724 = vmatpush.bf16.xpose.msra.mxu0 0
      %4725 = vmatpush.bf16.xpose.msra.mxu0 0
      %4726 = vmatpush.bf16.xpose.msra.mxu0 0
      %4727 = vmatpush.bf16.xpose.msra.mxu0 0
      %4728 = vmatpush.bf16.xpose.msra.mxu0 0
      %4729 = vmatpush.bf16.xpose.msra.mxu0 0
      %4730 = vmatpush.bf16.xpose.msra.mxu0 %v4722
      %4731 = vmatpush.bf16.xpose.msra.mxu0 %v4719
      %4732 = vmatmul.bf16.gmra.mxu0 %v4713
      %v4733 = vpop.f32.mrf.mxu0
      %v4734 = vadd.f32 0.0, %v4733
      %v4735 = vpop.f32.mrf.mxu0
      %v4736 = vadd.f32 0.0, %v4735
      %4737 = vmatmul.bf16.gmra.mxu0 %v4716
      %v4738 = vpop.f32.mrf.mxu0
      %v4739 = vadd.f32 0.0, %v4738
      %v4740 = vpop.f32.mrf.mxu0
      %4741 = vdwg.mxu0
      %4742 = vrot.lane.b32.xlu0 %v1459, 80
      %v4743 = vpop.permute.xlu0 %4742
      %4744 = vrot.lane.b32.xlu0 %v1460, 80
      %v4745 = vpop.permute.xlu0 %4744
      %4746 = vrot.lane.b32.xlu0 %v1467, 16
      %v4747 = vpop.permute.xlu0 %4746
      %4748 = vrot.lane.b32.xlu0 %v1468, 16
      %v4749 = vpop.permute.xlu0 %4748
      %v4751 = vsel %vm1272, %v4743, 0
      %v4754 = vsel %vm1272, %v4745, 0
      %v4757 = vsel %vm1272, %v4747, 0
      %v4760 = vsel %vm1272, %v4749, 0
      %4762 = vmatpush.bf16.xpose.msra.mxu0 0
      %4763 = vmatpush.bf16.xpose.msra.mxu0 0
      %4764 = vmatpush.bf16.xpose.msra.mxu0 0
      %4765 = vmatpush.bf16.xpose.msra.mxu0 0
      %4766 = vmatpush.bf16.xpose.msra.mxu0 0
      %4767 = vmatpush.bf16.xpose.msra.mxu0 0
      %4768 = vmatpush.bf16.xpose.msra.mxu0 %v4760
      %4769 = vmatpush.bf16.xpose.msra.mxu0 %v4757
      %4770 = vmatmul.bf16.gmra.mxu0 %v4751
      %v4771 = vpop.f32.mrf.mxu0
      %v4772 = vadd.f32 0.0, %v4771
      %v4773 = vpop.f32.mrf.mxu0
      %v4774 = vadd.f32 0.0, %v4773
      %4775 = vmatmul.bf16.gmra.mxu0 %v4754
      %v4776 = vpop.f32.mrf.mxu0
      %v4777 = vadd.f32 0.0, %v4776
      %v4778 = vpop.f32.mrf.mxu0
      %4779 = vdwg.mxu0
      %4780 = vrot.lane.b32.xlu0 %v1509, 80
      %v4781 = vpop.permute.xlu0 %4780
      %4782 = vrot.lane.b32.xlu0 %v1510, 80
      %v4783 = vpop.permute.xlu0 %4782
      %4784 = vrot.lane.b32.xlu0 %v1517, 16
      %v4785 = vpop.permute.xlu0 %4784
      %4786 = vrot.lane.b32.xlu0 %v1518, 16
      %v4787 = vpop.permute.xlu0 %4786
      %v4789 = vsel %vm1272, %v4781, 0
      %v4792 = vsel %vm1272, %v4783, 0
      %v4795 = vsel %vm1272, %v4785, 0
      %v4798 = vsel %vm1272, %v4787, 0
      %4800 = vmatpush.bf16.xpose.msra.mxu0 0
      %4801 = vmatpush.bf16.xpose.msra.mxu0 0
      %4802 = vmatpush.bf16.xpose.msra.mxu0 0
      %4803 = vmatpush.bf16.xpose.msra.mxu0 0
      %4804 = vmatpush.bf16.xpose.msra.mxu0 0
      %4805 = vmatpush.bf16.xpose.msra.mxu0 0
      %4806 = vmatpush.bf16.xpose.msra.mxu0 %v4798
      %4807 = vmatpush.bf16.xpose.msra.mxu0 %v4795
      %4808 = vmatmul.bf16.gmra.mxu0 %v4789
      %v4809 = vpop.f32.mrf.mxu0
      %v4810 = vadd.f32 0.0, %v4809
      %v4811 = vpop.f32.mrf.mxu0
      %v4812 = vadd.f32 0.0, %v4811
      %4813 = vmatmul.bf16.gmra.mxu0 %v4792
      %v4814 = vpop.f32.mrf.mxu0
      %v4815 = vadd.f32 0.0, %v4814
      %v4816 = vpop.f32.mrf.mxu0
      %4817 = vdwg.mxu0
      %4818 = vrot.lane.b32.xlu0 %v1559, 80
      %v4819 = vpop.permute.xlu0 %4818
      %4820 = vrot.lane.b32.xlu0 %v1560, 80
      %v4821 = vpop.permute.xlu0 %4820
      %4822 = vrot.lane.b32.xlu0 %v1567, 16
      %v4823 = vpop.permute.xlu0 %4822
      %4824 = vrot.lane.b32.xlu0 %v1568, 16
      %v4825 = vpop.permute.xlu0 %4824
      %v4827 = vsel %vm1272, %v4819, 0
      %v4830 = vsel %vm1272, %v4821, 0
      %v4833 = vsel %vm1272, %v4823, 0
      %v4836 = vsel %vm1272, %v4825, 0
      %4838 = vmatpush.bf16.xpose.msra.mxu0 0
      %4839 = vmatpush.bf16.xpose.msra.mxu0 0
      %4840 = vmatpush.bf16.xpose.msra.mxu0 0
      %4841 = vmatpush.bf16.xpose.msra.mxu0 0
      %4842 = vmatpush.bf16.xpose.msra.mxu0 0
      %4843 = vmatpush.bf16.xpose.msra.mxu0 0
      %4844 = vmatpush.bf16.xpose.msra.mxu0 %v4836
      %4845 = vmatpush.bf16.xpose.msra.mxu0 %v4833
      %4846 = vmatmul.bf16.gmra.mxu0 %v4827
      %v4847 = vpop.f32.mrf.mxu0
      %v4848 = vadd.f32 0.0, %v4847
      %v4849 = vpop.f32.mrf.mxu0
      %v4850 = vadd.f32 0.0, %v4849
      %4851 = vmatmul.bf16.gmra.mxu0 %v4830
      %v4852 = vpop.f32.mrf.mxu0
      %v4853 = vadd.f32 0.0, %v4852
      %v4854 = vpop.f32.mrf.mxu0
      %4855 = vdwg.mxu0
      %4856 = vrot.lane.b32.xlu0 %v1609, 80
      %v4857 = vpop.permute.xlu0 %4856
      %4858 = vrot.lane.b32.xlu0 %v1610, 80
      %v4859 = vpop.permute.xlu0 %4858
      %4860 = vrot.lane.b32.xlu0 %v1617, 16
      %v4861 = vpop.permute.xlu0 %4860
      %4862 = vrot.lane.b32.xlu0 %v1618, 16
      %v4863 = vpop.permute.xlu0 %4862
      %v4865 = vsel %vm1272, %v4857, 0
      %v4868 = vsel %vm1272, %v4859, 0
      %v4871 = vsel %vm1272, %v4861, 0
      %v4874 = vsel %vm1272, %v4863, 0
      %4876 = vmatpush.bf16.xpose.msra.mxu0 0
      %4877 = vmatpush.bf16.xpose.msra.mxu0 0
      %4878 = vmatpush.bf16.xpose.msra.mxu0 0
      %4879 = vmatpush.bf16.xpose.msra.mxu0 0
      %4880 = vmatpush.bf16.xpose.msra.mxu0 0
      %4881 = vmatpush.bf16.xpose.msra.mxu0 0
      %4882 = vmatpush.bf16.xpose.msra.mxu0 %v4874
      %4883 = vmatpush.bf16.xpose.msra.mxu0 %v4871
      %4884 = vmatmul.bf16.gmra.mxu0 %v4865
      %v4885 = vpop.f32.mrf.mxu0
      %v4886 = vadd.f32 0.0, %v4885
      %v4887 = vpop.f32.mrf.mxu0
      %v4888 = vadd.f32 0.0, %v4887
      %4889 = vmatmul.bf16.gmra.mxu0 %v4868
      %v4890 = vpop.f32.mrf.mxu0
      %v4891 = vadd.f32 0.0, %v4890
      %v4892 = vpop.f32.mrf.mxu0
      %4893 = vdwg.mxu0
      %v4894 = vsel %vm1155, %v4620, -1e+30
      %v4895 = vsel %vm1155, %v4622, -1e+30
      %v4896 = vsel %vm1155, %v4625, -1e+30
      %v4897 = vsel %vm1155, %v4658, -1e+30
      %v4898 = vsel %vm1155, %v4660, -1e+30
      %v4899 = vsel %vm1155, %v4663, -1e+30
      %v4900 = vsel %vm1155, %v4696, -1e+30
      %v4901 = vsel %vm1155, %v4698, -1e+30
      %v4902 = vsel %vm1155, %v4701, -1e+30
      %v4903 = vsel %vm1155, %v4734, -1e+30
      %v4904 = vsel %vm1155, %v4736, -1e+30
      %v4905 = vsel %vm1155, %v4739, -1e+30
      %v4906 = vsel %vm1155, %v4772, -1e+30
      %v4907 = vsel %vm1155, %v4774, -1e+30
      %v4908 = vsel %vm1155, %v4777, -1e+30
      %v4909 = vsel %vm1155, %v4810, -1e+30
      %v4910 = vsel %vm1155, %v4812, -1e+30
      %v4911 = vsel %vm1155, %v4815, -1e+30
      %v4912 = vsel %vm1155, %v4848, -1e+30
      %v4913 = vsel %vm1155, %v4850, -1e+30
      %v4914 = vsel %vm1155, %v4853, -1e+30
      %v4915 = vsel %vm1155, %v4886, -1e+30
      %v4916 = vsel %vm1155, %v4888, -1e+30
      %v4917 = vsel %vm1155, %v4891, -1e+30
      %v4918 = vsel %vm1677, %v4894, -inf
      %4919 = vmax.xlane.f32.xlu0 %v4918
      %v4920 = vpop.xlane.xlu0 %4919
      %v4921 = vsel %vm1677, %v4895, -inf
      %4922 = vmax.xlane.f32.xlu0 %v4921
      %v4923 = vpop.xlane.xlu0 %4922
      %v4924 = vsel %vm1677, %v4896, -inf
      %4925 = vmax.xlane.f32.xlu0 %v4924
      %v4926 = vpop.xlane.xlu0 %4925
      %v4927 = vsel %vm1677, %v4897, -inf
      %4928 = vmax.xlane.f32.xlu0 %v4927
      %v4929 = vpop.xlane.xlu0 %4928
      %v4930 = vsel %vm1677, %v4898, -inf
      %4931 = vmax.xlane.f32.xlu0 %v4930
      %v4932 = vpop.xlane.xlu0 %4931
      %v4933 = vsel %vm1677, %v4899, -inf
      %4934 = vmax.xlane.f32.xlu0 %v4933
      %v4935 = vpop.xlane.xlu0 %4934
      %v4936 = vsel %vm1677, %v4900, -inf
      %4937 = vmax.xlane.f32.xlu0 %v4936
      %v4938 = vpop.xlane.xlu0 %4937
      %v4939 = vsel %vm1677, %v4901, -inf
      %4940 = vmax.xlane.f32.xlu0 %v4939
      %v4941 = vpop.xlane.xlu0 %4940
      %v4942 = vsel %vm1677, %v4902, -inf
      %4943 = vmax.xlane.f32.xlu0 %v4942
      %v4944 = vpop.xlane.xlu0 %4943
      %v4945 = vsel %vm1677, %v4903, -inf
      %4946 = vmax.xlane.f32.xlu0 %v4945
      %v4947 = vpop.xlane.xlu0 %4946
      %v4948 = vsel %vm1677, %v4904, -inf
      %4949 = vmax.xlane.f32.xlu0 %v4948
      %v4950 = vpop.xlane.xlu0 %4949
      %v4951 = vsel %vm1677, %v4905, -inf
      %4952 = vmax.xlane.f32.xlu0 %v4951
      %v4953 = vpop.xlane.xlu0 %4952
      %v4954 = vsel %vm1677, %v4906, -inf
      %4955 = vmax.xlane.f32.xlu0 %v4954
      %v4956 = vpop.xlane.xlu0 %4955
      %v4957 = vsel %vm1677, %v4907, -inf
      %4958 = vmax.xlane.f32.xlu0 %v4957
      %v4959 = vpop.xlane.xlu0 %4958
      %v4960 = vsel %vm1677, %v4908, -inf
      %4961 = vmax.xlane.f32.xlu0 %v4960
      %v4962 = vpop.xlane.xlu0 %4961
      %v4963 = vsel %vm1677, %v4909, -inf
      %4964 = vmax.xlane.f32.xlu0 %v4963
      %v4965 = vpop.xlane.xlu0 %4964
      %v4966 = vsel %vm1677, %v4910, -inf
      %4967 = vmax.xlane.f32.xlu0 %v4966
      %v4968 = vpop.xlane.xlu0 %4967
      %v4969 = vsel %vm1677, %v4911, -inf
      %4970 = vmax.xlane.f32.xlu0 %v4969
      %v4971 = vpop.xlane.xlu0 %4970
      %v4972 = vsel %vm1677, %v4912, -inf
      %4973 = vmax.xlane.f32.xlu0 %v4972
      %v4974 = vpop.xlane.xlu0 %4973
      %v4975 = vsel %vm1677, %v4913, -inf
      %4976 = vmax.xlane.f32.xlu0 %v4975
      %v4977 = vpop.xlane.xlu0 %4976
      %v4978 = vsel %vm1677, %v4914, -inf
      %4979 = vmax.xlane.f32.xlu0 %v4978
      %v4980 = vpop.xlane.xlu0 %4979
      %v4981 = vsel %vm1677, %v4915, -inf
      %4982 = vmax.xlane.f32.xlu0 %v4981
      %v4983 = vpop.xlane.xlu0 %4982
      %v4984 = vsel %vm1677, %v4916, -inf
      %4985 = vmax.xlane.f32.xlu0 %v4984
      %v4986 = vpop.xlane.xlu0 %4985
      %v4987 = vsel %vm1677, %v4917, -inf
      %4988 = vmax.xlane.f32.xlu0 %v4987
      %v4989 = vpop.xlane.xlu0 %4988
      %v4990 = vsub.f32 %v4894, %v4920
      %v4991 = vsub.f32 %v4895, %v4923
      %v4992 = vsub.f32 %v4896, %v4926
      %v4993 = vsub.f32 %v4897, %v4929
      %v4994 = vsub.f32 %v4898, %v4932
      %v4995 = vsub.f32 %v4899, %v4935
      %v4996 = vsub.f32 %v4900, %v4938
      %v4997 = vsub.f32 %v4901, %v4941
      %v4998 = vsub.f32 %v4902, %v4944
      %v4999 = vsub.f32 %v4903, %v4947
      %v5000 = vsub.f32 %v4904, %v4950
      %v5001 = vsub.f32 %v4905, %v4953
      %v5002 = vsub.f32 %v4906, %v4956
      %v5003 = vsub.f32 %v4907, %v4959
      %v5004 = vsub.f32 %v4908, %v4962
      %v5005 = vsub.f32 %v4909, %v4965
      %v5006 = vsub.f32 %v4910, %v4968
      %v5007 = vsub.f32 %v4911, %v4971
      %v5008 = vsub.f32 %v4912, %v4974
      %v5009 = vsub.f32 %v4913, %v4977
      %v5010 = vsub.f32 %v4914, %v4980
      %v5011 = vsub.f32 %v4915, %v4983
      %v5012 = vsub.f32 %v4916, %v4986
      %v5013 = vsub.f32 %v4917, %v4989
      %v5014 = vmul.f32 %v4990, 1.442695
      %v5015 = vpow.pop %v5014
      %v5016 = vmul.f32 %v4991, 1.442695
      %v5017 = vpow.pop %v5016
      %v5018 = vmul.f32 %v4992, 1.442695
      %v5019 = vpow.pop %v5018
      %v5020 = vmul.f32 %v4993, 1.442695
      %v5021 = vpow.pop %v5020
      %v5022 = vmul.f32 %v4994, 1.442695
      %v5023 = vpow.pop %v5022
      %v5024 = vmul.f32 %v4995, 1.442695
      %v5025 = vpow.pop %v5024
      %v5026 = vmul.f32 %v4996, 1.442695
      %v5027 = vpow.pop %v5026
      %v5028 = vmul.f32 %v4997, 1.442695
      %v5029 = vpow.pop %v5028
      %v5030 = vmul.f32 %v4998, 1.442695
      %v5031 = vpow.pop %v5030
      %v5032 = vmul.f32 %v4999, 1.442695
      %v5033 = vpow.pop %v5032
      %v5034 = vmul.f32 %v5000, 1.442695
      %v5035 = vpow.pop %v5034
      %v5036 = vmul.f32 %v5001, 1.442695
      %v5037 = vpow.pop %v5036
      %v5038 = vmul.f32 %v5002, 1.442695
      %v5039 = vpow.pop %v5038
      %v5040 = vmul.f32 %v5003, 1.442695
      %v5041 = vpow.pop %v5040
      %v5042 = vmul.f32 %v5004, 1.442695
      %v5043 = vpow.pop %v5042
      %v5044 = vmul.f32 %v5005, 1.442695
      %v5045 = vpow.pop %v5044
      %v5046 = vmul.f32 %v5006, 1.442695
      %v5047 = vpow.pop %v5046
      %v5048 = vmul.f32 %v5007, 1.442695
      %v5049 = vpow.pop %v5048
      %v5050 = vmul.f32 %v5008, 1.442695
      %v5051 = vpow.pop %v5050
      %v5052 = vmul.f32 %v5009, 1.442695
      %v5053 = vpow.pop %v5052
      %v5054 = vmul.f32 %v5010, 1.442695
      %v5055 = vpow.pop %v5054
      %v5056 = vmul.f32 %v5011, 1.442695
      %v5057 = vpow.pop %v5056
      %v5058 = vmul.f32 %v5012, 1.442695
      %v5059 = vpow.pop %v5058
      %v5060 = vmul.f32 %v5013, 1.442695
      %v5061 = vpow.pop %v5060
      %v5062 = vsel %vm1677, %v5015, 0.0
      %5063 = vadd.xlane.f32.xlu0 %v5062
      %v5064 = vpop.xlane.xlu0 %5063
      %v5065 = vsel %vm1677, %v5017, 0.0
      %5066 = vadd.xlane.f32.xlu0 %v5065
      %v5067 = vpop.xlane.xlu0 %5066
      %v5068 = vsel %vm1677, %v5019, 0.0
      %5069 = vadd.xlane.f32.xlu0 %v5068
      %v5070 = vpop.xlane.xlu0 %5069
      %v5071 = vsel %vm1677, %v5021, 0.0
      %5072 = vadd.xlane.f32.xlu0 %v5071
      %v5073 = vpop.xlane.xlu0 %5072
      %v5074 = vsel %vm1677, %v5023, 0.0
      %5075 = vadd.xlane.f32.xlu0 %v5074
      %v5076 = vpop.xlane.xlu0 %5075
      %v5077 = vsel %vm1677, %v5025, 0.0
      %5078 = vadd.xlane.f32.xlu0 %v5077
      %v5079 = vpop.xlane.xlu0 %5078
      %v5080 = vsel %vm1677, %v5027, 0.0
      %5081 = vadd.xlane.f32.xlu0 %v5080
      %v5082 = vpop.xlane.xlu0 %5081
      %v5083 = vsel %vm1677, %v5029, 0.0
      %5084 = vadd.xlane.f32.xlu0 %v5083
      %v5085 = vpop.xlane.xlu0 %5084
      %v5086 = vsel %vm1677, %v5031, 0.0
      %5087 = vadd.xlane.f32.xlu0 %v5086
      %v5088 = vpop.xlane.xlu0 %5087
      %v5089 = vsel %vm1677, %v5033, 0.0
      %5090 = vadd.xlane.f32.xlu0 %v5089
      %v5091 = vpop.xlane.xlu0 %5090
      %v5092 = vsel %vm1677, %v5035, 0.0
      %5093 = vadd.xlane.f32.xlu0 %v5092
      %v5094 = vpop.xlane.xlu0 %5093
      %v5095 = vsel %vm1677, %v5037, 0.0
      %5096 = vadd.xlane.f32.xlu0 %v5095
      %v5097 = vpop.xlane.xlu0 %5096
      %v5098 = vsel %vm1677, %v5039, 0.0
      %5099 = vadd.xlane.f32.xlu0 %v5098
      %v5100 = vpop.xlane.xlu0 %5099
      %v5101 = vsel %vm1677, %v5041, 0.0
      %5102 = vadd.xlane.f32.xlu0 %v5101
      %v5103 = vpop.xlane.xlu0 %5102
      %v5104 = vsel %vm1677, %v5043, 0.0
      %5105 = vadd.xlane.f32.xlu0 %v5104
      %v5106 = vpop.xlane.xlu0 %5105
      %v5107 = vsel %vm1677, %v5045, 0.0
      %5108 = vadd.xlane.f32.xlu0 %v5107
      %v5109 = vpop.xlane.xlu0 %5108
      %v5110 = vsel %vm1677, %v5047, 0.0
      %5111 = vadd.xlane.f32.xlu0 %v5110
      %v5112 = vpop.xlane.xlu0 %5111
      %v5113 = vsel %vm1677, %v5049, 0.0
      %5114 = vadd.xlane.f32.xlu0 %v5113
      %v5115 = vpop.xlane.xlu0 %5114
      %v5116 = vsel %vm1677, %v5051, 0.0
      %5117 = vadd.xlane.f32.xlu0 %v5116
      %v5118 = vpop.xlane.xlu0 %5117
      %v5119 = vsel %vm1677, %v5053, 0.0
      %5120 = vadd.xlane.f32.xlu0 %v5119
      %v5121 = vpop.xlane.xlu0 %5120
      %v5122 = vsel %vm1677, %v5055, 0.0
      %5123 = vadd.xlane.f32.xlu0 %v5122
      %v5124 = vpop.xlane.xlu0 %5123
      %v5125 = vsel %vm1677, %v5057, 0.0
      %5126 = vadd.xlane.f32.xlu0 %v5125
      %v5127 = vpop.xlane.xlu0 %5126
      %v5128 = vsel %vm1677, %v5059, 0.0
      %5129 = vadd.xlane.f32.xlu0 %v5128
      %v5130 = vpop.xlane.xlu0 %5129
      %v5131 = vsel %vm1677, %v5061, 0.0
      %5132 = vadd.xlane.f32.xlu0 %v5131
      %v5133 = vpop.xlane.xlu0 %5132
      %v5134 = vrcp.pop %v5064
      %v5135 = vrcp.pop %v5067
      %v5136 = vrcp.pop %v5070
      %v5137 = vrcp.pop %v5073
      %v5138 = vrcp.pop %v5076
      %v5139 = vrcp.pop %v5079
      %v5140 = vrcp.pop %v5082
      %v5141 = vrcp.pop %v5085
      %v5142 = vrcp.pop %v5088
      %v5143 = vrcp.pop %v5091
      %v5144 = vrcp.pop %v5094
      %v5145 = vrcp.pop %v5097
      %v5146 = vrcp.pop %v5100
      %v5147 = vrcp.pop %v5103
      %v5148 = vrcp.pop %v5106
      %v5149 = vrcp.pop %v5109
      %v5150 = vrcp.pop %v5112
      %v5151 = vrcp.pop %v5115
      %v5152 = vrcp.pop %v5118
      %v5153 = vrcp.pop %v5121
      %v5154 = vrcp.pop %v5124
      %v5155 = vrcp.pop %v5127
      %v5156 = vrcp.pop %v5130
      %v5157 = vrcp.pop %v5133
      %v5158 = vmul.f32 %v5015, %v5134
      %v5159 = vmul.f32 %v5017, %v5135
      %v5160 = vmul.f32 %v5019, %v5136
      %v5161 = vmul.f32 %v5021, %v5137
      %v5162 = vmul.f32 %v5023, %v5138
      %v5163 = vmul.f32 %v5025, %v5139
      %v5164 = vmul.f32 %v5027, %v5140
      %v5165 = vmul.f32 %v5029, %v5141
      %v5166 = vmul.f32 %v5031, %v5142
      %v5167 = vmul.f32 %v5033, %v5143
      %v5168 = vmul.f32 %v5035, %v5144
      %v5169 = vmul.f32 %v5037, %v5145
      %v5170 = vmul.f32 %v5039, %v5146
      %v5171 = vmul.f32 %v5041, %v5147
      %v5172 = vmul.f32 %v5043, %v5148
      %v5173 = vmul.f32 %v5045, %v5149
      %v5174 = vmul.f32 %v5047, %v5150
      %v5175 = vmul.f32 %v5049, %v5151
      %v5176 = vmul.f32 %v5051, %v5152
      %v5177 = vmul.f32 %v5053, %v5153
      %v5178 = vmul.f32 %v5055, %v5154
      %v5179 = vmul.f32 %v5057, %v5155
      %v5180 = vmul.f32 %v5059, %v5156
      %v5181 = vmul.f32 %v5061, %v5157
      %v5182 = vpack.c.bf16 %v5158, %v5158
      %v5183 = vpack.c.bf16 %v5159, %v5159
      %v5184 = vpack.c.bf16 %v5160, %v5160
      %v5185 = vpack.c.bf16 %v5161, %v5161
      %v5186 = vpack.c.bf16 %v5162, %v5162
      %v5187 = vpack.c.bf16 %v5163, %v5163
      %v5188 = vpack.c.bf16 %v5164, %v5164
      %v5189 = vpack.c.bf16 %v5165, %v5165
      %v5190 = vpack.c.bf16 %v5166, %v5166
      %v5191 = vpack.c.bf16 %v5167, %v5167
      %v5192 = vpack.c.bf16 %v5168, %v5168
      %v5193 = vpack.c.bf16 %v5169, %v5169
      %v5194 = vpack.c.bf16 %v5170, %v5170
      %v5195 = vpack.c.bf16 %v5171, %v5171
      %v5196 = vpack.c.bf16 %v5172, %v5172
      %v5197 = vpack.c.bf16 %v5173, %v5173
      %v5198 = vpack.c.bf16 %v5174, %v5174
      %v5199 = vpack.c.bf16 %v5175, %v5175
      %v5200 = vpack.c.bf16 %v5176, %v5176
      %v5201 = vpack.c.bf16 %v5177, %v5177
      %v5202 = vpack.c.bf16 %v5178, %v5178
      %v5203 = vpack.c.bf16 %v5179, %v5179
      %v5204 = vpack.c.bf16 %v5180, %v5180
      %v5205 = vpack.c.bf16 %v5181, %v5181
      %v5209 = vunpack.c.l.b16 %v5182
      %v5210 = vunpack.c.l.b16 %v5183
      %v5211 = vunpack.c.l.b16 %v5184
      %v5212 = vpack.c.b16 %v5210, %v5209
      %v5213 = vpack.c.b16 %v5211, %v5211
      %5214 = vrot.lane.b32.xlu0 %v1980, 80
      %v5215 = vpop.permute.xlu0 %5214
      %5216 = vrot.lane.b32.xlu0 %v1981, 80
      %v5217 = vpop.permute.xlu0 %5216
      %v5220 = vsel %vm1677, %v5212, 0
      %v5223 = vsel %vm1677, %v5213, 0
      %v5226 = vsel %vm1989, %v5217, 0
      %5228 = vmatpush.bf16.msra.mxu0 0
      %5229 = vmatpush.bf16.msra.mxu0 0
      %5230 = vmatpush.bf16.msra.mxu0 0
      %5231 = vmatpush.bf16.msra.mxu0 0
      %5232 = vmatpush.bf16.msra.mxu0 0
      %5233 = vmatpush.bf16.msra.mxu0 0
      %5234 = vmatpush.bf16.msra.mxu0 %v5226
      %5235 = vmatpush.bf16.msra.mxu0 %v5215
      %5236 = vmatmul.bf16.gmra.mxu0 %v5220
      %v5237 = vpop.f32.mrf.mxu0
      %v5238 = vadd.f32 0.0, %v5237
      %v5239 = vpop.f32.mrf.mxu0
      %v5240 = vadd.f32 0.0, %v5239
      %5241 = vmatmul.bf16.gmra.mxu0 %v5223
      %v5242 = vpop.f32.mrf.mxu0
      %v5243 = vadd.f32 0.0, %v5242
      %v5244 = vpop.f32.mrf.mxu0
      %5245 = vdwg.mxu0
      %v5249 = vunpack.c.l.b16 %v5185
      %v5250 = vunpack.c.l.b16 %v5186
      %v5251 = vunpack.c.l.b16 %v5187
      %v5252 = vpack.c.b16 %v5250, %v5249
      %v5253 = vpack.c.b16 %v5251, %v5251
      %5254 = vrot.lane.b32.xlu0 %v2025, 80
      %v5255 = vpop.permute.xlu0 %5254
      %5256 = vrot.lane.b32.xlu0 %v2026, 80
      %v5257 = vpop.permute.xlu0 %5256
      %v5260 = vsel %vm1677, %v5252, 0
      %v5263 = vsel %vm1677, %v5253, 0
      %v5266 = vsel %vm1989, %v5257, 0
      %5268 = vmatpush.bf16.msra.mxu0 0
      %5269 = vmatpush.bf16.msra.mxu0 0
      %5270 = vmatpush.bf16.msra.mxu0 0
      %5271 = vmatpush.bf16.msra.mxu0 0
      %5272 = vmatpush.bf16.msra.mxu0 0
      %5273 = vmatpush.bf16.msra.mxu0 0
      %5274 = vmatpush.bf16.msra.mxu0 %v5266
      %5275 = vmatpush.bf16.msra.mxu0 %v5255
      %5276 = vmatmul.bf16.gmra.mxu0 %v5260
      %v5277 = vpop.f32.mrf.mxu0
      %v5278 = vadd.f32 0.0, %v5277
      %v5279 = vpop.f32.mrf.mxu0
      %v5280 = vadd.f32 0.0, %v5279
      %5281 = vmatmul.bf16.gmra.mxu0 %v5263
      %v5282 = vpop.f32.mrf.mxu0
      %v5283 = vadd.f32 0.0, %v5282
      %v5284 = vpop.f32.mrf.mxu0
      %5285 = vdwg.mxu0
      %v5289 = vunpack.c.l.b16 %v5188
      %v5290 = vunpack.c.l.b16 %v5189
      %v5291 = vunpack.c.l.b16 %v5190
      %v5292 = vpack.c.b16 %v5290, %v5289
      %v5293 = vpack.c.b16 %v5291, %v5291
      %5294 = vrot.lane.b32.xlu0 %v2069, 80
      %v5295 = vpop.permute.xlu0 %5294
      %5296 = vrot.lane.b32.xlu0 %v2070, 80
      %v5297 = vpop.permute.xlu0 %5296
      %v5300 = vsel %vm1677, %v5292, 0
      %v5303 = vsel %vm1677, %v5293, 0
      %v5306 = vsel %vm1989, %v5297, 0
      %5308 = vmatpush.bf16.msra.mxu0 0
      %5309 = vmatpush.bf16.msra.mxu0 0
      %5310 = vmatpush.bf16.msra.mxu0 0
      %5311 = vmatpush.bf16.msra.mxu0 0
      %5312 = vmatpush.bf16.msra.mxu0 0
      %5313 = vmatpush.bf16.msra.mxu0 0
      %5314 = vmatpush.bf16.msra.mxu0 %v5306
      %5315 = vmatpush.bf16.msra.mxu0 %v5295
      %5316 = vmatmul.bf16.gmra.mxu0 %v5300
      %v5317 = vpop.f32.mrf.mxu0
      %v5318 = vadd.f32 0.0, %v5317
      %v5319 = vpop.f32.mrf.mxu0
      %v5320 = vadd.f32 0.0, %v5319
      %5321 = vmatmul.bf16.gmra.mxu0 %v5303
      %v5322 = vpop.f32.mrf.mxu0
      %v5323 = vadd.f32 0.0, %v5322
      %v5324 = vpop.f32.mrf.mxu0
      %5325 = vdwg.mxu0
      %v5329 = vunpack.c.l.b16 %v5191
      %v5330 = vunpack.c.l.b16 %v5192
      %v5331 = vunpack.c.l.b16 %v5193
      %v5332 = vpack.c.b16 %v5330, %v5329
      %v5333 = vpack.c.b16 %v5331, %v5331
      %5334 = vrot.lane.b32.xlu0 %v2113, 80
      %v5335 = vpop.permute.xlu0 %5334
      %5336 = vrot.lane.b32.xlu0 %v2114, 80
      %v5337 = vpop.permute.xlu0 %5336
      %v5340 = vsel %vm1677, %v5332, 0
      %v5343 = vsel %vm1677, %v5333, 0
      %v5346 = vsel %vm1989, %v5337, 0
      %5348 = vmatpush.bf16.msra.mxu0 0
      %5349 = vmatpush.bf16.msra.mxu0 0
      %5350 = vmatpush.bf16.msra.mxu0 0
      %5351 = vmatpush.bf16.msra.mxu0 0
      %5352 = vmatpush.bf16.msra.mxu0 0
      %5353 = vmatpush.bf16.msra.mxu0 0
      %5354 = vmatpush.bf16.msra.mxu0 %v5346
      %5355 = vmatpush.bf16.msra.mxu0 %v5335
      %5356 = vmatmul.bf16.gmra.mxu0 %v5340
      %v5357 = vpop.f32.mrf.mxu0
      %v5358 = vadd.f32 0.0, %v5357
      %v5359 = vpop.f32.mrf.mxu0
      %v5360 = vadd.f32 0.0, %v5359
      %5361 = vmatmul.bf16.gmra.mxu0 %v5343
      %v5362 = vpop.f32.mrf.mxu0
      %v5363 = vadd.f32 0.0, %v5362
      %v5364 = vpop.f32.mrf.mxu0
      %5365 = vdwg.mxu0
      %v5369 = vunpack.c.l.b16 %v5194
      %v5370 = vunpack.c.l.b16 %v5195
      %v5371 = vunpack.c.l.b16 %v5196
      %v5372 = vpack.c.b16 %v5370, %v5369
      %v5373 = vpack.c.b16 %v5371, %v5371
      %5374 = vrot.lane.b32.xlu0 %v2157, 80
      %v5375 = vpop.permute.xlu0 %5374
      %5376 = vrot.lane.b32.xlu0 %v2158, 80
      %v5377 = vpop.permute.xlu0 %5376
      %v5380 = vsel %vm1677, %v5372, 0
      %v5383 = vsel %vm1677, %v5373, 0
      %v5386 = vsel %vm1989, %v5377, 0
      %5388 = vmatpush.bf16.msra.mxu0 0
      %5389 = vmatpush.bf16.msra.mxu0 0
      %5390 = vmatpush.bf16.msra.mxu0 0
      %5391 = vmatpush.bf16.msra.mxu0 0
      %5392 = vmatpush.bf16.msra.mxu0 0
      %5393 = vmatpush.bf16.msra.mxu0 0
      %5394 = vmatpush.bf16.msra.mxu0 %v5386
      %5395 = vmatpush.bf16.msra.mxu0 %v5375
      %5396 = vmatmul.bf16.gmra.mxu0 %v5380
      %v5397 = vpop.f32.mrf.mxu0
      %v5398 = vadd.f32 0.0, %v5397
      %v5399 = vpop.f32.mrf.mxu0
      %v5400 = vadd.f32 0.0, %v5399
      %5401 = vmatmul.bf16.gmra.mxu0 %v5383
      %v5402 = vpop.f32.mrf.mxu0
      %v5403 = vadd.f32 0.0, %v5402
      %v5404 = vpop.f32.mrf.mxu0
      %5405 = vdwg.mxu0
      %v5409 = vunpack.c.l.b16 %v5197
      %v5410 = vunpack.c.l.b16 %v5198
      %v5411 = vunpack.c.l.b16 %v5199
      %v5412 = vpack.c.b16 %v5410, %v5409
      %v5413 = vpack.c.b16 %v5411, %v5411
      %5414 = vrot.lane.b32.xlu0 %v2201, 80
      %v5415 = vpop.permute.xlu0 %5414
      %5416 = vrot.lane.b32.xlu0 %v2202, 80
      %v5417 = vpop.permute.xlu0 %5416
      %v5420 = vsel %vm1677, %v5412, 0
      %v5423 = vsel %vm1677, %v5413, 0
      %v5426 = vsel %vm1989, %v5417, 0
      %5428 = vmatpush.bf16.msra.mxu0 0
      %5429 = vmatpush.bf16.msra.mxu0 0
      %5430 = vmatpush.bf16.msra.mxu0 0
      %5431 = vmatpush.bf16.msra.mxu0 0
      %5432 = vmatpush.bf16.msra.mxu0 0
      %5433 = vmatpush.bf16.msra.mxu0 0
      %5434 = vmatpush.bf16.msra.mxu0 %v5426
      %5435 = vmatpush.bf16.msra.mxu0 %v5415
      %5436 = vmatmul.bf16.gmra.mxu0 %v5420
      %v5437 = vpop.f32.mrf.mxu0
      %v5438 = vadd.f32 0.0, %v5437
      %v5439 = vpop.f32.mrf.mxu0
      %v5440 = vadd.f32 0.0, %v5439
      %5441 = vmatmul.bf16.gmra.mxu0 %v5423
      %v5442 = vpop.f32.mrf.mxu0
      %v5443 = vadd.f32 0.0, %v5442
      %v5444 = vpop.f32.mrf.mxu0
      %5445 = vdwg.mxu0
      %v5449 = vunpack.c.l.b16 %v5200
      %v5450 = vunpack.c.l.b16 %v5201
      %v5451 = vunpack.c.l.b16 %v5202
      %v5452 = vpack.c.b16 %v5450, %v5449
      %v5453 = vpack.c.b16 %v5451, %v5451
      %5454 = vrot.lane.b32.xlu0 %v2245, 80
      %v5455 = vpop.permute.xlu0 %5454
      %5456 = vrot.lane.b32.xlu0 %v2246, 80
      %v5457 = vpop.permute.xlu0 %5456
      %v5460 = vsel %vm1677, %v5452, 0
      %v5463 = vsel %vm1677, %v5453, 0
      %v5466 = vsel %vm1989, %v5457, 0
      %5468 = vmatpush.bf16.msra.mxu0 0
      %5469 = vmatpush.bf16.msra.mxu0 0
      %5470 = vmatpush.bf16.msra.mxu0 0
      %5471 = vmatpush.bf16.msra.mxu0 0
      %5472 = vmatpush.bf16.msra.mxu0 0
      %5473 = vmatpush.bf16.msra.mxu0 0
      %5474 = vmatpush.bf16.msra.mxu0 %v5466
      %5475 = vmatpush.bf16.msra.mxu0 %v5455
      %5476 = vmatmul.bf16.gmra.mxu0 %v5460
      %v5477 = vpop.f32.mrf.mxu0
      %v5478 = vadd.f32 0.0, %v5477
      %v5479 = vpop.f32.mrf.mxu0
      %v5480 = vadd.f32 0.0, %v5479
      %5481 = vmatmul.bf16.gmra.mxu0 %v5463
      %v5482 = vpop.f32.mrf.mxu0
      %v5483 = vadd.f32 0.0, %v5482
      %v5484 = vpop.f32.mrf.mxu0
      %5485 = vdwg.mxu0
      %v5489 = vunpack.c.l.b16 %v5203
      %v5490 = vunpack.c.l.b16 %v5204
      %v5491 = vunpack.c.l.b16 %v5205
      %v5492 = vpack.c.b16 %v5490, %v5489
      %v5493 = vpack.c.b16 %v5491, %v5491
      %5494 = vrot.lane.b32.xlu0 %v2289, 80
      %v5495 = vpop.permute.xlu0 %5494
      %5496 = vrot.lane.b32.xlu0 %v2290, 80
      %v5497 = vpop.permute.xlu0 %5496
      %v5500 = vsel %vm1677, %v5492, 0
      %v5503 = vsel %vm1677, %v5493, 0
      %v5506 = vsel %vm1989, %v5497, 0
      %5508 = vmatpush.bf16.msra.mxu0 0
      %5509 = vmatpush.bf16.msra.mxu0 0
      %5510 = vmatpush.bf16.msra.mxu0 0
      %5511 = vmatpush.bf16.msra.mxu0 0
      %5512 = vmatpush.bf16.msra.mxu0 0
      %5513 = vmatpush.bf16.msra.mxu0 0
      %5514 = vmatpush.bf16.msra.mxu0 %v5506
      %5515 = vmatpush.bf16.msra.mxu0 %v5495
      %5516 = vmatmul.bf16.gmra.mxu0 %v5500
      %v5517 = vpop.f32.mrf.mxu0
      %v5518 = vadd.f32 0.0, %v5517
      %v5519 = vpop.f32.mrf.mxu0
      %v5520 = vadd.f32 0.0, %v5519
      %5521 = vmatmul.bf16.gmra.mxu0 %v5503
      %v5522 = vpop.f32.mrf.mxu0
      %v5523 = vadd.f32 0.0, %v5522
      %v5524 = vpop.f32.mrf.mxu0
      %5525 = vdwg.mxu0
      %v5526 = vpack.c.bf16 %v5240, %v5238
      %v5527 = vpack.c.bf16 %v5278, %v5243
      %v5528 = vpack.c.bf16 %v5283, %v5280
      %v5529 = vpack.c.bf16 %v5320, %v5318
      %v5530 = vpack.c.bf16 %v5358, %v5323
      %v5531 = vpack.c.bf16 %v5363, %v5360
      %v5532 = vpack.c.bf16 %v5400, %v5398
      %v5533 = vpack.c.bf16 %v5438, %v5403
      %v5534 = vpack.c.bf16 %v5443, %v5440
      %v5535 = vpack.c.bf16 %v5480, %v5478
      %v5536 = vpack.c.bf16 %v5518, %v5483
      %v5537 = vpack.c.bf16 %v5523, %v5520
      %v5538 = vld [vmem:[%s5 + $0x18] sm:$0xf]
      %v5539 = vld [vmem:[%s5 + $0x1c] sm:$0xf]
      %v5542 = vunpack.c.l.b16 %v5538
      %v5543 = vunpack.c.l.b16 %v5539
      %v5544 = vpack.c.b16 %v5543, %v5542
      %v5547 = vsel %vm1272, %v5526, 0
      %v5550 = vsel %vm1272, %v5527, 0
      %v5553 = vsel %vm1272, %v5528, 0
      %v5556 = vsel %vm1272, %v5529, 0
      %v5559 = vsel %vm1272, %v5530, 0
      %v5562 = vsel %vm1272, %v5531, 0
      %v5565 = vsel %vm1272, %v5532, 0
      %v5568 = vsel %vm1272, %v5533, 0
      %v5571 = vsel %vm1272, %v5534, 0
      %v5574 = vsel %vm1272, %v5535, 0
      %v5577 = vsel %vm1272, %v5536, 0
      %v5580 = vsel %vm1272, %v5537, 0
      %5582 = vmatpush.bf16.msra.mxu0 0
      %5583 = vmatpush.bf16.msra.mxu0 0
      %5584 = vmatpush.bf16.msra.mxu0 0
      %5585 = vmatpush.bf16.msra.mxu0 0
      %5586 = vmatpush.bf16.msra.mxu0 0
      %5587 = vmatpush.bf16.msra.mxu0 0
      %5588 = vmatpush.bf16.msra.mxu0 0
      %5589 = vmatpush.bf16.msra.mxu0 %v5544
      %5590 = vmatmul.bf16.gmra.mxu0 %v5547
      %v5591 = vpop.f32.mrf.mxu0
      %v5592 = vadd.f32 0.0, %v5591
      %v5593 = vpop.f32.mrf.mxu0
      %v5594 = vadd.f32 0.0, %v5593
      %5595 = vmatmul.bf16.gmra.mxu0 %v5550
      %v5596 = vpop.f32.mrf.mxu0
      %v5597 = vadd.f32 0.0, %v5596
      %v5598 = vpop.f32.mrf.mxu0
      %v5599 = vadd.f32 0.0, %v5598
      %5600 = vmatmul.bf16.gmra.mxu0 %v5553
      %v5601 = vpop.f32.mrf.mxu0
      %v5602 = vadd.f32 0.0, %v5601
      %v5603 = vpop.f32.mrf.mxu0
      %v5604 = vadd.f32 0.0, %v5603
      %5605 = vmatmul.bf16.gmra.mxu0 %v5556
      %v5606 = vpop.f32.mrf.mxu0
      %v5607 = vadd.f32 0.0, %v5606
      %v5608 = vpop.f32.mrf.mxu0
      %v5609 = vadd.f32 0.0, %v5608
      %5610 = vmatmul.bf16.gmra.mxu0 %v5559
      %v5611 = vpop.f32.mrf.mxu0
      %v5612 = vadd.f32 0.0, %v5611
      %v5613 = vpop.f32.mrf.mxu0
      %v5614 = vadd.f32 0.0, %v5613
      %5615 = vmatmul.bf16.gmra.mxu0 %v5562
      %v5616 = vpop.f32.mrf.mxu0
      %v5617 = vadd.f32 0.0, %v5616
      %v5618 = vpop.f32.mrf.mxu0
      %v5619 = vadd.f32 0.0, %v5618
      %5620 = vmatmul.bf16.gmra.mxu0 %v5565
      %v5621 = vpop.f32.mrf.mxu0
      %v5622 = vadd.f32 0.0, %v5621
      %v5623 = vpop.f32.mrf.mxu0
      %v5624 = vadd.f32 0.0, %v5623
      %5625 = vmatmul.bf16.gmra.mxu0 %v5568
      %v5626 = vpop.f32.mrf.mxu0
      %v5627 = vadd.f32 0.0, %v5626
      %v5628 = vpop.f32.mrf.mxu0
      %v5629 = vadd.f32 0.0, %v5628
      %5630 = vmatmul.bf16.gmra.mxu0 %v5571
      %v5631 = vpop.f32.mrf.mxu0
      %v5632 = vadd.f32 0.0, %v5631
      %v5633 = vpop.f32.mrf.mxu0
      %v5634 = vadd.f32 0.0, %v5633
      %5635 = vmatmul.bf16.gmra.mxu0 %v5574
      %v5636 = vpop.f32.mrf.mxu0
      %v5637 = vadd.f32 0.0, %v5636
      %v5638 = vpop.f32.mrf.mxu0
      %v5639 = vadd.f32 0.0, %v5638
      %5640 = vmatmul.bf16.gmra.mxu0 %v5577
      %v5641 = vpop.f32.mrf.mxu0
      %v5642 = vadd.f32 0.0, %v5641
      %v5643 = vpop.f32.mrf.mxu0
      %v5644 = vadd.f32 0.0, %v5643
      %5645 = vmatmul.bf16.gmra.mxu0 %v5580
      %v5646 = vpop.f32.mrf.mxu0
      %v5647 = vadd.f32 0.0, %v5646
      %v5648 = vpop.f32.mrf.mxu0
      %v5649 = vadd.f32 0.0, %v5648
      %5650 = vdwg.mxu0
      %v5651 = vadd.f32 %v4566, %v5592
      %v5652 = vadd.f32 %v4567, %v5594
      %v5653 = vadd.f32 %v4568, %v5597
      %v5654 = vadd.f32 %v4569, %v5599
      %v5655 = vadd.f32 %v4570, %v5602
      %v5656 = vadd.f32 %v4571, %v5604
      %v5657 = vadd.f32 %v4572, %v5607
      %v5658 = vadd.f32 %v4573, %v5609
      %v5659 = vadd.f32 %v4574, %v5612
      %v5660 = vadd.f32 %v4575, %v5614
      %v5661 = vadd.f32 %v4576, %v5617
      %v5662 = vadd.f32 %v4577, %v5619
      %v5663 = vadd.f32 %v4578, %v5622
      %v5664 = vadd.f32 %v4579, %v5624
      %v5665 = vadd.f32 %v4580, %v5627
      %v5666 = vadd.f32 %v4581, %v5629
      %v5667 = vadd.f32 %v4582, %v5632
      %v5668 = vadd.f32 %v4583, %v5634
      %v5669 = vadd.f32 %v4584, %v5637
      %v5670 = vadd.f32 %v4585, %v5639
      %v5671 = vadd.f32 %v4586, %v5642
      %v5672 = vadd.f32 %v4587, %v5644
      %v5673 = vadd.f32 %v4588, %v5647
      %v5674 = vadd.f32 %v4589, %v5649
      %v5675 = vld [vmem:[%s6] sm:$0x1]
      %v5677 = vperm.slane %v5675, 0
      %v5679 = vadd.f32 %v5651, %v5677
      %v5680 = vadd.f32 %v5652, %v5677
      %v5681 = vadd.f32 %v5653, %v5677
      %v5682 = vadd.f32 %v5654, %v5677
      %v5683 = vadd.f32 %v5655, %v5677
      %v5684 = vadd.f32 %v5656, %v5677
      %v5685 = vadd.f32 %v5657, %v5677
      %v5686 = vadd.f32 %v5658, %v5677
      %v5687 = vadd.f32 %v5659, %v5677
      %v5688 = vadd.f32 %v5660, %v5677
      %v5689 = vadd.f32 %v5661, %v5677
      %v5690 = vadd.f32 %v5662, %v5677
      %v5691 = vadd.f32 %v5663, %v5677
      %v5692 = vadd.f32 %v5664, %v5677
      %v5693 = vadd.f32 %v5665, %v5677
      %v5694 = vadd.f32 %v5666, %v5677
      %v5695 = vadd.f32 %v5667, %v5677
      %v5696 = vadd.f32 %v5668, %v5677
      %v5697 = vadd.f32 %v5669, %v5677
      %v5698 = vadd.f32 %v5670, %v5677
      %v5699 = vadd.f32 %v5671, %v5677
      %v5700 = vadd.f32 %v5672, %v5677
      %v5701 = vadd.f32 %v5673, %v5677
      %v5702 = vadd.f32 %v5674, %v5677
      %v5703 = vld [vmem:[%s278] sm:$0xff]
      %v5704 = vld [vmem:[%s278 + $0x8] sm:$0xff]
      %v5705 = vld [vmem:[%s278 + $0x10] sm:$0x1]
      %v5706 = vld [vmem:[%s278 + $0x18] sm:$0xff]
      %v5707 = vld [vmem:[%s278 + $0x20] sm:$0xff]
      %v5708 = vld [vmem:[%s278 + $0x28] sm:$0x1]
      %v5709 = vld [vmem:[%s278 + $0x30] sm:$0xff]
      %v5710 = vld [vmem:[%s278 + $0x38] sm:$0xff]
      %v5711 = vld [vmem:[%s278 + $0x40] sm:$0x1]
      %v5712 = vld [vmem:[%s278 + $0x48] sm:$0xff]
      %v5713 = vld [vmem:[%s278 + $0x50] sm:$0xff]
      %v5714 = vld [vmem:[%s278 + $0x58] sm:$0x1]
      %v5715 = vld [vmem:[%s278 + $0x60] sm:$0xff]
      %v5716 = vld [vmem:[%s278 + $0x68] sm:$0xff]
      %v5717 = vld [vmem:[%s278 + $0x70] sm:$0x1]
      %v5718 = vld [vmem:[%s278 + $0x78] sm:$0xff]
      %v5719 = vld [vmem:[%s278 + $0x80] sm:$0xff]
      %v5720 = vld [vmem:[%s278 + $0x88] sm:$0x1]
      %v5721 = vld [vmem:[%s278 + $0x90] sm:$0xff]
      %v5722 = vld [vmem:[%s278 + $0x98] sm:$0xff]
      %v5723 = vld [vmem:[%s278 + $0xa0] sm:$0x1]
      %v5724 = vld [vmem:[%s278 + $0xa8] sm:$0xff]
      %v5725 = vld [vmem:[%s278 + $0xb0] sm:$0xff]
      %v5726 = vld [vmem:[%s278 + $0xb8] sm:$0x1]
      %v5727 = vadd.f32 %v5703, %v5679
      %v5728 = vadd.f32 %v5704, %v5680
      %v5729 = vadd.f32 %v5705, %v5681
      %v5730 = vadd.f32 %v5706, %v5682
      %v5731 = vadd.f32 %v5707, %v5683
      %v5732 = vadd.f32 %v5708, %v5684
      %v5733 = vadd.f32 %v5709, %v5685
      %v5734 = vadd.f32 %v5710, %v5686
      %v5735 = vadd.f32 %v5711, %v5687
      %v5736 = vadd.f32 %v5712, %v5688
      %v5737 = vadd.f32 %v5713, %v5689
      %v5738 = vadd.f32 %v5714, %v5690
      %v5739 = vadd.f32 %v5715, %v5691
      %v5740 = vadd.f32 %v5716, %v5692
      %v5741 = vadd.f32 %v5717, %v5693
      %v5742 = vadd.f32 %v5718, %v5694
      %v5743 = vadd.f32 %v5719, %v5695
      %v5744 = vadd.f32 %v5720, %v5696
      %v5745 = vadd.f32 %v5721, %v5697
      %v5746 = vadd.f32 %v5722, %v5698
      %v5747 = vadd.f32 %v5723, %v5699
      %v5748 = vadd.f32 %v5724, %v5700
      %v5749 = vadd.f32 %v5725, %v5701
      %v5750 = vadd.f32 %v5726, %v5702
      %5751 = vst.msk [vmem:[%s285] sm:$0xff] %vm323, %v5727
      %5752 = vst.msk [vmem:[%s285 + $0x8] sm:$0xff] %vm323, %v5728
      %vm5753 = vcmask 516096
      %5754 = vst.msk [vmem:[%s285 + $0x10] sm:$0x1] %vm5753, %v5729
      %5755 = vst.msk [vmem:[%s285 + $0x18] sm:$0xff] %vm323, %v5730
      %5756 = vst.msk [vmem:[%s285 + $0x20] sm:$0xff] %vm323, %v5731
      %5757 = vst.msk [vmem:[%s285 + $0x28] sm:$0x1] %vm5753, %v5732
      %5758 = vst.msk [vmem:[%s285 + $0x30] sm:$0xff] %vm323, %v5733
      %5759 = vst.msk [vmem:[%s285 + $0x38] sm:$0xff] %vm323, %v5734
      %5760 = vst.msk [vmem:[%s285 + $0x40] sm:$0x1] %vm5753, %v5735
      %5761 = vst.msk [vmem:[%s285 + $0x48] sm:$0xff] %vm323, %v5736
      %5762 = vst.msk [vmem:[%s285 + $0x50] sm:$0xff] %vm323, %v5737
      %5763 = vst.msk [vmem:[%s285 + $0x58] sm:$0x1] %vm5753, %v5738
      %5764 = vst.msk [vmem:[%s285 + $0x60] sm:$0xff] %vm323, %v5739
      %5765 = vst.msk [vmem:[%s285 + $0x68] sm:$0xff] %vm323, %v5740
      %5766 = vst.msk [vmem:[%s285 + $0x70] sm:$0x1] %vm5753, %v5741
      %5767 = vst.msk [vmem:[%s285 + $0x78] sm:$0xff] %vm323, %v5742
      %5768 = vst.msk [vmem:[%s285 + $0x80] sm:$0xff] %vm323, %v5743
      %5769 = vst.msk [vmem:[%s285 + $0x88] sm:$0x1] %vm5753, %v5744
      %5770 = vst.msk [vmem:[%s285 + $0x90] sm:$0xff] %vm323, %v5745
      %5771 = vst.msk [vmem:[%s285 + $0x98] sm:$0xff] %vm323, %v5746
      %5772 = vst.msk [vmem:[%s285 + $0xa0] sm:$0x1] %vm5753, %v5747
      %5773 = vst.msk [vmem:[%s285 + $0xa8] sm:$0xff] %vm323, %v5748
      %5774 = vst.msk [vmem:[%s285 + $0xb0] sm:$0xff] %vm323, %v5749
      %5775 = vst.msk [vmem:[%s285 + $0xb8] sm:$0x1] %vm5753, %v5750
      %s5776 = smul.u32 8, %s18
      %p5777 = scmp.lt.s32.totalorder %s5776, 15
      %s5778 = scalar_select %p5777, %s5776, 15
      %s5779 = smul.addr %s5778, 3
      %s5780 = smul.addr %s5779, 8
      %s5781 = scalar_lea.vmem %s7, %s5780
      // Predicated region
      $region49: #{_lambda_.5} parent=47 // pred_check
        %p5782 = pneg %p188
      $region50: #{_lambda_.5} parent=47 // pred_check_branch
        %5784 = sbr.rel (%p5782) target = $region52
      $region51: #{_lambda_.5} parent=47 // pred_region
        %s5785 = smul.u32 8, %s18
      $region52: #{_lambda_.5} parent=47 // pred_fallthru
        _
    $region48: #{_lambda_.5} parent=5 // pred_fallthru
      _
    %p5786 = scmp.le.s32.totalorder 2, %s13
    // Predicated region
    $region53: #{_lambda_.5} parent=5 // pred_check
      %p5787 = pneg %p5786
    $region54: #{_lambda_.5} parent=5 // pred_check_branch
      %5789 = sbr.rel (%p5787) target = $region56
    $region55: #{_lambda_.5} parent=5 // pred_region
      %s5790 = ssub.s32 %s13, 2
      // Predicated region
      $region57: #{_lambda_.5} parent=55 // pred_check
        %p5791 = pneg %p194
      $region58: #{_lambda_.5} parent=55 // pred_check_branch
        %5793 = sbr.rel (%p5791) target = $region60
      $region59: #{_lambda_.5} parent=55 // pred_region
        %s5794 = smul.u32 8, %s19
        %p5795 = scmp.lt.s32.totalorder %s5794, 15
        %s5796 = scalar_select %p5795, %s5794, 15
        %s5797 = smul.addr %s5796, 3
        %s5798 = smul.addr %s5797, 8
        %s5799 = scalar_lea.vmem %s7, %s5798
      $region60: #{_lambda_.5} parent=55 // pred_fallthru
        _
    $region56: #{_lambda_.5} parent=5 // pred_fallthru
      _
  $region6: #{_lambda_.5} parent=0 // loop_footer
    %s17 = sadd.s32 1, %s13
  $region7: #{_lambda_.5} parent=0 // loop_footer_branch
    %12 = sbr.rel target = $region3
  $region8: #{_lambda_.5} parent=0 // loop_exit
    _

</llo_original>
